<compile_context>
chip_gen: v5e
topology: v5e:2x2
jax: 0.10.0
libtpu: 0.0.40
codegen_flags: <defaults>
</compile_context>

<pallas_src>
import functools

import jax
import jax.numpy as jnp
from jax.experimental import pallas as pl
from jax.experimental.pallas import tpu as pltpu


# ----------------------------------------------------------------------------
# Fused kernel: 3x3 conv (video channel) + folded bias + GELU  -> core out
#               + single K=C*S bf16 MXU readout matmul + ELU1   -> responses
# ----------------------------------------------------------------------------
def _fused_core_readout_kernel(
    vid_ref,    # (1, tt, S + 2W + 2)  f32   flat video, zero-padded W+1 each side
    wv_ref,     # (9, C)               f32   SMEM: 3x3 conv taps for video channel
    cb_ref,     # (1, tt, C)           f32   per-frame bias (beh/pupil fold + conv bias)
    wro_ref,    # (C*S, tn)            bf16  readout weight slab for this N tile
    rb_ref,     # (1, tn)              f32   readout bias slab (zero padded)
    core_ref,   # (1, C, tt, S)        f32   core activations (lane-dense: S in lanes)
    resp_ref,   # (1, tt, tn)          f32   responses (lane-dense: N in lanes)
    lhs_ref,    # (tt, C*S)            bf16  scratch: readout LHS, persists over N axis
    *, H, W, activate,
):
    C = wv_ref.shape[1]
    S = H * W
    tt = vid_ref.shape[1]
    nn = pl.program_id(2)

    # ---- core (3x3 conv + bias + GELU): computed once per (b, time-tile) ----
    @pl.when(nn == 0)
    def _compute_core():
        vp = vid_ref[0]                               # (tt, S + 2W + 2)
        bias = cb_ref[0]                              # (tt, C)

        # Horizontal edge masks (vertical edges are handled by the flat zero
        # pad); built once per (b, time-tile), reused for all taps/channels.
        col = jax.lax.broadcasted_iota(jnp.int32, (tt, S), 1) % W
        left = col == 0
        right = col == (W - 1)

        base = W + 1
        slabs = []
        for dh in (-1, 0, 1):
            for dw in (-1, 0, 1):
                start = base + dh * W + dw            # static offset
                sl = vp[:, start:start + S]           # (tt, S)
                if dw == -1:
                    sl = jnp.where(left, 0.0, sl)
                elif dw == 1:
                    sl = jnp.where(right, 0.0, sl)
                slabs.append(sl)

        # Per-output-channel accumulation keeps the accumulator at (tt, S).
        # TODO(synk): for very large tt move this onto the MXU as
        # (C,9) @ (9, tt*S); requires a lane-relayout of the shifted slabs.
        for c in range(C):
            acc = slabs[0] * wv_ref[0, c]
            for tap in range(1, 9):
                acc = acc + slabs[tap] * wv_ref[tap, c]
            acc = acc + bias[:, c:c + 1]              # (tt,1) lane-broadcast
            # TODO(synk): PyTorch nn.GELU defaults to exact erf; tanh form used
            # because it maps onto the EUP on all TPU generations.
            act = jax.nn.gelu(acc, approximate=True)  # (tt, S) f32
            core_ref[0, c] = act
            lhs_ref[:, c * S:(c + 1) * S] = act.astype(jnp.bfloat16)

    # ---- readout: one bf16 MXU matmul with K = C*S, fused ELU1 epilogue ----
    z = jnp.dot(lhs_ref[...], wro_ref[...],
                preferred_element_type=jnp.float32)   # (tt, tn)
    z = z + rb_ref[...]
    if activate:
        z = jnp.where(z > 0.0, z + 1.0, jnp.exp(z))   # ELU1 = ELU(x) + 1
    resp_ref[0] = z


def fused_core_readout(vid_fpad, w_vid, bias_btc, wro, rb, *, H, W, tt, tn, activate):
    B, T, SP = vid_fpad.shape
    C = w_vid.shape[1]
    S = H * W
    CS, N_pad = wro.shape
    assert CS == C * S and T % tt == 0 and N_pad % tn == 0

    # Explicit VMEM budget from the actual (double-buffered) block sizes.
    vmem_bytes = int(
        2 * tt * SP * 4            # vid block
        + 2 * tt * C * 4           # bias block
        + 2 * CS * tn * 2          # readout weight slab (bf16)
        + 2 * tn * 4               # readout bias slab
        + 2 * C * tt * S * 4       # core output block
        + 2 * tt * tn * 4          # response block
        + tt * CS * 2              # LHS scratch
    )
    vmem_bytes = min(100 << 20, max(vmem_bytes + (8 << 20), 32 << 20))

    kernel = functools.partial(_fused_core_readout_kernel, H=H, W=W, activate=activate)
    return pl.pallas_call(
        kernel,
        out_shape=(
            jax.ShapeDtypeStruct((B, C, T, S), jnp.float32),
            jax.ShapeDtypeStruct((B, T, N_pad), jnp.float32),
        ),
        grid_spec=pltpu.PrefetchScalarGridSpec(
            num_scalar_prefetch=0,
            # B and T-tiles are independent ("parallel", megacore-friendly);
            # the N axis is innermost + "arbitrary" so the core activations /
            # LHS scratch computed at n == 0 stay valid for all its N tiles
            # and the core output block is written back only once.
            grid=(B, T // tt, N_pad // tn),
            in_specs=[
                pl.BlockSpec((1, tt, SP), lambda b, j, n: (b, j, 0)),
                pl.BlockSpec(memory_space=pltpu.MemorySpace.SMEM),      # w_vid
                pl.BlockSpec((1, tt, C), lambda b, j, n: (b, j, 0)),
                pl.BlockSpec((CS, tn), lambda b, j, n: (0, n)),
                pl.BlockSpec((1, tn), lambda b, j, n: (0, n)),
            ],
            out_specs=[
                pl.BlockSpec((1, C, tt, S), lambda b, j, n: (b, 0, j, 0)),
                pl.BlockSpec((1, tt, tn), lambda b, j, n: (b, j, n)),
            ],
            scratch_shapes=[pltpu.VMEM((tt, CS), jnp.bfloat16)],
        ),
        compiler_params=pltpu.CompilerParams(
            dimension_semantics=("parallel", "parallel", "arbitrary"),
            vmem_limit_bytes=vmem_bytes,
        ),
    )(vid_fpad, w_vid, bias_btc, wro, rb)


# ----------------------------------------------------------------------------
# Parameters + forward wrapper (glue only; compute lives in the kernel)
# ----------------------------------------------------------------------------
def init_params(key, *, c_out, n_neurons, spatial_size):
    ks = jax.random.split(key, 6)
    return {
        # 3x3 taps for the video channel
        "w_vid": 0.1 * jax.random.normal(ks[0], (9, c_out), jnp.float32),
        # tap-summed weights for behaviors(3) + pupil(2) channels: since these
        # channels are spatially constant, their conv contribution is (by
        # definition of this parameterization) a spatially-uniform per-(b,t)
        # bias, so the in-kernel fold is exact (no border approximation).
        "w_bp": 0.1 * jax.random.normal(ks[1], (5, c_out), jnp.float32),
        "core_b": 0.1 * jax.random.normal(ks[2], (c_out,), jnp.float32),
        "spatial_w": (1.0 / spatial_size)
        * jax.random.normal(ks[3], (n_neurons, spatial_size), jnp.float32),
        "feature_w": 0.5 * jax.random.normal(ks[4], (n_neurons, c_out), jnp.float32),
        "readout_b": 0.1 * jax.random.normal(ks[5], (n_neurons,), jnp.float32),
    }


def _pick_tt(T, cap=128):
    """Largest multiple-of-8 divisor of T up to `cap` (raise cap to 256 on
    v6e/v7x if VMEM allows); falls back to the full T."""
    best = None
    for cand in range(8, min(T, cap) + 1, 8):
        if T % cand == 0:
            best = cand
    return T if best is None else best


@functools.partial(jax.jit, static_argnames=("activate",))
def model_forward(params, video, behaviors, pupil_centers, activate=True):
    """
    video: (B, 1, T, H, W) f32   behaviors: (B, 3, T)   pupil_centers: (B, 2, T)
    returns (outputs (B, N, T), core_outputs (B, C_out, T, H, W))
    """
    B, _, T, H, W = video.shape
    S = H * W
    C = params["w_vid"].shape[1]
    N = params["feature_w"].shape[0]

    LANE = 256                                   # fills the 256-wide v6e/v7x MXU
    N_pad = -(-N // LANE) * LANE
    tn = min(N_pad, 256)
    tt = _pick_tt(T)

    # Behavior/pupil channels are constant over (H, W): their conv contribution
    # is a per-(b, t) additive bias (tiny matmul; wrapper-side glue only).
    bp = jnp.transpose(jnp.concatenate([behaviors, pupil_centers], axis=1), (0, 2, 1))
    bias_btc = bp @ params["w_bp"] + params["core_b"]                 # (B, T, C)

    # Flat video with W+1 zeros either side: vertical conv padding for free;
    # horizontal edges are masked inside the kernel.
    vid_flat = video[:, 0].reshape(B, T, S).astype(jnp.float32)
    vid_fpad = jnp.pad(vid_flat, ((0, 0), (0, 0), (W + 1, W + 1)))    # (B,T,S+2W+2)

    # Combined readout weight, flattened c-major to match the kernel's LHS
    # lane layout: wro[c*S + s, n] = feature[n, c] * spatial[n, s]
    wro = jnp.einsum("nc,ns->csn", params["feature_w"], params["spatial_w"])
    wro = wro.reshape(C * S, N)
    wro = jnp.pad(wro, ((0, 0), (0, N_pad - N))).astype(jnp.bfloat16)
    rb = jnp.pad(params["readout_b"], (0, N_pad - N)).reshape(1, N_pad)

    core_cts, resp_pad = fused_core_readout(
        vid_fpad, params["w_vid"], bias_btc, wro, rb,
        H=H, W=W, tt=tt, tn=tn, activate=activate,
    )

    core_outputs = jax.lax.stop_gradient(core_cts.reshape(B, C, T, H, W))
    outputs = jnp.transpose(resp_pad[:, :, :N], (0, 2, 1))            # (B, N, T)
    return outputs, core_outputs


# ----------------------------------------------------------------------------
# Pure-JAX reference (same model semantics) for validation
# ----------------------------------------------------------------------------
def reference_forward(params, video, behaviors, pupil_centers):
    B, _, T, H, W = video.shape
    S = H * W
    vid = video[:, 0]
    vp = jnp.pad(vid, ((0, 0), (0, 0), (1, 1), (1, 1)))
    conv = jnp.zeros((B, T, H, W, params["w_vid"].shape[1]), jnp.float32)
    for dh in range(3):
        for dw in range(3):
            conv = conv + vp[:, :, dh:dh + H, dw:dw + W, None] * params["w_vid"][dh * 3 + dw]
    bp = jnp.transpose(jnp.concatenate([behaviors, pupil_centers], axis=1), (0, 2, 1))
    bias = bp @ params["w_bp"] + params["core_b"]
    core = jax.nn.gelu(conv + bias[:, :, None, None, :], approximate=True)
    core_out = jnp.transpose(core, (0, 4, 1, 2, 3))
    z = jnp.einsum("btsc,ns,nc->btn", core.reshape(B, T, S, -1),
                   params["spatial_w"], params["feature_w"]) + params["readout_b"]
    out = jnp.where(z > 0.0, z + 1.0, jnp.exp(z))
    return jnp.transpose(out, (0, 2, 1)), core_out


if __name__ == "__main__":
    B, T, H, W = 2, 16, 16, 16
    C_OUT, N_NEURONS = 16, 32

    key = jax.random.PRNGKey(0)
    k_vid, k_beh, k_pup, k_par = jax.random.split(key, 4)
    video = jax.random.normal(k_vid, (B, 1, T, H, W), jnp.float32)
    behaviors = jax.random.normal(k_beh, (B, 3, T), jnp.float32)
    pupil_centers = jax.random.normal(k_pup, (B, 2, T), jnp.float32)

    params = init_params(k_par, c_out=C_OUT, n_neurons=N_NEURONS, spatial_size=H * W)

    outputs, core_outputs = model_forward(params, video, behaviors, pupil_centers)
    jax.block_until_ready((outputs, core_outputs))

    assert outputs.shape == (B, N_NEURONS, T), outputs.shape
    assert core_outputs.shape == (B, C_OUT, T, H, W), core_outputs.shape
    assert bool(jnp.all(outputs > 0.0))          # ELU1 output is strictly positive

    ref_out, ref_core = reference_forward(params, video, behaviors, pupil_centers)
    assert bool(jnp.allclose(core_outputs, ref_core, rtol=1e-4, atol=1e-4)), (
        float(jnp.max(jnp.abs(core_outputs - ref_core)))
    )
    assert bool(jnp.allclose(outputs, ref_out, rtol=5e-2, atol=2e-2)), (
        float(jnp.max(jnp.abs(outputs - ref_out)))
    )

    print("KERNEL_OK")
</pallas_src>

<mosaic_0001>
module attributes {stable_mosaic.version = 11 : i64} {
  func.func @_fused_core_readout_kernel(%arg0: i32, %arg1: i32, %arg2: i32, %arg3: memref<1x16x290xf32, #tpu.memory_space<vmem>>, %arg4: memref<9x16xf32, #tpu.memory_space<smem>>, %arg5: memref<1x16x16xf32, #tpu.memory_space<vmem>>, %arg6: memref<4096x256xbf16, #tpu.memory_space<vmem>>, %arg7: memref<1x256xf32, #tpu.memory_space<vmem>>, %arg8: memref<1x16x16x256xf32, #tpu.memory_space<vmem>>, %arg9: memref<1x16x256xf32, #tpu.memory_space<vmem>>, %arg10: memref<16x4096xbf16, #tpu.memory_space<vmem>>) attributes {dimension_semantics = [#tpu.dimension_semantics<parallel>, #tpu.dimension_semantics<parallel>, #tpu.dimension_semantics<arbitrary>], iteration_bounds = array<i64: 2, 1, 1>, scalar_prefetch = 0 : i64, scratch_operands = 1 : i64, tpu.core_type = #tpu.core_type<tc>, window_params = [{transform_indices = @transform_0, window_bounds = array<i64: 1, 16, 290>}, {transform_indices = @transform_1, window_bounds = array<i64: 9, 16>}, {transform_indices = @transform_2, window_bounds = array<i64: 1, 16, 16>}, {transform_indices = @transform_3, window_bounds = array<i64: 4096, 256>}, {transform_indices = @transform_4, window_bounds = array<i64: 1, 256>}, {transform_indices = @transform_5, window_bounds = array<i64: 1, 16, 16, 256>}, {transform_indices = @transform_6, window_bounds = array<i64: 1, 16, 256>}]} {
    %c0_i32 = arith.constant 0 : i32
    %0 = arith.cmpi eq, %arg2, %c0_i32 : i32
    %1 = arith.extui %0 : i1 to i32
    %c0_i32_0 = arith.constant 0 : i32
    %2 = arith.cmpi ne, %1, %c0_i32_0 : i32
    scf.if %2 {
      %c0_11 = arith.constant 0 : index
      %c0_12 = arith.constant 0 : index
      %c0_13 = arith.constant 0 : index
      %18 = vector.load %arg3[%c0_11, %c0_12, %c0_13] : memref<1x16x290xf32, #tpu.memory_space<vmem>>, vector<1x16x290xf32>
      %19 = vector.shape_cast %18 : vector<1x16x290xf32> to vector<16x290xf32>
      %c0_14 = arith.constant 0 : index
      %c0_15 = arith.constant 0 : index
      %c0_16 = arith.constant 0 : index
      %20 = vector.load %arg5[%c0_14, %c0_15, %c0_16] : memref<1x16x16xf32, #tpu.memory_space<vmem>>, vector<1x16x16xf32>
      %21 = vector.shape_cast %20 : vector<1x16x16xf32> to vector<16x16xf32>
      %22 = tpu.iota {dimensions = array<i32: 1>} : vector<16x256xi32>
      %c16_i32 = arith.constant 16 : i32
      %c0_i32_17 = arith.constant 0 : i32
      %23 = arith.cmpi eq, %c16_i32, %c0_i32_17 : i32
      %c1_i32 = arith.constant 1 : i32
      %24 = arith.select %23, %c1_i32, %c16_i32 : i32
      %25 = vector.broadcast %24 : i32 to vector<16x256xi32>
      %26 = arith.remsi %22, %25 : vector<16x256xi32>
      %c0_i32_18 = arith.constant 0 : i32
      %27 = vector.broadcast %c0_i32_18 : i32 to vector<16x256xi32>
      %28 = arith.cmpi ne, %26, %27 : vector<16x256xi32>
      %c0_i32_19 = arith.constant 0 : i32
      %29 = vector.broadcast %c0_i32_19 : i32 to vector<16x256xi32>
      %30 = arith.cmpi slt, %26, %29 : vector<16x256xi32>
      %c0_i32_20 = arith.constant 0 : i32
      %31 = arith.cmpi slt, %24, %c0_i32_20 : i32
      %32 = vector.broadcast %31 : i1 to vector<16x256xi1>
      %33 = vector.broadcast %32 : vector<16x256xi1> to vector<16x256xi1>
      %34 = arith.xori %30, %33 : vector<16x256xi1>
      %35 = arith.andi %34, %28 : vector<16x256xi1>
      %36 = vector.broadcast %24 : i32 to vector<16x256xi32>
      %37 = arith.addi %26, %36 : vector<16x256xi32>
      %38 = arith.select %35, %37, %26 : vector<16x256xi1>, vector<16x256xi32>
      %c0_i32_21 = arith.constant 0 : i32
      %39 = vector.broadcast %c0_i32_21 : i32 to vector<16x256xi32>
      %40 = arith.cmpi eq, %38, %39 : vector<16x256xi32>
      %c15_i32 = arith.constant 15 : i32
      %41 = vector.broadcast %c15_i32 : i32 to vector<16x256xi32>
      %42 = arith.cmpi eq, %38, %41 : vector<16x256xi32>
      %43 = vector.extract_strided_slice %19 {offsets = [0, 0], sizes = [16, 256], strides = [1, 1]} : vector<16x290xf32> to vector<16x256xf32>
      %cst_22 = arith.constant 0.000000e+00 : f32
      %44 = vector.broadcast %cst_22 : f32 to vector<16x256xf32>
      %45 = arith.select %40, %44, %43 : vector<16x256xi1>, vector<16x256xf32>
      %46 = vector.extract_strided_slice %19 {offsets = [0, 1], sizes = [16, 256], strides = [1, 1]} : vector<16x290xf32> to vector<16x256xf32>
      %47 = vector.extract_strided_slice %19 {offsets = [0, 2], sizes = [16, 256], strides = [1, 1]} : vector<16x290xf32> to vector<16x256xf32>
      %cst_23 = arith.constant 0.000000e+00 : f32
      %48 = vector.broadcast %cst_23 : f32 to vector<16x256xf32>
      %49 = arith.select %42, %48, %47 : vector<16x256xi1>, vector<16x256xf32>
      %50 = vector.extract_strided_slice %19 {offsets = [0, 16], sizes = [16, 256], strides = [1, 1]} : vector<16x290xf32> to vector<16x256xf32>
      %cst_24 = arith.constant 0.000000e+00 : f32
      %51 = vector.broadcast %cst_24 : f32 to vector<16x256xf32>
      %52 = arith.select %40, %51, %50 : vector<16x256xi1>, vector<16x256xf32>
      %53 = vector.extract_strided_slice %19 {offsets = [0, 17], sizes = [16, 256], strides = [1, 1]} : vector<16x290xf32> to vector<16x256xf32>
      %54 = vector.extract_strided_slice %19 {offsets = [0, 18], sizes = [16, 256], strides = [1, 1]} : vector<16x290xf32> to vector<16x256xf32>
      %cst_25 = arith.constant 0.000000e+00 : f32
      %55 = vector.broadcast %cst_25 : f32 to vector<16x256xf32>
      %56 = arith.select %42, %55, %54 : vector<16x256xi1>, vector<16x256xf32>
      %57 = vector.extract_strided_slice %19 {offsets = [0, 32], sizes = [16, 256], strides = [1, 1]} : vector<16x290xf32> to vector<16x256xf32>
      %cst_26 = arith.constant 0.000000e+00 : f32
      %58 = vector.broadcast %cst_26 : f32 to vector<16x256xf32>
      %59 = arith.select %40, %58, %57 : vector<16x256xi1>, vector<16x256xf32>
      %60 = vector.extract_strided_slice %19 {offsets = [0, 33], sizes = [16, 256], strides = [1, 1]} : vector<16x290xf32> to vector<16x256xf32>
      %61 = vector.extract_strided_slice %19 {offsets = [0, 34], sizes = [16, 256], strides = [1, 1]} : vector<16x290xf32> to vector<16x256xf32>
      %cst_27 = arith.constant 0.000000e+00 : f32
      %62 = vector.broadcast %cst_27 : f32 to vector<16x256xf32>
      %63 = arith.select %42, %62, %61 : vector<16x256xi1>, vector<16x256xf32>
      %c0_28 = arith.constant 0 : index
      %c0_29 = arith.constant 0 : index
      %64 = memref.load %arg4[%c0_28, %c0_29] : memref<9x16xf32, #tpu.memory_space<smem>>
      %65 = vector.broadcast %64 : f32 to vector<16x256xf32>
      %66 = arith.mulf %45, %65 : vector<16x256xf32>
      %c1 = arith.constant 1 : index
      %c0_30 = arith.constant 0 : index
      %67 = memref.load %arg4[%c1, %c0_30] : memref<9x16xf32, #tpu.memory_space<smem>>
      %68 = vector.broadcast %67 : f32 to vector<16x256xf32>
      %69 = arith.mulf %46, %68 : vector<16x256xf32>
      %70 = arith.addf %66, %69 : vector<16x256xf32>
      %c2 = arith.constant 2 : index
      %c0_31 = arith.constant 0 : index
      %71 = memref.load %arg4[%c2, %c0_31] : memref<9x16xf32, #tpu.memory_space<smem>>
      %72 = vector.broadcast %71 : f32 to vector<16x256xf32>
      %73 = arith.mulf %49, %72 : vector<16x256xf32>
      %74 = arith.addf %70, %73 : vector<16x256xf32>
      %c3 = arith.constant 3 : index
      %c0_32 = arith.constant 0 : index
      %75 = memref.load %arg4[%c3, %c0_32] : memref<9x16xf32, #tpu.memory_space<smem>>
      %76 = vector.broadcast %75 : f32 to vector<16x256xf32>
      %77 = arith.mulf %52, %76 : vector<16x256xf32>
      %78 = arith.addf %74, %77 : vector<16x256xf32>
      %c4 = arith.constant 4 : index
      %c0_33 = arith.constant 0 : index
      %79 = memref.load %arg4[%c4, %c0_33] : memref<9x16xf32, #tpu.memory_space<smem>>
      %80 = vector.broadcast %79 : f32 to vector<16x256xf32>
      %81 = arith.mulf %53, %80 : vector<16x256xf32>
      %82 = arith.addf %78, %81 : vector<16x256xf32>
      %c5 = arith.constant 5 : index
      %c0_34 = arith.constant 0 : index
      %83 = memref.load %arg4[%c5, %c0_34] : memref<9x16xf32, #tpu.memory_space<smem>>
      %84 = vector.broadcast %83 : f32 to vector<16x256xf32>
      %85 = arith.mulf %56, %84 : vector<16x256xf32>
      %86 = arith.addf %82, %85 : vector<16x256xf32>
      %c6 = arith.constant 6 : index
      %c0_35 = arith.constant 0 : index
      %87 = memref.load %arg4[%c6, %c0_35] : memref<9x16xf32, #tpu.memory_space<smem>>
      %88 = vector.broadcast %87 : f32 to vector<16x256xf32>
      %89 = arith.mulf %59, %88 : vector<16x256xf32>
      %90 = arith.addf %86, %89 : vector<16x256xf32>
      %c7 = arith.constant 7 : index
      %c0_36 = arith.constant 0 : index
      %91 = memref.load %arg4[%c7, %c0_36] : memref<9x16xf32, #tpu.memory_space<smem>>
      %92 = vector.broadcast %91 : f32 to vector<16x256xf32>
      %93 = arith.mulf %60, %92 : vector<16x256xf32>
      %94 = arith.addf %90, %93 : vector<16x256xf32>
      %c8 = arith.constant 8 : index
      %c0_37 = arith.constant 0 : index
      %95 = memref.load %arg4[%c8, %c0_37] : memref<9x16xf32, #tpu.memory_space<smem>>
      %96 = vector.broadcast %95 : f32 to vector<16x256xf32>
      %97 = arith.mulf %63, %96 : vector<16x256xf32>
      %98 = arith.addf %94, %97 : vector<16x256xf32>
      %99 = vector.extract_strided_slice %21 {offsets = [0, 0], sizes = [16, 1], strides = [1, 1]} : vector<16x16xf32> to vector<16x1xf32>
      %100 = vector.broadcast %99 : vector<16x1xf32> to vector<16x256xf32>
      %101 = arith.addf %98, %100 : vector<16x256xf32>
      %102 = arith.mulf %101, %101 : vector<16x256xf32>
      %103 = arith.mulf %101, %102 : vector<16x256xf32>
      %cst_38 = arith.constant 4.471500e-02 : f32
      %104 = vector.broadcast %cst_38 : f32 to vector<16x256xf32>
      %105 = arith.mulf %104, %103 : vector<16x256xf32>
      %106 = arith.addf %101, %105 : vector<16x256xf32>
      %cst_39 = arith.constant 0.797884583 : f32
      %107 = vector.broadcast %cst_39 : f32 to vector<16x256xf32>
      %108 = arith.mulf %107, %106 : vector<16x256xf32>
      %109 = math.tanh %108 : vector<16x256xf32>
      %cst_40 = arith.constant 1.000000e+00 : f32
      %110 = vector.broadcast %cst_40 : f32 to vector<16x256xf32>
      %111 = arith.addf %110, %109 : vector<16x256xf32>
      %cst_41 = arith.constant 5.000000e-01 : f32
      %112 = vector.broadcast %cst_41 : f32 to vector<16x256xf32>
      %113 = arith.mulf %112, %111 : vector<16x256xf32>
      %114 = arith.mulf %101, %113 : vector<16x256xf32>
      %c0_42 = arith.constant 0 : index
      %c0_43 = arith.constant 0 : index
      %c0_44 = arith.constant 0 : index
      %c0_45 = arith.constant 0 : index
      %115 = vector.load %arg8[%c0_42, %c0_43, %c0_44, %c0_45] : memref<1x16x16x256xf32, #tpu.memory_space<vmem>>, vector<1x1x16x256xf32>
      %116 = vector.shape_cast %115 : vector<1x1x16x256xf32> to vector<16x256xf32>
      %117 = vector.shape_cast %114 : vector<16x256xf32> to vector<1x1x16x256xf32>
      tpu.vector_store %arg8[%c0_42, %c0_43, %c0_44, %c0_45], %117 {strides = array<i32>} : memref<1x16x16x256xf32, #tpu.memory_space<vmem>>, vector<1x1x16x256xf32>,
      %118 = arith.truncf %114 : vector<16x256xf32> to vector<16x256xbf16>
      %c0_46 = arith.constant 0 : index
      %c0_47 = arith.constant 0 : index
      %119 = vector.load %arg10[%c0_46, %c0_47] : memref<16x4096xbf16, #tpu.memory_space<vmem>>, vector<16x256xbf16>
      tpu.vector_store %arg10[%c0_46, %c0_47], %118 {strides = array<i32>} : memref<16x4096xbf16, #tpu.memory_space<vmem>>, vector<16x256xbf16>,
      %c0_48 = arith.constant 0 : index
      %c1_49 = arith.constant 1 : index
      %120 = memref.load %arg4[%c0_48, %c1_49] : memref<9x16xf32, #tpu.memory_space<smem>>
      %121 = vector.broadcast %120 : f32 to vector<16x256xf32>
      %122 = arith.mulf %45, %121 : vector<16x256xf32>
      %c1_50 = arith.constant 1 : index
      %c1_51 = arith.constant 1 : index
      %123 = memref.load %arg4[%c1_50, %c1_51] : memref<9x16xf32, #tpu.memory_space<smem>>
      %124 = vector.broadcast %123 : f32 to vector<16x256xf32>
      %125 = arith.mulf %46, %124 : vector<16x256xf32>
      %126 = arith.addf %122, %125 : vector<16x256xf32>
      %c2_52 = arith.constant 2 : index
      %c1_53 = arith.constant 1 : index
      %127 = memref.load %arg4[%c2_52, %c1_53] : memref<9x16xf32, #tpu.memory_space<smem>>
      %128 = vector.broadcast %127 : f32 to vector<16x256xf32>
      %129 = arith.mulf %49, %128 : vector<16x256xf32>
      %130 = arith.addf %126, %129 : vector<16x256xf32>
      %c3_54 = arith.constant 3 : index
      %c1_55 = arith.constant 1 : index
      %131 = memref.load %arg4[%c3_54, %c1_55] : memref<9x16xf32, #tpu.memory_space<smem>>
      %132 = vector.broadcast %131 : f32 to vector<16x256xf32>
      %133 = arith.mulf %52, %132 : vector<16x256xf32>
      %134 = arith.addf %130, %133 : vector<16x256xf32>
      %c4_56 = arith.constant 4 : index
      %c1_57 = arith.constant 1 : index
      %135 = memref.load %arg4[%c4_56, %c1_57] : memref<9x16xf32, #tpu.memory_space<smem>>
      %136 = vector.broadcast %135 : f32 to vector<16x256xf32>
      %137 = arith.mulf %53, %136 : vector<16x256xf32>
      %138 = arith.addf %134, %137 : vector<16x256xf32>
      %c5_58 = arith.constant 5 : index
      %c1_59 = arith.constant 1 : index
      %139 = memref.load %arg4[%c5_58, %c1_59] : memref<9x16xf32, #tpu.memory_space<smem>>
      %140 = vector.broadcast %139 : f32 to vector<16x256xf32>
      %141 = arith.mulf %56, %140 : vector<16x256xf32>
      %142 = arith.addf %138, %141 : vector<16x256xf32>
      %c6_60 = arith.constant 6 : index
      %c1_61 = arith.constant 1 : index
      %143 = memref.load %arg4[%c6_60, %c1_61] : memref<9x16xf32, #tpu.memory_space<smem>>
      %144 = vector.broadcast %143 : f32 to vector<16x256xf32>
      %145 = arith.mulf %59, %144 : vector<16x256xf32>
      %146 = arith.addf %142, %145 : vector<16x256xf32>
      %c7_62 = arith.constant 7 : index
      %c1_63 = arith.constant 1 : index
      %147 = memref.load %arg4[%c7_62, %c1_63] : memref<9x16xf32, #tpu.memory_space<smem>>
      %148 = vector.broadcast %147 : f32 to vector<16x256xf32>
      %149 = arith.mulf %60, %148 : vector<16x256xf32>
      %150 = arith.addf %146, %149 : vector<16x256xf32>
      %c8_64 = arith.constant 8 : index
      %c1_65 = arith.constant 1 : index
      %151 = memref.load %arg4[%c8_64, %c1_65] : memref<9x16xf32, #tpu.memory_space<smem>>
      %152 = vector.broadcast %151 : f32 to vector<16x256xf32>
      %153 = arith.mulf %63, %152 : vector<16x256xf32>
      %154 = arith.addf %150, %153 : vector<16x256xf32>
      %155 = vector.extract_strided_slice %21 {offsets = [0, 1], sizes = [16, 1], strides = [1, 1]} : vector<16x16xf32> to vector<16x1xf32>
      %156 = vector.broadcast %155 : vector<16x1xf32> to vector<16x256xf32>
      %157 = arith.addf %154, %156 : vector<16x256xf32>
      %158 = arith.mulf %157, %157 : vector<16x256xf32>
      %159 = arith.mulf %157, %158 : vector<16x256xf32>
      %cst_66 = arith.constant 4.471500e-02 : f32
      %160 = vector.broadcast %cst_66 : f32 to vector<16x256xf32>
      %161 = arith.mulf %160, %159 : vector<16x256xf32>
      %162 = arith.addf %157, %161 : vector<16x256xf32>
      %cst_67 = arith.constant 0.797884583 : f32
      %163 = vector.broadcast %cst_67 : f32 to vector<16x256xf32>
      %164 = arith.mulf %163, %162 : vector<16x256xf32>
      %165 = math.tanh %164 : vector<16x256xf32>
      %cst_68 = arith.constant 1.000000e+00 : f32
      %166 = vector.broadcast %cst_68 : f32 to vector<16x256xf32>
      %167 = arith.addf %166, %165 : vector<16x256xf32>
      %cst_69 = arith.constant 5.000000e-01 : f32
      %168 = vector.broadcast %cst_69 : f32 to vector<16x256xf32>
      %169 = arith.mulf %168, %167 : vector<16x256xf32>
      %170 = arith.mulf %157, %169 : vector<16x256xf32>
      %c0_70 = arith.constant 0 : index
      %c1_71 = arith.constant 1 : index
      %c0_72 = arith.constant 0 : index
      %c0_73 = arith.constant 0 : index
      %171 = vector.load %arg8[%c0_70, %c1_71, %c0_72, %c0_73] : memref<1x16x16x256xf32, #tpu.memory_space<vmem>>, vector<1x1x16x256xf32>
      %172 = vector.shape_cast %171 : vector<1x1x16x256xf32> to vector<16x256xf32>
      %173 = vector.shape_cast %170 : vector<16x256xf32> to vector<1x1x16x256xf32>
      tpu.vector_store %arg8[%c0_70, %c1_71, %c0_72, %c0_73], %173 {strides = array<i32>} : memref<1x16x16x256xf32, #tpu.memory_space<vmem>>, vector<1x1x16x256xf32>,
      %174 = arith.truncf %170 : vector<16x256xf32> to vector<16x256xbf16>
      %c0_74 = arith.constant 0 : index
      %c256 = arith.constant 256 : index
      %175 = vector.load %arg10[%c0_74, %c256] : memref<16x4096xbf16, #tpu.memory_space<vmem>>, vector<16x256xbf16>
      tpu.vector_store %arg10[%c0_74, %c256], %174 {strides = array<i32>} : memref<16x4096xbf16, #tpu.memory_space<vmem>>, vector<16x256xbf16>,
      %c0_75 = arith.constant 0 : index
      %c2_76 = arith.constant 2 : index
      %176 = memref.load %arg4[%c0_75, %c2_76] : memref<9x16xf32, #tpu.memory_space<smem>>
      %177 = vector.broadcast %176 : f32 to vector<16x256xf32>
      %178 = arith.mulf %45, %177 : vector<16x256xf32>
      %c1_77 = arith.constant 1 : index
      %c2_78 = arith.constant 2 : index
      %179 = memref.load %arg4[%c1_77, %c2_78] : memref<9x16xf32, #tpu.memory_space<smem>>
      %180 = vector.broadcast %179 : f32 to vector<16x256xf32>
      %181 = arith.mulf %46, %180 : vector<16x256xf32>
      %182 = arith.addf %178, %181 : vector<16x256xf32>
      %c2_79 = arith.constant 2 : index
      %c2_80 = arith.constant 2 : index
      %183 = memref.load %arg4[%c2_79, %c2_80] : memref<9x16xf32, #tpu.memory_space<smem>>
      %184 = vector.broadcast %183 : f32 to vector<16x256xf32>
      %185 = arith.mulf %49, %184 : vector<16x256xf32>
      %186 = arith.addf %182, %185 : vector<16x256xf32>
      %c3_81 = arith.constant 3 : index
      %c2_82 = arith.constant 2 : index
      %187 = memref.load %arg4[%c3_81, %c2_82] : memref<9x16xf32, #tpu.memory_space<smem>>
      %188 = vector.broadcast %187 : f32 to vector<16x256xf32>
      %189 = arith.mulf %52, %188 : vector<16x256xf32>
      %190 = arith.addf %186, %189 : vector<16x256xf32>
      %c4_83 = arith.constant 4 : index
      %c2_84 = arith.constant 2 : index
      %191 = memref.load %arg4[%c4_83, %c2_84] : memref<9x16xf32, #tpu.memory_space<smem>>
      %192 = vector.broadcast %191 : f32 to vector<16x256xf32>
      %193 = arith.mulf %53, %192 : vector<16x256xf32>
      %194 = arith.addf %190, %193 : vector<16x256xf32>
      %c5_85 = arith.constant 5 : index
      %c2_86 = arith.constant 2 : index
      %195 = memref.load %arg4[%c5_85, %c2_86] : memref<9x16xf32, #tpu.memory_space<smem>>
      %196 = vector.broadcast %195 : f32 to vector<16x256xf32>
      %197 = arith.mulf %56, %196 : vector<16x256xf32>
      %198 = arith.addf %194, %197 : vector<16x256xf32>
      %c6_87 = arith.constant 6 : index
      %c2_88 = arith.constant 2 : index
      %199 = memref.load %arg4[%c6_87, %c2_88] : memref<9x16xf32, #tpu.memory_space<smem>>
      %200 = vector.broadcast %199 : f32 to vector<16x256xf32>
      %201 = arith.mulf %59, %200 : vector<16x256xf32>
      %202 = arith.addf %198, %201 : vector<16x256xf32>
      %c7_89 = arith.constant 7 : index
      %c2_90 = arith.constant 2 : index
      %203 = memref.load %arg4[%c7_89, %c2_90] : memref<9x16xf32, #tpu.memory_space<smem>>
      %204 = vector.broadcast %203 : f32 to vector<16x256xf32>
      %205 = arith.mulf %60, %204 : vector<16x256xf32>
      %206 = arith.addf %202, %205 : vector<16x256xf32>
      %c8_91 = arith.constant 8 : index
      %c2_92 = arith.constant 2 : index
      %207 = memref.load %arg4[%c8_91, %c2_92] : memref<9x16xf32, #tpu.memory_space<smem>>
      %208 = vector.broadcast %207 : f32 to vector<16x256xf32>
      %209 = arith.mulf %63, %208 : vector<16x256xf32>
      %210 = arith.addf %206, %209 : vector<16x256xf32>
      %211 = vector.extract_strided_slice %21 {offsets = [0, 2], sizes = [16, 1], strides = [1, 1]} : vector<16x16xf32> to vector<16x1xf32>
      %212 = vector.broadcast %211 : vector<16x1xf32> to vector<16x256xf32>
      %213 = arith.addf %210, %212 : vector<16x256xf32>
      %214 = arith.mulf %213, %213 : vector<16x256xf32>
      %215 = arith.mulf %213, %214 : vector<16x256xf32>
      %cst_93 = arith.constant 4.471500e-02 : f32
      %216 = vector.broadcast %cst_93 : f32 to vector<16x256xf32>
      %217 = arith.mulf %216, %215 : vector<16x256xf32>
      %218 = arith.addf %213, %217 : vector<16x256xf32>
      %cst_94 = arith.constant 0.797884583 : f32
      %219 = vector.broadcast %cst_94 : f32 to vector<16x256xf32>
      %220 = arith.mulf %219, %218 : vector<16x256xf32>
      %221 = math.tanh %220 : vector<16x256xf32>
      %cst_95 = arith.constant 1.000000e+00 : f32
      %222 = vector.broadcast %cst_95 : f32 to vector<16x256xf32>
      %223 = arith.addf %222, %221 : vector<16x256xf32>
      %cst_96 = arith.constant 5.000000e-01 : f32
      %224 = vector.broadcast %cst_96 : f32 to vector<16x256xf32>
      %225 = arith.mulf %224, %223 : vector<16x256xf32>
      %226 = arith.mulf %213, %225 : vector<16x256xf32>
      %c0_97 = arith.constant 0 : index
      %c2_98 = arith.constant 2 : index
      %c0_99 = arith.constant 0 : index
      %c0_100 = arith.constant 0 : index
      %227 = vector.load %arg8[%c0_97, %c2_98, %c0_99, %c0_100] : memref<1x16x16x256xf32, #tpu.memory_space<vmem>>, vector<1x1x16x256xf32>
      %228 = vector.shape_cast %227 : vector<1x1x16x256xf32> to vector<16x256xf32>
      %229 = vector.shape_cast %226 : vector<16x256xf32> to vector<1x1x16x256xf32>
      tpu.vector_store %arg8[%c0_97, %c2_98, %c0_99, %c0_100], %229 {strides = array<i32>} : memref<1x16x16x256xf32, #tpu.memory_space<vmem>>, vector<1x1x16x256xf32>,
      %230 = arith.truncf %226 : vector<16x256xf32> to vector<16x256xbf16>
      %c0_101 = arith.constant 0 : index
      %c512 = arith.constant 512 : index
      %231 = vector.load %arg10[%c0_101, %c512] : memref<16x4096xbf16, #tpu.memory_space<vmem>>, vector<16x256xbf16>
      tpu.vector_store %arg10[%c0_101, %c512], %230 {strides = array<i32>} : memref<16x4096xbf16, #tpu.memory_space<vmem>>, vector<16x256xbf16>,
      %c0_102 = arith.constant 0 : index
      %c3_103 = arith.constant 3 : index
      %232 = memref.load %arg4[%c0_102, %c3_103] : memref<9x16xf32, #tpu.memory_space<smem>>
      %233 = vector.broadcast %232 : f32 to vector<16x256xf32>
      %234 = arith.mulf %45, %233 : vector<16x256xf32>
      %c1_104 = arith.constant 1 : index
      %c3_105 = arith.constant 3 : index
      %235 = memref.load %arg4[%c1_104, %c3_105] : memref<9x16xf32, #tpu.memory_space<smem>>
      %236 = vector.broadcast %235 : f32 to vector<16x256xf32>
      %237 = arith.mulf %46, %236 : vector<16x256xf32>
      %238 = arith.addf %234, %237 : vector<16x256xf32>
      %c2_106 = arith.constant 2 : index
      %c3_107 = arith.constant 3 : index
      %239 = memref.load %arg4[%c2_106, %c3_107] : memref<9x16xf32, #tpu.memory_space<smem>>
      %240 = vector.broadcast %239 : f32 to vector<16x256xf32>
      %241 = arith.mulf %49, %240 : vector<16x256xf32>
      %242 = arith.addf %238, %241 : vector<16x256xf32>
      %c3_108 = arith.constant 3 : index
      %c3_109 = arith.constant 3 : index
      %243 = memref.load %arg4[%c3_108, %c3_109] : memref<9x16xf32, #tpu.memory_space<smem>>
      %244 = vector.broadcast %243 : f32 to vector<16x256xf32>
      %245 = arith.mulf %52, %244 : vector<16x256xf32>
      %246 = arith.addf %242, %245 : vector<16x256xf32>
      %c4_110 = arith.constant 4 : index
      %c3_111 = arith.constant 3 : index
      %247 = memref.load %arg4[%c4_110, %c3_111] : memref<9x16xf32, #tpu.memory_space<smem>>
      %248 = vector.broadcast %247 : f32 to vector<16x256xf32>
      %249 = arith.mulf %53, %248 : vector<16x256xf32>
      %250 = arith.addf %246, %249 : vector<16x256xf32>
      %c5_112 = arith.constant 5 : index
      %c3_113 = arith.constant 3 : index
      %251 = memref.load %arg4[%c5_112, %c3_113] : memref<9x16xf32, #tpu.memory_space<smem>>
      %252 = vector.broadcast %251 : f32 to vector<16x256xf32>
      %253 = arith.mulf %56, %252 : vector<16x256xf32>
      %254 = arith.addf %250, %253 : vector<16x256xf32>
      %c6_114 = arith.constant 6 : index
      %c3_115 = arith.constant 3 : index
      %255 = memref.load %arg4[%c6_114, %c3_115] : memref<9x16xf32, #tpu.memory_space<smem>>
      %256 = vector.broadcast %255 : f32 to vector<16x256xf32>
      %257 = arith.mulf %59, %256 : vector<16x256xf32>
      %258 = arith.addf %254, %257 : vector<16x256xf32>
      %c7_116 = arith.constant 7 : index
      %c3_117 = arith.constant 3 : index
      %259 = memref.load %arg4[%c7_116, %c3_117] : memref<9x16xf32, #tpu.memory_space<smem>>
      %260 = vector.broadcast %259 : f32 to vector<16x256xf32>
      %261 = arith.mulf %60, %260 : vector<16x256xf32>
      %262 = arith.addf %258, %261 : vector<16x256xf32>
      %c8_118 = arith.constant 8 : index
      %c3_119 = arith.constant 3 : index
      %263 = memref.load %arg4[%c8_118, %c3_119] : memref<9x16xf32, #tpu.memory_space<smem>>
      %264 = vector.broadcast %263 : f32 to vector<16x256xf32>
      %265 = arith.mulf %63, %264 : vector<16x256xf32>
      %266 = arith.addf %262, %265 : vector<16x256xf32>
      %267 = vector.extract_strided_slice %21 {offsets = [0, 3], sizes = [16, 1], strides = [1, 1]} : vector<16x16xf32> to vector<16x1xf32>
      %268 = vector.broadcast %267 : vector<16x1xf32> to vector<16x256xf32>
      %269 = arith.addf %266, %268 : vector<16x256xf32>
      %270 = arith.mulf %269, %269 : vector<16x256xf32>
      %271 = arith.mulf %269, %270 : vector<16x256xf32>
      %cst_120 = arith.constant 4.471500e-02 : f32
      %272 = vector.broadcast %cst_120 : f32 to vector<16x256xf32>
      %273 = arith.mulf %272, %271 : vector<16x256xf32>
      %274 = arith.addf %269, %273 : vector<16x256xf32>
      %cst_121 = arith.constant 0.797884583 : f32
      %275 = vector.broadcast %cst_121 : f32 to vector<16x256xf32>
      %276 = arith.mulf %275, %274 : vector<16x256xf32>
      %277 = math.tanh %276 : vector<16x256xf32>
      %cst_122 = arith.constant 1.000000e+00 : f32
      %278 = vector.broadcast %cst_122 : f32 to vector<16x256xf32>
      %279 = arith.addf %278, %277 : vector<16x256xf32>
      %cst_123 = arith.constant 5.000000e-01 : f32
      %280 = vector.broadcast %cst_123 : f32 to vector<16x256xf32>
      %281 = arith.mulf %280, %279 : vector<16x256xf32>
      %282 = arith.mulf %269, %281 : vector<16x256xf32>
      %c0_124 = arith.constant 0 : index
      %c3_125 = arith.constant 3 : index
      %c0_126 = arith.constant 0 : index
      %c0_127 = arith.constant 0 : index
      %283 = vector.load %arg8[%c0_124, %c3_125, %c0_126, %c0_127] : memref<1x16x16x256xf32, #tpu.memory_space<vmem>>, vector<1x1x16x256xf32>
      %284 = vector.shape_cast %283 : vector<1x1x16x256xf32> to vector<16x256xf32>
      %285 = vector.shape_cast %282 : vector<16x256xf32> to vector<1x1x16x256xf32>
      tpu.vector_store %arg8[%c0_124, %c3_125, %c0_126, %c0_127], %285 {strides = array<i32>} : memref<1x16x16x256xf32, #tpu.memory_space<vmem>>, vector<1x1x16x256xf32>,
      %286 = arith.truncf %282 : vector<16x256xf32> to vector<16x256xbf16>
      %c0_128 = arith.constant 0 : index
      %c768 = arith.constant 768 : index
      %287 = vector.load %arg10[%c0_128, %c768] : memref<16x4096xbf16, #tpu.memory_space<vmem>>, vector<16x256xbf16>
      tpu.vector_store %arg10[%c0_128, %c768], %286 {strides = array<i32>} : memref<16x4096xbf16, #tpu.memory_space<vmem>>, vector<16x256xbf16>,
      %c0_129 = arith.constant 0 : index
      %c4_130 = arith.constant 4 : index
      %288 = memref.load %arg4[%c0_129, %c4_130] : memref<9x16xf32, #tpu.memory_space<smem>>
      %289 = vector.broadcast %288 : f32 to vector<16x256xf32>
      %290 = arith.mulf %45, %289 : vector<16x256xf32>
      %c1_131 = arith.constant 1 : index
      %c4_132 = arith.constant 4 : index
      %291 = memref.load %arg4[%c1_131, %c4_132] : memref<9x16xf32, #tpu.memory_space<smem>>
      %292 = vector.broadcast %291 : f32 to vector<16x256xf32>
      %293 = arith.mulf %46, %292 : vector<16x256xf32>
      %294 = arith.addf %290, %293 : vector<16x256xf32>
      %c2_133 = arith.constant 2 : index
      %c4_134 = arith.constant 4 : index
      %295 = memref.load %arg4[%c2_133, %c4_134] : memref<9x16xf32, #tpu.memory_space<smem>>
      %296 = vector.broadcast %295 : f32 to vector<16x256xf32>
      %297 = arith.mulf %49, %296 : vector<16x256xf32>
      %298 = arith.addf %294, %297 : vector<16x256xf32>
      %c3_135 = arith.constant 3 : index
      %c4_136 = arith.constant 4 : index
      %299 = memref.load %arg4[%c3_135, %c4_136] : memref<9x16xf32, #tpu.memory_space<smem>>
      %300 = vector.broadcast %299 : f32 to vector<16x256xf32>
      %301 = arith.mulf %52, %300 : vector<16x256xf32>
      %302 = arith.addf %298, %301 : vector<16x256xf32>
      %c4_137 = arith.constant 4 : index
      %c4_138 = arith.constant 4 : index
      %303 = memref.load %arg4[%c4_137, %c4_138] : memref<9x16xf32, #tpu.memory_space<smem>>
      %304 = vector.broadcast %303 : f32 to vector<16x256xf32>
      %305 = arith.mulf %53, %304 : vector<16x256xf32>
      %306 = arith.addf %302, %305 : vector<16x256xf32>
      %c5_139 = arith.constant 5 : index
      %c4_140 = arith.constant 4 : index
      %307 = memref.load %arg4[%c5_139, %c4_140] : memref<9x16xf32, #tpu.memory_space<smem>>
      %308 = vector.broadcast %307 : f32 to vector<16x256xf32>
      %309 = arith.mulf %56, %308 : vector<16x256xf32>
      %310 = arith.addf %306, %309 : vector<16x256xf32>
      %c6_141 = arith.constant 6 : index
      %c4_142 = arith.constant 4 : index
      %311 = memref.load %arg4[%c6_141, %c4_142] : memref<9x16xf32, #tpu.memory_space<smem>>
      %312 = vector.broadcast %311 : f32 to vector<16x256xf32>
      %313 = arith.mulf %59, %312 : vector<16x256xf32>
      %314 = arith.addf %310, %313 : vector<16x256xf32>
      %c7_143 = arith.constant 7 : index
      %c4_144 = arith.constant 4 : index
      %315 = memref.load %arg4[%c7_143, %c4_144] : memref<9x16xf32, #tpu.memory_space<smem>>
      %316 = vector.broadcast %315 : f32 to vector<16x256xf32>
      %317 = arith.mulf %60, %316 : vector<16x256xf32>
      %318 = arith.addf %314, %317 : vector<16x256xf32>
      %c8_145 = arith.constant 8 : index
      %c4_146 = arith.constant 4 : index
      %319 = memref.load %arg4[%c8_145, %c4_146] : memref<9x16xf32, #tpu.memory_space<smem>>
      %320 = vector.broadcast %319 : f32 to vector<16x256xf32>
      %321 = arith.mulf %63, %320 : vector<16x256xf32>
      %322 = arith.addf %318, %321 : vector<16x256xf32>
      %323 = vector.extract_strided_slice %21 {offsets = [0, 4], sizes = [16, 1], strides = [1, 1]} : vector<16x16xf32> to vector<16x1xf32>
      %324 = vector.broadcast %323 : vector<16x1xf32> to vector<16x256xf32>
      %325 = arith.addf %322, %324 : vector<16x256xf32>
      %326 = arith.mulf %325, %325 : vector<16x256xf32>
      %327 = arith.mulf %325, %326 : vector<16x256xf32>
      %cst_147 = arith.constant 4.471500e-02 : f32
      %328 = vector.broadcast %cst_147 : f32 to vector<16x256xf32>
      %329 = arith.mulf %328, %327 : vector<16x256xf32>
      %330 = arith.addf %325, %329 : vector<16x256xf32>
      %cst_148 = arith.constant 0.797884583 : f32
      %331 = vector.broadcast %cst_148 : f32 to vector<16x256xf32>
      %332 = arith.mulf %331, %330 : vector<16x256xf32>
      %333 = math.tanh %332 : vector<16x256xf32>
      %cst_149 = arith.constant 1.000000e+00 : f32
      %334 = vector.broadcast %cst_149 : f32 to vector<16x256xf32>
      %335 = arith.addf %334, %333 : vector<16x256xf32>
      %cst_150 = arith.constant 5.000000e-01 : f32
      %336 = vector.broadcast %cst_150 : f32 to vector<16x256xf32>
      %337 = arith.mulf %336, %335 : vector<16x256xf32>
      %338 = arith.mulf %325, %337 : vector<16x256xf32>
      %c0_151 = arith.constant 0 : index
      %c4_152 = arith.constant 4 : index
      %c0_153 = arith.constant 0 : index
      %c0_154 = arith.constant 0 : index
      %339 = vector.load %arg8[%c0_151, %c4_152, %c0_153, %c0_154] : memref<1x16x16x256xf32, #tpu.memory_space<vmem>>, vector<1x1x16x256xf32>
      %340 = vector.shape_cast %339 : vector<1x1x16x256xf32> to vector<16x256xf32>
      %341 = vector.shape_cast %338 : vector<16x256xf32> to vector<1x1x16x256xf32>
      tpu.vector_store %arg8[%c0_151, %c4_152, %c0_153, %c0_154], %341 {strides = array<i32>} : memref<1x16x16x256xf32, #tpu.memory_space<vmem>>, vector<1x1x16x256xf32>,
      %342 = arith.truncf %338 : vector<16x256xf32> to vector<16x256xbf16>
      %c0_155 = arith.constant 0 : index
      %c1024 = arith.constant 1024 : index
      %343 = vector.load %arg10[%c0_155, %c1024] : memref<16x4096xbf16, #tpu.memory_space<vmem>>, vector<16x256xbf16>
      tpu.vector_store %arg10[%c0_155, %c1024], %342 {strides = array<i32>} : memref<16x4096xbf16, #tpu.memory_space<vmem>>, vector<16x256xbf16>,
      %c0_156 = arith.constant 0 : index
      %c5_157 = arith.constant 5 : index
      %344 = memref.load %arg4[%c0_156, %c5_157] : memref<9x16xf32, #tpu.memory_space<smem>>
      %345 = vector.broadcast %344 : f32 to vector<16x256xf32>
      %346 = arith.mulf %45, %345 : vector<16x256xf32>
      %c1_158 = arith.constant 1 : index
      %c5_159 = arith.constant 5 : index
      %347 = memref.load %arg4[%c1_158, %c5_159] : memref<9x16xf32, #tpu.memory_space<smem>>
      %348 = vector.broadcast %347 : f32 to vector<16x256xf32>
      %349 = arith.mulf %46, %348 : vector<16x256xf32>
      %350 = arith.addf %346, %349 : vector<16x256xf32>
      %c2_160 = arith.constant 2 : index
      %c5_161 = arith.constant 5 : index
      %351 = memref.load %arg4[%c2_160, %c5_161] : memref<9x16xf32, #tpu.memory_space<smem>>
      %352 = vector.broadcast %351 : f32 to vector<16x256xf32>
      %353 = arith.mulf %49, %352 : vector<16x256xf32>
      %354 = arith.addf %350, %353 : vector<16x256xf32>
      %c3_162 = arith.constant 3 : index
      %c5_163 = arith.constant 5 : index
      %355 = memref.load %arg4[%c3_162, %c5_163] : memref<9x16xf32, #tpu.memory_space<smem>>
      %356 = vector.broadcast %355 : f32 to vector<16x256xf32>
      %357 = arith.mulf %52, %356 : vector<16x256xf32>
      %358 = arith.addf %354, %357 : vector<16x256xf32>
      %c4_164 = arith.constant 4 : index
      %c5_165 = arith.constant 5 : index
      %359 = memref.load %arg4[%c4_164, %c5_165] : memref<9x16xf32, #tpu.memory_space<smem>>
      %360 = vector.broadcast %359 : f32 to vector<16x256xf32>
      %361 = arith.mulf %53, %360 : vector<16x256xf32>
      %362 = arith.addf %358, %361 : vector<16x256xf32>
      %c5_166 = arith.constant 5 : index
      %c5_167 = arith.constant 5 : index
      %363 = memref.load %arg4[%c5_166, %c5_167] : memref<9x16xf32, #tpu.memory_space<smem>>
      %364 = vector.broadcast %363 : f32 to vector<16x256xf32>
      %365 = arith.mulf %56, %364 : vector<16x256xf32>
      %366 = arith.addf %362, %365 : vector<16x256xf32>
      %c6_168 = arith.constant 6 : index
      %c5_169 = arith.constant 5 : index
      %367 = memref.load %arg4[%c6_168, %c5_169] : memref<9x16xf32, #tpu.memory_space<smem>>
      %368 = vector.broadcast %367 : f32 to vector<16x256xf32>
      %369 = arith.mulf %59, %368 : vector<16x256xf32>
      %370 = arith.addf %366, %369 : vector<16x256xf32>
      %c7_170 = arith.constant 7 : index
      %c5_171 = arith.constant 5 : index
      %371 = memref.load %arg4[%c7_170, %c5_171] : memref<9x16xf32, #tpu.memory_space<smem>>
      %372 = vector.broadcast %371 : f32 to vector<16x256xf32>
      %373 = arith.mulf %60, %372 : vector<16x256xf32>
      %374 = arith.addf %370, %373 : vector<16x256xf32>
      %c8_172 = arith.constant 8 : index
      %c5_173 = arith.constant 5 : index
      %375 = memref.load %arg4[%c8_172, %c5_173] : memref<9x16xf32, #tpu.memory_space<smem>>
      %376 = vector.broadcast %375 : f32 to vector<16x256xf32>
      %377 = arith.mulf %63, %376 : vector<16x256xf32>
      %378 = arith.addf %374, %377 : vector<16x256xf32>
      %379 = vector.extract_strided_slice %21 {offsets = [0, 5], sizes = [16, 1], strides = [1, 1]} : vector<16x16xf32> to vector<16x1xf32>
      %380 = vector.broadcast %379 : vector<16x1xf32> to vector<16x256xf32>
      %381 = arith.addf %378, %380 : vector<16x256xf32>
      %382 = arith.mulf %381, %381 : vector<16x256xf32>
      %383 = arith.mulf %381, %382 : vector<16x256xf32>
      %cst_174 = arith.constant 4.471500e-02 : f32
      %384 = vector.broadcast %cst_174 : f32 to vector<16x256xf32>
      %385 = arith.mulf %384, %383 : vector<16x256xf32>
      %386 = arith.addf %381, %385 : vector<16x256xf32>
      %cst_175 = arith.constant 0.797884583 : f32
      %387 = vector.broadcast %cst_175 : f32 to vector<16x256xf32>
      %388 = arith.mulf %387, %386 : vector<16x256xf32>
      %389 = math.tanh %388 : vector<16x256xf32>
      %cst_176 = arith.constant 1.000000e+00 : f32
      %390 = vector.broadcast %cst_176 : f32 to vector<16x256xf32>
      %391 = arith.addf %390, %389 : vector<16x256xf32>
      %cst_177 = arith.constant 5.000000e-01 : f32
      %392 = vector.broadcast %cst_177 : f32 to vector<16x256xf32>
      %393 = arith.mulf %392, %391 : vector<16x256xf32>
      %394 = arith.mulf %381, %393 : vector<16x256xf32>
      %c0_178 = arith.constant 0 : index
      %c5_179 = arith.constant 5 : index
      %c0_180 = arith.constant 0 : index
      %c0_181 = arith.constant 0 : index
      %395 = vector.load %arg8[%c0_178, %c5_179, %c0_180, %c0_181] : memref<1x16x16x256xf32, #tpu.memory_space<vmem>>, vector<1x1x16x256xf32>
      %396 = vector.shape_cast %395 : vector<1x1x16x256xf32> to vector<16x256xf32>
      %397 = vector.shape_cast %394 : vector<16x256xf32> to vector<1x1x16x256xf32>
      tpu.vector_store %arg8[%c0_178, %c5_179, %c0_180, %c0_181], %397 {strides = array<i32>} : memref<1x16x16x256xf32, #tpu.memory_space<vmem>>, vector<1x1x16x256xf32>,
      %398 = arith.truncf %394 : vector<16x256xf32> to vector<16x256xbf16>
      %c0_182 = arith.constant 0 : index
      %c1280 = arith.constant 1280 : index
      %399 = vector.load %arg10[%c0_182, %c1280] : memref<16x4096xbf16, #tpu.memory_space<vmem>>, vector<16x256xbf16>
      tpu.vector_store %arg10[%c0_182, %c1280], %398 {strides = array<i32>} : memref<16x4096xbf16, #tpu.memory_space<vmem>>, vector<16x256xbf16>,
      %c0_183 = arith.constant 0 : index
      %c6_184 = arith.constant 6 : index
      %400 = memref.load %arg4[%c0_183, %c6_184] : memref<9x16xf32, #tpu.memory_space<smem>>
      %401 = vector.broadcast %400 : f32 to vector<16x256xf32>
      %402 = arith.mulf %45, %401 : vector<16x256xf32>
      %c1_185 = arith.constant 1 : index
      %c6_186 = arith.constant 6 : index
      %403 = memref.load %arg4[%c1_185, %c6_186] : memref<9x16xf32, #tpu.memory_space<smem>>
      %404 = vector.broadcast %403 : f32 to vector<16x256xf32>
      %405 = arith.mulf %46, %404 : vector<16x256xf32>
      %406 = arith.addf %402, %405 : vector<16x256xf32>
      %c2_187 = arith.constant 2 : index
      %c6_188 = arith.constant 6 : index
      %407 = memref.load %arg4[%c2_187, %c6_188] : memref<9x16xf32, #tpu.memory_space<smem>>
      %408 = vector.broadcast %407 : f32 to vector<16x256xf32>
      %409 = arith.mulf %49, %408 : vector<16x256xf32>
      %410 = arith.addf %406, %409 : vector<16x256xf32>
      %c3_189 = arith.constant 3 : index
      %c6_190 = arith.constant 6 : index
      %411 = memref.load %arg4[%c3_189, %c6_190] : memref<9x16xf32, #tpu.memory_space<smem>>
      %412 = vector.broadcast %411 : f32 to vector<16x256xf32>
      %413 = arith.mulf %52, %412 : vector<16x256xf32>
      %414 = arith.addf %410, %413 : vector<16x256xf32>
      %c4_191 = arith.constant 4 : index
      %c6_192 = arith.constant 6 : index
      %415 = memref.load %arg4[%c4_191, %c6_192] : memref<9x16xf32, #tpu.memory_space<smem>>
      %416 = vector.broadcast %415 : f32 to vector<16x256xf32>
      %417 = arith.mulf %53, %416 : vector<16x256xf32>
      %418 = arith.addf %414, %417 : vector<16x256xf32>
      %c5_193 = arith.constant 5 : index
      %c6_194 = arith.constant 6 : index
      %419 = memref.load %arg4[%c5_193, %c6_194] : memref<9x16xf32, #tpu.memory_space<smem>>
      %420 = vector.broadcast %419 : f32 to vector<16x256xf32>
      %421 = arith.mulf %56, %420 : vector<16x256xf32>
      %422 = arith.addf %418, %421 : vector<16x256xf32>
      %c6_195 = arith.constant 6 : index
      %c6_196 = arith.constant 6 : index
      %423 = memref.load %arg4[%c6_195, %c6_196] : memref<9x16xf32, #tpu.memory_space<smem>>
      %424 = vector.broadcast %423 : f32 to vector<16x256xf32>
      %425 = arith.mulf %59, %424 : vector<16x256xf32>
      %426 = arith.addf %422, %425 : vector<16x256xf32>
      %c7_197 = arith.constant 7 : index
      %c6_198 = arith.constant 6 : index
      %427 = memref.load %arg4[%c7_197, %c6_198] : memref<9x16xf32, #tpu.memory_space<smem>>
      %428 = vector.broadcast %427 : f32 to vector<16x256xf32>
      %429 = arith.mulf %60, %428 : vector<16x256xf32>
      %430 = arith.addf %426, %429 : vector<16x256xf32>
      %c8_199 = arith.constant 8 : index
      %c6_200 = arith.constant 6 : index
      %431 = memref.load %arg4[%c8_199, %c6_200] : memref<9x16xf32, #tpu.memory_space<smem>>
      %432 = vector.broadcast %431 : f32 to vector<16x256xf32>
      %433 = arith.mulf %63, %432 : vector<16x256xf32>
      %434 = arith.addf %430, %433 : vector<16x256xf32>
      %435 = vector.extract_strided_slice %21 {offsets = [0, 6], sizes = [16, 1], strides = [1, 1]} : vector<16x16xf32> to vector<16x1xf32>
      %436 = vector.broadcast %435 : vector<16x1xf32> to vector<16x256xf32>
      %437 = arith.addf %434, %436 : vector<16x256xf32>
      %438 = arith.mulf %437, %437 : vector<16x256xf32>
      %439 = arith.mulf %437, %438 : vector<16x256xf32>
      %cst_201 = arith.constant 4.471500e-02 : f32
      %440 = vector.broadcast %cst_201 : f32 to vector<16x256xf32>
      %441 = arith.mulf %440, %439 : vector<16x256xf32>
      %442 = arith.addf %437, %441 : vector<16x256xf32>
      %cst_202 = arith.constant 0.797884583 : f32
      %443 = vector.broadcast %cst_202 : f32 to vector<16x256xf32>
      %444 = arith.mulf %443, %442 : vector<16x256xf32>
      %445 = math.tanh %444 : vector<16x256xf32>
      %cst_203 = arith.constant 1.000000e+00 : f32
      %446 = vector.broadcast %cst_203 : f32 to vector<16x256xf32>
      %447 = arith.addf %446, %445 : vector<16x256xf32>
      %cst_204 = arith.constant 5.000000e-01 : f32
      %448 = vector.broadcast %cst_204 : f32 to vector<16x256xf32>
      %449 = arith.mulf %448, %447 : vector<16x256xf32>
      %450 = arith.mulf %437, %449 : vector<16x256xf32>
      %c0_205 = arith.constant 0 : index
      %c6_206 = arith.constant 6 : index
      %c0_207 = arith.constant 0 : index
      %c0_208 = arith.constant 0 : index
      %451 = vector.load %arg8[%c0_205, %c6_206, %c0_207, %c0_208] : memref<1x16x16x256xf32, #tpu.memory_space<vmem>>, vector<1x1x16x256xf32>
      %452 = vector.shape_cast %451 : vector<1x1x16x256xf32> to vector<16x256xf32>
      %453 = vector.shape_cast %450 : vector<16x256xf32> to vector<1x1x16x256xf32>
      tpu.vector_store %arg8[%c0_205, %c6_206, %c0_207, %c0_208], %453 {strides = array<i32>} : memref<1x16x16x256xf32, #tpu.memory_space<vmem>>, vector<1x1x16x256xf32>,
      %454 = arith.truncf %450 : vector<16x256xf32> to vector<16x256xbf16>
      %c0_209 = arith.constant 0 : index
      %c1536 = arith.constant 1536 : index
      %455 = vector.load %arg10[%c0_209, %c1536] : memref<16x4096xbf16, #tpu.memory_space<vmem>>, vector<16x256xbf16>
      tpu.vector_store %arg10[%c0_209, %c1536], %454 {strides = array<i32>} : memref<16x4096xbf16, #tpu.memory_space<vmem>>, vector<16x256xbf16>,
      %c0_210 = arith.constant 0 : index
      %c7_211 = arith.constant 7 : index
      %456 = memref.load %arg4[%c0_210, %c7_211] : memref<9x16xf32, #tpu.memory_space<smem>>
      %457 = vector.broadcast %456 : f32 to vector<16x256xf32>
      %458 = arith.mulf %45, %457 : vector<16x256xf32>
      %c1_212 = arith.constant 1 : index
      %c7_213 = arith.constant 7 : index
      %459 = memref.load %arg4[%c1_212, %c7_213] : memref<9x16xf32, #tpu.memory_space<smem>>
      %460 = vector.broadcast %459 : f32 to vector<16x256xf32>
      %461 = arith.mulf %46, %460 : vector<16x256xf32>
      %462 = arith.addf %458, %461 : vector<16x256xf32>
      %c2_214 = arith.constant 2 : index
      %c7_215 = arith.constant 7 : index
      %463 = memref.load %arg4[%c2_214, %c7_215] : memref<9x16xf32, #tpu.memory_space<smem>>
      %464 = vector.broadcast %463 : f32 to vector<16x256xf32>
      %465 = arith.mulf %49, %464 : vector<16x256xf32>
      %466 = arith.addf %462, %465 : vector<16x256xf32>
      %c3_216 = arith.constant 3 : index
      %c7_217 = arith.constant 7 : index
      %467 = memref.load %arg4[%c3_216, %c7_217] : memref<9x16xf32, #tpu.memory_space<smem>>
      %468 = vector.broadcast %467 : f32 to vector<16x256xf32>
      %469 = arith.mulf %52, %468 : vector<16x256xf32>
      %470 = arith.addf %466, %469 : vector<16x256xf32>
      %c4_218 = arith.constant 4 : index
      %c7_219 = arith.constant 7 : index
      %471 = memref.load %arg4[%c4_218, %c7_219] : memref<9x16xf32, #tpu.memory_space<smem>>
      %472 = vector.broadcast %471 : f32 to vector<16x256xf32>
      %473 = arith.mulf %53, %472 : vector<16x256xf32>
      %474 = arith.addf %470, %473 : vector<16x256xf32>
      %c5_220 = arith.constant 5 : index
      %c7_221 = arith.constant 7 : index
      %475 = memref.load %arg4[%c5_220, %c7_221] : memref<9x16xf32, #tpu.memory_space<smem>>
      %476 = vector.broadcast %475 : f32 to vector<16x256xf32>
      %477 = arith.mulf %56, %476 : vector<16x256xf32>
      %478 = arith.addf %474, %477 : vector<16x256xf32>
      %c6_222 = arith.constant 6 : index
      %c7_223 = arith.constant 7 : index
      %479 = memref.load %arg4[%c6_222, %c7_223] : memref<9x16xf32, #tpu.memory_space<smem>>
      %480 = vector.broadcast %479 : f32 to vector<16x256xf32>
      %481 = arith.mulf %59, %480 : vector<16x256xf32>
      %482 = arith.addf %478, %481 : vector<16x256xf32>
      %c7_224 = arith.constant 7 : index
      %c7_225 = arith.constant 7 : index
      %483 = memref.load %arg4[%c7_224, %c7_225] : memref<9x16xf32, #tpu.memory_space<smem>>
      %484 = vector.broadcast %483 : f32 to vector<16x256xf32>
      %485 = arith.mulf %60, %484 : vector<16x256xf32>
      %486 = arith.addf %482, %485 : vector<16x256xf32>
      %c8_226 = arith.constant 8 : index
      %c7_227 = arith.constant 7 : index
      %487 = memref.load %arg4[%c8_226, %c7_227] : memref<9x16xf32, #tpu.memory_space<smem>>
      %488 = vector.broadcast %487 : f32 to vector<16x256xf32>
      %489 = arith.mulf %63, %488 : vector<16x256xf32>
      %490 = arith.addf %486, %489 : vector<16x256xf32>
      %491 = vector.extract_strided_slice %21 {offsets = [0, 7], sizes = [16, 1], strides = [1, 1]} : vector<16x16xf32> to vector<16x1xf32>
      %492 = vector.broadcast %491 : vector<16x1xf32> to vector<16x256xf32>
      %493 = arith.addf %490, %492 : vector<16x256xf32>
      %494 = arith.mulf %493, %493 : vector<16x256xf32>
      %495 = arith.mulf %493, %494 : vector<16x256xf32>
      %cst_228 = arith.constant 4.471500e-02 : f32
      %496 = vector.broadcast %cst_228 : f32 to vector<16x256xf32>
      %497 = arith.mulf %496, %495 : vector<16x256xf32>
      %498 = arith.addf %493, %497 : vector<16x256xf32>
      %cst_229 = arith.constant 0.797884583 : f32
      %499 = vector.broadcast %cst_229 : f32 to vector<16x256xf32>
      %500 = arith.mulf %499, %498 : vector<16x256xf32>
      %501 = math.tanh %500 : vector<16x256xf32>
      %cst_230 = arith.constant 1.000000e+00 : f32
      %502 = vector.broadcast %cst_230 : f32 to vector<16x256xf32>
      %503 = arith.addf %502, %501 : vector<16x256xf32>
      %cst_231 = arith.constant 5.000000e-01 : f32
      %504 = vector.broadcast %cst_231 : f32 to vector<16x256xf32>
      %505 = arith.mulf %504, %503 : vector<16x256xf32>
      %506 = arith.mulf %493, %505 : vector<16x256xf32>
      %c0_232 = arith.constant 0 : index
      %c7_233 = arith.constant 7 : index
      %c0_234 = arith.constant 0 : index
      %c0_235 = arith.constant 0 : index
      %507 = vector.load %arg8[%c0_232, %c7_233, %c0_234, %c0_235] : memref<1x16x16x256xf32, #tpu.memory_space<vmem>>, vector<1x1x16x256xf32>
      %508 = vector.shape_cast %507 : vector<1x1x16x256xf32> to vector<16x256xf32>
      %509 = vector.shape_cast %506 : vector<16x256xf32> to vector<1x1x16x256xf32>
      tpu.vector_store %arg8[%c0_232, %c7_233, %c0_234, %c0_235], %509 {strides = array<i32>} : memref<1x16x16x256xf32, #tpu.memory_space<vmem>>, vector<1x1x16x256xf32>,
      %510 = arith.truncf %506 : vector<16x256xf32> to vector<16x256xbf16>
      %c0_236 = arith.constant 0 : index
      %c1792 = arith.constant 1792 : index
      %511 = vector.load %arg10[%c0_236, %c1792] : memref<16x4096xbf16, #tpu.memory_space<vmem>>, vector<16x256xbf16>
      tpu.vector_store %arg10[%c0_236, %c1792], %510 {strides = array<i32>} : memref<16x4096xbf16, #tpu.memory_space<vmem>>, vector<16x256xbf16>,
      %c0_237 = arith.constant 0 : index
      %c8_238 = arith.constant 8 : index
      %512 = memref.load %arg4[%c0_237, %c8_238] : memref<9x16xf32, #tpu.memory_space<smem>>
      %513 = vector.broadcast %512 : f32 to vector<16x256xf32>
      %514 = arith.mulf %45, %513 : vector<16x256xf32>
      %c1_239 = arith.constant 1 : index
      %c8_240 = arith.constant 8 : index
      %515 = memref.load %arg4[%c1_239, %c8_240] : memref<9x16xf32, #tpu.memory_space<smem>>
      %516 = vector.broadcast %515 : f32 to vector<16x256xf32>
      %517 = arith.mulf %46, %516 : vector<16x256xf32>
      %518 = arith.addf %514, %517 : vector<16x256xf32>
      %c2_241 = arith.constant 2 : index
      %c8_242 = arith.constant 8 : index
      %519 = memref.load %arg4[%c2_241, %c8_242] : memref<9x16xf32, #tpu.memory_space<smem>>
      %520 = vector.broadcast %519 : f32 to vector<16x256xf32>
      %521 = arith.mulf %49, %520 : vector<16x256xf32>
      %522 = arith.addf %518, %521 : vector<16x256xf32>
      %c3_243 = arith.constant 3 : index
      %c8_244 = arith.constant 8 : index
      %523 = memref.load %arg4[%c3_243, %c8_244] : memref<9x16xf32, #tpu.memory_space<smem>>
      %524 = vector.broadcast %523 : f32 to vector<16x256xf32>
      %525 = arith.mulf %52, %524 : vector<16x256xf32>
      %526 = arith.addf %522, %525 : vector<16x256xf32>
      %c4_245 = arith.constant 4 : index
      %c8_246 = arith.constant 8 : index
      %527 = memref.load %arg4[%c4_245, %c8_246] : memref<9x16xf32, #tpu.memory_space<smem>>
      %528 = vector.broadcast %527 : f32 to vector<16x256xf32>
      %529 = arith.mulf %53, %528 : vector<16x256xf32>
      %530 = arith.addf %526, %529 : vector<16x256xf32>
      %c5_247 = arith.constant 5 : index
      %c8_248 = arith.constant 8 : index
      %531 = memref.load %arg4[%c5_247, %c8_248] : memref<9x16xf32, #tpu.memory_space<smem>>
      %532 = vector.broadcast %531 : f32 to vector<16x256xf32>
      %533 = arith.mulf %56, %532 : vector<16x256xf32>
      %534 = arith.addf %530, %533 : vector<16x256xf32>
      %c6_249 = arith.constant 6 : index
      %c8_250 = arith.constant 8 : index
      %535 = memref.load %arg4[%c6_249, %c8_250] : memref<9x16xf32, #tpu.memory_space<smem>>
      %536 = vector.broadcast %535 : f32 to vector<16x256xf32>
      %537 = arith.mulf %59, %536 : vector<16x256xf32>
      %538 = arith.addf %534, %537 : vector<16x256xf32>
      %c7_251 = arith.constant 7 : index
      %c8_252 = arith.constant 8 : index
      %539 = memref.load %arg4[%c7_251, %c8_252] : memref<9x16xf32, #tpu.memory_space<smem>>
      %540 = vector.broadcast %539 : f32 to vector<16x256xf32>
      %541 = arith.mulf %60, %540 : vector<16x256xf32>
      %542 = arith.addf %538, %541 : vector<16x256xf32>
      %c8_253 = arith.constant 8 : index
      %c8_254 = arith.constant 8 : index
      %543 = memref.load %arg4[%c8_253, %c8_254] : memref<9x16xf32, #tpu.memory_space<smem>>
      %544 = vector.broadcast %543 : f32 to vector<16x256xf32>
      %545 = arith.mulf %63, %544 : vector<16x256xf32>
      %546 = arith.addf %542, %545 : vector<16x256xf32>
      %547 = vector.extract_strided_slice %21 {offsets = [0, 8], sizes = [16, 1], strides = [1, 1]} : vector<16x16xf32> to vector<16x1xf32>
      %548 = vector.broadcast %547 : vector<16x1xf32> to vector<16x256xf32>
      %549 = arith.addf %546, %548 : vector<16x256xf32>
      %550 = arith.mulf %549, %549 : vector<16x256xf32>
      %551 = arith.mulf %549, %550 : vector<16x256xf32>
      %cst_255 = arith.constant 4.471500e-02 : f32
      %552 = vector.broadcast %cst_255 : f32 to vector<16x256xf32>
      %553 = arith.mulf %552, %551 : vector<16x256xf32>
      %554 = arith.addf %549, %553 : vector<16x256xf32>
      %cst_256 = arith.constant 0.797884583 : f32
      %555 = vector.broadcast %cst_256 : f32 to vector<16x256xf32>
      %556 = arith.mulf %555, %554 : vector<16x256xf32>
      %557 = math.tanh %556 : vector<16x256xf32>
      %cst_257 = arith.constant 1.000000e+00 : f32
      %558 = vector.broadcast %cst_257 : f32 to vector<16x256xf32>
      %559 = arith.addf %558, %557 : vector<16x256xf32>
      %cst_258 = arith.constant 5.000000e-01 : f32
      %560 = vector.broadcast %cst_258 : f32 to vector<16x256xf32>
      %561 = arith.mulf %560, %559 : vector<16x256xf32>
      %562 = arith.mulf %549, %561 : vector<16x256xf32>
      %c0_259 = arith.constant 0 : index
      %c8_260 = arith.constant 8 : index
      %c0_261 = arith.constant 0 : index
      %c0_262 = arith.constant 0 : index
      %563 = vector.load %arg8[%c0_259, %c8_260, %c0_261, %c0_262] : memref<1x16x16x256xf32, #tpu.memory_space<vmem>>, vector<1x1x16x256xf32>
      %564 = vector.shape_cast %563 : vector<1x1x16x256xf32> to vector<16x256xf32>
      %565 = vector.shape_cast %562 : vector<16x256xf32> to vector<1x1x16x256xf32>
      tpu.vector_store %arg8[%c0_259, %c8_260, %c0_261, %c0_262], %565 {strides = array<i32>} : memref<1x16x16x256xf32, #tpu.memory_space<vmem>>, vector<1x1x16x256xf32>,
      %566 = arith.truncf %562 : vector<16x256xf32> to vector<16x256xbf16>
      %c0_263 = arith.constant 0 : index
      %c2048 = arith.constant 2048 : index
      %567 = vector.load %arg10[%c0_263, %c2048] : memref<16x4096xbf16, #tpu.memory_space<vmem>>, vector<16x256xbf16>
      tpu.vector_store %arg10[%c0_263, %c2048], %566 {strides = array<i32>} : memref<16x4096xbf16, #tpu.memory_space<vmem>>, vector<16x256xbf16>,
      %c0_264 = arith.constant 0 : index
      %c9 = arith.constant 9 : index
      %568 = memref.load %arg4[%c0_264, %c9] : memref<9x16xf32, #tpu.memory_space<smem>>
      %569 = vector.broadcast %568 : f32 to vector<16x256xf32>
      %570 = arith.mulf %45, %569 : vector<16x256xf32>
      %c1_265 = arith.constant 1 : index
      %c9_266 = arith.constant 9 : index
      %571 = memref.load %arg4[%c1_265, %c9_266] : memref<9x16xf32, #tpu.memory_space<smem>>
      %572 = vector.broadcast %571 : f32 to vector<16x256xf32>
      %573 = arith.mulf %46, %572 : vector<16x256xf32>
      %574 = arith.addf %570, %573 : vector<16x256xf32>
      %c2_267 = arith.constant 2 : index
      %c9_268 = arith.constant 9 : index
      %575 = memref.load %arg4[%c2_267, %c9_268] : memref<9x16xf32, #tpu.memory_space<smem>>
      %576 = vector.broadcast %575 : f32 to vector<16x256xf32>
      %577 = arith.mulf %49, %576 : vector<16x256xf32>
      %578 = arith.addf %574, %577 : vector<16x256xf32>
      %c3_269 = arith.constant 3 : index
      %c9_270 = arith.constant 9 : index
      %579 = memref.load %arg4[%c3_269, %c9_270] : memref<9x16xf32, #tpu.memory_space<smem>>
      %580 = vector.broadcast %579 : f32 to vector<16x256xf32>
      %581 = arith.mulf %52, %580 : vector<16x256xf32>
      %582 = arith.addf %578, %581 : vector<16x256xf32>
      %c4_271 = arith.constant 4 : index
      %c9_272 = arith.constant 9 : index
      %583 = memref.load %arg4[%c4_271, %c9_272] : memref<9x16xf32, #tpu.memory_space<smem>>
      %584 = vector.broadcast %583 : f32 to vector<16x256xf32>
      %585 = arith.mulf %53, %584 : vector<16x256xf32>
      %586 = arith.addf %582, %585 : vector<16x256xf32>
      %c5_273 = arith.constant 5 : index
      %c9_274 = arith.constant 9 : index
      %587 = memref.load %arg4[%c5_273, %c9_274] : memref<9x16xf32, #tpu.memory_space<smem>>
      %588 = vector.broadcast %587 : f32 to vector<16x256xf32>
      %589 = arith.mulf %56, %588 : vector<16x256xf32>
      %590 = arith.addf %586, %589 : vector<16x256xf32>
      %c6_275 = arith.constant 6 : index
      %c9_276 = arith.constant 9 : index
      %591 = memref.load %arg4[%c6_275, %c9_276] : memref<9x16xf32, #tpu.memory_space<smem>>
      %592 = vector.broadcast %591 : f32 to vector<16x256xf32>
      %593 = arith.mulf %59, %592 : vector<16x256xf32>
      %594 = arith.addf %590, %593 : vector<16x256xf32>
      %c7_277 = arith.constant 7 : index
      %c9_278 = arith.constant 9 : index
      %595 = memref.load %arg4[%c7_277, %c9_278] : memref<9x16xf32, #tpu.memory_space<smem>>
      %596 = vector.broadcast %595 : f32 to vector<16x256xf32>
      %597 = arith.mulf %60, %596 : vector<16x256xf32>
      %598 = arith.addf %594, %597 : vector<16x256xf32>
      %c8_279 = arith.constant 8 : index
      %c9_280 = arith.constant 9 : index
      %599 = memref.load %arg4[%c8_279, %c9_280] : memref<9x16xf32, #tpu.memory_space<smem>>
      %600 = vector.broadcast %599 : f32 to vector<16x256xf32>
      %601 = arith.mulf %63, %600 : vector<16x256xf32>
      %602 = arith.addf %598, %601 : vector<16x256xf32>
      %603 = vector.extract_strided_slice %21 {offsets = [0, 9], sizes = [16, 1], strides = [1, 1]} : vector<16x16xf32> to vector<16x1xf32>
      %604 = vector.broadcast %603 : vector<16x1xf32> to vector<16x256xf32>
      %605 = arith.addf %602, %604 : vector<16x256xf32>
      %606 = arith.mulf %605, %605 : vector<16x256xf32>
      %607 = arith.mulf %605, %606 : vector<16x256xf32>
      %cst_281 = arith.constant 4.471500e-02 : f32
      %608 = vector.broadcast %cst_281 : f32 to vector<16x256xf32>
      %609 = arith.mulf %608, %607 : vector<16x256xf32>
      %610 = arith.addf %605, %609 : vector<16x256xf32>
      %cst_282 = arith.constant 0.797884583 : f32
      %611 = vector.broadcast %cst_282 : f32 to vector<16x256xf32>
      %612 = arith.mulf %611, %610 : vector<16x256xf32>
      %613 = math.tanh %612 : vector<16x256xf32>
      %cst_283 = arith.constant 1.000000e+00 : f32
      %614 = vector.broadcast %cst_283 : f32 to vector<16x256xf32>
      %615 = arith.addf %614, %613 : vector<16x256xf32>
      %cst_284 = arith.constant 5.000000e-01 : f32
      %616 = vector.broadcast %cst_284 : f32 to vector<16x256xf32>
      %617 = arith.mulf %616, %615 : vector<16x256xf32>
      %618 = arith.mulf %605, %617 : vector<16x256xf32>
      %c0_285 = arith.constant 0 : index
      %c9_286 = arith.constant 9 : index
      %c0_287 = arith.constant 0 : index
      %c0_288 = arith.constant 0 : index
      %619 = vector.load %arg8[%c0_285, %c9_286, %c0_287, %c0_288] : memref<1x16x16x256xf32, #tpu.memory_space<vmem>>, vector<1x1x16x256xf32>
      %620 = vector.shape_cast %619 : vector<1x1x16x256xf32> to vector<16x256xf32>
      %621 = vector.shape_cast %618 : vector<16x256xf32> to vector<1x1x16x256xf32>
      tpu.vector_store %arg8[%c0_285, %c9_286, %c0_287, %c0_288], %621 {strides = array<i32>} : memref<1x16x16x256xf32, #tpu.memory_space<vmem>>, vector<1x1x16x256xf32>,
      %622 = arith.truncf %618 : vector<16x256xf32> to vector<16x256xbf16>
      %c0_289 = arith.constant 0 : index
      %c2304 = arith.constant 2304 : index
      %623 = vector.load %arg10[%c0_289, %c2304] : memref<16x4096xbf16, #tpu.memory_space<vmem>>, vector<16x256xbf16>
      tpu.vector_store %arg10[%c0_289, %c2304], %622 {strides = array<i32>} : memref<16x4096xbf16, #tpu.memory_space<vmem>>, vector<16x256xbf16>,
      %c0_290 = arith.constant 0 : index
      %c10 = arith.constant 10 : index
      %624 = memref.load %arg4[%c0_290, %c10] : memref<9x16xf32, #tpu.memory_space<smem>>
      %625 = vector.broadcast %624 : f32 to vector<16x256xf32>
      %626 = arith.mulf %45, %625 : vector<16x256xf32>
      %c1_291 = arith.constant 1 : index
      %c10_292 = arith.constant 10 : index
      %627 = memref.load %arg4[%c1_291, %c10_292] : memref<9x16xf32, #tpu.memory_space<smem>>
      %628 = vector.broadcast %627 : f32 to vector<16x256xf32>
      %629 = arith.mulf %46, %628 : vector<16x256xf32>
      %630 = arith.addf %626, %629 : vector<16x256xf32>
      %c2_293 = arith.constant 2 : index
      %c10_294 = arith.constant 10 : index
      %631 = memref.load %arg4[%c2_293, %c10_294] : memref<9x16xf32, #tpu.memory_space<smem>>
      %632 = vector.broadcast %631 : f32 to vector<16x256xf32>
      %633 = arith.mulf %49, %632 : vector<16x256xf32>
      %634 = arith.addf %630, %633 : vector<16x256xf32>
      %c3_295 = arith.constant 3 : index
      %c10_296 = arith.constant 10 : index
      %635 = memref.load %arg4[%c3_295, %c10_296] : memref<9x16xf32, #tpu.memory_space<smem>>
      %636 = vector.broadcast %635 : f32 to vector<16x256xf32>
      %637 = arith.mulf %52, %636 : vector<16x256xf32>
      %638 = arith.addf %634, %637 : vector<16x256xf32>
      %c4_297 = arith.constant 4 : index
      %c10_298 = arith.constant 10 : index
      %639 = memref.load %arg4[%c4_297, %c10_298] : memref<9x16xf32, #tpu.memory_space<smem>>
      %640 = vector.broadcast %639 : f32 to vector<16x256xf32>
      %641 = arith.mulf %53, %640 : vector<16x256xf32>
      %642 = arith.addf %638, %641 : vector<16x256xf32>
      %c5_299 = arith.constant 5 : index
      %c10_300 = arith.constant 10 : index
      %643 = memref.load %arg4[%c5_299, %c10_300] : memref<9x16xf32, #tpu.memory_space<smem>>
      %644 = vector.broadcast %643 : f32 to vector<16x256xf32>
      %645 = arith.mulf %56, %644 : vector<16x256xf32>
      %646 = arith.addf %642, %645 : vector<16x256xf32>
      %c6_301 = arith.constant 6 : index
      %c10_302 = arith.constant 10 : index
      %647 = memref.load %arg4[%c6_301, %c10_302] : memref<9x16xf32, #tpu.memory_space<smem>>
      %648 = vector.broadcast %647 : f32 to vector<16x256xf32>
      %649 = arith.mulf %59, %648 : vector<16x256xf32>
      %650 = arith.addf %646, %649 : vector<16x256xf32>
      %c7_303 = arith.constant 7 : index
      %c10_304 = arith.constant 10 : index
      %651 = memref.load %arg4[%c7_303, %c10_304] : memref<9x16xf32, #tpu.memory_space<smem>>
      %652 = vector.broadcast %651 : f32 to vector<16x256xf32>
      %653 = arith.mulf %60, %652 : vector<16x256xf32>
      %654 = arith.addf %650, %653 : vector<16x256xf32>
      %c8_305 = arith.constant 8 : index
      %c10_306 = arith.constant 10 : index
      %655 = memref.load %arg4[%c8_305, %c10_306] : memref<9x16xf32, #tpu.memory_space<smem>>
      %656 = vector.broadcast %655 : f32 to vector<16x256xf32>
      %657 = arith.mulf %63, %656 : vector<16x256xf32>
      %658 = arith.addf %654, %657 : vector<16x256xf32>
      %659 = vector.extract_strided_slice %21 {offsets = [0, 10], sizes = [16, 1], strides = [1, 1]} : vector<16x16xf32> to vector<16x1xf32>
      %660 = vector.broadcast %659 : vector<16x1xf32> to vector<16x256xf32>
      %661 = arith.addf %658, %660 : vector<16x256xf32>
      %662 = arith.mulf %661, %661 : vector<16x256xf32>
      %663 = arith.mulf %661, %662 : vector<16x256xf32>
      %cst_307 = arith.constant 4.471500e-02 : f32
      %664 = vector.broadcast %cst_307 : f32 to vector<16x256xf32>
      %665 = arith.mulf %664, %663 : vector<16x256xf32>
      %666 = arith.addf %661, %665 : vector<16x256xf32>
      %cst_308 = arith.constant 0.797884583 : f32
      %667 = vector.broadcast %cst_308 : f32 to vector<16x256xf32>
      %668 = arith.mulf %667, %666 : vector<16x256xf32>
      %669 = math.tanh %668 : vector<16x256xf32>
      %cst_309 = arith.constant 1.000000e+00 : f32
      %670 = vector.broadcast %cst_309 : f32 to vector<16x256xf32>
      %671 = arith.addf %670, %669 : vector<16x256xf32>
      %cst_310 = arith.constant 5.000000e-01 : f32
      %672 = vector.broadcast %cst_310 : f32 to vector<16x256xf32>
      %673 = arith.mulf %672, %671 : vector<16x256xf32>
      %674 = arith.mulf %661, %673 : vector<16x256xf32>
      %c0_311 = arith.constant 0 : index
      %c10_312 = arith.constant 10 : index
      %c0_313 = arith.constant 0 : index
      %c0_314 = arith.constant 0 : index
      %675 = vector.load %arg8[%c0_311, %c10_312, %c0_313, %c0_314] : memref<1x16x16x256xf32, #tpu.memory_space<vmem>>, vector<1x1x16x256xf32>
      %676 = vector.shape_cast %675 : vector<1x1x16x256xf32> to vector<16x256xf32>
      %677 = vector.shape_cast %674 : vector<16x256xf32> to vector<1x1x16x256xf32>
      tpu.vector_store %arg8[%c0_311, %c10_312, %c0_313, %c0_314], %677 {strides = array<i32>} : memref<1x16x16x256xf32, #tpu.memory_space<vmem>>, vector<1x1x16x256xf32>,
      %678 = arith.truncf %674 : vector<16x256xf32> to vector<16x256xbf16>
      %c0_315 = arith.constant 0 : index
      %c2560 = arith.constant 2560 : index
      %679 = vector.load %arg10[%c0_315, %c2560] : memref<16x4096xbf16, #tpu.memory_space<vmem>>, vector<16x256xbf16>
      tpu.vector_store %arg10[%c0_315, %c2560], %678 {strides = array<i32>} : memref<16x4096xbf16, #tpu.memory_space<vmem>>, vector<16x256xbf16>,
      %c0_316 = arith.constant 0 : index
      %c11 = arith.constant 11 : index
      %680 = memref.load %arg4[%c0_316, %c11] : memref<9x16xf32, #tpu.memory_space<smem>>
      %681 = vector.broadcast %680 : f32 to vector<16x256xf32>
      %682 = arith.mulf %45, %681 : vector<16x256xf32>
      %c1_317 = arith.constant 1 : index
      %c11_318 = arith.constant 11 : index
      %683 = memref.load %arg4[%c1_317, %c11_318] : memref<9x16xf32, #tpu.memory_space<smem>>
      %684 = vector.broadcast %683 : f32 to vector<16x256xf32>
      %685 = arith.mulf %46, %684 : vector<16x256xf32>
      %686 = arith.addf %682, %685 : vector<16x256xf32>
      %c2_319 = arith.constant 2 : index
      %c11_320 = arith.constant 11 : index
      %687 = memref.load %arg4[%c2_319, %c11_320] : memref<9x16xf32, #tpu.memory_space<smem>>
      %688 = vector.broadcast %687 : f32 to vector<16x256xf32>
      %689 = arith.mulf %49, %688 : vector<16x256xf32>
      %690 = arith.addf %686, %689 : vector<16x256xf32>
      %c3_321 = arith.constant 3 : index
      %c11_322 = arith.constant 11 : index
      %691 = memref.load %arg4[%c3_321, %c11_322] : memref<9x16xf32, #tpu.memory_space<smem>>
      %692 = vector.broadcast %691 : f32 to vector<16x256xf32>
      %693 = arith.mulf %52, %692 : vector<16x256xf32>
      %694 = arith.addf %690, %693 : vector<16x256xf32>
      %c4_323 = arith.constant 4 : index
      %c11_324 = arith.constant 11 : index
      %695 = memref.load %arg4[%c4_323, %c11_324] : memref<9x16xf32, #tpu.memory_space<smem>>
      %696 = vector.broadcast %695 : f32 to vector<16x256xf32>
      %697 = arith.mulf %53, %696 : vector<16x256xf32>
      %698 = arith.addf %694, %697 : vector<16x256xf32>
      %c5_325 = arith.constant 5 : index
      %c11_326 = arith.constant 11 : index
      %699 = memref.load %arg4[%c5_325, %c11_326] : memref<9x16xf32, #tpu.memory_space<smem>>
      %700 = vector.broadcast %699 : f32 to vector<16x256xf32>
      %701 = arith.mulf %56, %700 : vector<16x256xf32>
      %702 = arith.addf %698, %701 : vector<16x256xf32>
      %c6_327 = arith.constant 6 : index
      %c11_328 = arith.constant 11 : index
      %703 = memref.load %arg4[%c6_327, %c11_328] : memref<9x16xf32, #tpu.memory_space<smem>>
      %704 = vector.broadcast %703 : f32 to vector<16x256xf32>
      %705 = arith.mulf %59, %704 : vector<16x256xf32>
      %706 = arith.addf %702, %705 : vector<16x256xf32>
      %c7_329 = arith.constant 7 : index
      %c11_330 = arith.constant 11 : index
      %707 = memref.load %arg4[%c7_329, %c11_330] : memref<9x16xf32, #tpu.memory_space<smem>>
      %708 = vector.broadcast %707 : f32 to vector<16x256xf32>
      %709 = arith.mulf %60, %708 : vector<16x256xf32>
      %710 = arith.addf %706, %709 : vector<16x256xf32>
      %c8_331 = arith.constant 8 : index
      %c11_332 = arith.constant 11 : index
      %711 = memref.load %arg4[%c8_331, %c11_332] : memref<9x16xf32, #tpu.memory_space<smem>>
      %712 = vector.broadcast %711 : f32 to vector<16x256xf32>
      %713 = arith.mulf %63, %712 : vector<16x256xf32>
      %714 = arith.addf %710, %713 : vector<16x256xf32>
      %715 = vector.extract_strided_slice %21 {offsets = [0, 11], sizes = [16, 1], strides = [1, 1]} : vector<16x16xf32> to vector<16x1xf32>
      %716 = vector.broadcast %715 : vector<16x1xf32> to vector<16x256xf32>
      %717 = arith.addf %714, %716 : vector<16x256xf32>
      %718 = arith.mulf %717, %717 : vector<16x256xf32>
      %719 = arith.mulf %717, %718 : vector<16x256xf32>
      %cst_333 = arith.constant 4.471500e-02 : f32
      %720 = vector.broadcast %cst_333 : f32 to vector<16x256xf32>
      %721 = arith.mulf %720, %719 : vector<16x256xf32>
      %722 = arith.addf %717, %721 : vector<16x256xf32>
      %cst_334 = arith.constant 0.797884583 : f32
      %723 = vector.broadcast %cst_334 : f32 to vector<16x256xf32>
      %724 = arith.mulf %723, %722 : vector<16x256xf32>
      %725 = math.tanh %724 : vector<16x256xf32>
      %cst_335 = arith.constant 1.000000e+00 : f32
      %726 = vector.broadcast %cst_335 : f32 to vector<16x256xf32>
      %727 = arith.addf %726, %725 : vector<16x256xf32>
      %cst_336 = arith.constant 5.000000e-01 : f32
      %728 = vector.broadcast %cst_336 : f32 to vector<16x256xf32>
      %729 = arith.mulf %728, %727 : vector<16x256xf32>
      %730 = arith.mulf %717, %729 : vector<16x256xf32>
      %c0_337 = arith.constant 0 : index
      %c11_338 = arith.constant 11 : index
      %c0_339 = arith.constant 0 : index
      %c0_340 = arith.constant 0 : index
      %731 = vector.load %arg8[%c0_337, %c11_338, %c0_339, %c0_340] : memref<1x16x16x256xf32, #tpu.memory_space<vmem>>, vector<1x1x16x256xf32>
      %732 = vector.shape_cast %731 : vector<1x1x16x256xf32> to vector<16x256xf32>
      %733 = vector.shape_cast %730 : vector<16x256xf32> to vector<1x1x16x256xf32>
      tpu.vector_store %arg8[%c0_337, %c11_338, %c0_339, %c0_340], %733 {strides = array<i32>} : memref<1x16x16x256xf32, #tpu.memory_space<vmem>>, vector<1x1x16x256xf32>,
      %734 = arith.truncf %730 : vector<16x256xf32> to vector<16x256xbf16>
      %c0_341 = arith.constant 0 : index
      %c2816 = arith.constant 2816 : index
      %735 = vector.load %arg10[%c0_341, %c2816] : memref<16x4096xbf16, #tpu.memory_space<vmem>>, vector<16x256xbf16>
      tpu.vector_store %arg10[%c0_341, %c2816], %734 {strides = array<i32>} : memref<16x4096xbf16, #tpu.memory_space<vmem>>, vector<16x256xbf16>,
      %c0_342 = arith.constant 0 : index
      %c12 = arith.constant 12 : index
      %736 = memref.load %arg4[%c0_342, %c12] : memref<9x16xf32, #tpu.memory_space<smem>>
      %737 = vector.broadcast %736 : f32 to vector<16x256xf32>
      %738 = arith.mulf %45, %737 : vector<16x256xf32>
      %c1_343 = arith.constant 1 : index
      %c12_344 = arith.constant 12 : index
      %739 = memref.load %arg4[%c1_343, %c12_344] : memref<9x16xf32, #tpu.memory_space<smem>>
      %740 = vector.broadcast %739 : f32 to vector<16x256xf32>
      %741 = arith.mulf %46, %740 : vector<16x256xf32>
      %742 = arith.addf %738, %741 : vector<16x256xf32>
      %c2_345 = arith.constant 2 : index
      %c12_346 = arith.constant 12 : index
      %743 = memref.load %arg4[%c2_345, %c12_346] : memref<9x16xf32, #tpu.memory_space<smem>>
      %744 = vector.broadcast %743 : f32 to vector<16x256xf32>
      %745 = arith.mulf %49, %744 : vector<16x256xf32>
      %746 = arith.addf %742, %745 : vector<16x256xf32>
      %c3_347 = arith.constant 3 : index
      %c12_348 = arith.constant 12 : index
      %747 = memref.load %arg4[%c3_347, %c12_348] : memref<9x16xf32, #tpu.memory_space<smem>>
      %748 = vector.broadcast %747 : f32 to vector<16x256xf32>
      %749 = arith.mulf %52, %748 : vector<16x256xf32>
      %750 = arith.addf %746, %749 : vector<16x256xf32>
      %c4_349 = arith.constant 4 : index
      %c12_350 = arith.constant 12 : index
      %751 = memref.load %arg4[%c4_349, %c12_350] : memref<9x16xf32, #tpu.memory_space<smem>>
      %752 = vector.broadcast %751 : f32 to vector<16x256xf32>
      %753 = arith.mulf %53, %752 : vector<16x256xf32>
      %754 = arith.addf %750, %753 : vector<16x256xf32>
      %c5_351 = arith.constant 5 : index
      %c12_352 = arith.constant 12 : index
      %755 = memref.load %arg4[%c5_351, %c12_352] : memref<9x16xf32, #tpu.memory_space<smem>>
      %756 = vector.broadcast %755 : f32 to vector<16x256xf32>
      %757 = arith.mulf %56, %756 : vector<16x256xf32>
      %758 = arith.addf %754, %757 : vector<16x256xf32>
      %c6_353 = arith.constant 6 : index
      %c12_354 = arith.constant 12 : index
      %759 = memref.load %arg4[%c6_353, %c12_354] : memref<9x16xf32, #tpu.memory_space<smem>>
      %760 = vector.broadcast %759 : f32 to vector<16x256xf32>
      %761 = arith.mulf %59, %760 : vector<16x256xf32>
      %762 = arith.addf %758, %761 : vector<16x256xf32>
      %c7_355 = arith.constant 7 : index
      %c12_356 = arith.constant 12 : index
      %763 = memref.load %arg4[%c7_355, %c12_356] : memref<9x16xf32, #tpu.memory_space<smem>>
      %764 = vector.broadcast %763 : f32 to vector<16x256xf32>
      %765 = arith.mulf %60, %764 : vector<16x256xf32>
      %766 = arith.addf %762, %765 : vector<16x256xf32>
      %c8_357 = arith.constant 8 : index
      %c12_358 = arith.constant 12 : index
      %767 = memref.load %arg4[%c8_357, %c12_358] : memref<9x16xf32, #tpu.memory_space<smem>>
      %768 = vector.broadcast %767 : f32 to vector<16x256xf32>
      %769 = arith.mulf %63, %768 : vector<16x256xf32>
      %770 = arith.addf %766, %769 : vector<16x256xf32>
      %771 = vector.extract_strided_slice %21 {offsets = [0, 12], sizes = [16, 1], strides = [1, 1]} : vector<16x16xf32> to vector<16x1xf32>
      %772 = vector.broadcast %771 : vector<16x1xf32> to vector<16x256xf32>
      %773 = arith.addf %770, %772 : vector<16x256xf32>
      %774 = arith.mulf %773, %773 : vector<16x256xf32>
      %775 = arith.mulf %773, %774 : vector<16x256xf32>
      %cst_359 = arith.constant 4.471500e-02 : f32
      %776 = vector.broadcast %cst_359 : f32 to vector<16x256xf32>
      %777 = arith.mulf %776, %775 : vector<16x256xf32>
      %778 = arith.addf %773, %777 : vector<16x256xf32>
      %cst_360 = arith.constant 0.797884583 : f32
      %779 = vector.broadcast %cst_360 : f32 to vector<16x256xf32>
      %780 = arith.mulf %779, %778 : vector<16x256xf32>
      %781 = math.tanh %780 : vector<16x256xf32>
      %cst_361 = arith.constant 1.000000e+00 : f32
      %782 = vector.broadcast %cst_361 : f32 to vector<16x256xf32>
      %783 = arith.addf %782, %781 : vector<16x256xf32>
      %cst_362 = arith.constant 5.000000e-01 : f32
      %784 = vector.broadcast %cst_362 : f32 to vector<16x256xf32>
      %785 = arith.mulf %784, %783 : vector<16x256xf32>
      %786 = arith.mulf %773, %785 : vector<16x256xf32>
      %c0_363 = arith.constant 0 : index
      %c12_364 = arith.constant 12 : index
      %c0_365 = arith.constant 0 : index
      %c0_366 = arith.constant 0 : index
      %787 = vector.load %arg8[%c0_363, %c12_364, %c0_365, %c0_366] : memref<1x16x16x256xf32, #tpu.memory_space<vmem>>, vector<1x1x16x256xf32>
      %788 = vector.shape_cast %787 : vector<1x1x16x256xf32> to vector<16x256xf32>
      %789 = vector.shape_cast %786 : vector<16x256xf32> to vector<1x1x16x256xf32>
      tpu.vector_store %arg8[%c0_363, %c12_364, %c0_365, %c0_366], %789 {strides = array<i32>} : memref<1x16x16x256xf32, #tpu.memory_space<vmem>>, vector<1x1x16x256xf32>,
      %790 = arith.truncf %786 : vector<16x256xf32> to vector<16x256xbf16>
      %c0_367 = arith.constant 0 : index
      %c3072 = arith.constant 3072 : index
      %791 = vector.load %arg10[%c0_367, %c3072] : memref<16x4096xbf16, #tpu.memory_space<vmem>>, vector<16x256xbf16>
      tpu.vector_store %arg10[%c0_367, %c3072], %790 {strides = array<i32>} : memref<16x4096xbf16, #tpu.memory_space<vmem>>, vector<16x256xbf16>,
      %c0_368 = arith.constant 0 : index
      %c13 = arith.constant 13 : index
      %792 = memref.load %arg4[%c0_368, %c13] : memref<9x16xf32, #tpu.memory_space<smem>>
      %793 = vector.broadcast %792 : f32 to vector<16x256xf32>
      %794 = arith.mulf %45, %793 : vector<16x256xf32>
      %c1_369 = arith.constant 1 : index
      %c13_370 = arith.constant 13 : index
      %795 = memref.load %arg4[%c1_369, %c13_370] : memref<9x16xf32, #tpu.memory_space<smem>>
      %796 = vector.broadcast %795 : f32 to vector<16x256xf32>
      %797 = arith.mulf %46, %796 : vector<16x256xf32>
      %798 = arith.addf %794, %797 : vector<16x256xf32>
      %c2_371 = arith.constant 2 : index
      %c13_372 = arith.constant 13 : index
      %799 = memref.load %arg4[%c2_371, %c13_372] : memref<9x16xf32, #tpu.memory_space<smem>>
      %800 = vector.broadcast %799 : f32 to vector<16x256xf32>
      %801 = arith.mulf %49, %800 : vector<16x256xf32>
      %802 = arith.addf %798, %801 : vector<16x256xf32>
      %c3_373 = arith.constant 3 : index
      %c13_374 = arith.constant 13 : index
      %803 = memref.load %arg4[%c3_373, %c13_374] : memref<9x16xf32, #tpu.memory_space<smem>>
      %804 = vector.broadcast %803 : f32 to vector<16x256xf32>
      %805 = arith.mulf %52, %804 : vector<16x256xf32>
      %806 = arith.addf %802, %805 : vector<16x256xf32>
      %c4_375 = arith.constant 4 : index
      %c13_376 = arith.constant 13 : index
      %807 = memref.load %arg4[%c4_375, %c13_376] : memref<9x16xf32, #tpu.memory_space<smem>>
      %808 = vector.broadcast %807 : f32 to vector<16x256xf32>
      %809 = arith.mulf %53, %808 : vector<16x256xf32>
      %810 = arith.addf %806, %809 : vector<16x256xf32>
      %c5_377 = arith.constant 5 : index
      %c13_378 = arith.constant 13 : index
      %811 = memref.load %arg4[%c5_377, %c13_378] : memref<9x16xf32, #tpu.memory_space<smem>>
      %812 = vector.broadcast %811 : f32 to vector<16x256xf32>
      %813 = arith.mulf %56, %812 : vector<16x256xf32>
      %814 = arith.addf %810, %813 : vector<16x256xf32>
      %c6_379 = arith.constant 6 : index
      %c13_380 = arith.constant 13 : index
      %815 = memref.load %arg4[%c6_379, %c13_380] : memref<9x16xf32, #tpu.memory_space<smem>>
      %816 = vector.broadcast %815 : f32 to vector<16x256xf32>
      %817 = arith.mulf %59, %816 : vector<16x256xf32>
      %818 = arith.addf %814, %817 : vector<16x256xf32>
      %c7_381 = arith.constant 7 : index
      %c13_382 = arith.constant 13 : index
      %819 = memref.load %arg4[%c7_381, %c13_382] : memref<9x16xf32, #tpu.memory_space<smem>>
      %820 = vector.broadcast %819 : f32 to vector<16x256xf32>
      %821 = arith.mulf %60, %820 : vector<16x256xf32>
      %822 = arith.addf %818, %821 : vector<16x256xf32>
      %c8_383 = arith.constant 8 : index
      %c13_384 = arith.constant 13 : index
      %823 = memref.load %arg4[%c8_383, %c13_384] : memref<9x16xf32, #tpu.memory_space<smem>>
      %824 = vector.broadcast %823 : f32 to vector<16x256xf32>
      %825 = arith.mulf %63, %824 : vector<16x256xf32>
      %826 = arith.addf %822, %825 : vector<16x256xf32>
      %827 = vector.extract_strided_slice %21 {offsets = [0, 13], sizes = [16, 1], strides = [1, 1]} : vector<16x16xf32> to vector<16x1xf32>
      %828 = vector.broadcast %827 : vector<16x1xf32> to vector<16x256xf32>
      %829 = arith.addf %826, %828 : vector<16x256xf32>
      %830 = arith.mulf %829, %829 : vector<16x256xf32>
      %831 = arith.mulf %829, %830 : vector<16x256xf32>
      %cst_385 = arith.constant 4.471500e-02 : f32
      %832 = vector.broadcast %cst_385 : f32 to vector<16x256xf32>
      %833 = arith.mulf %832, %831 : vector<16x256xf32>
      %834 = arith.addf %829, %833 : vector<16x256xf32>
      %cst_386 = arith.constant 0.797884583 : f32
      %835 = vector.broadcast %cst_386 : f32 to vector<16x256xf32>
      %836 = arith.mulf %835, %834 : vector<16x256xf32>
      %837 = math.tanh %836 : vector<16x256xf32>
      %cst_387 = arith.constant 1.000000e+00 : f32
      %838 = vector.broadcast %cst_387 : f32 to vector<16x256xf32>
      %839 = arith.addf %838, %837 : vector<16x256xf32>
      %cst_388 = arith.constant 5.000000e-01 : f32
      %840 = vector.broadcast %cst_388 : f32 to vector<16x256xf32>
      %841 = arith.mulf %840, %839 : vector<16x256xf32>
      %842 = arith.mulf %829, %841 : vector<16x256xf32>
      %c0_389 = arith.constant 0 : index
      %c13_390 = arith.constant 13 : index
      %c0_391 = arith.constant 0 : index
      %c0_392 = arith.constant 0 : index
      %843 = vector.load %arg8[%c0_389, %c13_390, %c0_391, %c0_392] : memref<1x16x16x256xf32, #tpu.memory_space<vmem>>, vector<1x1x16x256xf32>
      %844 = vector.shape_cast %843 : vector<1x1x16x256xf32> to vector<16x256xf32>
      %845 = vector.shape_cast %842 : vector<16x256xf32> to vector<1x1x16x256xf32>
      tpu.vector_store %arg8[%c0_389, %c13_390, %c0_391, %c0_392], %845 {strides = array<i32>} : memref<1x16x16x256xf32, #tpu.memory_space<vmem>>, vector<1x1x16x256xf32>,
      %846 = arith.truncf %842 : vector<16x256xf32> to vector<16x256xbf16>
      %c0_393 = arith.constant 0 : index
      %c3328 = arith.constant 3328 : index
      %847 = vector.load %arg10[%c0_393, %c3328] : memref<16x4096xbf16, #tpu.memory_space<vmem>>, vector<16x256xbf16>
      tpu.vector_store %arg10[%c0_393, %c3328], %846 {strides = array<i32>} : memref<16x4096xbf16, #tpu.memory_space<vmem>>, vector<16x256xbf16>,
      %c0_394 = arith.constant 0 : index
      %c14 = arith.constant 14 : index
      %848 = memref.load %arg4[%c0_394, %c14] : memref<9x16xf32, #tpu.memory_space<smem>>
      %849 = vector.broadcast %848 : f32 to vector<16x256xf32>
      %850 = arith.mulf %45, %849 : vector<16x256xf32>
      %c1_395 = arith.constant 1 : index
      %c14_396 = arith.constant 14 : index
      %851 = memref.load %arg4[%c1_395, %c14_396] : memref<9x16xf32, #tpu.memory_space<smem>>
      %852 = vector.broadcast %851 : f32 to vector<16x256xf32>
      %853 = arith.mulf %46, %852 : vector<16x256xf32>
      %854 = arith.addf %850, %853 : vector<16x256xf32>
      %c2_397 = arith.constant 2 : index
      %c14_398 = arith.constant 14 : index
      %855 = memref.load %arg4[%c2_397, %c14_398] : memref<9x16xf32, #tpu.memory_space<smem>>
      %856 = vector.broadcast %855 : f32 to vector<16x256xf32>
      %857 = arith.mulf %49, %856 : vector<16x256xf32>
      %858 = arith.addf %854, %857 : vector<16x256xf32>
      %c3_399 = arith.constant 3 : index
      %c14_400 = arith.constant 14 : index
      %859 = memref.load %arg4[%c3_399, %c14_400] : memref<9x16xf32, #tpu.memory_space<smem>>
      %860 = vector.broadcast %859 : f32 to vector<16x256xf32>
      %861 = arith.mulf %52, %860 : vector<16x256xf32>
      %862 = arith.addf %858, %861 : vector<16x256xf32>
      %c4_401 = arith.constant 4 : index
      %c14_402 = arith.constant 14 : index
      %863 = memref.load %arg4[%c4_401, %c14_402] : memref<9x16xf32, #tpu.memory_space<smem>>
      %864 = vector.broadcast %863 : f32 to vector<16x256xf32>
      %865 = arith.mulf %53, %864 : vector<16x256xf32>
      %866 = arith.addf %862, %865 : vector<16x256xf32>
      %c5_403 = arith.constant 5 : index
      %c14_404 = arith.constant 14 : index
      %867 = memref.load %arg4[%c5_403, %c14_404] : memref<9x16xf32, #tpu.memory_space<smem>>
      %868 = vector.broadcast %867 : f32 to vector<16x256xf32>
      %869 = arith.mulf %56, %868 : vector<16x256xf32>
      %870 = arith.addf %866, %869 : vector<16x256xf32>
      %c6_405 = arith.constant 6 : index
      %c14_406 = arith.constant 14 : index
      %871 = memref.load %arg4[%c6_405, %c14_406] : memref<9x16xf32, #tpu.memory_space<smem>>
      %872 = vector.broadcast %871 : f32 to vector<16x256xf32>
      %873 = arith.mulf %59, %872 : vector<16x256xf32>
      %874 = arith.addf %870, %873 : vector<16x256xf32>
      %c7_407 = arith.constant 7 : index
      %c14_408 = arith.constant 14 : index
      %875 = memref.load %arg4[%c7_407, %c14_408] : memref<9x16xf32, #tpu.memory_space<smem>>
      %876 = vector.broadcast %875 : f32 to vector<16x256xf32>
      %877 = arith.mulf %60, %876 : vector<16x256xf32>
      %878 = arith.addf %874, %877 : vector<16x256xf32>
      %c8_409 = arith.constant 8 : index
      %c14_410 = arith.constant 14 : index
      %879 = memref.load %arg4[%c8_409, %c14_410] : memref<9x16xf32, #tpu.memory_space<smem>>
      %880 = vector.broadcast %879 : f32 to vector<16x256xf32>
      %881 = arith.mulf %63, %880 : vector<16x256xf32>
      %882 = arith.addf %878, %881 : vector<16x256xf32>
      %883 = vector.extract_strided_slice %21 {offsets = [0, 14], sizes = [16, 1], strides = [1, 1]} : vector<16x16xf32> to vector<16x1xf32>
      %884 = vector.broadcast %883 : vector<16x1xf32> to vector<16x256xf32>
      %885 = arith.addf %882, %884 : vector<16x256xf32>
      %886 = arith.mulf %885, %885 : vector<16x256xf32>
      %887 = arith.mulf %885, %886 : vector<16x256xf32>
      %cst_411 = arith.constant 4.471500e-02 : f32
      %888 = vector.broadcast %cst_411 : f32 to vector<16x256xf32>
      %889 = arith.mulf %888, %887 : vector<16x256xf32>
      %890 = arith.addf %885, %889 : vector<16x256xf32>
      %cst_412 = arith.constant 0.797884583 : f32
      %891 = vector.broadcast %cst_412 : f32 to vector<16x256xf32>
      %892 = arith.mulf %891, %890 : vector<16x256xf32>
      %893 = math.tanh %892 : vector<16x256xf32>
      %cst_413 = arith.constant 1.000000e+00 : f32
      %894 = vector.broadcast %cst_413 : f32 to vector<16x256xf32>
      %895 = arith.addf %894, %893 : vector<16x256xf32>
      %cst_414 = arith.constant 5.000000e-01 : f32
      %896 = vector.broadcast %cst_414 : f32 to vector<16x256xf32>
      %897 = arith.mulf %896, %895 : vector<16x256xf32>
      %898 = arith.mulf %885, %897 : vector<16x256xf32>
      %c0_415 = arith.constant 0 : index
      %c14_416 = arith.constant 14 : index
      %c0_417 = arith.constant 0 : index
      %c0_418 = arith.constant 0 : index
      %899 = vector.load %arg8[%c0_415, %c14_416, %c0_417, %c0_418] : memref<1x16x16x256xf32, #tpu.memory_space<vmem>>, vector<1x1x16x256xf32>
      %900 = vector.shape_cast %899 : vector<1x1x16x256xf32> to vector<16x256xf32>
      %901 = vector.shape_cast %898 : vector<16x256xf32> to vector<1x1x16x256xf32>
      tpu.vector_store %arg8[%c0_415, %c14_416, %c0_417, %c0_418], %901 {strides = array<i32>} : memref<1x16x16x256xf32, #tpu.memory_space<vmem>>, vector<1x1x16x256xf32>,
      %902 = arith.truncf %898 : vector<16x256xf32> to vector<16x256xbf16>
      %c0_419 = arith.constant 0 : index
      %c3584 = arith.constant 3584 : index
      %903 = vector.load %arg10[%c0_419, %c3584] : memref<16x4096xbf16, #tpu.memory_space<vmem>>, vector<16x256xbf16>
      tpu.vector_store %arg10[%c0_419, %c3584], %902 {strides = array<i32>} : memref<16x4096xbf16, #tpu.memory_space<vmem>>, vector<16x256xbf16>,
      %c0_420 = arith.constant 0 : index
      %c15 = arith.constant 15 : index
      %904 = memref.load %arg4[%c0_420, %c15] : memref<9x16xf32, #tpu.memory_space<smem>>
      %905 = vector.broadcast %904 : f32 to vector<16x256xf32>
      %906 = arith.mulf %45, %905 : vector<16x256xf32>
      %c1_421 = arith.constant 1 : index
      %c15_422 = arith.constant 15 : index
      %907 = memref.load %arg4[%c1_421, %c15_422] : memref<9x16xf32, #tpu.memory_space<smem>>
      %908 = vector.broadcast %907 : f32 to vector<16x256xf32>
      %909 = arith.mulf %46, %908 : vector<16x256xf32>
      %910 = arith.addf %906, %909 : vector<16x256xf32>
      %c2_423 = arith.constant 2 : index
      %c15_424 = arith.constant 15 : index
      %911 = memref.load %arg4[%c2_423, %c15_424] : memref<9x16xf32, #tpu.memory_space<smem>>
      %912 = vector.broadcast %911 : f32 to vector<16x256xf32>
      %913 = arith.mulf %49, %912 : vector<16x256xf32>
      %914 = arith.addf %910, %913 : vector<16x256xf32>
      %c3_425 = arith.constant 3 : index
      %c15_426 = arith.constant 15 : index
      %915 = memref.load %arg4[%c3_425, %c15_426] : memref<9x16xf32, #tpu.memory_space<smem>>
      %916 = vector.broadcast %915 : f32 to vector<16x256xf32>
      %917 = arith.mulf %52, %916 : vector<16x256xf32>
      %918 = arith.addf %914, %917 : vector<16x256xf32>
      %c4_427 = arith.constant 4 : index
      %c15_428 = arith.constant 15 : index
      %919 = memref.load %arg4[%c4_427, %c15_428] : memref<9x16xf32, #tpu.memory_space<smem>>
      %920 = vector.broadcast %919 : f32 to vector<16x256xf32>
      %921 = arith.mulf %53, %920 : vector<16x256xf32>
      %922 = arith.addf %918, %921 : vector<16x256xf32>
      %c5_429 = arith.constant 5 : index
      %c15_430 = arith.constant 15 : index
      %923 = memref.load %arg4[%c5_429, %c15_430] : memref<9x16xf32, #tpu.memory_space<smem>>
      %924 = vector.broadcast %923 : f32 to vector<16x256xf32>
      %925 = arith.mulf %56, %924 : vector<16x256xf32>
      %926 = arith.addf %922, %925 : vector<16x256xf32>
      %c6_431 = arith.constant 6 : index
      %c15_432 = arith.constant 15 : index
      %927 = memref.load %arg4[%c6_431, %c15_432] : memref<9x16xf32, #tpu.memory_space<smem>>
      %928 = vector.broadcast %927 : f32 to vector<16x256xf32>
      %929 = arith.mulf %59, %928 : vector<16x256xf32>
      %930 = arith.addf %926, %929 : vector<16x256xf32>
      %c7_433 = arith.constant 7 : index
      %c15_434 = arith.constant 15 : index
      %931 = memref.load %arg4[%c7_433, %c15_434] : memref<9x16xf32, #tpu.memory_space<smem>>
      %932 = vector.broadcast %931 : f32 to vector<16x256xf32>
      %933 = arith.mulf %60, %932 : vector<16x256xf32>
      %934 = arith.addf %930, %933 : vector<16x256xf32>
      %c8_435 = arith.constant 8 : index
      %c15_436 = arith.constant 15 : index
      %935 = memref.load %arg4[%c8_435, %c15_436] : memref<9x16xf32, #tpu.memory_space<smem>>
      %936 = vector.broadcast %935 : f32 to vector<16x256xf32>
      %937 = arith.mulf %63, %936 : vector<16x256xf32>
      %938 = arith.addf %934, %937 : vector<16x256xf32>
      %939 = vector.extract_strided_slice %21 {offsets = [0, 15], sizes = [16, 1], strides = [1, 1]} : vector<16x16xf32> to vector<16x1xf32>
      %940 = vector.broadcast %939 : vector<16x1xf32> to vector<16x256xf32>
      %941 = arith.addf %938, %940 : vector<16x256xf32>
      %942 = arith.mulf %941, %941 : vector<16x256xf32>
      %943 = arith.mulf %941, %942 : vector<16x256xf32>
      %cst_437 = arith.constant 4.471500e-02 : f32
      %944 = vector.broadcast %cst_437 : f32 to vector<16x256xf32>
      %945 = arith.mulf %944, %943 : vector<16x256xf32>
      %946 = arith.addf %941, %945 : vector<16x256xf32>
      %cst_438 = arith.constant 0.797884583 : f32
      %947 = vector.broadcast %cst_438 : f32 to vector<16x256xf32>
      %948 = arith.mulf %947, %946 : vector<16x256xf32>
      %949 = math.tanh %948 : vector<16x256xf32>
      %cst_439 = arith.constant 1.000000e+00 : f32
      %950 = vector.broadcast %cst_439 : f32 to vector<16x256xf32>
      %951 = arith.addf %950, %949 : vector<16x256xf32>
      %cst_440 = arith.constant 5.000000e-01 : f32
      %952 = vector.broadcast %cst_440 : f32 to vector<16x256xf32>
      %953 = arith.mulf %952, %951 : vector<16x256xf32>
      %954 = arith.mulf %941, %953 : vector<16x256xf32>
      %c0_441 = arith.constant 0 : index
      %c15_442 = arith.constant 15 : index
      %c0_443 = arith.constant 0 : index
      %c0_444 = arith.constant 0 : index
      %955 = vector.load %arg8[%c0_441, %c15_442, %c0_443, %c0_444] : memref<1x16x16x256xf32, #tpu.memory_space<vmem>>, vector<1x1x16x256xf32>
      %956 = vector.shape_cast %955 : vector<1x1x16x256xf32> to vector<16x256xf32>
      %957 = vector.shape_cast %954 : vector<16x256xf32> to vector<1x1x16x256xf32>
      tpu.vector_store %arg8[%c0_441, %c15_442, %c0_443, %c0_444], %957 {strides = array<i32>} : memref<1x16x16x256xf32, #tpu.memory_space<vmem>>, vector<1x1x16x256xf32>,
      %958 = arith.truncf %954 : vector<16x256xf32> to vector<16x256xbf16>
      %c0_445 = arith.constant 0 : index
      %c3840 = arith.constant 3840 : index
      %959 = vector.load %arg10[%c0_445, %c3840] : memref<16x4096xbf16, #tpu.memory_space<vmem>>, vector<16x256xbf16>
      tpu.vector_store %arg10[%c0_445, %c3840], %958 {strides = array<i32>} : memref<16x4096xbf16, #tpu.memory_space<vmem>>, vector<16x256xbf16>,
    } else {
    }
    %c0 = arith.constant 0 : index
    %c0_1 = arith.constant 0 : index
    %3 = vector.load %arg10[%c0, %c0_1] : memref<16x4096xbf16, #tpu.memory_space<vmem>>, vector<16x4096xbf16>
    %c0_2 = arith.constant 0 : index
    %c0_3 = arith.constant 0 : index
    %4 = vector.load %arg6[%c0_2, %c0_3] : memref<4096x256xbf16, #tpu.memory_space<vmem>>, vector<4096x256xbf16>
    %cst = arith.constant dense<0.000000e+00> : vector<16x256xf32>
    %5 = tpu.matmul %3, %4, %cst {dimension_numbers = #tpu.dot_dimension_numbers<[1], [0], [0], [1], [0, 0, 1, 1], [], []>} : vector<16x4096xbf16>, vector<4096x256xbf16>, vector<16x256xf32> -> vector<16x256xf32>
    %c0_4 = arith.constant 0 : index
    %c0_5 = arith.constant 0 : index
    %6 = vector.load %arg7[%c0_4, %c0_5] : memref<1x256xf32, #tpu.memory_space<vmem>>, vector<1x256xf32>
    %7 = vector.broadcast %6 : vector<1x256xf32> to vector<16x256xf32>
    %8 = arith.addf %5, %7 : vector<16x256xf32>
    %cst_6 = arith.constant 0.000000e+00 : f32
    %9 = vector.broadcast %cst_6 : f32 to vector<16x256xf32>
    %10 = arith.cmpf ogt, %8, %9 : vector<16x256xf32>
    %cst_7 = arith.constant 1.000000e+00 : f32
    %11 = vector.broadcast %cst_7 : f32 to vector<16x256xf32>
    %12 = arith.addf %8, %11 : vector<16x256xf32>
    %13 = math.exp %8 : vector<16x256xf32>
    %14 = arith.select %10, %12, %13 : vector<16x256xi1>, vector<16x256xf32>
    %c0_8 = arith.constant 0 : index
    %c0_9 = arith.constant 0 : index
    %c0_10 = arith.constant 0 : index
    %15 = vector.load %arg9[%c0_8, %c0_9, %c0_10] : memref<1x16x256xf32, #tpu.memory_space<vmem>>, vector<1x16x256xf32>
    %16 = vector.shape_cast %15 : vector<1x16x256xf32> to vector<16x256xf32>
    %17 = vector.shape_cast %14 : vector<16x256xf32> to vector<1x16x256xf32>
    tpu.vector_store %arg9[%c0_8, %c0_9, %c0_10], %17 {strides = array<i32>} : memref<1x16x256xf32, #tpu.memory_space<vmem>>, vector<1x16x256xf32>,
    return
  }
  func.func @transform_0(%arg0: i32, %arg1: i32, %arg2: i32) -> (i32, i32, i32) {
    %c0_i32 = arith.constant 0 : i32
    %c0_i32_0 = arith.constant 0 : i32
    return %arg0, %arg1, %c0_i32 : i32, i32, i32
  }
  func.func @transform_1(%arg0: i32, %arg1: i32, %arg2: i32) -> (i32, i32) {
    %c0_i32 = arith.constant 0 : i32
    %c0_i32_0 = arith.constant 0 : i32
    %c0_i32_1 = arith.constant 0 : i32
    return %c0_i32, %c0_i32_0 : i32, i32
  }
  func.func @transform_2(%arg0: i32, %arg1: i32, %arg2: i32) -> (i32, i32, i32) {
    %c0_i32 = arith.constant 0 : i32
    %c0_i32_0 = arith.constant 0 : i32
    return %arg0, %arg1, %c0_i32 : i32, i32, i32
  }
  func.func @transform_3(%arg0: i32, %arg1: i32, %arg2: i32) -> (i32, i32) {
    %c0_i32 = arith.constant 0 : i32
    %c0_i32_0 = arith.constant 0 : i32
    return %c0_i32, %arg2 : i32, i32
  }
  func.func @transform_4(%arg0: i32, %arg1: i32, %arg2: i32) -> (i32, i32) {
    %c0_i32 = arith.constant 0 : i32
    %c0_i32_0 = arith.constant 0 : i32
    return %c0_i32, %arg2 : i32, i32
  }
  func.func @transform_5(%arg0: i32, %arg1: i32, %arg2: i32) -> (i32, i32, i32, i32) {
    %c0_i32 = arith.constant 0 : i32
    %c0_i32_0 = arith.constant 0 : i32
    %c0_i32_1 = arith.constant 0 : i32
    return %arg0, %c0_i32, %arg1, %c0_i32_0 : i32, i32, i32, i32
  }
  func.func @transform_6(%arg0: i32, %arg1: i32, %arg2: i32) -> (i32, i32, i32) {
    %c0_i32 = arith.constant 0 : i32
    return %arg0, %arg1, %arg2 : i32, i32, i32
  }
}

</mosaic_0001>

<llo_original>
// kernel: squeeze.1
$region0: #{squeeze.1}
  %s0 = inlined_call_operand.hbm [shape: f32[2,1,16,16,16], index: 0, kind: input, shape index: {}]
  %s1 = inlined_call_operand.vmem [shape: f32[2,16,256], index: 1, kind: output, shape index: {}]
  $region1: #{squeeze.1} parent=0
    #allocation0 [shape = 'u8[262144]{0}', space=vmem, size = 0x40000, scoped, tag = 'operand span for operand 0']
    #allocation1 [shape = 's32[1]{0}', space=sflag, size = 0x4, scoped, tag = 'scoped memory for squeeze.1']
    %2 = vsyncpa [#allocation1], 0
    %4 = vsyncadd [#allocation1], 0
    %s6 = sshll.u32 %s0, 4
    %s7 = int_to_ptr.hbm [resolvable:$true] %s6
    %s8 = sshll.u32 [#allocation0], 4
    %s9 = int_to_ptr.vmem [resolvable:$true] %s8
    %11 = dma.hbm_to_vmem [thread:$0]  %s7, 8192, %s9, [#allocation1]
    %13 = dma.done [#allocation1], 8192
    %v14 = vld [vmem:[#allocation0] ss:$8 sm:$0xf]
    %v15 = vld [vmem:[#allocation0] ss:$8 sm:$0xf0]
    %vm16 = vcmask 1047556
    %v17 = vsel %vm16, %v15, %v14
    %vm18 = vcmask 130048
    %19 = vst.msk [vmem:[%s1] ss:$8 sm:$0x3] %vm18, %v17
    %s20 = scalar_lea.vmem %s1, 4294967281
    %21 = vst.msk [vmem:[%s20] ss:$8 sm:$0xc] %vm18, %v17
    %s22 = scalar_lea.vmem %s1, 4294967266
    %23 = vst.msk [vmem:[%s22] ss:$8 sm:$0x30] %vm18, %v17
    %s24 = scalar_lea.vmem %s1, 4294967251
    %25 = vst.msk [vmem:[%s24] ss:$8 sm:$0xc0] %vm18, %v17
    %s26 = scalar_lea.vmem [#allocation0], 64
    %v27 = vld [vmem:[%s26] ss:$8 sm:$0xf]
    %s28 = scalar_lea.vmem [#allocation0], 64
    %v29 = vld [vmem:[%s28] ss:$8 sm:$0xf0]
    %vm30 = vcmask 1047556
    %v31 = vsel %vm30, %v29, %v27
    %vm32 = vcmask 130048
    %s33 = scalar_lea.vmem %s1, 4
    %34 = vst.msk [vmem:[%s33] ss:$8 sm:$0x3] %vm32, %v31
    %s35 = scalar_lea.vmem %s1, 4294967285
    %36 = vst.msk [vmem:[%s35] ss:$8 sm:$0xc] %vm32, %v31
    %s37 = scalar_lea.vmem %s1, 4294967270
    %38 = vst.msk [vmem:[%s37] ss:$8 sm:$0x30] %vm32, %v31
    %s39 = scalar_lea.vmem %s1, 4294967255
    %40 = vst.msk [vmem:[%s39] ss:$8 sm:$0xc0] %vm32, %v31
    %s41 = scalar_lea.vmem [#allocation0], 128
    %v42 = vld [vmem:[%s41] ss:$8 sm:$0xf]
    %s43 = scalar_lea.vmem [#allocation0], 128
    %v44 = vld [vmem:[%s43] ss:$8 sm:$0xf0]
    %vm45 = vcmask 1047556
    %v46 = vsel %vm45, %v44, %v42
    %vm47 = vcmask 130048
    %s48 = scalar_lea.vmem %s1, 16
    %49 = vst.msk [vmem:[%s48] ss:$8 sm:$0x3] %vm47, %v46
    %s50 = scalar_lea.vmem %s1, 1
    %51 = vst.msk [vmem:[%s50] ss:$8 sm:$0xc] %vm47, %v46
    %s52 = scalar_lea.vmem %s1, 4294967282
    %53 = vst.msk [vmem:[%s52] ss:$8 sm:$0x30] %vm47, %v46
    %s54 = scalar_lea.vmem %s1, 4294967267
    %55 = vst.msk [vmem:[%s54] ss:$8 sm:$0xc0] %vm47, %v46
    %s56 = scalar_lea.vmem [#allocation0], 192
    %v57 = vld [vmem:[%s56] ss:$8 sm:$0xf]
    %s58 = scalar_lea.vmem [#allocation0], 192
    %v59 = vld [vmem:[%s58] ss:$8 sm:$0xf0]
    %vm60 = vcmask 1047556
    %v61 = vsel %vm60, %v59, %v57
    %vm62 = vcmask 130048
    %s63 = scalar_lea.vmem %s1, 20
    %64 = vst.msk [vmem:[%s63] ss:$8 sm:$0x3] %vm62, %v61
    %s65 = scalar_lea.vmem %s1, 5
    %66 = vst.msk [vmem:[%s65] ss:$8 sm:$0xc] %vm62, %v61
    %s67 = scalar_lea.vmem %s1, 4294967286
    %68 = vst.msk [vmem:[%s67] ss:$8 sm:$0x30] %vm62, %v61
    %s69 = scalar_lea.vmem %s1, 4294967271
    %70 = vst.msk [vmem:[%s69] ss:$8 sm:$0xc0] %vm62, %v61
    %s71 = scalar_lea.vmem [#allocation0], 256
    %v72 = vld [vmem:[%s71] ss:$8 sm:$0xf]
    %s73 = scalar_lea.vmem [#allocation0], 256
    %v74 = vld [vmem:[%s73] ss:$8 sm:$0xf0]
    %vm75 = vcmask 1047556
    %v76 = vsel %vm75, %v74, %v72
    %vm77 = vcmask 130048
    %s78 = scalar_lea.vmem %s1, 32
    %79 = vst.msk [vmem:[%s78] ss:$8 sm:$0x3] %vm77, %v76
    %s80 = scalar_lea.vmem %s1, 17
    %81 = vst.msk [vmem:[%s80] ss:$8 sm:$0xc] %vm77, %v76
    %s82 = scalar_lea.vmem %s1, 2
    %83 = vst.msk [vmem:[%s82] ss:$8 sm:$0x30] %vm77, %v76
    %s84 = scalar_lea.vmem %s1, 4294967283
    %85 = vst.msk [vmem:[%s84] ss:$8 sm:$0xc0] %vm77, %v76
    %s86 = scalar_lea.vmem [#allocation0], 320
    %v87 = vld [vmem:[%s86] ss:$8 sm:$0xf]
    %s88 = scalar_lea.vmem [#allocation0], 320
    %v89 = vld [vmem:[%s88] ss:$8 sm:$0xf0]
    %vm90 = vcmask 1047556
    %v91 = vsel %vm90, %v89, %v87
    %vm92 = vcmask 130048
    %s93 = scalar_lea.vmem %s1, 36
    %94 = vst.msk [vmem:[%s93] ss:$8 sm:$0x3] %vm92, %v91
    %s95 = scalar_lea.vmem %s1, 21
    %96 = vst.msk [vmem:[%s95] ss:$8 sm:$0xc] %vm92, %v91
    %s97 = scalar_lea.vmem %s1, 6
    %98 = vst.msk [vmem:[%s97] ss:$8 sm:$0x30] %vm92, %v91
    %s99 = scalar_lea.vmem %s1, 4294967287
    %100 = vst.msk [vmem:[%s99] ss:$8 sm:$0xc0] %vm92, %v91
    %s101 = scalar_lea.vmem [#allocation0], 384
    %v102 = vld [vmem:[%s101] ss:$8 sm:$0xf]
    %s103 = scalar_lea.vmem [#allocation0], 384
    %v104 = vld [vmem:[%s103] ss:$8 sm:$0xf0]
    %vm105 = vcmask 1047556
    %v106 = vsel %vm105, %v104, %v102
    %vm107 = vcmask 130048
    %s108 = scalar_lea.vmem %s1, 48
    %109 = vst.msk [vmem:[%s108] ss:$8 sm:$0x3] %vm107, %v106
    %s110 = scalar_lea.vmem %s1, 33
    %111 = vst.msk [vmem:[%s110] ss:$8 sm:$0xc] %vm107, %v106
    %s112 = scalar_lea.vmem %s1, 18
    %113 = vst.msk [vmem:[%s112] ss:$8 sm:$0x30] %vm107, %v106
    %s114 = scalar_lea.vmem %s1, 3
    %115 = vst.msk [vmem:[%s114] ss:$8 sm:$0xc0] %vm107, %v106
    %s116 = scalar_lea.vmem [#allocation0], 448
    %v117 = vld [vmem:[%s116] ss:$8 sm:$0xf]
    %s118 = scalar_lea.vmem [#allocation0], 448
    %v119 = vld [vmem:[%s118] ss:$8 sm:$0xf0]
    %vm120 = vcmask 1047556
    %v121 = vsel %vm120, %v119, %v117
    %vm122 = vcmask 130048
    %s123 = scalar_lea.vmem %s1, 52
    %124 = vst.msk [vmem:[%s123] ss:$8 sm:$0x3] %vm122, %v121
    %s125 = scalar_lea.vmem %s1, 37
    %126 = vst.msk [vmem:[%s125] ss:$8 sm:$0xc] %vm122, %v121
    %s127 = scalar_lea.vmem %s1, 22
    %128 = vst.msk [vmem:[%s127] ss:$8 sm:$0x30] %vm122, %v121
    %s129 = scalar_lea.vmem %s1, 7
    %130 = vst.msk [vmem:[%s129] ss:$8 sm:$0xc0] %vm122, %v121
    %s131 = scalar_lea.vmem [#allocation0], 7
    %s132 = smov 3
    %v133 = vld [vmem:[%s131] ss:$16 sm:%s132]
    %s134 = scalar_lea.vmem [#allocation0], 7
    %s135 = smov 12
    %v136 = vld [vmem:[%s134] ss:$16 sm:%s135]
    %vm137 = vcmask 1043458
    %v138 = vsel %vm137, %v136, %v133
    %s139 = scalar_lea.vmem [#allocation0], 7
    %s140 = smov 48
    %v141 = vld [vmem:[%s139] ss:$16 sm:%s140]
    %vm142 = vcmask 1045508
    %v143 = vsel %vm142, %v141, %v138
    %s144 = scalar_lea.vmem [#allocation0], 7
    %s145 = smov 192
    %v146 = vld [vmem:[%s144] ss:$16 sm:%s145]
    %vm147 = vcmask 1047558
    %v148 = vsel %vm147, %v146, %v143
    %149 = vrot.lane.b32.xlu0 %v148, 112
    %v150 = vpop.permute.xlu0 %149
    %vm151 = vcmask 1048448
    %152 = vst.msk [vmem:[%s1] sm:$0xff] %vm151, %v150
    %s153 = scalar_lea.vmem [#allocation0], 263
    %s154 = smov 3
    %v155 = vld [vmem:[%s153] ss:$16 sm:%s154]
    %s156 = scalar_lea.vmem [#allocation0], 263
    %s157 = smov 12
    %v158 = vld [vmem:[%s156] ss:$16 sm:%s157]
    %vm159 = vcmask 1043458
    %v160 = vsel %vm159, %v158, %v155
    %s161 = scalar_lea.vmem [#allocation0], 263
    %s162 = smov 48
    %v163 = vld [vmem:[%s161] ss:$16 sm:%s162]
    %vm164 = vcmask 1045508
    %v165 = vsel %vm164, %v163, %v160
    %s166 = scalar_lea.vmem [#allocation0], 263
    %s167 = smov 192
    %v168 = vld [vmem:[%s166] ss:$16 sm:%s167]
    %vm169 = vcmask 1047558
    %v170 = vsel %vm169, %v168, %v165
    %171 = vrot.lane.b32.xlu0 %v170, 112
    %v172 = vpop.permute.xlu0 %171
    %vm173 = vcmask 1048448
    %s174 = scalar_lea.vmem %s1, 32
    %175 = vst.msk [vmem:[%s174] sm:$0xff] %vm173, %v172
    %s176 = scalar_lea.vmem [#allocation0], 15
    %s177 = smov 3
    %v178 = vld [vmem:[%s176] ss:$16 sm:%s177]
    %s179 = scalar_lea.vmem [#allocation0], 15
    %s180 = smov 12
    %v181 = vld [vmem:[%s179] ss:$16 sm:%s180]
    %vm182 = vcmask 1043458
    %v183 = vsel %vm182, %v181, %v178
    %s184 = scalar_lea.vmem [#allocation0], 15
    %s185 = smov 48
    %v186 = vld [vmem:[%s184] ss:$16 sm:%s185]
    %vm187 = vcmask 1045508
    %v188 = vsel %vm187, %v186, %v183
    %s189 = scalar_lea.vmem [#allocation0], 15
    %s190 = smov 192
    %v191 = vld [vmem:[%s189] ss:$16 sm:%s190]
    %vm192 = vcmask 1047558
    %v193 = vsel %vm192, %v191, %v188
    %194 = vrot.lane.b32.xlu0 %v193, 112
    %v195 = vpop.permute.xlu0 %194
    %vm196 = vcmask 1048448
    %s197 = scalar_lea.vmem %s1, 8
    %198 = vst.msk [vmem:[%s197] sm:$0xff] %vm196, %v195
    %s199 = scalar_lea.vmem [#allocation0], 271
    %s200 = smov 3
    %v201 = vld [vmem:[%s199] ss:$16 sm:%s200]
    %s202 = scalar_lea.vmem [#allocation0], 271
    %s203 = smov 12
    %v204 = vld [vmem:[%s202] ss:$16 sm:%s203]
    %vm205 = vcmask 1043458
    %v206 = vsel %vm205, %v204, %v201
    %s207 = scalar_lea.vmem [#allocation0], 271
    %s208 = smov 48
    %v209 = vld [vmem:[%s207] ss:$16 sm:%s208]
    %vm210 = vcmask 1045508
    %v211 = vsel %vm210, %v209, %v206
    %s212 = scalar_lea.vmem [#allocation0], 271
    %s213 = smov 192
    %v214 = vld [vmem:[%s212] ss:$16 sm:%s213]
    %vm215 = vcmask 1047558
    %v216 = vsel %vm215, %v214, %v211
    %217 = vrot.lane.b32.xlu0 %v216, 112
    %v218 = vpop.permute.xlu0 %217
    %vm219 = vcmask 1048448
    %s220 = scalar_lea.vmem %s1, 40
    %221 = vst.msk [vmem:[%s220] sm:$0xff] %vm219, %v218
    %s222 = scalar_lea.vmem [#allocation0], 135
    %s223 = smov 3
    %v224 = vld [vmem:[%s222] ss:$16 sm:%s223]
    %s225 = scalar_lea.vmem [#allocation0], 135
    %s226 = smov 12
    %v227 = vld [vmem:[%s225] ss:$16 sm:%s226]
    %vm228 = vcmask 1043458
    %v229 = vsel %vm228, %v227, %v224
    %s230 = scalar_lea.vmem [#allocation0], 135
    %s231 = smov 48
    %v232 = vld [vmem:[%s230] ss:$16 sm:%s231]
    %vm233 = vcmask 1045508
    %v234 = vsel %vm233, %v232, %v229
    %s235 = scalar_lea.vmem [#allocation0], 135
    %s236 = smov 192
    %v237 = vld [vmem:[%s235] ss:$16 sm:%s236]
    %vm238 = vcmask 1047558
    %v239 = vsel %vm238, %v237, %v234
    %240 = vrot.lane.b32.xlu0 %v239, 112
    %v241 = vpop.permute.xlu0 %240
    %vm242 = vcmask 1048448
    %s243 = scalar_lea.vmem %s1, 16
    %244 = vst.msk [vmem:[%s243] sm:$0xff] %vm242, %v241
    %s245 = scalar_lea.vmem [#allocation0], 391
    %s246 = smov 3
    %v247 = vld [vmem:[%s245] ss:$16 sm:%s246]
    %s248 = scalar_lea.vmem [#allocation0], 391
    %s249 = smov 12
    %v250 = vld [vmem:[%s248] ss:$16 sm:%s249]
    %vm251 = vcmask 1043458
    %v252 = vsel %vm251, %v250, %v247
    %s253 = scalar_lea.vmem [#allocation0], 391
    %s254 = smov 48
    %v255 = vld [vmem:[%s253] ss:$16 sm:%s254]
    %vm256 = vcmask 1045508
    %v257 = vsel %vm256, %v255, %v252
    %s258 = scalar_lea.vmem [#allocation0], 391
    %s259 = smov 192
    %v260 = vld [vmem:[%s258] ss:$16 sm:%s259]
    %vm261 = vcmask 1047558
    %v262 = vsel %vm261, %v260, %v257
    %263 = vrot.lane.b32.xlu0 %v262, 112
    %v264 = vpop.permute.xlu0 %263
    %vm265 = vcmask 1048448
    %s266 = scalar_lea.vmem %s1, 48
    %267 = vst.msk [vmem:[%s266] sm:$0xff] %vm265, %v264
    %s268 = scalar_lea.vmem [#allocation0], 143
    %s269 = smov 3
    %v270 = vld [vmem:[%s268] ss:$16 sm:%s269]
    %s271 = scalar_lea.vmem [#allocation0], 143
    %s272 = smov 12
    %v273 = vld [vmem:[%s271] ss:$16 sm:%s272]
    %vm274 = vcmask 1043458
    %v275 = vsel %vm274, %v273, %v270
    %s276 = scalar_lea.vmem [#allocation0], 143
    %s277 = smov 48
    %v278 = vld [vmem:[%s276] ss:$16 sm:%s277]
    %vm279 = vcmask 1045508
    %v280 = vsel %vm279, %v278, %v275
    %s281 = scalar_lea.vmem [#allocation0], 143
    %s282 = smov 192
    %v283 = vld [vmem:[%s281] ss:$16 sm:%s282]
    %vm284 = vcmask 1047558
    %v285 = vsel %vm284, %v283, %v280
    %286 = vrot.lane.b32.xlu0 %v285, 112
    %v287 = vpop.permute.xlu0 %286
    %vm288 = vcmask 1048448
    %s289 = scalar_lea.vmem %s1, 24
    %290 = vst.msk [vmem:[%s289] sm:$0xff] %vm288, %v287
    %s291 = scalar_lea.vmem [#allocation0], 399
    %s292 = smov 3
    %v293 = vld [vmem:[%s291] ss:$16 sm:%s292]
    %s294 = scalar_lea.vmem [#allocation0], 399
    %s295 = smov 12
    %v296 = vld [vmem:[%s294] ss:$16 sm:%s295]
    %vm297 = vcmask 1043458
    %v298 = vsel %vm297, %v296, %v293
    %s299 = scalar_lea.vmem [#allocation0], 399
    %s300 = smov 48
    %v301 = vld [vmem:[%s299] ss:$16 sm:%s300]
    %vm302 = vcmask 1045508
    %v303 = vsel %vm302, %v301, %v298
    %s304 = scalar_lea.vmem [#allocation0], 399
    %s305 = smov 192
    %v306 = vld [vmem:[%s304] ss:$16 sm:%s305]
    %vm307 = vcmask 1047558
    %v308 = vsel %vm307, %v306, %v303
    %309 = vrot.lane.b32.xlu0 %v308, 112
    %v310 = vpop.permute.xlu0 %309
    %vm311 = vcmask 1048448
    %s312 = scalar_lea.vmem %s1, 56
    %313 = vst.msk [vmem:[%s312] sm:$0xff] %vm311, %v310
    %s314 = scalar_lea.vmem [#allocation0], 6
    %s315 = smov 3
    %v316 = vld [vmem:[%s314] ss:$16 sm:%s315]
    %s317 = scalar_lea.vmem [#allocation0], 6
    %s318 = smov 12
    %v319 = vld [vmem:[%s317] ss:$16 sm:%s318]
    %vm320 = vcmask 1043458
    %v321 = vsel %vm320, %v319, %v316
    %s322 = scalar_lea.vmem [#allocation0], 6
    %s323 = smov 48
    %v324 = vld [vmem:[%s322] ss:$16 sm:%s323]
    %vm325 = vcmask 1045508
    %v326 = vsel %vm325, %v324, %v321
    %s327 = scalar_lea.vmem [#allocation0], 6
    %s328 = smov 192
    %v329 = vld [vmem:[%s327] ss:$16 sm:%s328]
    %vm330 = vcmask 1047558
    %v331 = vsel %vm330, %v329, %v326
    %332 = vrot.lane.b32.xlu0 %v331, 96
    %v333 = vpop.permute.xlu0 %332
    %vm334 = vcmask 917248
    %335 = vst.msk [vmem:[%s1] sm:$0xff] %vm334, %v333
    %s336 = scalar_lea.vmem [#allocation0], 262
    %s337 = smov 3
    %v338 = vld [vmem:[%s336] ss:$16 sm:%s337]
    %s339 = scalar_lea.vmem [#allocation0], 262
    %s340 = smov 12
    %v341 = vld [vmem:[%s339] ss:$16 sm:%s340]
    %vm342 = vcmask 1043458
    %v343 = vsel %vm342, %v341, %v338
    %s344 = scalar_lea.vmem [#allocation0], 262
    %s345 = smov 48
    %v346 = vld [vmem:[%s344] ss:$16 sm:%s345]
    %vm347 = vcmask 1045508
    %v348 = vsel %vm347, %v346, %v343
    %s349 = scalar_lea.vmem [#allocation0], 262
    %s350 = smov 192
    %v351 = vld [vmem:[%s349] ss:$16 sm:%s350]
    %vm352 = vcmask 1047558
    %v353 = vsel %vm352, %v351, %v348
    %354 = vrot.lane.b32.xlu0 %v353, 96
    %v355 = vpop.permute.xlu0 %354
    %vm356 = vcmask 917248
    %s357 = scalar_lea.vmem %s1, 32
    %358 = vst.msk [vmem:[%s357] sm:$0xff] %vm356, %v355
    %s359 = scalar_lea.vmem [#allocation0], 14
    %s360 = smov 3
    %v361 = vld [vmem:[%s359] ss:$16 sm:%s360]
    %s362 = scalar_lea.vmem [#allocation0], 14
    %s363 = smov 12
    %v364 = vld [vmem:[%s362] ss:$16 sm:%s363]
    %vm365 = vcmask 1043458
    %v366 = vsel %vm365, %v364, %v361
    %s367 = scalar_lea.vmem [#allocation0], 14
    %s368 = smov 48
    %v369 = vld [vmem:[%s367] ss:$16 sm:%s368]
    %vm370 = vcmask 1045508
    %v371 = vsel %vm370, %v369, %v366
    %s372 = scalar_lea.vmem [#allocation0], 14
    %s373 = smov 192
    %v374 = vld [vmem:[%s372] ss:$16 sm:%s373]
    %vm375 = vcmask 1047558
    %v376 = vsel %vm375, %v374, %v371
    %377 = vrot.lane.b32.xlu0 %v376, 96
    %v378 = vpop.permute.xlu0 %377
    %vm379 = vcmask 917248
    %s380 = scalar_lea.vmem %s1, 8
    %381 = vst.msk [vmem:[%s380] sm:$0xff] %vm379, %v378
    %s382 = scalar_lea.vmem [#allocation0], 270
    %s383 = smov 3
    %v384 = vld [vmem:[%s382] ss:$16 sm:%s383]
    %s385 = scalar_lea.vmem [#allocation0], 270
    %s386 = smov 12
    %v387 = vld [vmem:[%s385] ss:$16 sm:%s386]
    %vm388 = vcmask 1043458
    %v389 = vsel %vm388, %v387, %v384
    %s390 = scalar_lea.vmem [#allocation0], 270
    %s391 = smov 48
    %v392 = vld [vmem:[%s390] ss:$16 sm:%s391]
    %vm393 = vcmask 1045508
    %v394 = vsel %vm393, %v392, %v389
    %s395 = scalar_lea.vmem [#allocation0], 270
    %s396 = smov 192
    %v397 = vld [vmem:[%s395] ss:$16 sm:%s396]
    %vm398 = vcmask 1047558
    %v399 = vsel %vm398, %v397, %v394
    %400 = vrot.lane.b32.xlu0 %v399, 96
    %v401 = vpop.permute.xlu0 %400
    %vm402 = vcmask 917248
    %s403 = scalar_lea.vmem %s1, 40
    %404 = vst.msk [vmem:[%s403] sm:$0xff] %vm402, %v401
    %s405 = scalar_lea.vmem [#allocation0], 134
    %s406 = smov 3
    %v407 = vld [vmem:[%s405] ss:$16 sm:%s406]
    %s408 = scalar_lea.vmem [#allocation0], 134
    %s409 = smov 12
    %v410 = vld [vmem:[%s408] ss:$16 sm:%s409]
    %vm411 = vcmask 1043458
    %v412 = vsel %vm411, %v410, %v407
    %s413 = scalar_lea.vmem [#allocation0], 134
    %s414 = smov 48
    %v415 = vld [vmem:[%s413] ss:$16 sm:%s414]
    %vm416 = vcmask 1045508
    %v417 = vsel %vm416, %v415, %v412
    %s418 = scalar_lea.vmem [#allocation0], 134
    %s419 = smov 192
    %v420 = vld [vmem:[%s418] ss:$16 sm:%s419]
    %vm421 = vcmask 1047558
    %v422 = vsel %vm421, %v420, %v417
    %423 = vrot.lane.b32.xlu0 %v422, 96
    %v424 = vpop.permute.xlu0 %423
    %vm425 = vcmask 917248
    %s426 = scalar_lea.vmem %s1, 16
    %427 = vst.msk [vmem:[%s426] sm:$0xff] %vm425, %v424
    %s428 = scalar_lea.vmem [#allocation0], 390
    %s429 = smov 3
    %v430 = vld [vmem:[%s428] ss:$16 sm:%s429]
    %s431 = scalar_lea.vmem [#allocation0], 390
    %s432 = smov 12
    %v433 = vld [vmem:[%s431] ss:$16 sm:%s432]
    %vm434 = vcmask 1043458
    %v435 = vsel %vm434, %v433, %v430
    %s436 = scalar_lea.vmem [#allocation0], 390
    %s437 = smov 48
    %v438 = vld [vmem:[%s436] ss:$16 sm:%s437]
    %vm439 = vcmask 1045508
    %v440 = vsel %vm439, %v438, %v435
    %s441 = scalar_lea.vmem [#allocation0], 390
    %s442 = smov 192
    %v443 = vld [vmem:[%s441] ss:$16 sm:%s442]
    %vm444 = vcmask 1047558
    %v445 = vsel %vm444, %v443, %v440
    %446 = vrot.lane.b32.xlu0 %v445, 96
    %v447 = vpop.permute.xlu0 %446
    %vm448 = vcmask 917248
    %s449 = scalar_lea.vmem %s1, 48
    %450 = vst.msk [vmem:[%s449] sm:$0xff] %vm448, %v447
    %s451 = scalar_lea.vmem [#allocation0], 142
    %s452 = smov 3
    %v453 = vld [vmem:[%s451] ss:$16 sm:%s452]
    %s454 = scalar_lea.vmem [#allocation0], 142
    %s455 = smov 12
    %v456 = vld [vmem:[%s454] ss:$16 sm:%s455]
    %vm457 = vcmask 1043458
    %v458 = vsel %vm457, %v456, %v453
    %s459 = scalar_lea.vmem [#allocation0], 142
    %s460 = smov 48
    %v461 = vld [vmem:[%s459] ss:$16 sm:%s460]
    %vm462 = vcmask 1045508
    %v463 = vsel %vm462, %v461, %v458
    %s464 = scalar_lea.vmem [#allocation0], 142
    %s465 = smov 192
    %v466 = vld [vmem:[%s464] ss:$16 sm:%s465]
    %vm467 = vcmask 1047558
    %v468 = vsel %vm467, %v466, %v463
    %469 = vrot.lane.b32.xlu0 %v468, 96
    %v470 = vpop.permute.xlu0 %469
    %vm471 = vcmask 917248
    %s472 = scalar_lea.vmem %s1, 24
    %473 = vst.msk [vmem:[%s472] sm:$0xff] %vm471, %v470
    %s474 = scalar_lea.vmem [#allocation0], 398
    %s475 = smov 3
    %v476 = vld [vmem:[%s474] ss:$16 sm:%s475]
    %s477 = scalar_lea.vmem [#allocation0], 398
    %s478 = smov 12
    %v479 = vld [vmem:[%s477] ss:$16 sm:%s478]
    %vm480 = vcmask 1043458
    %v481 = vsel %vm480, %v479, %v476
    %s482 = scalar_lea.vmem [#allocation0], 398
    %s483 = smov 48
    %v484 = vld [vmem:[%s482] ss:$16 sm:%s483]
    %vm485 = vcmask 1045508
    %v486 = vsel %vm485, %v484, %v481
    %s487 = scalar_lea.vmem [#allocation0], 398
    %s488 = smov 192
    %v489 = vld [vmem:[%s487] ss:$16 sm:%s488]
    %vm490 = vcmask 1047558
    %v491 = vsel %vm490, %v489, %v486
    %492 = vrot.lane.b32.xlu0 %v491, 96
    %v493 = vpop.permute.xlu0 %492
    %vm494 = vcmask 917248
    %s495 = scalar_lea.vmem %s1, 56
    %496 = vst.msk [vmem:[%s495] sm:$0xff] %vm494, %v493
    %s497 = scalar_lea.vmem [#allocation0], 5
    %s498 = smov 3
    %v499 = vld [vmem:[%s497] ss:$16 sm:%s498]
    %s500 = scalar_lea.vmem [#allocation0], 5
    %s501 = smov 12
    %v502 = vld [vmem:[%s500] ss:$16 sm:%s501]
    %vm503 = vcmask 1043458
    %v504 = vsel %vm503, %v502, %v499
    %s505 = scalar_lea.vmem [#allocation0], 5
    %s506 = smov 48
    %v507 = vld [vmem:[%s505] ss:$16 sm:%s506]
    %vm508 = vcmask 1045508
    %v509 = vsel %vm508, %v507, %v504
    %s510 = scalar_lea.vmem [#allocation0], 5
    %s511 = smov 192
    %v512 = vld [vmem:[%s510] ss:$16 sm:%s511]
    %vm513 = vcmask 1047558
    %v514 = vsel %vm513, %v512, %v509
    %515 = vrot.lane.b32.xlu0 %v514, 80
    %v516 = vpop.permute.xlu0 %515
    %vm517 = vcmask 786048
    %518 = vst.msk [vmem:[%s1] sm:$0xff] %vm517, %v516
    %s519 = scalar_lea.vmem [#allocation0], 261
    %s520 = smov 3
    %v521 = vld [vmem:[%s519] ss:$16 sm:%s520]
    %s522 = scalar_lea.vmem [#allocation0], 261
    %s523 = smov 12
    %v524 = vld [vmem:[%s522] ss:$16 sm:%s523]
    %vm525 = vcmask 1043458
    %v526 = vsel %vm525, %v524, %v521
    %s527 = scalar_lea.vmem [#allocation0], 261
    %s528 = smov 48
    %v529 = vld [vmem:[%s527] ss:$16 sm:%s528]
    %vm530 = vcmask 1045508
    %v531 = vsel %vm530, %v529, %v526
    %s532 = scalar_lea.vmem [#allocation0], 261
    %s533 = smov 192
    %v534 = vld [vmem:[%s532] ss:$16 sm:%s533]
    %vm535 = vcmask 1047558
    %v536 = vsel %vm535, %v534, %v531
    %537 = vrot.lane.b32.xlu0 %v536, 80
    %v538 = vpop.permute.xlu0 %537
    %vm539 = vcmask 786048
    %s540 = scalar_lea.vmem %s1, 32
    %541 = vst.msk [vmem:[%s540] sm:$0xff] %vm539, %v538
    %s542 = scalar_lea.vmem [#allocation0], 13
    %s543 = smov 3
    %v544 = vld [vmem:[%s542] ss:$16 sm:%s543]
    %s545 = scalar_lea.vmem [#allocation0], 13
    %s546 = smov 12
    %v547 = vld [vmem:[%s545] ss:$16 sm:%s546]
    %vm548 = vcmask 1043458
    %v549 = vsel %vm548, %v547, %v544
    %s550 = scalar_lea.vmem [#allocation0], 13
    %s551 = smov 48
    %v552 = vld [vmem:[%s550] ss:$16 sm:%s551]
    %vm553 = vcmask 1045508
    %v554 = vsel %vm553, %v552, %v549
    %s555 = scalar_lea.vmem [#allocation0], 13
    %s556 = smov 192
    %v557 = vld [vmem:[%s555] ss:$16 sm:%s556]
    %vm558 = vcmask 1047558
    %v559 = vsel %vm558, %v557, %v554
    %560 = vrot.lane.b32.xlu0 %v559, 80
    %v561 = vpop.permute.xlu0 %560
    %vm562 = vcmask 786048
    %s563 = scalar_lea.vmem %s1, 8
    %564 = vst.msk [vmem:[%s563] sm:$0xff] %vm562, %v561
    %s565 = scalar_lea.vmem [#allocation0], 269
    %s566 = smov 3
    %v567 = vld [vmem:[%s565] ss:$16 sm:%s566]
    %s568 = scalar_lea.vmem [#allocation0], 269
    %s569 = smov 12
    %v570 = vld [vmem:[%s568] ss:$16 sm:%s569]
    %vm571 = vcmask 1043458
    %v572 = vsel %vm571, %v570, %v567
    %s573 = scalar_lea.vmem [#allocation0], 269
    %s574 = smov 48
    %v575 = vld [vmem:[%s573] ss:$16 sm:%s574]
    %vm576 = vcmask 1045508
    %v577 = vsel %vm576, %v575, %v572
    %s578 = scalar_lea.vmem [#allocation0], 269
    %s579 = smov 192
    %v580 = vld [vmem:[%s578] ss:$16 sm:%s579]
    %vm581 = vcmask 1047558
    %v582 = vsel %vm581, %v580, %v577
    %583 = vrot.lane.b32.xlu0 %v582, 80
    %v584 = vpop.permute.xlu0 %583
    %vm585 = vcmask 786048
    %s586 = scalar_lea.vmem %s1, 40
    %587 = vst.msk [vmem:[%s586] sm:$0xff] %vm585, %v584
    %s588 = scalar_lea.vmem [#allocation0], 133
    %s589 = smov 3
    %v590 = vld [vmem:[%s588] ss:$16 sm:%s589]
    %s591 = scalar_lea.vmem [#allocation0], 133
    %s592 = smov 12
    %v593 = vld [vmem:[%s591] ss:$16 sm:%s592]
    %vm594 = vcmask 1043458
    %v595 = vsel %vm594, %v593, %v590
    %s596 = scalar_lea.vmem [#allocation0], 133
    %s597 = smov 48
    %v598 = vld [vmem:[%s596] ss:$16 sm:%s597]
    %vm599 = vcmask 1045508
    %v600 = vsel %vm599, %v598, %v595
    %s601 = scalar_lea.vmem [#allocation0], 133
    %s602 = smov 192
    %v603 = vld [vmem:[%s601] ss:$16 sm:%s602]
    %vm604 = vcmask 1047558
    %v605 = vsel %vm604, %v603, %v600
    %606 = vrot.lane.b32.xlu0 %v605, 80
    %v607 = vpop.permute.xlu0 %606
    %vm608 = vcmask 786048
    %s609 = scalar_lea.vmem %s1, 16
    %610 = vst.msk [vmem:[%s609] sm:$0xff] %vm608, %v607
    %s611 = scalar_lea.vmem [#allocation0], 389
    %s612 = smov 3
    %v613 = vld [vmem:[%s611] ss:$16 sm:%s612]
    %s614 = scalar_lea.vmem [#allocation0], 389
    %s615 = smov 12
    %v616 = vld [vmem:[%s614] ss:$16 sm:%s615]
    %vm617 = vcmask 1043458
    %v618 = vsel %vm617, %v616, %v613
    %s619 = scalar_lea.vmem [#allocation0], 389
    %s620 = smov 48
    %v621 = vld [vmem:[%s619] ss:$16 sm:%s620]
    %vm622 = vcmask 1045508
    %v623 = vsel %vm622, %v621, %v618
    %s624 = scalar_lea.vmem [#allocation0], 389
    %s625 = smov 192
    %v626 = vld [vmem:[%s624] ss:$16 sm:%s625]
    %vm627 = vcmask 1047558
    %v628 = vsel %vm627, %v626, %v623
    %629 = vrot.lane.b32.xlu0 %v628, 80
    %v630 = vpop.permute.xlu0 %629
    %vm631 = vcmask 786048
    %s632 = scalar_lea.vmem %s1, 48
    %633 = vst.msk [vmem:[%s632] sm:$0xff] %vm631, %v630
    %s634 = scalar_lea.vmem [#allocation0], 141
    %s635 = smov 3
    %v636 = vld [vmem:[%s634] ss:$16 sm:%s635]
    %s637 = scalar_lea.vmem [#allocation0], 141
    %s638 = smov 12
    %v639 = vld [vmem:[%s637] ss:$16 sm:%s638]
    %vm640 = vcmask 1043458
    %v641 = vsel %vm640, %v639, %v636
    %s642 = scalar_lea.vmem [#allocation0], 141
    %s643 = smov 48
    %v644 = vld [vmem:[%s642] ss:$16 sm:%s643]
    %vm645 = vcmask 1045508
    %v646 = vsel %vm645, %v644, %v641
    %s647 = scalar_lea.vmem [#allocation0], 141
    %s648 = smov 192
    %v649 = vld [vmem:[%s647] ss:$16 sm:%s648]
    %vm650 = vcmask 1047558
    %v651 = vsel %vm650, %v649, %v646
    %652 = vrot.lane.b32.xlu0 %v651, 80
    %v653 = vpop.permute.xlu0 %652
    %vm654 = vcmask 786048
    %s655 = scalar_lea.vmem %s1, 24
    %656 = vst.msk [vmem:[%s655] sm:$0xff] %vm654, %v653
    %s657 = scalar_lea.vmem [#allocation0], 397
    %s658 = smov 3
    %v659 = vld [vmem:[%s657] ss:$16 sm:%s658]
    %s660 = scalar_lea.vmem [#allocation0], 397
    %s661 = smov 12
    %v662 = vld [vmem:[%s660] ss:$16 sm:%s661]
    %vm663 = vcmask 1043458
    %v664 = vsel %vm663, %v662, %v659
    %s665 = scalar_lea.vmem [#allocation0], 397
    %s666 = smov 48
    %v667 = vld [vmem:[%s665] ss:$16 sm:%s666]
    %vm668 = vcmask 1045508
    %v669 = vsel %vm668, %v667, %v664
    %s670 = scalar_lea.vmem [#allocation0], 397
    %s671 = smov 192
    %v672 = vld [vmem:[%s670] ss:$16 sm:%s671]
    %vm673 = vcmask 1047558
    %v674 = vsel %vm673, %v672, %v669
    %675 = vrot.lane.b32.xlu0 %v674, 80
    %v676 = vpop.permute.xlu0 %675
    %vm677 = vcmask 786048
    %s678 = scalar_lea.vmem %s1, 56
    %679 = vst.msk [vmem:[%s678] sm:$0xff] %vm677, %v676
    %s680 = scalar_lea.vmem [#allocation0], 4
    %s681 = smov 3
    %v682 = vld [vmem:[%s680] ss:$16 sm:%s681]
    %s683 = scalar_lea.vmem [#allocation0], 4
    %s684 = smov 12
    %v685 = vld [vmem:[%s683] ss:$16 sm:%s684]
    %vm686 = vcmask 1043458
    %v687 = vsel %vm686, %v685, %v682
    %s688 = scalar_lea.vmem [#allocation0], 4
    %s689 = smov 48
    %v690 = vld [vmem:[%s688] ss:$16 sm:%s689]
    %vm691 = vcmask 1045508
    %v692 = vsel %vm691, %v690, %v687
    %s693 = scalar_lea.vmem [#allocation0], 4
    %s694 = smov 192
    %v695 = vld [vmem:[%s693] ss:$16 sm:%s694]
    %vm696 = vcmask 1047558
    %v697 = vsel %vm696, %v695, %v692
    %698 = vrot.lane.b32.xlu0 %v697, 64
    %v699 = vpop.permute.xlu0 %698
    %vm700 = vcmask 654848
    %701 = vst.msk [vmem:[%s1] sm:$0xff] %vm700, %v699
    %s702 = scalar_lea.vmem [#allocation0], 260
    %s703 = smov 3
    %v704 = vld [vmem:[%s702] ss:$16 sm:%s703]
    %s705 = scalar_lea.vmem [#allocation0], 260
    %s706 = smov 12
    %v707 = vld [vmem:[%s705] ss:$16 sm:%s706]
    %vm708 = vcmask 1043458
    %v709 = vsel %vm708, %v707, %v704
    %s710 = scalar_lea.vmem [#allocation0], 260
    %s711 = smov 48
    %v712 = vld [vmem:[%s710] ss:$16 sm:%s711]
    %vm713 = vcmask 1045508
    %v714 = vsel %vm713, %v712, %v709
    %s715 = scalar_lea.vmem [#allocation0], 260
    %s716 = smov 192
    %v717 = vld [vmem:[%s715] ss:$16 sm:%s716]
    %vm718 = vcmask 1047558
    %v719 = vsel %vm718, %v717, %v714
    %720 = vrot.lane.b32.xlu0 %v719, 64
    %v721 = vpop.permute.xlu0 %720
    %vm722 = vcmask 654848
    %s723 = scalar_lea.vmem %s1, 32
    %724 = vst.msk [vmem:[%s723] sm:$0xff] %vm722, %v721
    %s725 = scalar_lea.vmem [#allocation0], 12
    %s726 = smov 3
    %v727 = vld [vmem:[%s725] ss:$16 sm:%s726]
    %s728 = scalar_lea.vmem [#allocation0], 12
    %s729 = smov 12
    %v730 = vld [vmem:[%s728] ss:$16 sm:%s729]
    %vm731 = vcmask 1043458
    %v732 = vsel %vm731, %v730, %v727
    %s733 = scalar_lea.vmem [#allocation0], 12
    %s734 = smov 48
    %v735 = vld [vmem:[%s733] ss:$16 sm:%s734]
    %vm736 = vcmask 1045508
    %v737 = vsel %vm736, %v735, %v732
    %s738 = scalar_lea.vmem [#allocation0], 12
    %s739 = smov 192
    %v740 = vld [vmem:[%s738] ss:$16 sm:%s739]
    %vm741 = vcmask 1047558
    %v742 = vsel %vm741, %v740, %v737
    %743 = vrot.lane.b32.xlu0 %v742, 64
    %v744 = vpop.permute.xlu0 %743
    %vm745 = vcmask 654848
    %s746 = scalar_lea.vmem %s1, 8
    %747 = vst.msk [vmem:[%s746] sm:$0xff] %vm745, %v744
    %s748 = scalar_lea.vmem [#allocation0], 268
    %s749 = smov 3
    %v750 = vld [vmem:[%s748] ss:$16 sm:%s749]
    %s751 = scalar_lea.vmem [#allocation0], 268
    %s752 = smov 12
    %v753 = vld [vmem:[%s751] ss:$16 sm:%s752]
    %vm754 = vcmask 1043458
    %v755 = vsel %vm754, %v753, %v750
    %s756 = scalar_lea.vmem [#allocation0], 268
    %s757 = smov 48
    %v758 = vld [vmem:[%s756] ss:$16 sm:%s757]
    %vm759 = vcmask 1045508
    %v760 = vsel %vm759, %v758, %v755
    %s761 = scalar_lea.vmem [#allocation0], 268
    %s762 = smov 192
    %v763 = vld [vmem:[%s761] ss:$16 sm:%s762]
    %vm764 = vcmask 1047558
    %v765 = vsel %vm764, %v763, %v760
    %766 = vrot.lane.b32.xlu0 %v765, 64
    %v767 = vpop.permute.xlu0 %766
    %vm768 = vcmask 654848
    %s769 = scalar_lea.vmem %s1, 40
    %770 = vst.msk [vmem:[%s769] sm:$0xff] %vm768, %v767
    %s771 = scalar_lea.vmem [#allocation0], 132
    %s772 = smov 3
    %v773 = vld [vmem:[%s771] ss:$16 sm:%s772]
    %s774 = scalar_lea.vmem [#allocation0], 132
    %s775 = smov 12
    %v776 = vld [vmem:[%s774] ss:$16 sm:%s775]
    %vm777 = vcmask 1043458
    %v778 = vsel %vm777, %v776, %v773
    %s779 = scalar_lea.vmem [#allocation0], 132
    %s780 = smov 48
    %v781 = vld [vmem:[%s779] ss:$16 sm:%s780]
    %vm782 = vcmask 1045508
    %v783 = vsel %vm782, %v781, %v778
    %s784 = scalar_lea.vmem [#allocation0], 132
    %s785 = smov 192
    %v786 = vld [vmem:[%s784] ss:$16 sm:%s785]
    %vm787 = vcmask 1047558
    %v788 = vsel %vm787, %v786, %v783
    %789 = vrot.lane.b32.xlu0 %v788, 64
    %v790 = vpop.permute.xlu0 %789
    %vm791 = vcmask 654848
    %s792 = scalar_lea.vmem %s1, 16
    %793 = vst.msk [vmem:[%s792] sm:$0xff] %vm791, %v790
    %s794 = scalar_lea.vmem [#allocation0], 388
    %s795 = smov 3
    %v796 = vld [vmem:[%s794] ss:$16 sm:%s795]
    %s797 = scalar_lea.vmem [#allocation0], 388
    %s798 = smov 12
    %v799 = vld [vmem:[%s797] ss:$16 sm:%s798]
    %vm800 = vcmask 1043458
    %v801 = vsel %vm800, %v799, %v796
    %s802 = scalar_lea.vmem [#allocation0], 388
    %s803 = smov 48
    %v804 = vld [vmem:[%s802] ss:$16 sm:%s803]
    %vm805 = vcmask 1045508
    %v806 = vsel %vm805, %v804, %v801
    %s807 = scalar_lea.vmem [#allocation0], 388
    %s808 = smov 192
    %v809 = vld [vmem:[%s807] ss:$16 sm:%s808]
    %vm810 = vcmask 1047558
    %v811 = vsel %vm810, %v809, %v806
    %812 = vrot.lane.b32.xlu0 %v811, 64
    %v813 = vpop.permute.xlu0 %812
    %vm814 = vcmask 654848
    %s815 = scalar_lea.vmem %s1, 48
    %816 = vst.msk [vmem:[%s815] sm:$0xff] %vm814, %v813
    %s817 = scalar_lea.vmem [#allocation0], 140
    %s818 = smov 3
    %v819 = vld [vmem:[%s817] ss:$16 sm:%s818]
    %s820 = scalar_lea.vmem [#allocation0], 140
    %s821 = smov 12
    %v822 = vld [vmem:[%s820] ss:$16 sm:%s821]
    %vm823 = vcmask 1043458
    %v824 = vsel %vm823, %v822, %v819
    %s825 = scalar_lea.vmem [#allocation0], 140
    %s826 = smov 48
    %v827 = vld [vmem:[%s825] ss:$16 sm:%s826]
    %vm828 = vcmask 1045508
    %v829 = vsel %vm828, %v827, %v824
    %s830 = scalar_lea.vmem [#allocation0], 140
    %s831 = smov 192
    %v832 = vld [vmem:[%s830] ss:$16 sm:%s831]
    %vm833 = vcmask 1047558
    %v834 = vsel %vm833, %v832, %v829
    %835 = vrot.lane.b32.xlu0 %v834, 64
    %v836 = vpop.permute.xlu0 %835
    %vm837 = vcmask 654848
    %s838 = scalar_lea.vmem %s1, 24
    %839 = vst.msk [vmem:[%s838] sm:$0xff] %vm837, %v836
    %s840 = scalar_lea.vmem [#allocation0], 396
    %s841 = smov 3
    %v842 = vld [vmem:[%s840] ss:$16 sm:%s841]
    %s843 = scalar_lea.vmem [#allocation0], 396
    %s844 = smov 12
    %v845 = vld [vmem:[%s843] ss:$16 sm:%s844]
    %vm846 = vcmask 1043458
    %v847 = vsel %vm846, %v845, %v842
    %s848 = scalar_lea.vmem [#allocation0], 396
    %s849 = smov 48
    %v850 = vld [vmem:[%s848] ss:$16 sm:%s849]
    %vm851 = vcmask 1045508
    %v852 = vsel %vm851, %v850, %v847
    %s853 = scalar_lea.vmem [#allocation0], 396
    %s854 = smov 192
    %v855 = vld [vmem:[%s853] ss:$16 sm:%s854]
    %vm856 = vcmask 1047558
    %v857 = vsel %vm856, %v855, %v852
    %858 = vrot.lane.b32.xlu0 %v857, 64
    %v859 = vpop.permute.xlu0 %858
    %vm860 = vcmask 654848
    %s861 = scalar_lea.vmem %s1, 56
    %862 = vst.msk [vmem:[%s861] sm:$0xff] %vm860, %v859
    %s863 = scalar_lea.vmem [#allocation0], 3
    %s864 = smov 3
    %v865 = vld [vmem:[%s863] ss:$16 sm:%s864]
    %s866 = scalar_lea.vmem [#allocation0], 3
    %s867 = smov 12
    %v868 = vld [vmem:[%s866] ss:$16 sm:%s867]
    %vm869 = vcmask 1043458
    %v870 = vsel %vm869, %v868, %v865
    %s871 = scalar_lea.vmem [#allocation0], 3
    %s872 = smov 48
    %v873 = vld [vmem:[%s871] ss:$16 sm:%s872]
    %vm874 = vcmask 1045508
    %v875 = vsel %vm874, %v873, %v870
    %s876 = scalar_lea.vmem [#allocation0], 3
    %s877 = smov 192
    %v878 = vld [vmem:[%s876] ss:$16 sm:%s877]
    %vm879 = vcmask 1047558
    %v880 = vsel %vm879, %v878, %v875
    %881 = vrot.lane.b32.xlu0 %v880, 48
    %v882 = vpop.permute.xlu0 %881
    %vm883 = vcmask 523648
    %884 = vst.msk [vmem:[%s1] sm:$0xff] %vm883, %v882
    %s885 = scalar_lea.vmem [#allocation0], 259
    %s886 = smov 3
    %v887 = vld [vmem:[%s885] ss:$16 sm:%s886]
    %s888 = scalar_lea.vmem [#allocation0], 259
    %s889 = smov 12
    %v890 = vld [vmem:[%s888] ss:$16 sm:%s889]
    %vm891 = vcmask 1043458
    %v892 = vsel %vm891, %v890, %v887
    %s893 = scalar_lea.vmem [#allocation0], 259
    %s894 = smov 48
    %v895 = vld [vmem:[%s893] ss:$16 sm:%s894]
    %vm896 = vcmask 1045508
    %v897 = vsel %vm896, %v895, %v892
    %s898 = scalar_lea.vmem [#allocation0], 259
    %s899 = smov 192
    %v900 = vld [vmem:[%s898] ss:$16 sm:%s899]
    %vm901 = vcmask 1047558
    %v902 = vsel %vm901, %v900, %v897
    %903 = vrot.lane.b32.xlu0 %v902, 48
    %v904 = vpop.permute.xlu0 %903
    %vm905 = vcmask 523648
    %s906 = scalar_lea.vmem %s1, 32
    %907 = vst.msk [vmem:[%s906] sm:$0xff] %vm905, %v904
    %s908 = scalar_lea.vmem [#allocation0], 11
    %s909 = smov 3
    %v910 = vld [vmem:[%s908] ss:$16 sm:%s909]
    %s911 = scalar_lea.vmem [#allocation0], 11
    %s912 = smov 12
    %v913 = vld [vmem:[%s911] ss:$16 sm:%s912]
    %vm914 = vcmask 1043458
    %v915 = vsel %vm914, %v913, %v910
    %s916 = scalar_lea.vmem [#allocation0], 11
    %s917 = smov 48
    %v918 = vld [vmem:[%s916] ss:$16 sm:%s917]
    %vm919 = vcmask 1045508
    %v920 = vsel %vm919, %v918, %v915
    %s921 = scalar_lea.vmem [#allocation0], 11
    %s922 = smov 192
    %v923 = vld [vmem:[%s921] ss:$16 sm:%s922]
    %vm924 = vcmask 1047558
    %v925 = vsel %vm924, %v923, %v920
    %926 = vrot.lane.b32.xlu0 %v925, 48
    %v927 = vpop.permute.xlu0 %926
    %vm928 = vcmask 523648
    %s929 = scalar_lea.vmem %s1, 8
    %930 = vst.msk [vmem:[%s929] sm:$0xff] %vm928, %v927
    %s931 = scalar_lea.vmem [#allocation0], 267
    %s932 = smov 3
    %v933 = vld [vmem:[%s931] ss:$16 sm:%s932]
    %s934 = scalar_lea.vmem [#allocation0], 267
    %s935 = smov 12
    %v936 = vld [vmem:[%s934] ss:$16 sm:%s935]
    %vm937 = vcmask 1043458
    %v938 = vsel %vm937, %v936, %v933
    %s939 = scalar_lea.vmem [#allocation0], 267
    %s940 = smov 48
    %v941 = vld [vmem:[%s939] ss:$16 sm:%s940]
    %vm942 = vcmask 1045508
    %v943 = vsel %vm942, %v941, %v938
    %s944 = scalar_lea.vmem [#allocation0], 267
    %s945 = smov 192
    %v946 = vld [vmem:[%s944] ss:$16 sm:%s945]
    %vm947 = vcmask 1047558
    %v948 = vsel %vm947, %v946, %v943
    %949 = vrot.lane.b32.xlu0 %v948, 48
    %v950 = vpop.permute.xlu0 %949
    %vm951 = vcmask 523648
    %s952 = scalar_lea.vmem %s1, 40
    %953 = vst.msk [vmem:[%s952] sm:$0xff] %vm951, %v950
    %s954 = scalar_lea.vmem [#allocation0], 131
    %s955 = smov 3
    %v956 = vld [vmem:[%s954] ss:$16 sm:%s955]
    %s957 = scalar_lea.vmem [#allocation0], 131
    %s958 = smov 12
    %v959 = vld [vmem:[%s957] ss:$16 sm:%s958]
    %vm960 = vcmask 1043458
    %v961 = vsel %vm960, %v959, %v956
    %s962 = scalar_lea.vmem [#allocation0], 131
    %s963 = smov 48
    %v964 = vld [vmem:[%s962] ss:$16 sm:%s963]
    %vm965 = vcmask 1045508
    %v966 = vsel %vm965, %v964, %v961
    %s967 = scalar_lea.vmem [#allocation0], 131
    %s968 = smov 192
    %v969 = vld [vmem:[%s967] ss:$16 sm:%s968]
    %vm970 = vcmask 1047558
    %v971 = vsel %vm970, %v969, %v966
    %972 = vrot.lane.b32.xlu0 %v971, 48
    %v973 = vpop.permute.xlu0 %972
    %vm974 = vcmask 523648
    %s975 = scalar_lea.vmem %s1, 16
    %976 = vst.msk [vmem:[%s975] sm:$0xff] %vm974, %v973
    %s977 = scalar_lea.vmem [#allocation0], 387
    %s978 = smov 3
    %v979 = vld [vmem:[%s977] ss:$16 sm:%s978]
    %s980 = scalar_lea.vmem [#allocation0], 387
    %s981 = smov 12
    %v982 = vld [vmem:[%s980] ss:$16 sm:%s981]
    %vm983 = vcmask 1043458
    %v984 = vsel %vm983, %v982, %v979
    %s985 = scalar_lea.vmem [#allocation0], 387
    %s986 = smov 48
    %v987 = vld [vmem:[%s985] ss:$16 sm:%s986]
    %vm988 = vcmask 1045508
    %v989 = vsel %vm988, %v987, %v984
    %s990 = scalar_lea.vmem [#allocation0], 387
    %s991 = smov 192
    %v992 = vld [vmem:[%s990] ss:$16 sm:%s991]
    %vm993 = vcmask 1047558
    %v994 = vsel %vm993, %v992, %v989
    %995 = vrot.lane.b32.xlu0 %v994, 48
    %v996 = vpop.permute.xlu0 %995
    %vm997 = vcmask 523648
    %s998 = scalar_lea.vmem %s1, 48
    %999 = vst.msk [vmem:[%s998] sm:$0xff] %vm997, %v996
    %s1000 = scalar_lea.vmem [#allocation0], 139
    %s1001 = smov 3
    %v1002 = vld [vmem:[%s1000] ss:$16 sm:%s1001]
    %s1003 = scalar_lea.vmem [#allocation0], 139
    %s1004 = smov 12
    %v1005 = vld [vmem:[%s1003] ss:$16 sm:%s1004]
    %vm1006 = vcmask 1043458
    %v1007 = vsel %vm1006, %v1005, %v1002
    %s1008 = scalar_lea.vmem [#allocation0], 139
    %s1009 = smov 48
    %v1010 = vld [vmem:[%s1008] ss:$16 sm:%s1009]
    %vm1011 = vcmask 1045508
    %v1012 = vsel %vm1011, %v1010, %v1007
    %s1013 = scalar_lea.vmem [#allocation0], 139
    %s1014 = smov 192
    %v1015 = vld [vmem:[%s1013] ss:$16 sm:%s1014]
    %vm1016 = vcmask 1047558
    %v1017 = vsel %vm1016, %v1015, %v1012
    %1018 = vrot.lane.b32.xlu0 %v1017, 48
    %v1019 = vpop.permute.xlu0 %1018
    %vm1020 = vcmask 523648
    %s1021 = scalar_lea.vmem %s1, 24
    %1022 = vst.msk [vmem:[%s1021] sm:$0xff] %vm1020, %v1019
    %s1023 = scalar_lea.vmem [#allocation0], 395
    %s1024 = smov 3
    %v1025 = vld [vmem:[%s1023] ss:$16 sm:%s1024]
    %s1026 = scalar_lea.vmem [#allocation0], 395
    %s1027 = smov 12
    %v1028 = vld [vmem:[%s1026] ss:$16 sm:%s1027]
    %vm1029 = vcmask 1043458
    %v1030 = vsel %vm1029, %v1028, %v1025
    %s1031 = scalar_lea.vmem [#allocation0], 395
    %s1032 = smov 48
    %v1033 = vld [vmem:[%s1031] ss:$16 sm:%s1032]
    %vm1034 = vcmask 1045508
    %v1035 = vsel %vm1034, %v1033, %v1030
    %s1036 = scalar_lea.vmem [#allocation0], 395
    %s1037 = smov 192
    %v1038 = vld [vmem:[%s1036] ss:$16 sm:%s1037]
    %vm1039 = vcmask 1047558
    %v1040 = vsel %vm1039, %v1038, %v1035
    %1041 = vrot.lane.b32.xlu0 %v1040, 48
    %v1042 = vpop.permute.xlu0 %1041
    %vm1043 = vcmask 523648
    %s1044 = scalar_lea.vmem %s1, 56
    %1045 = vst.msk [vmem:[%s1044] sm:$0xff] %vm1043, %v1042
    %s1046 = scalar_lea.vmem [#allocation0], 2
    %s1047 = smov 3
    %v1048 = vld [vmem:[%s1046] ss:$16 sm:%s1047]
    %s1049 = scalar_lea.vmem [#allocation0], 2
    %s1050 = smov 12
    %v1051 = vld [vmem:[%s1049] ss:$16 sm:%s1050]
    %vm1052 = vcmask 1043458
    %v1053 = vsel %vm1052, %v1051, %v1048
    %s1054 = scalar_lea.vmem [#allocation0], 2
    %s1055 = smov 48
    %v1056 = vld [vmem:[%s1054] ss:$16 sm:%s1055]
    %vm1057 = vcmask 1045508
    %v1058 = vsel %vm1057, %v1056, %v1053
    %s1059 = scalar_lea.vmem [#allocation0], 2
    %s1060 = smov 192
    %v1061 = vld [vmem:[%s1059] ss:$16 sm:%s1060]
    %vm1062 = vcmask 1047558
    %v1063 = vsel %vm1062, %v1061, %v1058
    %1064 = vrot.lane.b32.xlu0 %v1063, 32
    %v1065 = vpop.permute.xlu0 %1064
    %vm1066 = vcmask 392448
    %1067 = vst.msk [vmem:[%s1] sm:$0xff] %vm1066, %v1065
    %s1068 = scalar_lea.vmem [#allocation0], 258
    %s1069 = smov 3
    %v1070 = vld [vmem:[%s1068] ss:$16 sm:%s1069]
    %s1071 = scalar_lea.vmem [#allocation0], 258
    %s1072 = smov 12
    %v1073 = vld [vmem:[%s1071] ss:$16 sm:%s1072]
    %vm1074 = vcmask 1043458
    %v1075 = vsel %vm1074, %v1073, %v1070
    %s1076 = scalar_lea.vmem [#allocation0], 258
    %s1077 = smov 48
    %v1078 = vld [vmem:[%s1076] ss:$16 sm:%s1077]
    %vm1079 = vcmask 1045508
    %v1080 = vsel %vm1079, %v1078, %v1075
    %s1081 = scalar_lea.vmem [#allocation0], 258
    %s1082 = smov 192
    %v1083 = vld [vmem:[%s1081] ss:$16 sm:%s1082]
    %vm1084 = vcmask 1047558
    %v1085 = vsel %vm1084, %v1083, %v1080
    %1086 = vrot.lane.b32.xlu0 %v1085, 32
    %v1087 = vpop.permute.xlu0 %1086
    %vm1088 = vcmask 392448
    %s1089 = scalar_lea.vmem %s1, 32
    %1090 = vst.msk [vmem:[%s1089] sm:$0xff] %vm1088, %v1087
    %s1091 = scalar_lea.vmem [#allocation0], 10
    %s1092 = smov 3
    %v1093 = vld [vmem:[%s1091] ss:$16 sm:%s1092]
    %s1094 = scalar_lea.vmem [#allocation0], 10
    %s1095 = smov 12
    %v1096 = vld [vmem:[%s1094] ss:$16 sm:%s1095]
    %vm1097 = vcmask 1043458
    %v1098 = vsel %vm1097, %v1096, %v1093
    %s1099 = scalar_lea.vmem [#allocation0], 10
    %s1100 = smov 48
    %v1101 = vld [vmem:[%s1099] ss:$16 sm:%s1100]
    %vm1102 = vcmask 1045508
    %v1103 = vsel %vm1102, %v1101, %v1098
    %s1104 = scalar_lea.vmem [#allocation0], 10
    %s1105 = smov 192
    %v1106 = vld [vmem:[%s1104] ss:$16 sm:%s1105]
    %vm1107 = vcmask 1047558
    %v1108 = vsel %vm1107, %v1106, %v1103
    %1109 = vrot.lane.b32.xlu0 %v1108, 32
    %v1110 = vpop.permute.xlu0 %1109
    %vm1111 = vcmask 392448
    %s1112 = scalar_lea.vmem %s1, 8
    %1113 = vst.msk [vmem:[%s1112] sm:$0xff] %vm1111, %v1110
    %s1114 = scalar_lea.vmem [#allocation0], 266
    %s1115 = smov 3
    %v1116 = vld [vmem:[%s1114] ss:$16 sm:%s1115]
    %s1117 = scalar_lea.vmem [#allocation0], 266
    %s1118 = smov 12
    %v1119 = vld [vmem:[%s1117] ss:$16 sm:%s1118]
    %vm1120 = vcmask 1043458
    %v1121 = vsel %vm1120, %v1119, %v1116
    %s1122 = scalar_lea.vmem [#allocation0], 266
    %s1123 = smov 48
    %v1124 = vld [vmem:[%s1122] ss:$16 sm:%s1123]
    %vm1125 = vcmask 1045508
    %v1126 = vsel %vm1125, %v1124, %v1121
    %s1127 = scalar_lea.vmem [#allocation0], 266
    %s1128 = smov 192
    %v1129 = vld [vmem:[%s1127] ss:$16 sm:%s1128]
    %vm1130 = vcmask 1047558
    %v1131 = vsel %vm1130, %v1129, %v1126
    %1132 = vrot.lane.b32.xlu0 %v1131, 32
    %v1133 = vpop.permute.xlu0 %1132
    %vm1134 = vcmask 392448
    %s1135 = scalar_lea.vmem %s1, 40
    %1136 = vst.msk [vmem:[%s1135] sm:$0xff] %vm1134, %v1133
    %s1137 = scalar_lea.vmem [#allocation0], 130
    %s1138 = smov 3
    %v1139 = vld [vmem:[%s1137] ss:$16 sm:%s1138]
    %s1140 = scalar_lea.vmem [#allocation0], 130
    %s1141 = smov 12
    %v1142 = vld [vmem:[%s1140] ss:$16 sm:%s1141]
    %vm1143 = vcmask 1043458
    %v1144 = vsel %vm1143, %v1142, %v1139
    %s1145 = scalar_lea.vmem [#allocation0], 130
    %s1146 = smov 48
    %v1147 = vld [vmem:[%s1145] ss:$16 sm:%s1146]
    %vm1148 = vcmask 1045508
    %v1149 = vsel %vm1148, %v1147, %v1144
    %s1150 = scalar_lea.vmem [#allocation0], 130
    %s1151 = smov 192
    %v1152 = vld [vmem:[%s1150] ss:$16 sm:%s1151]
    %vm1153 = vcmask 1047558
    %v1154 = vsel %vm1153, %v1152, %v1149
    %1155 = vrot.lane.b32.xlu0 %v1154, 32
    %v1156 = vpop.permute.xlu0 %1155
    %vm1157 = vcmask 392448
    %s1158 = scalar_lea.vmem %s1, 16
    %1159 = vst.msk [vmem:[%s1158] sm:$0xff] %vm1157, %v1156
    %s1160 = scalar_lea.vmem [#allocation0], 386
    %s1161 = smov 3
    %v1162 = vld [vmem:[%s1160] ss:$16 sm:%s1161]
    %s1163 = scalar_lea.vmem [#allocation0], 386
    %s1164 = smov 12
    %v1165 = vld [vmem:[%s1163] ss:$16 sm:%s1164]
    %vm1166 = vcmask 1043458
    %v1167 = vsel %vm1166, %v1165, %v1162
    %s1168 = scalar_lea.vmem [#allocation0], 386
    %s1169 = smov 48
    %v1170 = vld [vmem:[%s1168] ss:$16 sm:%s1169]
    %vm1171 = vcmask 1045508
    %v1172 = vsel %vm1171, %v1170, %v1167
    %s1173 = scalar_lea.vmem [#allocation0], 386
    %s1174 = smov 192
    %v1175 = vld [vmem:[%s1173] ss:$16 sm:%s1174]
    %vm1176 = vcmask 1047558
    %v1177 = vsel %vm1176, %v1175, %v1172
    %1178 = vrot.lane.b32.xlu0 %v1177, 32
    %v1179 = vpop.permute.xlu0 %1178
    %vm1180 = vcmask 392448
    %s1181 = scalar_lea.vmem %s1, 48
    %1182 = vst.msk [vmem:[%s1181] sm:$0xff] %vm1180, %v1179
    %s1183 = scalar_lea.vmem [#allocation0], 138
    %s1184 = smov 3
    %v1185 = vld [vmem:[%s1183] ss:$16 sm:%s1184]
    %s1186 = scalar_lea.vmem [#allocation0], 138
    %s1187 = smov 12
    %v1188 = vld [vmem:[%s1186] ss:$16 sm:%s1187]
    %vm1189 = vcmask 1043458
    %v1190 = vsel %vm1189, %v1188, %v1185
    %s1191 = scalar_lea.vmem [#allocation0], 138
    %s1192 = smov 48
    %v1193 = vld [vmem:[%s1191] ss:$16 sm:%s1192]
    %vm1194 = vcmask 1045508
    %v1195 = vsel %vm1194, %v1193, %v1190
    %s1196 = scalar_lea.vmem [#allocation0], 138
    %s1197 = smov 192
    %v1198 = vld [vmem:[%s1196] ss:$16 sm:%s1197]
    %vm1199 = vcmask 1047558
    %v1200 = vsel %vm1199, %v1198, %v1195
    %1201 = vrot.lane.b32.xlu0 %v1200, 32
    %v1202 = vpop.permute.xlu0 %1201
    %vm1203 = vcmask 392448
    %s1204 = scalar_lea.vmem %s1, 24
    %1205 = vst.msk [vmem:[%s1204] sm:$0xff] %vm1203, %v1202
    %s1206 = scalar_lea.vmem [#allocation0], 394
    %s1207 = smov 3
    %v1208 = vld [vmem:[%s1206] ss:$16 sm:%s1207]
    %s1209 = scalar_lea.vmem [#allocation0], 394
    %s1210 = smov 12
    %v1211 = vld [vmem:[%s1209] ss:$16 sm:%s1210]
    %vm1212 = vcmask 1043458
    %v1213 = vsel %vm1212, %v1211, %v1208
    %s1214 = scalar_lea.vmem [#allocation0], 394
    %s1215 = smov 48
    %v1216 = vld [vmem:[%s1214] ss:$16 sm:%s1215]
    %vm1217 = vcmask 1045508
    %v1218 = vsel %vm1217, %v1216, %v1213
    %s1219 = scalar_lea.vmem [#allocation0], 394
    %s1220 = smov 192
    %v1221 = vld [vmem:[%s1219] ss:$16 sm:%s1220]
    %vm1222 = vcmask 1047558
    %v1223 = vsel %vm1222, %v1221, %v1218
    %1224 = vrot.lane.b32.xlu0 %v1223, 32
    %v1225 = vpop.permute.xlu0 %1224
    %vm1226 = vcmask 392448
    %s1227 = scalar_lea.vmem %s1, 56
    %1228 = vst.msk [vmem:[%s1227] sm:$0xff] %vm1226, %v1225
    %s1229 = scalar_lea.vmem [#allocation0], 1
    %s1230 = smov 3
    %v1231 = vld [vmem:[%s1229] ss:$16 sm:%s1230]
    %s1232 = scalar_lea.vmem [#allocation0], 1
    %s1233 = smov 12
    %v1234 = vld [vmem:[%s1232] ss:$16 sm:%s1233]
    %vm1235 = vcmask 1043458
    %v1236 = vsel %vm1235, %v1234, %v1231
    %s1237 = scalar_lea.vmem [#allocation0], 1
    %s1238 = smov 48
    %v1239 = vld [vmem:[%s1237] ss:$16 sm:%s1238]
    %vm1240 = vcmask 1045508
    %v1241 = vsel %vm1240, %v1239, %v1236
    %s1242 = scalar_lea.vmem [#allocation0], 1
    %s1243 = smov 192
    %v1244 = vld [vmem:[%s1242] ss:$16 sm:%s1243]
    %vm1245 = vcmask 1047558
    %v1246 = vsel %vm1245, %v1244, %v1241
    %1247 = vrot.lane.b32.xlu0 %v1246, 16
    %v1248 = vpop.permute.xlu0 %1247
    %vm1249 = vcmask 261248
    %1250 = vst.msk [vmem:[%s1] sm:$0xff] %vm1249, %v1248
    %s1251 = scalar_lea.vmem [#allocation0], 257
    %s1252 = smov 3
    %v1253 = vld [vmem:[%s1251] ss:$16 sm:%s1252]
    %s1254 = scalar_lea.vmem [#allocation0], 257
    %s1255 = smov 12
    %v1256 = vld [vmem:[%s1254] ss:$16 sm:%s1255]
    %vm1257 = vcmask 1043458
    %v1258 = vsel %vm1257, %v1256, %v1253
    %s1259 = scalar_lea.vmem [#allocation0], 257
    %s1260 = smov 48
    %v1261 = vld [vmem:[%s1259] ss:$16 sm:%s1260]
    %vm1262 = vcmask 1045508
    %v1263 = vsel %vm1262, %v1261, %v1258
    %s1264 = scalar_lea.vmem [#allocation0], 257
    %s1265 = smov 192
    %v1266 = vld [vmem:[%s1264] ss:$16 sm:%s1265]
    %vm1267 = vcmask 1047558
    %v1268 = vsel %vm1267, %v1266, %v1263
    %1269 = vrot.lane.b32.xlu0 %v1268, 16
    %v1270 = vpop.permute.xlu0 %1269
    %vm1271 = vcmask 261248
    %s1272 = scalar_lea.vmem %s1, 32
    %1273 = vst.msk [vmem:[%s1272] sm:$0xff] %vm1271, %v1270
    %s1274 = scalar_lea.vmem [#allocation0], 9
    %s1275 = smov 3
    %v1276 = vld [vmem:[%s1274] ss:$16 sm:%s1275]
    %s1277 = scalar_lea.vmem [#allocation0], 9
    %s1278 = smov 12
    %v1279 = vld [vmem:[%s1277] ss:$16 sm:%s1278]
    %vm1280 = vcmask 1043458
    %v1281 = vsel %vm1280, %v1279, %v1276
    %s1282 = scalar_lea.vmem [#allocation0], 9
    %s1283 = smov 48
    %v1284 = vld [vmem:[%s1282] ss:$16 sm:%s1283]
    %vm1285 = vcmask 1045508
    %v1286 = vsel %vm1285, %v1284, %v1281
    %s1287 = scalar_lea.vmem [#allocation0], 9
    %s1288 = smov 192
    %v1289 = vld [vmem:[%s1287] ss:$16 sm:%s1288]
    %vm1290 = vcmask 1047558
    %v1291 = vsel %vm1290, %v1289, %v1286
    %1292 = vrot.lane.b32.xlu0 %v1291, 16
    %v1293 = vpop.permute.xlu0 %1292
    %vm1294 = vcmask 261248
    %s1295 = scalar_lea.vmem %s1, 8
    %1296 = vst.msk [vmem:[%s1295] sm:$0xff] %vm1294, %v1293
    %s1297 = scalar_lea.vmem [#allocation0], 265
    %s1298 = smov 3
    %v1299 = vld [vmem:[%s1297] ss:$16 sm:%s1298]
    %s1300 = scalar_lea.vmem [#allocation0], 265
    %s1301 = smov 12
    %v1302 = vld [vmem:[%s1300] ss:$16 sm:%s1301]
    %vm1303 = vcmask 1043458
    %v1304 = vsel %vm1303, %v1302, %v1299
    %s1305 = scalar_lea.vmem [#allocation0], 265
    %s1306 = smov 48
    %v1307 = vld [vmem:[%s1305] ss:$16 sm:%s1306]
    %vm1308 = vcmask 1045508
    %v1309 = vsel %vm1308, %v1307, %v1304
    %s1310 = scalar_lea.vmem [#allocation0], 265
    %s1311 = smov 192
    %v1312 = vld [vmem:[%s1310] ss:$16 sm:%s1311]
    %vm1313 = vcmask 1047558
    %v1314 = vsel %vm1313, %v1312, %v1309
    %1315 = vrot.lane.b32.xlu0 %v1314, 16
    %v1316 = vpop.permute.xlu0 %1315
    %vm1317 = vcmask 261248
    %s1318 = scalar_lea.vmem %s1, 40
    %1319 = vst.msk [vmem:[%s1318] sm:$0xff] %vm1317, %v1316
    %s1320 = scalar_lea.vmem [#allocation0], 129
    %s1321 = smov 3
    %v1322 = vld [vmem:[%s1320] ss:$16 sm:%s1321]
    %s1323 = scalar_lea.vmem [#allocation0], 129
    %s1324 = smov 12
    %v1325 = vld [vmem:[%s1323] ss:$16 sm:%s1324]
    %vm1326 = vcmask 1043458
    %v1327 = vsel %vm1326, %v1325, %v1322
    %s1328 = scalar_lea.vmem [#allocation0], 129
    %s1329 = smov 48
    %v1330 = vld [vmem:[%s1328] ss:$16 sm:%s1329]
    %vm1331 = vcmask 1045508
    %v1332 = vsel %vm1331, %v1330, %v1327
    %s1333 = scalar_lea.vmem [#allocation0], 129
    %s1334 = smov 192
    %v1335 = vld [vmem:[%s1333] ss:$16 sm:%s1334]
    %vm1336 = vcmask 1047558
    %v1337 = vsel %vm1336, %v1335, %v1332
    %1338 = vrot.lane.b32.xlu0 %v1337, 16
    %v1339 = vpop.permute.xlu0 %1338
    %vm1340 = vcmask 261248
    %s1341 = scalar_lea.vmem %s1, 16
    %1342 = vst.msk [vmem:[%s1341] sm:$0xff] %vm1340, %v1339
    %s1343 = scalar_lea.vmem [#allocation0], 385
    %s1344 = smov 3
    %v1345 = vld [vmem:[%s1343] ss:$16 sm:%s1344]
    %s1346 = scalar_lea.vmem [#allocation0], 385
    %s1347 = smov 12
    %v1348 = vld [vmem:[%s1346] ss:$16 sm:%s1347]
    %vm1349 = vcmask 1043458
    %v1350 = vsel %vm1349, %v1348, %v1345
    %s1351 = scalar_lea.vmem [#allocation0], 385
    %s1352 = smov 48
    %v1353 = vld [vmem:[%s1351] ss:$16 sm:%s1352]
    %vm1354 = vcmask 1045508
    %v1355 = vsel %vm1354, %v1353, %v1350
    %s1356 = scalar_lea.vmem [#allocation0], 385
    %s1357 = smov 192
    %v1358 = vld [vmem:[%s1356] ss:$16 sm:%s1357]
    %vm1359 = vcmask 1047558
    %v1360 = vsel %vm1359, %v1358, %v1355
    %1361 = vrot.lane.b32.xlu0 %v1360, 16
    %v1362 = vpop.permute.xlu0 %1361
    %vm1363 = vcmask 261248
    %s1364 = scalar_lea.vmem %s1, 48
    %1365 = vst.msk [vmem:[%s1364] sm:$0xff] %vm1363, %v1362
    %s1366 = scalar_lea.vmem [#allocation0], 137
    %s1367 = smov 3
    %v1368 = vld [vmem:[%s1366] ss:$16 sm:%s1367]
    %s1369 = scalar_lea.vmem [#allocation0], 137
    %s1370 = smov 12
    %v1371 = vld [vmem:[%s1369] ss:$16 sm:%s1370]
    %vm1372 = vcmask 1043458
    %v1373 = vsel %vm1372, %v1371, %v1368
    %s1374 = scalar_lea.vmem [#allocation0], 137
    %s1375 = smov 48
    %v1376 = vld [vmem:[%s1374] ss:$16 sm:%s1375]
    %vm1377 = vcmask 1045508
    %v1378 = vsel %vm1377, %v1376, %v1373
    %s1379 = scalar_lea.vmem [#allocation0], 137
    %s1380 = smov 192
    %v1381 = vld [vmem:[%s1379] ss:$16 sm:%s1380]
    %vm1382 = vcmask 1047558
    %v1383 = vsel %vm1382, %v1381, %v1378
    %1384 = vrot.lane.b32.xlu0 %v1383, 16
    %v1385 = vpop.permute.xlu0 %1384
    %vm1386 = vcmask 261248
    %s1387 = scalar_lea.vmem %s1, 24
    %1388 = vst.msk [vmem:[%s1387] sm:$0xff] %vm1386, %v1385
    %s1389 = scalar_lea.vmem [#allocation0], 393
    %s1390 = smov 3
    %v1391 = vld [vmem:[%s1389] ss:$16 sm:%s1390]
    %s1392 = scalar_lea.vmem [#allocation0], 393
    %s1393 = smov 12
    %v1394 = vld [vmem:[%s1392] ss:$16 sm:%s1393]
    %vm1395 = vcmask 1043458
    %v1396 = vsel %vm1395, %v1394, %v1391
    %s1397 = scalar_lea.vmem [#allocation0], 393
    %s1398 = smov 48
    %v1399 = vld [vmem:[%s1397] ss:$16 sm:%s1398]
    %vm1400 = vcmask 1045508
    %v1401 = vsel %vm1400, %v1399, %v1396
    %s1402 = scalar_lea.vmem [#allocation0], 393
    %s1403 = smov 192
    %v1404 = vld [vmem:[%s1402] ss:$16 sm:%s1403]
    %vm1405 = vcmask 1047558
    %v1406 = vsel %vm1405, %v1404, %v1401
    %1407 = vrot.lane.b32.xlu0 %v1406, 16
    %v1408 = vpop.permute.xlu0 %1407
    %vm1409 = vcmask 261248
    %s1410 = scalar_lea.vmem %s1, 56
    %1411 = vst.msk [vmem:[%s1410] sm:$0xff] %vm1409, %v1408
    %1412 = vsyncpa [#allocation1], 1

// kernel: model_forward.1
$region0: #{model_forward.1}
  #allocation0 [shape = 'u32[]', space=smem, size = 0x4, offset = 0x4, fixed_abs, tag = 'smem constant byte address 0x4 - core index']
  #allocation1 [shape = 'u32[72,128]{1,0:T(1,128)}', space=vmem, size = 0x9000, scoped, tag = 'internal scratch']
  #allocation2 [shape = 'bf16[16,4096]{1,0:T(8,128)(2,1)}', space=vmem, size = 0x20000, scoped, tag = 'scratch operand']
  %s0 = inlined_call_operand.vmem [shape: f32[2,16,290], index: 0, kind: input, shape index: {}]
  %s1 = inlined_call_operand.vmem [shape: f32[9,16], index: 1, kind: input, shape index: {}]
  %s2 = inlined_call_operand.vmem [shape: f32[2,16,16], index: 2, kind: input, shape index: {}]
  %s3 = inlined_call_operand.vmem [shape: bf16[4096,256], index: 3, kind: input, shape index: {}]
  %s4 = inlined_call_operand.vmem [shape: f32[1,256], index: 4, kind: input, shape index: {}]
  %s5 = inlined_call_operand.vmem [shape: f32[2,16,16,256], index: 5, kind: output, shape index: {0}]
  %s6 = inlined_call_operand.vmem [shape: f32[2,16,256], index: 6, kind: output, shape index: {1}]
  %7 = xla_tuple %s5, %s6
  %s8 = sld [smem:[#allocation0]]
  $region69: #{model_forward.1} parent=0
    _
  %s10 = ssub.s32 1, %s8
  %s11 = scalar_select 0, %s10, %s8
  $region1: #{model_forward.1} parent=0
    #allocation3 [shape = 'u8[8192]{0}', space=smem, size = 0x2000, scoped, tag = 'input window, operand 1, single buffered']
    #allocation4 [shape = 's32[2]{0}', space=sflag, size = 0x8, scoped, tag = 'scoped memory for model_forward.1']
    %12 = vsyncpa [#allocation4], 0
    loop: start=0, step=1, limit=4
    $region2: #{model_forward.1} parent=1 // loop_pre_header
      _
    $region3: #{model_forward.1} parent=1 // loop_header
      %s14 = sphi 0, %s18
      %p15 = scmp.ge.s32.totalorder %s14, 4
      %s21 = sphi 0, %s40
      %s22 = sphi 0, %s36
      %s23 = sphi 0, %s32
      %s24 = sphi 0, %s21
      %s25 = sphi 0, %s22
      %s26 = sphi 0, %s23
      %s27 = sphi 0, %s24
      %s28 = sphi 0, %s25
      %s29 = sphi 0, %s26
      %s45 = sphi 0, %s47
      %s48 = sphi 0, %s45
      %s49 = sphi 0, %s48
      %s65 = sphi 0, %s49
      %s69 = sphi 0, %s69
      %s71 = sphi 0, %s69
      %s72 = sphi 0, %s71
      %s86 = sphi 0, %s72
      %s94 = sphi 0, %s96
      %s97 = sphi 0, %s94
      %s98 = sphi 0, %s97
      %s114 = sphi 0, %s98
      %s120 = sphi 0, %s122
      %s123 = sphi 0, %s120
      %s124 = sphi 0, %s123
      %s140 = sphi 0, %s124
      %s146 = sphi 0, %s148
      %s149 = sphi 0, %s146
      %s150 = sphi 0, %s149
      %s166 = sphi 0, %s150
      %s174 = sphi 0, %s176
      %s177 = sphi 0, %s174
      %s178 = sphi 0, %s177
      %s194 = sphi 0, %s178
      %s204 = sphi 0, %s206
      %s207 = sphi 0, %s204
      %s208 = sphi 0, %s207
      %s224 = sphi 0, %s208
    $region4: #{model_forward.1} parent=1 // loop_header_branch
      %17 = sbr.rel (%p15) target = $region8
    $region5: #{model_forward.1} parent=1 // loop_body
      %s19 = ssub.s32 %s14, 1
      %s20 = ssub.s32 %s14, 2
      %s30 = sadd.s32 1, %s23
      %p31 = scmp.ge.s32.totalorder %s30, 1
      %s32 = scalar_select %p31, 0, %s30
      %s33 = sadd.s32 1, %s22
      %s34 = scalar_select %p31, %s33, %s22
      %p35 = scmp.ge.s32.totalorder %s34, 1
      %s36 = scalar_select %p35, 0, %s34
      %s37 = sadd.s32 1, %s21
      %s38 = scalar_select %p35, %s37, %s21
      %p39 = scmp.ge.s32.totalorder %s38, 2
      %s40 = scalar_select %p39, 0, %s38
      %s41 = ssub.s32 %s21, %s40
      %s42 = ssub.s32 %s22, %s36
      %s43 = sor.u32 %s41, %s42
      %p44 = scmp.eq.s32.totalorder %s43, 0
      %s46 = sadd.s32 %s45, 1
      %s47 = scalar_select %p44, %s45, %s46
      %p50 = pneg %p44
      %p51 = scmp.eq.s32.totalorder %s14, 1
      %p52 = por %p50, %p51
      %p53 = scmp.ne.s32.totalorder %s45, %s48
      %p54 = scmp.eq.s32.totalorder %s14, 0
      %p55 = por %p53, %p54
      %p56 = scmp.ne.s32.totalorder %s45, %s48
      %p57 = scmp.eq.s32.totalorder %s19, 1
      %p58 = por %p56, %p57
      %p59 = scmp.ne.s32.totalorder %s48, %s49
      %p60 = scmp.eq.s32.totalorder %s19, 0
      %p61 = por %p59, %p60
      %p62 = scmp.ne.s32.totalorder %s48, %s49
      %p63 = scmp.eq.s32.totalorder %s20, 1
      %p64 = por %p62, %p63
      %p66 = scmp.ne.s32.totalorder %s49, %s65
      %p67 = scmp.eq.s32.totalorder %s20, 0
      %p68 = por %p66, %p67
      %s70 = sadd.s32 %s69, 1
      %p73 = scmp.eq.s32.totalorder %s14, 1
      %p74 = scmp.ne.s32.totalorder %s69, %s71
      %p75 = scmp.eq.s32.totalorder %s14, 0
      %p76 = por %p74, %p75
      %p77 = scmp.ne.s32.totalorder %s69, %s71
      %p78 = scmp.eq.s32.totalorder %s19, 1
      %p79 = por %p77, %p78
      %p80 = scmp.ne.s32.totalorder %s71, %s72
      %p81 = scmp.eq.s32.totalorder %s19, 0
      %p82 = por %p80, %p81
      %p83 = scmp.ne.s32.totalorder %s71, %s72
      %p84 = scmp.eq.s32.totalorder %s20, 1
      %p85 = por %p83, %p84
      %p87 = scmp.ne.s32.totalorder %s72, %s86
      %p88 = scmp.eq.s32.totalorder %s20, 0
      %p89 = por %p87, %p88
      %s90 = ssub.s32 %s21, %s40
      %s91 = ssub.s32 %s22, %s36
      %s92 = sor.u32 %s90, %s91
      %p93 = scmp.eq.s32.totalorder %s92, 0
      %s95 = sadd.s32 %s94, 1
      %s96 = scalar_select %p93, %s94, %s95
      %p99 = pneg %p93
      %p100 = scmp.eq.s32.totalorder %s14, 1
      %p101 = por %p99, %p100
      %p102 = scmp.ne.s32.totalorder %s94, %s97
      %p103 = scmp.eq.s32.totalorder %s14, 0
      %p104 = por %p102, %p103
      %p105 = scmp.ne.s32.totalorder %s94, %s97
      %p106 = scmp.eq.s32.totalorder %s19, 1
      %p107 = por %p105, %p106
      %p108 = scmp.ne.s32.totalorder %s97, %s98
      %p109 = scmp.eq.s32.totalorder %s19, 0
      %p110 = por %p108, %p109
      %p111 = scmp.ne.s32.totalorder %s97, %s98
      %p112 = scmp.eq.s32.totalorder %s20, 1
      %p113 = por %p111, %p112
      %p115 = scmp.ne.s32.totalorder %s98, %s114
      %p116 = scmp.eq.s32.totalorder %s20, 0
      %p117 = por %p115, %p116
      %s118 = ssub.s32 %s23, %s32
      %p119 = scmp.eq.s32.totalorder %s118, 0
      %s121 = sadd.s32 %s120, 1
      %s122 = scalar_select %p119, %s120, %s121
      %p125 = pneg %p119
      %p126 = scmp.eq.s32.totalorder %s14, 1
      %p127 = por %p125, %p126
      %p128 = scmp.ne.s32.totalorder %s120, %s123
      %p129 = scmp.eq.s32.totalorder %s14, 0
      %p130 = por %p128, %p129
      %p131 = scmp.ne.s32.totalorder %s120, %s123
      %p132 = scmp.eq.s32.totalorder %s19, 1
      %p133 = por %p131, %p132
      %p134 = scmp.ne.s32.totalorder %s123, %s124
      %p135 = scmp.eq.s32.totalorder %s19, 0
      %p136 = por %p134, %p135
      %p137 = scmp.ne.s32.totalorder %s123, %s124
      %p138 = scmp.eq.s32.totalorder %s20, 1
      %p139 = por %p137, %p138
      %p141 = scmp.ne.s32.totalorder %s124, %s140
      %p142 = scmp.eq.s32.totalorder %s20, 0
      %p143 = por %p141, %p142
      %s144 = ssub.s32 %s23, %s32
      %p145 = scmp.eq.s32.totalorder %s144, 0
      %s147 = sadd.s32 %s146, 1
      %s148 = scalar_select %p145, %s146, %s147
      %p151 = pneg %p145
      %p152 = scmp.eq.s32.totalorder %s14, 1
      %p153 = por %p151, %p152
      %p154 = scmp.ne.s32.totalorder %s146, %s149
      %p155 = scmp.eq.s32.totalorder %s14, 0
      %p156 = por %p154, %p155
      %p157 = scmp.ne.s32.totalorder %s146, %s149
      %p158 = scmp.eq.s32.totalorder %s19, 1
      %p159 = por %p157, %p158
      %p160 = scmp.ne.s32.totalorder %s149, %s150
      %p161 = scmp.eq.s32.totalorder %s19, 0
      %p162 = por %p160, %p161
      %p163 = scmp.ne.s32.totalorder %s149, %s150
      %p164 = scmp.eq.s32.totalorder %s20, 1
      %p165 = por %p163, %p164
      %p167 = scmp.ne.s32.totalorder %s150, %s166
      %p168 = scmp.eq.s32.totalorder %s20, 0
      %p169 = por %p167, %p168
      %s170 = ssub.s32 %s21, %s40
      %s171 = ssub.s32 %s22, %s36
      %s172 = sor.u32 %s170, %s171
      %p173 = scmp.eq.s32.totalorder %s172, 0
      %s175 = sadd.s32 %s174, 1
      %s176 = scalar_select %p173, %s174, %s175
      %p179 = pneg %p173
      %p180 = scmp.eq.s32.totalorder %s14, 1
      %p181 = por %p179, %p180
      %p182 = scmp.ne.s32.totalorder %s174, %s177
      %p183 = scmp.eq.s32.totalorder %s14, 0
      %p184 = por %p182, %p183
      %p185 = scmp.ne.s32.totalorder %s174, %s177
      %p186 = scmp.eq.s32.totalorder %s19, 1
      %p187 = por %p185, %p186
      %p188 = scmp.ne.s32.totalorder %s177, %s178
      %p189 = scmp.eq.s32.totalorder %s19, 0
      %p190 = por %p188, %p189
      %p191 = scmp.ne.s32.totalorder %s177, %s178
      %p192 = scmp.eq.s32.totalorder %s20, 1
      %p193 = por %p191, %p192
      %p195 = scmp.ne.s32.totalorder %s178, %s194
      %p196 = scmp.eq.s32.totalorder %s20, 0
      %p197 = por %p195, %p196
      %s198 = ssub.s32 %s21, %s40
      %s199 = ssub.s32 %s22, %s36
      %s200 = sor.u32 %s198, %s199
      %s201 = ssub.s32 %s23, %s32
      %s202 = sor.u32 %s200, %s201
      %p203 = scmp.eq.s32.totalorder %s202, 0
      %s205 = sadd.s32 %s204, 1
      %s206 = scalar_select %p203, %s204, %s205
      %p209 = pneg %p203
      %p210 = scmp.eq.s32.totalorder %s14, 1
      %p211 = por %p209, %p210
      %p212 = scmp.ne.s32.totalorder %s204, %s207
      %p213 = scmp.eq.s32.totalorder %s14, 0
      %p214 = por %p212, %p213
      %p215 = scmp.ne.s32.totalorder %s204, %s207
      %p216 = scmp.eq.s32.totalorder %s19, 1
      %p217 = por %p215, %p216
      %p218 = scmp.ne.s32.totalorder %s207, %s208
      %p219 = scmp.eq.s32.totalorder %s19, 0
      %p220 = por %p218, %p219
      %p221 = scmp.ne.s32.totalorder %s207, %s208
      %p222 = scmp.eq.s32.totalorder %s20, 1
      %p223 = por %p221, %p222
      %p225 = scmp.ne.s32.totalorder %s208, %s224
      %p226 = scmp.eq.s32.totalorder %s20, 0
      %p227 = por %p225, %p226
      %p228 = scmp.le.s32.totalorder 1, %s14
      %p229 = scmp.lt.s32.totalorder %s14, 3
      %p230 = pnand %p228, %p229
      %p231 = pneg %p230
      // Predicated region
      $region9: #{model_forward.1} parent=5 // pred_check
        _
      $region10: #{model_forward.1} parent=5 // pred_check_branch
        %233 = sbr.rel (%p230) target = $region12
      $region11: #{model_forward.1} parent=5 // pred_region
        %s234 = ssub.s32 %s14, 1
        // Predicated region
        $region13: #{model_forward.1} parent=11 // pred_check
          %p235 = pneg %p82
        $region14: #{model_forward.1} parent=11 // pred_check_branch
          %237 = sbr.rel (%p235) target = $region16
        $region15: #{model_forward.1} parent=11 // pred_region
          %239 = vsyncadd [#allocation4], 0
          %s240 = sshll.u32 %s1, 4
          %s241 = int_to_ptr.vmem [resolvable:$true] %s240
          %246 = dma.vmem_to_smem %s241, 256, [#allocation3], [#allocation4], 128, 128, 8
        $region16: #{model_forward.1} parent=11 // pred_fallthru
          _
        // Predicated region
        $region17: #{model_forward.1} parent=11 // pred_check
          %p247 = pneg %p136
        $region18: #{model_forward.1} parent=11 // pred_check_branch
          %249 = sbr.rel (%p247) target = $region20
        $region19: #{model_forward.1} parent=11 // pred_region
          %s250 = smul.u32 2, %s26
          %p251 = scmp.lt.s32.totalorder %s250, 1
          %s252 = scalar_select %p251, %s250, 1
          %s253 = smul.addr %s252, 4
          %s254 = scalar_lea.vmem %s3, %s253
          %s255 = smul.u32 2, %s26
        $region20: #{model_forward.1} parent=11 // pred_fallthru
          _
        // Predicated region
        $region21: #{model_forward.1} parent=11 // pred_check
          %p256 = pneg %p162
        $region22: #{model_forward.1} parent=11 // pred_check_branch
          %258 = sbr.rel (%p256) target = $region24
        $region23: #{model_forward.1} parent=11 // pred_region
          %s259 = smul.u32 2, %s26
          %p260 = scmp.lt.s32.totalorder %s259, 1
          %s261 = scalar_select %p260, %s259, 1
          %s262 = scalar_lea.vmem %s4, %s261
          %s263 = smul.u32 2, %s26
        $region24: #{model_forward.1} parent=11 // pred_fallthru
          _
      $region12: #{model_forward.1} parent=5 // pred_fallthru
        _
      %p264 = scmp.lt.s32.totalorder %s14, 2
      // Predicated region
      $region25: #{model_forward.1} parent=5 // pred_check
        %p265 = pneg %p264
      $region26: #{model_forward.1} parent=5 // pred_check_branch
        %267 = sbr.rel (%p265) target = $region28
      $region27: #{model_forward.1} parent=5 // pred_region
        // Predicated region
        $region29: #{model_forward.1} parent=27 // pred_check
          %p268 = pneg %p55
        $region30: #{model_forward.1} parent=27 // pred_check_branch
          %270 = sbr.rel (%p268) target = $region32
        $region31: #{model_forward.1} parent=27 // pred_region
          %s271 = smul.u32 2, %s22
          %p272 = scmp.lt.s32.totalorder %s21, 1
          %s273 = scalar_select %p272, %s21, 1
          %p274 = scmp.lt.s32.totalorder %s271, 1
          %s275 = scalar_select %p274, %s271, 1
          %s276 = smul.addr %s275, 3
          %s277 = smul.addr %s273, 6
          %s278 = sadd.s32 %s276, %s277
          %s279 = smul.addr %s278, 8
          %s280 = scalar_lea.vmem %s0, %s279
          %s281 = smul.u32 2, %s22
        $region32: #{model_forward.1} parent=27 // pred_fallthru
          _
        // Predicated region
        $region33: #{model_forward.1} parent=27 // pred_check
          %p282 = pneg %p104
        $region34: #{model_forward.1} parent=27 // pred_check_branch
          %284 = sbr.rel (%p282) target = $region36
        $region35: #{model_forward.1} parent=27 // pred_region
          %s285 = smul.u32 2, %s22
          %p286 = scmp.lt.s32.totalorder %s21, 1
          %s287 = scalar_select %p286, %s21, 1
          %p288 = scmp.lt.s32.totalorder %s285, 1
          %s289 = scalar_select %p288, %s285, 1
          %s290 = smul.addr %s287, 2
          %s291 = sadd.s32 %s289, %s290
          %s292 = smul.addr %s291, 8
          %s293 = scalar_lea.vmem %s2, %s292
          %s294 = smul.u32 2, %s22
        $region36: #{model_forward.1} parent=27 // pred_fallthru
          _
      $region28: #{model_forward.1} parent=5 // pred_fallthru
        _
      %p295 = scmp.le.s32.totalorder 1, %s14
      %p296 = scmp.lt.s32.totalorder %s14, 3
      %p297 = pnand %p295, %p296
      %p298 = pneg %p297
      // Predicated region
      $region37: #{model_forward.1} parent=5 // pred_check
        _
      $region38: #{model_forward.1} parent=5 // pred_check_branch
        %300 = sbr.rel (%p297) target = $region40
      $region39: #{model_forward.1} parent=5 // pred_region
        %s301 = ssub.s32 %s14, 1
        // Predicated region
        $region41: #{model_forward.1} parent=39 // pred_check
          %p302 = pneg %p82
        $region42: #{model_forward.1} parent=39 // pred_check_branch
          %304 = sbr.rel (%p302) target = $region44
        $region43: #{model_forward.1} parent=39 // pred_region
          %306 = dma.done [#allocation4], 256
        $region44: #{model_forward.1} parent=39 // pred_fallthru
          _
        %307 = sfence
        %s308 = smul.u32 2, %s25
        %p309 = scmp.lt.s32.totalorder %s24, 1
        %s310 = scalar_select %p309, %s24, 1
        %p311 = scmp.lt.s32.totalorder %s308, 1
        %s312 = scalar_select %p311, %s308, 1
        %s313 = smul.addr %s312, 3
        %s314 = smul.addr %s310, 6
        %s315 = sadd.s32 %s313, %s314
        %s316 = smul.addr %s315, 8
        %s317 = scalar_lea.vmem %s0, %s316
        %p318 = pneg %p61
        %p319 = pneg %p58
        %p320 = pneg %p82
        %p321 = pneg %p79
        %s322 = smul.u32 2, %s25
        %p323 = scmp.lt.s32.totalorder %s24, 1
        %s324 = scalar_select %p323, %s24, 1
        %p325 = scmp.lt.s32.totalorder %s322, 1
        %s326 = scalar_select %p325, %s322, 1
        %s327 = smul.addr %s324, 2
        %s328 = sadd.s32 %s326, %s327
        %s329 = smul.addr %s328, 8
        %s330 = scalar_lea.vmem %s2, %s329
        %p331 = pneg %p110
        %p332 = pneg %p107
        %s333 = smul.u32 2, %s26
        %p334 = scmp.lt.s32.totalorder %s333, 1
        %s335 = scalar_select %p334, %s333, 1
        %s336 = smul.addr %s335, 4
        %s337 = scalar_lea.vmem %s3, %s336
        %p338 = pneg %p136
        %p339 = pneg %p133
        %s340 = smul.u32 2, %s26
        %p341 = scmp.lt.s32.totalorder %s340, 1
        %s342 = scalar_select %p341, %s340, 1
        %s343 = scalar_lea.vmem %s4, %s342
        %p344 = pneg %p162
        %p345 = pneg %p159
        %p346 = pneg %p190
        %p347 = pneg %p187
        %s348 = smul.u32 2, %s25
        %p349 = scmp.lt.s32.totalorder %s24, 1
        %s350 = scalar_select %p349, %s24, 1
        %p351 = scmp.lt.s32.totalorder %s348, 1
        %s352 = scalar_select %p351, %s348, 1
        %s353 = smul.addr %s352, 2
        %s354 = smul.addr %s350, 64
        %s355 = sadd.s32 %s353, %s354
        %s356 = smul.addr %s355, 8
        %s357 = scalar_lea.vmem %s5, %s356
        %p358 = pneg %p220
        %p359 = pneg %p217
        %s360 = smul.u32 2, %s25
        %s361 = smul.u32 2, %s26
        %p362 = scmp.lt.s32.totalorder %s24, 1
        %s363 = scalar_select %p362, %s24, 1
        %p364 = scmp.lt.s32.totalorder %s360, 1
        %s365 = scalar_select %p364, %s360, 1
        %p366 = scmp.lt.s32.totalorder %s361, 1
        %s367 = scalar_select %p366, %s361, 1
        %s368 = smul.addr %s365, 2
        %s369 = sadd.s32 %s367, %s368
        %s370 = smul.addr %s363, 4
        %s371 = sadd.s32 %s369, %s370
        %s372 = smul.addr %s371, 8
        %s373 = scalar_lea.vmem %s6, %s372
        %s374 = smul.u32 2, %s25
        %p375 = scmp.lt.s32.totalorder %s24, 1
        %s376 = scalar_select %p375, %s24, 1
        %p377 = scmp.lt.s32.totalorder %s374, 1
        %s378 = scalar_select %p377, %s374, 1
        %s379 = smul.addr %s378, 3
        %s380 = smul.addr %s376, 6
        %s381 = sadd.s32 %s379, %s380
        %s382 = smul.addr %s381, 8
        %s383 = scalar_lea.vmem %s0, %s382
        %s384 = smul.u32 2, %s25
        %s385 = smul.u32 2, %s25
        %p386 = scmp.lt.s32.totalorder %s24, 1
        %s387 = scalar_select %p386, %s24, 1
        %p388 = scmp.lt.s32.totalorder %s385, 1
        %s389 = scalar_select %p388, %s385, 1
        %s390 = smul.addr %s387, 2
        %s391 = sadd.s32 %s389, %s390
        %s392 = smul.addr %s391, 8
        %s393 = scalar_lea.vmem %s2, %s392
        %s394 = smul.u32 2, %s25
        %s395 = smul.u32 2, %s26
        %p396 = scmp.lt.s32.totalorder %s395, 1
        %s397 = scalar_select %p396, %s395, 1
        %s398 = smul.addr %s397, 4
        %s399 = scalar_lea.vmem %s3, %s398
        %s400 = smul.u32 2, %s26
        %s401 = smul.u32 2, %s26
        %p402 = scmp.lt.s32.totalorder %s401, 1
        %s403 = scalar_select %p402, %s401, 1
        %s404 = scalar_lea.vmem %s4, %s403
        %s405 = smul.u32 2, %s26
        %s406 = smul.u32 2, %s25
        %p407 = scmp.lt.s32.totalorder %s24, 1
        %s408 = scalar_select %p407, %s24, 1
        %p409 = scmp.lt.s32.totalorder %s406, 1
        %s410 = scalar_select %p409, %s406, 1
        %s411 = smul.addr %s410, 2
        %s412 = smul.addr %s408, 64
        %s413 = sadd.s32 %s411, %s412
        %s414 = smul.addr %s413, 8
        %s415 = scalar_lea.vmem %s5, %s414
        %s416 = smul.u32 2, %s25
        %s417 = smul.u32 2, %s25
        %s418 = smul.u32 2, %s26
        %p419 = scmp.lt.s32.totalorder %s24, 1
        %s420 = scalar_select %p419, %s24, 1
        %p421 = scmp.lt.s32.totalorder %s417, 1
        %s422 = scalar_select %p421, %s417, 1
        %p423 = scmp.lt.s32.totalorder %s418, 1
        %s424 = scalar_select %p423, %s418, 1
        %s425 = smul.addr %s422, 2
        %s426 = sadd.s32 %s424, %s425
        %s427 = smul.addr %s420, 4
        %s428 = sadd.s32 %s426, %s427
        %s429 = smul.addr %s428, 8
        %s430 = scalar_lea.vmem %s6, %s429
        %s431 = smul.u32 2, %s25
        %s432 = smul.u32 2, %s26
        %p433 = scmp.eq.s32.totalorder %s26, 0
        // Predicated region
        $region45: #{model_forward.1} parent=39 // pred_check
          %p434 = pneg %p433
        $region46: #{model_forward.1} parent=39 // pred_check_branch
          %436 = sbr.rel (%p434) target = $region48
        $region47: #{model_forward.1} parent=39 // pred_region
          %v437 = vld [vmem:[%s383] sm:$0xff]
          %v438 = vld [vmem:[%s383 + $0x8] sm:$0xff]
          %v439 = vld [vmem:[%s383 + $0x10] sm:$0xff]
          %v440 = vld [vmem:[%s383 + $0x18] sm:$0xff]
          %v441 = vld [vmem:[%s383 + $0x20] sm:$0xff]
          %v442 = vld [vmem:[%s383 + $0x28] sm:$0xff]
          %v443 = vld [vmem:[%s393] sm:$0xff]
          %v444 = vld [vmem:[%s393 + $0x8] sm:$0xff]
          %v445 = vlaneseq
          %v446 = vand.u32 %v445, 127
          %v447 = vadd.s32 %v446, 128
          %vm448 = vcmp.lt.s32.totalorder %v446, 0
          %v449 = vsub.s32 0, %v446
          %v450 = vsel %vm448, %v449, %v446
          %v451 = vshrl.u32 %v450, 4
          %v452 = vand.u32 %v450, 15
          %v453 = vsub.s32 0, %v452
          %v454 = vsel %vm448, %v453, %v452
          %vm455 = vcmp.lt.s32.totalorder %v447, 0
          %v456 = vsub.s32 0, %v447
          %v457 = vsel %vm455, %v456, %v447
          %v458 = vshrl.u32 %v457, 4
          %v459 = vand.u32 %v457, 15
          %v460 = vsub.s32 0, %v459
          %v461 = vsel %vm455, %v460, %v459
          %vm462 = vcmp.ne.s32.totalorder %v454, 0
          %vm463 = vcmp.ne.s32.totalorder %v461, 0
          %vm464 = vcmp.lt.s32.totalorder %v454, 0
          %vm465 = vcmp.lt.s32.totalorder %v461, 0
          %vm466 = vmand %vm464, %vm462
          %vm467 = vmand %vm465, %vm463
          %v468 = vadd.s32 %v454, 16
          %v469 = vadd.s32 %v461, 16
          %v470 = vsel %vm466, %v468, %v454
          %v471 = vsel %vm467, %v469, %v461
          %vm472 = vcmp.eq.s32.totalorder %v470, 0
          %vm473 = vcmp.eq.s32.totalorder %v471, 0
          %vm474 = vcmp.eq.s32.totalorder %v470, 15
          %vm475 = vcmp.eq.s32.totalorder %v471, 15
          %v476 = vsel %vm472, 0.0, %v437
          %v477 = vsel %vm473, 0.0, %v438
          %v478 = vsel %vm472, 0.0, %v440
          %v479 = vsel %vm473, 0.0, %v441
          %486 = vrot.lane.b32.xlu0 %v437, 126
          %v487 = vpop.permute.xlu0 %486
          %488 = vrot.lane.b32.xlu0 %v438, 126
          %v489 = vpop.permute.xlu0 %488
          %490 = vrot.lane.b32.xlu0 %v439, 126
          %v491 = vpop.permute.xlu0 %490
          %492 = vrot.lane.b32.xlu0 %v440, 126
          %v493 = vpop.permute.xlu0 %492
          %494 = vrot.lane.b32.xlu0 %v441, 126
          %v495 = vpop.permute.xlu0 %494
          %496 = vrot.lane.b32.xlu0 %v442, 126
          %v497 = vpop.permute.xlu0 %496
          %vm498 = vcmask 1031168
          %v499 = vsel %vm498, %v487, %v489
          %v500 = vsel %vm498, %v489, %v491
          %v501 = vsel %vm498, %v493, %v495
          %v502 = vsel %vm498, %v495, %v497
          %v507 = vsel %vm474, 0.0, %v499
          %v508 = vsel %vm475, 0.0, %v500
          %v509 = vsel %vm474, 0.0, %v501
          %v510 = vsel %vm475, 0.0, %v502
          %511 = vrot.lane.b32.xlu0 %v437, 112
          %v512 = vpop.permute.xlu0 %511
          %513 = vrot.lane.b32.xlu0 %v438, 112
          %v514 = vpop.permute.xlu0 %513
          %515 = vrot.lane.b32.xlu0 %v439, 112
          %v516 = vpop.permute.xlu0 %515
          %517 = vrot.lane.b32.xlu0 %v440, 112
          %v518 = vpop.permute.xlu0 %517
          %519 = vrot.lane.b32.xlu0 %v441, 112
          %v520 = vpop.permute.xlu0 %519
          %521 = vrot.lane.b32.xlu0 %v442, 112
          %v522 = vpop.permute.xlu0 %521
          %vm523 = vcmask 916480
          %v524 = vsel %vm523, %v512, %v514
          %v525 = vsel %vm523, %v514, %v516
          %v526 = vsel %vm523, %v518, %v520
          %v527 = vsel %vm523, %v520, %v522
          %v532 = vsel %vm472, 0.0, %v524
          %v533 = vsel %vm473, 0.0, %v525
          %v534 = vsel %vm472, 0.0, %v526
          %v535 = vsel %vm473, 0.0, %v527
          %536 = vrot.lane.b32.xlu0 %v437, 110
          %v537 = vpop.permute.xlu0 %536
          %538 = vrot.lane.b32.xlu0 %v438, 110
          %v539 = vpop.permute.xlu0 %538
          %540 = vrot.lane.b32.xlu0 %v439, 110
          %v541 = vpop.permute.xlu0 %540
          %542 = vrot.lane.b32.xlu0 %v440, 110
          %v543 = vpop.permute.xlu0 %542
          %544 = vrot.lane.b32.xlu0 %v441, 110
          %v545 = vpop.permute.xlu0 %544
          %546 = vrot.lane.b32.xlu0 %v442, 110
          %v547 = vpop.permute.xlu0 %546
          %vm548 = vcmask 900096
          %v549 = vsel %vm548, %v537, %v539
          %v550 = vsel %vm548, %v539, %v541
          %v551 = vsel %vm548, %v543, %v545
          %v552 = vsel %vm548, %v545, %v547
          %v557 = vsel %vm474, 0.0, %v549
          %v558 = vsel %vm475, 0.0, %v550
          %v559 = vsel %vm474, 0.0, %v551
          %v560 = vsel %vm475, 0.0, %v552
          %561 = vrot.lane.b32.xlu0 %v437, 96
          %v562 = vpop.permute.xlu0 %561
          %563 = vrot.lane.b32.xlu0 %v438, 96
          %v564 = vpop.permute.xlu0 %563
          %565 = vrot.lane.b32.xlu0 %v439, 96
          %v566 = vpop.permute.xlu0 %565
          %567 = vrot.lane.b32.xlu0 %v440, 96
          %v568 = vpop.permute.xlu0 %567
          %569 = vrot.lane.b32.xlu0 %v441, 96
          %v570 = vpop.permute.xlu0 %569
          %571 = vrot.lane.b32.xlu0 %v442, 96
          %v572 = vpop.permute.xlu0 %571
          %vm573 = vcmask 785408
          %v574 = vsel %vm573, %v562, %v564
          %v575 = vsel %vm573, %v564, %v566
          %v576 = vsel %vm573, %v568, %v570
          %v577 = vsel %vm573, %v570, %v572
          %v582 = vsel %vm472, 0.0, %v574
          %v583 = vsel %vm473, 0.0, %v575
          %v584 = vsel %vm472, 0.0, %v576
          %v585 = vsel %vm473, 0.0, %v577
          %586 = vrot.lane.b32.xlu0 %v437, 94
          %v587 = vpop.permute.xlu0 %586
          %588 = vrot.lane.b32.xlu0 %v438, 94
          %v589 = vpop.permute.xlu0 %588
          %590 = vrot.lane.b32.xlu0 %v439, 94
          %v591 = vpop.permute.xlu0 %590
          %592 = vrot.lane.b32.xlu0 %v440, 94
          %v593 = vpop.permute.xlu0 %592
          %594 = vrot.lane.b32.xlu0 %v441, 94
          %v595 = vpop.permute.xlu0 %594
          %596 = vrot.lane.b32.xlu0 %v442, 94
          %v597 = vpop.permute.xlu0 %596
          %vm598 = vcmask 769024
          %v599 = vsel %vm598, %v587, %v589
          %v600 = vsel %vm598, %v589, %v591
          %v601 = vsel %vm598, %v593, %v595
          %v602 = vsel %vm598, %v595, %v597
          %v607 = vsel %vm474, 0.0, %v599
          %v608 = vsel %vm475, 0.0, %v600
          %v609 = vsel %vm474, 0.0, %v601
          %v610 = vsel %vm475, 0.0, %v602
          %s611 = sld [smem:[#allocation3]]
          %v612 = vstv %s611
          %v613 = vmul.f32 %v476, %v612
          %v614 = vmul.f32 %v477, %v612
          %v615 = vmul.f32 %v478, %v612
          %v616 = vmul.f32 %v479, %v612
          %s617 = sld [smem:[#allocation3 + $0x80]]
          %v618 = vstv %s617
          %v619 = vmul.f32 %v437, %v618
          %v620 = vmul.f32 %v438, %v618
          %v621 = vmul.f32 %v439, %v618
          %v622 = vmul.f32 %v440, %v618
          %v623 = vmul.f32 %v441, %v618
          %v624 = vmul.f32 %v442, %v618
          %631 = vrot.lane.b32.xlu0 %v619, 127
          %v632 = vpop.permute.xlu0 %631
          %633 = vrot.lane.b32.xlu0 %v620, 127
          %v634 = vpop.permute.xlu0 %633
          %635 = vrot.lane.b32.xlu0 %v621, 127
          %v636 = vpop.permute.xlu0 %635
          %637 = vrot.lane.b32.xlu0 %v622, 127
          %v638 = vpop.permute.xlu0 %637
          %639 = vrot.lane.b32.xlu0 %v623, 127
          %v640 = vpop.permute.xlu0 %639
          %641 = vrot.lane.b32.xlu0 %v624, 127
          %v642 = vpop.permute.xlu0 %641
          %vm643 = vcmask 1039360
          %v644 = vsel %vm643, %v632, %v634
          %v645 = vsel %vm643, %v634, %v636
          %v646 = vsel %vm643, %v638, %v640
          %v647 = vsel %vm643, %v640, %v642
          %v652 = vadd.f32 %v613, %v644
          %v653 = vadd.f32 %v614, %v645
          %v654 = vadd.f32 %v615, %v646
          %v655 = vadd.f32 %v616, %v647
          %s656 = sld [smem:[#allocation3 + $0x100]]
          %v657 = vstv %s656
          %v658 = vmul.f32 %v507, %v657
          %v659 = vmul.f32 %v508, %v657
          %v660 = vmul.f32 %v509, %v657
          %v661 = vmul.f32 %v510, %v657
          %v662 = vadd.f32 %v652, %v658
          %v663 = vadd.f32 %v653, %v659
          %v664 = vadd.f32 %v654, %v660
          %v665 = vadd.f32 %v655, %v661
          %s666 = sld [smem:[#allocation3 + $0x180]]
          %v667 = vstv %s666
          %v668 = vmul.f32 %v532, %v667
          %v669 = vmul.f32 %v533, %v667
          %v670 = vmul.f32 %v534, %v667
          %v671 = vmul.f32 %v535, %v667
          %v672 = vadd.f32 %v662, %v668
          %v673 = vadd.f32 %v663, %v669
          %v674 = vadd.f32 %v664, %v670
          %v675 = vadd.f32 %v665, %v671
          %s676 = sld [smem:[#allocation3 + $0x200]]
          %v677 = vstv %s676
          %v678 = vmul.f32 %v437, %v677
          %v679 = vmul.f32 %v438, %v677
          %v680 = vmul.f32 %v439, %v677
          %v681 = vmul.f32 %v440, %v677
          %v682 = vmul.f32 %v441, %v677
          %v683 = vmul.f32 %v442, %v677
          %690 = vrot.lane.b32.xlu0 %v678, 111
          %v691 = vpop.permute.xlu0 %690
          %692 = vrot.lane.b32.xlu0 %v679, 111
          %v693 = vpop.permute.xlu0 %692
          %694 = vrot.lane.b32.xlu0 %v680, 111
          %v695 = vpop.permute.xlu0 %694
          %696 = vrot.lane.b32.xlu0 %v681, 111
          %v697 = vpop.permute.xlu0 %696
          %698 = vrot.lane.b32.xlu0 %v682, 111
          %v699 = vpop.permute.xlu0 %698
          %700 = vrot.lane.b32.xlu0 %v683, 111
          %v701 = vpop.permute.xlu0 %700
          %vm702 = vcmask 908288
          %v703 = vsel %vm702, %v691, %v693
          %v704 = vsel %vm702, %v693, %v695
          %v705 = vsel %vm702, %v697, %v699
          %v706 = vsel %vm702, %v699, %v701
          %v711 = vadd.f32 %v672, %v703
          %v712 = vadd.f32 %v673, %v704
          %v713 = vadd.f32 %v674, %v705
          %v714 = vadd.f32 %v675, %v706
          %s715 = sld [smem:[#allocation3 + $0x280]]
          %v716 = vstv %s715
          %v717 = vmul.f32 %v557, %v716
          %v718 = vmul.f32 %v558, %v716
          %v719 = vmul.f32 %v559, %v716
          %v720 = vmul.f32 %v560, %v716
          %v721 = vadd.f32 %v711, %v717
          %v722 = vadd.f32 %v712, %v718
          %v723 = vadd.f32 %v713, %v719
          %v724 = vadd.f32 %v714, %v720
          %s725 = sld [smem:[#allocation3 + $0x300]]
          %v726 = vstv %s725
          %v727 = vmul.f32 %v582, %v726
          %v728 = vmul.f32 %v583, %v726
          %v729 = vmul.f32 %v584, %v726
          %v730 = vmul.f32 %v585, %v726
          %v731 = vadd.f32 %v721, %v727
          %v732 = vadd.f32 %v722, %v728
          %v733 = vadd.f32 %v723, %v729
          %v734 = vadd.f32 %v724, %v730
          %s735 = sld [smem:[#allocation3 + $0x380]]
          %v736 = vstv %s735
          %v737 = vmul.f32 %v437, %v736
          %v738 = vmul.f32 %v438, %v736
          %v739 = vmul.f32 %v439, %v736
          %v740 = vmul.f32 %v440, %v736
          %v741 = vmul.f32 %v441, %v736
          %v742 = vmul.f32 %v442, %v736
          %749 = vrot.lane.b32.xlu0 %v737, 95
          %v750 = vpop.permute.xlu0 %749
          %751 = vrot.lane.b32.xlu0 %v738, 95
          %v752 = vpop.permute.xlu0 %751
          %753 = vrot.lane.b32.xlu0 %v739, 95
          %v754 = vpop.permute.xlu0 %753
          %755 = vrot.lane.b32.xlu0 %v740, 95
          %v756 = vpop.permute.xlu0 %755
          %757 = vrot.lane.b32.xlu0 %v741, 95
          %v758 = vpop.permute.xlu0 %757
          %759 = vrot.lane.b32.xlu0 %v742, 95
          %v760 = vpop.permute.xlu0 %759
          %vm761 = vcmask 777216
          %v762 = vsel %vm761, %v750, %v752
          %v763 = vsel %vm761, %v752, %v754
          %v764 = vsel %vm761, %v756, %v758
          %v765 = vsel %vm761, %v758, %v760
          %v770 = vadd.f32 %v731, %v762
          %v771 = vadd.f32 %v732, %v763
          %v772 = vadd.f32 %v733, %v764
          %v773 = vadd.f32 %v734, %v765
          %s774 = sld [smem:[#allocation3 + $0x400]]
          %v775 = vstv %s774
          %v776 = vmul.f32 %v607, %v775
          %v777 = vmul.f32 %v608, %v775
          %v778 = vmul.f32 %v609, %v775
          %v779 = vmul.f32 %v610, %v775
          %v780 = vadd.f32 %v770, %v776
          %v781 = vadd.f32 %v771, %v777
          %v782 = vadd.f32 %v772, %v778
          %v783 = vadd.f32 %v773, %v779
          %785 = vset.pattern.permute.xlu0 0
          %786 = vperm.xlu0 %785, %v443
          %v787 = vpop.permute.xlu0 %786
          %790 = vset.pattern.permute.xlu0 0
          %791 = vperm.xlu0 %790, %v444
          %v792 = vpop.permute.xlu0 %791
          %v794 = vadd.f32 %v780, %v787
          %v795 = vadd.f32 %v781, %v787
          %v796 = vadd.f32 %v782, %v792
          %v797 = vadd.f32 %v783, %v792
          %v798 = vmul.f32 %v794, %v794
          %v799 = vmul.f32 %v795, %v795
          %v800 = vmul.f32 %v796, %v796
          %v801 = vmul.f32 %v797, %v797
          %v802 = vmul.f32 %v794, %v798
          %v803 = vmul.f32 %v795, %v799
          %v804 = vmul.f32 %v796, %v800
          %v805 = vmul.f32 %v797, %v801
          %v806 = vmul.f32 %v802, 0.044715
          %v807 = vmul.f32 %v803, 0.044715
          %v808 = vmul.f32 %v804, 0.044715
          %v809 = vmul.f32 %v805, 0.044715
          %v810 = vadd.f32 %v794, %v806
          %v811 = vadd.f32 %v795, %v807
          %v812 = vadd.f32 %v796, %v808
          %v813 = vadd.f32 %v797, %v809
          %v814 = vmul.f32 %v810, 0.7978846
          %v815 = vmul.f32 %v811, 0.7978846
          %v816 = vmul.f32 %v812, 0.7978846
          %v817 = vmul.f32 %v813, 0.7978846
          %v818 = vtanh.pop %v814
          %v819 = vtanh.pop %v815
          %v820 = vtanh.pop %v816
          %v821 = vtanh.pop %v817
          %v822 = vadd.f32 %v818, 1.0
          %v823 = vadd.f32 %v819, 1.0
          %v824 = vadd.f32 %v820, 1.0
          %v825 = vadd.f32 %v821, 1.0
          %v826 = vmul.f32 %v822, 0.5
          %v827 = vmul.f32 %v823, 0.5
          %v828 = vmul.f32 %v824, 0.5
          %v829 = vmul.f32 %v825, 0.5
          %v830 = vmul.f32 %v794, %v826
          %v831 = vmul.f32 %v795, %v827
          %v832 = vmul.f32 %v796, %v828
          %v833 = vmul.f32 %v797, %v829
          %834 = vst [vmem:[%s415] sm:$0xff] %v830
          %835 = vst [vmem:[%s415 + $0x8] sm:$0xff] %v831
          %836 = vst [vmem:[%s415 + $0x10] sm:$0xff] %v832
          %837 = vst [vmem:[%s415 + $0x18] sm:$0xff] %v833
          %v838 = vpack.c.bf16 %v831, %v830
          %v839 = vpack.c.bf16 %v833, %v832
          %840 = vst [vmem:[#allocation2] sm:$0xff] %v838
          %841 = vst [vmem:[#allocation2 + $0x80] sm:$0xff] %v839
          %s842 = sld [smem:[#allocation3 + $0x1]]
          %v843 = vstv %s842
          %v844 = vmul.f32 %v476, %v843
          %v845 = vmul.f32 %v477, %v843
          %v846 = vmul.f32 %v478, %v843
          %v847 = vmul.f32 %v479, %v843
          %s848 = sld [smem:[#allocation3 + $0x81]]
          %v849 = vstv %s848
          %v850 = vmul.f32 %v437, %v849
          %v851 = vmul.f32 %v438, %v849
          %v852 = vmul.f32 %v439, %v849
          %v853 = vmul.f32 %v440, %v849
          %v854 = vmul.f32 %v441, %v849
          %v855 = vmul.f32 %v442, %v849
          %862 = vrot.lane.b32.xlu0 %v850, 127
          %v863 = vpop.permute.xlu0 %862
          %864 = vrot.lane.b32.xlu0 %v851, 127
          %v865 = vpop.permute.xlu0 %864
          %866 = vrot.lane.b32.xlu0 %v852, 127
          %v867 = vpop.permute.xlu0 %866
          %868 = vrot.lane.b32.xlu0 %v853, 127
          %v869 = vpop.permute.xlu0 %868
          %870 = vrot.lane.b32.xlu0 %v854, 127
          %v871 = vpop.permute.xlu0 %870
          %872 = vrot.lane.b32.xlu0 %v855, 127
          %v873 = vpop.permute.xlu0 %872
          %v874 = vsel %vm643, %v863, %v865
          %v875 = vsel %vm643, %v865, %v867
          %v876 = vsel %vm643, %v869, %v871
          %v877 = vsel %vm643, %v871, %v873
          %v882 = vadd.f32 %v844, %v874
          %v883 = vadd.f32 %v845, %v875
          %v884 = vadd.f32 %v846, %v876
          %v885 = vadd.f32 %v847, %v877
          %s886 = sld [smem:[#allocation3 + $0x101]]
          %v887 = vstv %s886
          %v888 = vmul.f32 %v507, %v887
          %v889 = vmul.f32 %v508, %v887
          %v890 = vmul.f32 %v509, %v887
          %v891 = vmul.f32 %v510, %v887
          %v892 = vadd.f32 %v882, %v888
          %v893 = vadd.f32 %v883, %v889
          %v894 = vadd.f32 %v884, %v890
          %v895 = vadd.f32 %v885, %v891
          %s896 = sld [smem:[#allocation3 + $0x181]]
          %v897 = vstv %s896
          %v898 = vmul.f32 %v532, %v897
          %v899 = vmul.f32 %v533, %v897
          %v900 = vmul.f32 %v534, %v897
          %v901 = vmul.f32 %v535, %v897
          %v902 = vadd.f32 %v892, %v898
          %v903 = vadd.f32 %v893, %v899
          %v904 = vadd.f32 %v894, %v900
          %v905 = vadd.f32 %v895, %v901
          %s906 = sld [smem:[#allocation3 + $0x201]]
          %v907 = vstv %s906
          %v908 = vmul.f32 %v437, %v907
          %v909 = vmul.f32 %v438, %v907
          %v910 = vmul.f32 %v439, %v907
          %v911 = vmul.f32 %v440, %v907
          %v912 = vmul.f32 %v441, %v907
          %v913 = vmul.f32 %v442, %v907
          %920 = vrot.lane.b32.xlu0 %v908, 111
          %v921 = vpop.permute.xlu0 %920
          %922 = vrot.lane.b32.xlu0 %v909, 111
          %v923 = vpop.permute.xlu0 %922
          %924 = vrot.lane.b32.xlu0 %v910, 111
          %v925 = vpop.permute.xlu0 %924
          %926 = vrot.lane.b32.xlu0 %v911, 111
          %v927 = vpop.permute.xlu0 %926
          %928 = vrot.lane.b32.xlu0 %v912, 111
          %v929 = vpop.permute.xlu0 %928
          %930 = vrot.lane.b32.xlu0 %v913, 111
          %v931 = vpop.permute.xlu0 %930
          %v932 = vsel %vm702, %v921, %v923
          %v933 = vsel %vm702, %v923, %v925
          %v934 = vsel %vm702, %v927, %v929
          %v935 = vsel %vm702, %v929, %v931
          %v940 = vadd.f32 %v902, %v932
          %v941 = vadd.f32 %v903, %v933
          %v942 = vadd.f32 %v904, %v934
          %v943 = vadd.f32 %v905, %v935
          %s944 = sld [smem:[#allocation3 + $0x281]]
          %v945 = vstv %s944
          %v946 = vmul.f32 %v557, %v945
          %v947 = vmul.f32 %v558, %v945
          %v948 = vmul.f32 %v559, %v945
          %v949 = vmul.f32 %v560, %v945
          %v950 = vadd.f32 %v940, %v946
          %v951 = vadd.f32 %v941, %v947
          %v952 = vadd.f32 %v942, %v948
          %v953 = vadd.f32 %v943, %v949
          %s954 = sld [smem:[#allocation3 + $0x301]]
          %v955 = vstv %s954
          %v956 = vmul.f32 %v582, %v955
          %v957 = vmul.f32 %v583, %v955
          %v958 = vmul.f32 %v584, %v955
          %v959 = vmul.f32 %v585, %v955
          %v960 = vadd.f32 %v950, %v956
          %v961 = vadd.f32 %v951, %v957
          %v962 = vadd.f32 %v952, %v958
          %v963 = vadd.f32 %v953, %v959
          %s964 = sld [smem:[#allocation3 + $0x381]]
          %v965 = vstv %s964
          %v966 = vmul.f32 %v437, %v965
          %v967 = vmul.f32 %v438, %v965
          %v968 = vmul.f32 %v439, %v965
          %v969 = vmul.f32 %v440, %v965
          %v970 = vmul.f32 %v441, %v965
          %v971 = vmul.f32 %v442, %v965
          %978 = vrot.lane.b32.xlu0 %v966, 95
          %v979 = vpop.permute.xlu0 %978
          %980 = vrot.lane.b32.xlu0 %v967, 95
          %v981 = vpop.permute.xlu0 %980
          %982 = vrot.lane.b32.xlu0 %v968, 95
          %v983 = vpop.permute.xlu0 %982
          %984 = vrot.lane.b32.xlu0 %v969, 95
          %v985 = vpop.permute.xlu0 %984
          %986 = vrot.lane.b32.xlu0 %v970, 95
          %v987 = vpop.permute.xlu0 %986
          %988 = vrot.lane.b32.xlu0 %v971, 95
          %v989 = vpop.permute.xlu0 %988
          %v990 = vsel %vm761, %v979, %v981
          %v991 = vsel %vm761, %v981, %v983
          %v992 = vsel %vm761, %v985, %v987
          %v993 = vsel %vm761, %v987, %v989
          %v998 = vadd.f32 %v960, %v990
          %v999 = vadd.f32 %v961, %v991
          %v1000 = vadd.f32 %v962, %v992
          %v1001 = vadd.f32 %v963, %v993
          %s1002 = sld [smem:[#allocation3 + $0x401]]
          %v1003 = vstv %s1002
          %v1004 = vmul.f32 %v607, %v1003
          %v1005 = vmul.f32 %v608, %v1003
          %v1006 = vmul.f32 %v609, %v1003
          %v1007 = vmul.f32 %v610, %v1003
          %v1008 = vadd.f32 %v998, %v1004
          %v1009 = vadd.f32 %v999, %v1005
          %v1010 = vadd.f32 %v1000, %v1006
          %v1011 = vadd.f32 %v1001, %v1007
          %1012 = vset.pattern.permute.xlu0 1
          %1013 = vperm.xlu0 %1012, %v443
          %v1014 = vpop.permute.xlu0 %1013
          %1016 = vset.pattern.permute.xlu0 1
          %1017 = vperm.xlu0 %1016, %v444
          %v1018 = vpop.permute.xlu0 %1017
          %v1020 = vadd.f32 %v1008, %v1014
          %v1021 = vadd.f32 %v1009, %v1014
          %v1022 = vadd.f32 %v1010, %v1018
          %v1023 = vadd.f32 %v1011, %v1018
          %v1024 = vmul.f32 %v1020, %v1020
          %v1025 = vmul.f32 %v1021, %v1021
          %v1026 = vmul.f32 %v1022, %v1022
          %v1027 = vmul.f32 %v1023, %v1023
          %v1028 = vmul.f32 %v1020, %v1024
          %v1029 = vmul.f32 %v1021, %v1025
          %v1030 = vmul.f32 %v1022, %v1026
          %v1031 = vmul.f32 %v1023, %v1027
          %v1032 = vmul.f32 %v1028, 0.044715
          %v1033 = vmul.f32 %v1029, 0.044715
          %v1034 = vmul.f32 %v1030, 0.044715
          %v1035 = vmul.f32 %v1031, 0.044715
          %v1036 = vadd.f32 %v1020, %v1032
          %v1037 = vadd.f32 %v1021, %v1033
          %v1038 = vadd.f32 %v1022, %v1034
          %v1039 = vadd.f32 %v1023, %v1035
          %v1040 = vmul.f32 %v1036, 0.7978846
          %v1041 = vmul.f32 %v1037, 0.7978846
          %v1042 = vmul.f32 %v1038, 0.7978846
          %v1043 = vmul.f32 %v1039, 0.7978846
          %v1044 = vtanh.pop %v1040
          %v1045 = vtanh.pop %v1041
          %v1046 = vtanh.pop %v1042
          %v1047 = vtanh.pop %v1043
          %v1048 = vadd.f32 %v1044, 1.0
          %v1049 = vadd.f32 %v1045, 1.0
          %v1050 = vadd.f32 %v1046, 1.0
          %v1051 = vadd.f32 %v1047, 1.0
          %v1052 = vmul.f32 %v1048, 0.5
          %v1053 = vmul.f32 %v1049, 0.5
          %v1054 = vmul.f32 %v1050, 0.5
          %v1055 = vmul.f32 %v1051, 0.5
          %v1056 = vmul.f32 %v1020, %v1052
          %v1057 = vmul.f32 %v1021, %v1053
          %v1058 = vmul.f32 %v1022, %v1054
          %v1059 = vmul.f32 %v1023, %v1055
          %s1060 = scalar_lea.vmem %s415, 32
          %1061 = vst [vmem:[%s1060] sm:$0xff] %v1056
          %1062 = vst [vmem:[%s1060 + $0x8] sm:$0xff] %v1057
          %1063 = vst [vmem:[%s1060 + $0x10] sm:$0xff] %v1058
          %1064 = vst [vmem:[%s1060 + $0x18] sm:$0xff] %v1059
          %v1065 = vpack.c.bf16 %v1057, %v1056
          %v1066 = vpack.c.bf16 %v1059, %v1058
          %1067 = vst [vmem:[#allocation2 + $0x8] sm:$0xff] %v1065
          %1068 = vst [vmem:[#allocation2 + $0x88] sm:$0xff] %v1066
          %s1069 = sld [smem:[#allocation3 + $0x2]]
          %v1070 = vstv %s1069
          %v1071 = vmul.f32 %v476, %v1070
          %v1072 = vmul.f32 %v477, %v1070
          %v1073 = vmul.f32 %v478, %v1070
          %v1074 = vmul.f32 %v479, %v1070
          %s1075 = sld [smem:[#allocation3 + $0x82]]
          %v1076 = vstv %s1075
          %v1077 = vmul.f32 %v437, %v1076
          %v1078 = vmul.f32 %v438, %v1076
          %v1079 = vmul.f32 %v439, %v1076
          %v1080 = vmul.f32 %v440, %v1076
          %v1081 = vmul.f32 %v441, %v1076
          %v1082 = vmul.f32 %v442, %v1076
          %1089 = vrot.lane.b32.xlu0 %v1077, 127
          %v1090 = vpop.permute.xlu0 %1089
          %1091 = vrot.lane.b32.xlu0 %v1078, 127
          %v1092 = vpop.permute.xlu0 %1091
          %1093 = vrot.lane.b32.xlu0 %v1079, 127
          %v1094 = vpop.permute.xlu0 %1093
          %1095 = vrot.lane.b32.xlu0 %v1080, 127
          %v1096 = vpop.permute.xlu0 %1095
          %1097 = vrot.lane.b32.xlu0 %v1081, 127
          %v1098 = vpop.permute.xlu0 %1097
          %1099 = vrot.lane.b32.xlu0 %v1082, 127
          %v1100 = vpop.permute.xlu0 %1099
          %v1101 = vsel %vm643, %v1090, %v1092
          %v1102 = vsel %vm643, %v1092, %v1094
          %v1103 = vsel %vm643, %v1096, %v1098
          %v1104 = vsel %vm643, %v1098, %v1100
          %v1109 = vadd.f32 %v1071, %v1101
          %v1110 = vadd.f32 %v1072, %v1102
          %v1111 = vadd.f32 %v1073, %v1103
          %v1112 = vadd.f32 %v1074, %v1104
          %s1113 = sld [smem:[#allocation3 + $0x102]]
          %v1114 = vstv %s1113
          %v1115 = vmul.f32 %v507, %v1114
          %v1116 = vmul.f32 %v508, %v1114
          %v1117 = vmul.f32 %v509, %v1114
          %v1118 = vmul.f32 %v510, %v1114
          %v1119 = vadd.f32 %v1109, %v1115
          %v1120 = vadd.f32 %v1110, %v1116
          %v1121 = vadd.f32 %v1111, %v1117
          %v1122 = vadd.f32 %v1112, %v1118
          %s1123 = sld [smem:[#allocation3 + $0x182]]
          %v1124 = vstv %s1123
          %v1125 = vmul.f32 %v532, %v1124
          %v1126 = vmul.f32 %v533, %v1124
          %v1127 = vmul.f32 %v534, %v1124
          %v1128 = vmul.f32 %v535, %v1124
          %v1129 = vadd.f32 %v1119, %v1125
          %v1130 = vadd.f32 %v1120, %v1126
          %v1131 = vadd.f32 %v1121, %v1127
          %v1132 = vadd.f32 %v1122, %v1128
          %s1133 = sld [smem:[#allocation3 + $0x202]]
          %v1134 = vstv %s1133
          %v1135 = vmul.f32 %v437, %v1134
          %v1136 = vmul.f32 %v438, %v1134
          %v1137 = vmul.f32 %v439, %v1134
          %v1138 = vmul.f32 %v440, %v1134
          %v1139 = vmul.f32 %v441, %v1134
          %v1140 = vmul.f32 %v442, %v1134
          %1147 = vrot.lane.b32.xlu0 %v1135, 111
          %v1148 = vpop.permute.xlu0 %1147
          %1149 = vrot.lane.b32.xlu0 %v1136, 111
          %v1150 = vpop.permute.xlu0 %1149
          %1151 = vrot.lane.b32.xlu0 %v1137, 111
          %v1152 = vpop.permute.xlu0 %1151
          %1153 = vrot.lane.b32.xlu0 %v1138, 111
          %v1154 = vpop.permute.xlu0 %1153
          %1155 = vrot.lane.b32.xlu0 %v1139, 111
          %v1156 = vpop.permute.xlu0 %1155
          %1157 = vrot.lane.b32.xlu0 %v1140, 111
          %v1158 = vpop.permute.xlu0 %1157
          %v1159 = vsel %vm702, %v1148, %v1150
          %v1160 = vsel %vm702, %v1150, %v1152
          %v1161 = vsel %vm702, %v1154, %v1156
          %v1162 = vsel %vm702, %v1156, %v1158
          %v1167 = vadd.f32 %v1129, %v1159
          %v1168 = vadd.f32 %v1130, %v1160
          %v1169 = vadd.f32 %v1131, %v1161
          %v1170 = vadd.f32 %v1132, %v1162
          %s1171 = sld [smem:[#allocation3 + $0x282]]
          %v1172 = vstv %s1171
          %v1173 = vmul.f32 %v557, %v1172
          %v1174 = vmul.f32 %v558, %v1172
          %v1175 = vmul.f32 %v559, %v1172
          %v1176 = vmul.f32 %v560, %v1172
          %v1177 = vadd.f32 %v1167, %v1173
          %v1178 = vadd.f32 %v1168, %v1174
          %v1179 = vadd.f32 %v1169, %v1175
          %v1180 = vadd.f32 %v1170, %v1176
          %s1181 = sld [smem:[#allocation3 + $0x302]]
          %v1182 = vstv %s1181
          %v1183 = vmul.f32 %v582, %v1182
          %v1184 = vmul.f32 %v583, %v1182
          %v1185 = vmul.f32 %v584, %v1182
          %v1186 = vmul.f32 %v585, %v1182
          %v1187 = vadd.f32 %v1177, %v1183
          %v1188 = vadd.f32 %v1178, %v1184
          %v1189 = vadd.f32 %v1179, %v1185
          %v1190 = vadd.f32 %v1180, %v1186
          %s1191 = sld [smem:[#allocation3 + $0x382]]
          %v1192 = vstv %s1191
          %v1193 = vmul.f32 %v437, %v1192
          %v1194 = vmul.f32 %v438, %v1192
          %v1195 = vmul.f32 %v439, %v1192
          %v1196 = vmul.f32 %v440, %v1192
          %v1197 = vmul.f32 %v441, %v1192
          %v1198 = vmul.f32 %v442, %v1192
          %1205 = vrot.lane.b32.xlu0 %v1193, 95
          %v1206 = vpop.permute.xlu0 %1205
          %1207 = vrot.lane.b32.xlu0 %v1194, 95
          %v1208 = vpop.permute.xlu0 %1207
          %1209 = vrot.lane.b32.xlu0 %v1195, 95
          %v1210 = vpop.permute.xlu0 %1209
          %1211 = vrot.lane.b32.xlu0 %v1196, 95
          %v1212 = vpop.permute.xlu0 %1211
          %1213 = vrot.lane.b32.xlu0 %v1197, 95
          %v1214 = vpop.permute.xlu0 %1213
          %1215 = vrot.lane.b32.xlu0 %v1198, 95
          %v1216 = vpop.permute.xlu0 %1215
          %v1217 = vsel %vm761, %v1206, %v1208
          %v1218 = vsel %vm761, %v1208, %v1210
          %v1219 = vsel %vm761, %v1212, %v1214
          %v1220 = vsel %vm761, %v1214, %v1216
          %v1225 = vadd.f32 %v1187, %v1217
          %v1226 = vadd.f32 %v1188, %v1218
          %v1227 = vadd.f32 %v1189, %v1219
          %v1228 = vadd.f32 %v1190, %v1220
          %s1229 = sld [smem:[#allocation3 + $0x402]]
          %v1230 = vstv %s1229
          %v1231 = vmul.f32 %v607, %v1230
          %v1232 = vmul.f32 %v608, %v1230
          %v1233 = vmul.f32 %v609, %v1230
          %v1234 = vmul.f32 %v610, %v1230
          %v1235 = vadd.f32 %v1225, %v1231
          %v1236 = vadd.f32 %v1226, %v1232
          %v1237 = vadd.f32 %v1227, %v1233
          %v1238 = vadd.f32 %v1228, %v1234
          %1239 = vset.pattern.permute.xlu0 2
          %1240 = vperm.xlu0 %1239, %v443
          %v1241 = vpop.permute.xlu0 %1240
          %1243 = vset.pattern.permute.xlu0 2
          %1244 = vperm.xlu0 %1243, %v444
          %v1245 = vpop.permute.xlu0 %1244
          %v1247 = vadd.f32 %v1235, %v1241
          %v1248 = vadd.f32 %v1236, %v1241
          %v1249 = vadd.f32 %v1237, %v1245
          %v1250 = vadd.f32 %v1238, %v1245
          %v1251 = vmul.f32 %v1247, %v1247
          %v1252 = vmul.f32 %v1248, %v1248
          %v1253 = vmul.f32 %v1249, %v1249
          %v1254 = vmul.f32 %v1250, %v1250
          %v1255 = vmul.f32 %v1247, %v1251
          %v1256 = vmul.f32 %v1248, %v1252
          %v1257 = vmul.f32 %v1249, %v1253
          %v1258 = vmul.f32 %v1250, %v1254
          %v1259 = vmul.f32 %v1255, 0.044715
          %v1260 = vmul.f32 %v1256, 0.044715
          %v1261 = vmul.f32 %v1257, 0.044715
          %v1262 = vmul.f32 %v1258, 0.044715
          %v1263 = vadd.f32 %v1247, %v1259
          %v1264 = vadd.f32 %v1248, %v1260
          %v1265 = vadd.f32 %v1249, %v1261
          %v1266 = vadd.f32 %v1250, %v1262
          %v1267 = vmul.f32 %v1263, 0.7978846
          %v1268 = vmul.f32 %v1264, 0.7978846
          %v1269 = vmul.f32 %v1265, 0.7978846
          %v1270 = vmul.f32 %v1266, 0.7978846
          %v1271 = vtanh.pop %v1267
          %v1272 = vtanh.pop %v1268
          %v1273 = vtanh.pop %v1269
          %v1274 = vtanh.pop %v1270
          %v1275 = vadd.f32 %v1271, 1.0
          %v1276 = vadd.f32 %v1272, 1.0
          %v1277 = vadd.f32 %v1273, 1.0
          %v1278 = vadd.f32 %v1274, 1.0
          %v1279 = vmul.f32 %v1275, 0.5
          %v1280 = vmul.f32 %v1276, 0.5
          %v1281 = vmul.f32 %v1277, 0.5
          %v1282 = vmul.f32 %v1278, 0.5
          %v1283 = vmul.f32 %v1247, %v1279
          %v1284 = vmul.f32 %v1248, %v1280
          %v1285 = vmul.f32 %v1249, %v1281
          %v1286 = vmul.f32 %v1250, %v1282
          %s1287 = scalar_lea.vmem %s415, 64
          %1288 = vst [vmem:[%s1287] sm:$0xff] %v1283
          %1289 = vst [vmem:[%s1287 + $0x8] sm:$0xff] %v1284
          %1290 = vst [vmem:[%s1287 + $0x10] sm:$0xff] %v1285
          %1291 = vst [vmem:[%s1287 + $0x18] sm:$0xff] %v1286
          %v1292 = vpack.c.bf16 %v1284, %v1283
          %v1293 = vpack.c.bf16 %v1286, %v1285
          %1294 = vst [vmem:[#allocation2 + $0x10] sm:$0xff] %v1292
          %1295 = vst [vmem:[#allocation2 + $0x90] sm:$0xff] %v1293
          %s1296 = sld [smem:[#allocation3 + $0x3]]
          %v1297 = vstv %s1296
          %v1298 = vmul.f32 %v476, %v1297
          %v1299 = vmul.f32 %v477, %v1297
          %v1300 = vmul.f32 %v478, %v1297
          %v1301 = vmul.f32 %v479, %v1297
          %s1302 = sld [smem:[#allocation3 + $0x83]]
          %v1303 = vstv %s1302
          %v1304 = vmul.f32 %v437, %v1303
          %v1305 = vmul.f32 %v438, %v1303
          %v1306 = vmul.f32 %v439, %v1303
          %v1307 = vmul.f32 %v440, %v1303
          %v1308 = vmul.f32 %v441, %v1303
          %v1309 = vmul.f32 %v442, %v1303
          %1316 = vrot.lane.b32.xlu0 %v1304, 127
          %v1317 = vpop.permute.xlu0 %1316
          %1318 = vrot.lane.b32.xlu0 %v1305, 127
          %v1319 = vpop.permute.xlu0 %1318
          %1320 = vrot.lane.b32.xlu0 %v1306, 127
          %v1321 = vpop.permute.xlu0 %1320
          %1322 = vrot.lane.b32.xlu0 %v1307, 127
          %v1323 = vpop.permute.xlu0 %1322
          %1324 = vrot.lane.b32.xlu0 %v1308, 127
          %v1325 = vpop.permute.xlu0 %1324
          %1326 = vrot.lane.b32.xlu0 %v1309, 127
          %v1327 = vpop.permute.xlu0 %1326
          %v1328 = vsel %vm643, %v1317, %v1319
          %v1329 = vsel %vm643, %v1319, %v1321
          %v1330 = vsel %vm643, %v1323, %v1325
          %v1331 = vsel %vm643, %v1325, %v1327
          %v1336 = vadd.f32 %v1298, %v1328
          %v1337 = vadd.f32 %v1299, %v1329
          %v1338 = vadd.f32 %v1300, %v1330
          %v1339 = vadd.f32 %v1301, %v1331
          %s1340 = sld [smem:[#allocation3 + $0x103]]
          %v1341 = vstv %s1340
          %v1342 = vmul.f32 %v507, %v1341
          %v1343 = vmul.f32 %v508, %v1341
          %v1344 = vmul.f32 %v509, %v1341
          %v1345 = vmul.f32 %v510, %v1341
          %v1346 = vadd.f32 %v1336, %v1342
          %v1347 = vadd.f32 %v1337, %v1343
          %v1348 = vadd.f32 %v1338, %v1344
          %v1349 = vadd.f32 %v1339, %v1345
          %s1350 = sld [smem:[#allocation3 + $0x183]]
          %v1351 = vstv %s1350
          %v1352 = vmul.f32 %v532, %v1351
          %v1353 = vmul.f32 %v533, %v1351
          %v1354 = vmul.f32 %v534, %v1351
          %v1355 = vmul.f32 %v535, %v1351
          %v1356 = vadd.f32 %v1346, %v1352
          %v1357 = vadd.f32 %v1347, %v1353
          %v1358 = vadd.f32 %v1348, %v1354
          %v1359 = vadd.f32 %v1349, %v1355
          %s1360 = sld [smem:[#allocation3 + $0x203]]
          %v1361 = vstv %s1360
          %v1362 = vmul.f32 %v437, %v1361
          %v1363 = vmul.f32 %v438, %v1361
          %v1364 = vmul.f32 %v439, %v1361
          %v1365 = vmul.f32 %v440, %v1361
          %v1366 = vmul.f32 %v441, %v1361
          %v1367 = vmul.f32 %v442, %v1361
          %1374 = vrot.lane.b32.xlu0 %v1362, 111
          %v1375 = vpop.permute.xlu0 %1374
          %1376 = vrot.lane.b32.xlu0 %v1363, 111
          %v1377 = vpop.permute.xlu0 %1376
          %1378 = vrot.lane.b32.xlu0 %v1364, 111
          %v1379 = vpop.permute.xlu0 %1378
          %1380 = vrot.lane.b32.xlu0 %v1365, 111
          %v1381 = vpop.permute.xlu0 %1380
          %1382 = vrot.lane.b32.xlu0 %v1366, 111
          %v1383 = vpop.permute.xlu0 %1382
          %1384 = vrot.lane.b32.xlu0 %v1367, 111
          %v1385 = vpop.permute.xlu0 %1384
          %v1386 = vsel %vm702, %v1375, %v1377
          %v1387 = vsel %vm702, %v1377, %v1379
          %v1388 = vsel %vm702, %v1381, %v1383
          %v1389 = vsel %vm702, %v1383, %v1385
          %v1394 = vadd.f32 %v1356, %v1386
          %v1395 = vadd.f32 %v1357, %v1387
          %v1396 = vadd.f32 %v1358, %v1388
          %v1397 = vadd.f32 %v1359, %v1389
          %s1398 = sld [smem:[#allocation3 + $0x283]]
          %v1399 = vstv %s1398
          %v1400 = vmul.f32 %v557, %v1399
          %v1401 = vmul.f32 %v558, %v1399
          %v1402 = vmul.f32 %v559, %v1399
          %v1403 = vmul.f32 %v560, %v1399
          %v1404 = vadd.f32 %v1394, %v1400
          %v1405 = vadd.f32 %v1395, %v1401
          %v1406 = vadd.f32 %v1396, %v1402
          %v1407 = vadd.f32 %v1397, %v1403
          %s1408 = sld [smem:[#allocation3 + $0x303]]
          %v1409 = vstv %s1408
          %v1410 = vmul.f32 %v582, %v1409
          %v1411 = vmul.f32 %v583, %v1409
          %v1412 = vmul.f32 %v584, %v1409
          %v1413 = vmul.f32 %v585, %v1409
          %v1414 = vadd.f32 %v1404, %v1410
          %v1415 = vadd.f32 %v1405, %v1411
          %v1416 = vadd.f32 %v1406, %v1412
          %v1417 = vadd.f32 %v1407, %v1413
          %s1418 = sld [smem:[#allocation3 + $0x383]]
          %v1419 = vstv %s1418
          %v1420 = vmul.f32 %v437, %v1419
          %v1421 = vmul.f32 %v438, %v1419
          %v1422 = vmul.f32 %v439, %v1419
          %v1423 = vmul.f32 %v440, %v1419
          %v1424 = vmul.f32 %v441, %v1419
          %v1425 = vmul.f32 %v442, %v1419
          %1432 = vrot.lane.b32.xlu0 %v1420, 95
          %v1433 = vpop.permute.xlu0 %1432
          %1434 = vrot.lane.b32.xlu0 %v1421, 95
          %v1435 = vpop.permute.xlu0 %1434
          %1436 = vrot.lane.b32.xlu0 %v1422, 95
          %v1437 = vpop.permute.xlu0 %1436
          %1438 = vrot.lane.b32.xlu0 %v1423, 95
          %v1439 = vpop.permute.xlu0 %1438
          %1440 = vrot.lane.b32.xlu0 %v1424, 95
          %v1441 = vpop.permute.xlu0 %1440
          %1442 = vrot.lane.b32.xlu0 %v1425, 95
          %v1443 = vpop.permute.xlu0 %1442
          %v1444 = vsel %vm761, %v1433, %v1435
          %v1445 = vsel %vm761, %v1435, %v1437
          %v1446 = vsel %vm761, %v1439, %v1441
          %v1447 = vsel %vm761, %v1441, %v1443
          %v1452 = vadd.f32 %v1414, %v1444
          %v1453 = vadd.f32 %v1415, %v1445
          %v1454 = vadd.f32 %v1416, %v1446
          %v1455 = vadd.f32 %v1417, %v1447
          %s1456 = sld [smem:[#allocation3 + $0x403]]
          %v1457 = vstv %s1456
          %v1458 = vmul.f32 %v607, %v1457
          %v1459 = vmul.f32 %v608, %v1457
          %v1460 = vmul.f32 %v609, %v1457
          %v1461 = vmul.f32 %v610, %v1457
          %v1462 = vadd.f32 %v1452, %v1458
          %v1463 = vadd.f32 %v1453, %v1459
          %v1464 = vadd.f32 %v1454, %v1460
          %v1465 = vadd.f32 %v1455, %v1461
          %1466 = vset.pattern.permute.xlu0 3
          %1467 = vperm.xlu0 %1466, %v443
          %v1468 = vpop.permute.xlu0 %1467
          %1470 = vset.pattern.permute.xlu0 3
          %1471 = vperm.xlu0 %1470, %v444
          %v1472 = vpop.permute.xlu0 %1471
          %v1474 = vadd.f32 %v1462, %v1468
          %v1475 = vadd.f32 %v1463, %v1468
          %v1476 = vadd.f32 %v1464, %v1472
          %v1477 = vadd.f32 %v1465, %v1472
          %v1478 = vmul.f32 %v1474, %v1474
          %v1479 = vmul.f32 %v1475, %v1475
          %v1480 = vmul.f32 %v1476, %v1476
          %v1481 = vmul.f32 %v1477, %v1477
          %v1482 = vmul.f32 %v1474, %v1478
          %v1483 = vmul.f32 %v1475, %v1479
          %v1484 = vmul.f32 %v1476, %v1480
          %v1485 = vmul.f32 %v1477, %v1481
          %v1486 = vmul.f32 %v1482, 0.044715
          %v1487 = vmul.f32 %v1483, 0.044715
          %v1488 = vmul.f32 %v1484, 0.044715
          %v1489 = vmul.f32 %v1485, 0.044715
          %v1490 = vadd.f32 %v1474, %v1486
          %v1491 = vadd.f32 %v1475, %v1487
          %v1492 = vadd.f32 %v1476, %v1488
          %v1493 = vadd.f32 %v1477, %v1489
          %v1494 = vmul.f32 %v1490, 0.7978846
          %v1495 = vmul.f32 %v1491, 0.7978846
          %v1496 = vmul.f32 %v1492, 0.7978846
          %v1497 = vmul.f32 %v1493, 0.7978846
          %v1498 = vtanh.pop %v1494
          %v1499 = vtanh.pop %v1495
          %v1500 = vtanh.pop %v1496
          %v1501 = vtanh.pop %v1497
          %v1502 = vadd.f32 %v1498, 1.0
          %v1503 = vadd.f32 %v1499, 1.0
          %v1504 = vadd.f32 %v1500, 1.0
          %v1505 = vadd.f32 %v1501, 1.0
          %v1506 = vmul.f32 %v1502, 0.5
          %v1507 = vmul.f32 %v1503, 0.5
          %v1508 = vmul.f32 %v1504, 0.5
          %v1509 = vmul.f32 %v1505, 0.5
          %v1510 = vmul.f32 %v1474, %v1506
          %v1511 = vmul.f32 %v1475, %v1507
          %v1512 = vmul.f32 %v1476, %v1508
          %v1513 = vmul.f32 %v1477, %v1509
          %s1514 = scalar_lea.vmem %s415, 96
          %1515 = vst [vmem:[%s1514] sm:$0xff] %v1510
          %1516 = vst [vmem:[%s1514 + $0x8] sm:$0xff] %v1511
          %1517 = vst [vmem:[%s1514 + $0x10] sm:$0xff] %v1512
          %1518 = vst [vmem:[%s1514 + $0x18] sm:$0xff] %v1513
          %v1519 = vpack.c.bf16 %v1511, %v1510
          %v1520 = vpack.c.bf16 %v1513, %v1512
          %1521 = vst [vmem:[#allocation2 + $0x18] sm:$0xff] %v1519
          %1522 = vst [vmem:[#allocation2 + $0x98] sm:$0xff] %v1520
          %s1523 = sld [smem:[#allocation3 + $0x4]]
          %v1524 = vstv %s1523
          %v1525 = vmul.f32 %v476, %v1524
          %v1526 = vmul.f32 %v477, %v1524
          %v1527 = vmul.f32 %v478, %v1524
          %v1528 = vmul.f32 %v479, %v1524
          %s1529 = sld [smem:[#allocation3 + $0x84]]
          %v1530 = vstv %s1529
          %v1531 = vmul.f32 %v437, %v1530
          %v1532 = vmul.f32 %v438, %v1530
          %v1533 = vmul.f32 %v439, %v1530
          %v1534 = vmul.f32 %v440, %v1530
          %v1535 = vmul.f32 %v441, %v1530
          %v1536 = vmul.f32 %v442, %v1530
          %1543 = vrot.lane.b32.xlu0 %v1531, 127
          %v1544 = vpop.permute.xlu0 %1543
          %1545 = vrot.lane.b32.xlu0 %v1532, 127
          %v1546 = vpop.permute.xlu0 %1545
          %1547 = vrot.lane.b32.xlu0 %v1533, 127
          %v1548 = vpop.permute.xlu0 %1547
          %1549 = vrot.lane.b32.xlu0 %v1534, 127
          %v1550 = vpop.permute.xlu0 %1549
          %1551 = vrot.lane.b32.xlu0 %v1535, 127
          %v1552 = vpop.permute.xlu0 %1551
          %1553 = vrot.lane.b32.xlu0 %v1536, 127
          %v1554 = vpop.permute.xlu0 %1553
          %v1555 = vsel %vm643, %v1544, %v1546
          %v1556 = vsel %vm643, %v1546, %v1548
          %v1557 = vsel %vm643, %v1550, %v1552
          %v1558 = vsel %vm643, %v1552, %v1554
          %v1563 = vadd.f32 %v1525, %v1555
          %v1564 = vadd.f32 %v1526, %v1556
          %v1565 = vadd.f32 %v1527, %v1557
          %v1566 = vadd.f32 %v1528, %v1558
          %s1567 = sld [smem:[#allocation3 + $0x104]]
          %v1568 = vstv %s1567
          %v1569 = vmul.f32 %v507, %v1568
          %v1570 = vmul.f32 %v508, %v1568
          %v1571 = vmul.f32 %v509, %v1568
          %v1572 = vmul.f32 %v510, %v1568
          %v1573 = vadd.f32 %v1563, %v1569
          %v1574 = vadd.f32 %v1564, %v1570
          %v1575 = vadd.f32 %v1565, %v1571
          %v1576 = vadd.f32 %v1566, %v1572
          %s1577 = sld [smem:[#allocation3 + $0x184]]
          %v1578 = vstv %s1577
          %v1579 = vmul.f32 %v532, %v1578
          %v1580 = vmul.f32 %v533, %v1578
          %v1581 = vmul.f32 %v534, %v1578
          %v1582 = vmul.f32 %v535, %v1578
          %v1583 = vadd.f32 %v1573, %v1579
          %v1584 = vadd.f32 %v1574, %v1580
          %v1585 = vadd.f32 %v1575, %v1581
          %v1586 = vadd.f32 %v1576, %v1582
          %s1587 = sld [smem:[#allocation3 + $0x204]]
          %v1588 = vstv %s1587
          %v1589 = vmul.f32 %v437, %v1588
          %v1590 = vmul.f32 %v438, %v1588
          %v1591 = vmul.f32 %v439, %v1588
          %v1592 = vmul.f32 %v440, %v1588
          %v1593 = vmul.f32 %v441, %v1588
          %v1594 = vmul.f32 %v442, %v1588
          %1601 = vrot.lane.b32.xlu0 %v1589, 111
          %v1602 = vpop.permute.xlu0 %1601
          %1603 = vrot.lane.b32.xlu0 %v1590, 111
          %v1604 = vpop.permute.xlu0 %1603
          %1605 = vrot.lane.b32.xlu0 %v1591, 111
          %v1606 = vpop.permute.xlu0 %1605
          %1607 = vrot.lane.b32.xlu0 %v1592, 111
          %v1608 = vpop.permute.xlu0 %1607
          %1609 = vrot.lane.b32.xlu0 %v1593, 111
          %v1610 = vpop.permute.xlu0 %1609
          %1611 = vrot.lane.b32.xlu0 %v1594, 111
          %v1612 = vpop.permute.xlu0 %1611
          %v1613 = vsel %vm702, %v1602, %v1604
          %v1614 = vsel %vm702, %v1604, %v1606
          %v1615 = vsel %vm702, %v1608, %v1610
          %v1616 = vsel %vm702, %v1610, %v1612
          %v1621 = vadd.f32 %v1583, %v1613
          %v1622 = vadd.f32 %v1584, %v1614
          %v1623 = vadd.f32 %v1585, %v1615
          %v1624 = vadd.f32 %v1586, %v1616
          %s1625 = sld [smem:[#allocation3 + $0x284]]
          %v1626 = vstv %s1625
          %v1627 = vmul.f32 %v557, %v1626
          %v1628 = vmul.f32 %v558, %v1626
          %v1629 = vmul.f32 %v559, %v1626
          %v1630 = vmul.f32 %v560, %v1626
          %v1631 = vadd.f32 %v1621, %v1627
          %v1632 = vadd.f32 %v1622, %v1628
          %v1633 = vadd.f32 %v1623, %v1629
          %v1634 = vadd.f32 %v1624, %v1630
          %s1635 = sld [smem:[#allocation3 + $0x304]]
          %v1636 = vstv %s1635
          %v1637 = vmul.f32 %v582, %v1636
          %v1638 = vmul.f32 %v583, %v1636
          %v1639 = vmul.f32 %v584, %v1636
          %v1640 = vmul.f32 %v585, %v1636
          %v1641 = vadd.f32 %v1631, %v1637
          %v1642 = vadd.f32 %v1632, %v1638
          %v1643 = vadd.f32 %v1633, %v1639
          %v1644 = vadd.f32 %v1634, %v1640
          %s1645 = sld [smem:[#allocation3 + $0x384]]
          %v1646 = vstv %s1645
          %v1647 = vmul.f32 %v437, %v1646
          %v1648 = vmul.f32 %v438, %v1646
          %v1649 = vmul.f32 %v439, %v1646
          %v1650 = vmul.f32 %v440, %v1646
          %v1651 = vmul.f32 %v441, %v1646
          %v1652 = vmul.f32 %v442, %v1646
          %1659 = vrot.lane.b32.xlu0 %v1647, 95
          %v1660 = vpop.permute.xlu0 %1659
          %1661 = vrot.lane.b32.xlu0 %v1648, 95
          %v1662 = vpop.permute.xlu0 %1661
          %1663 = vrot.lane.b32.xlu0 %v1649, 95
          %v1664 = vpop.permute.xlu0 %1663
          %1665 = vrot.lane.b32.xlu0 %v1650, 95
          %v1666 = vpop.permute.xlu0 %1665
          %1667 = vrot.lane.b32.xlu0 %v1651, 95
          %v1668 = vpop.permute.xlu0 %1667
          %1669 = vrot.lane.b32.xlu0 %v1652, 95
          %v1670 = vpop.permute.xlu0 %1669
          %v1671 = vsel %vm761, %v1660, %v1662
          %v1672 = vsel %vm761, %v1662, %v1664
          %v1673 = vsel %vm761, %v1666, %v1668
          %v1674 = vsel %vm761, %v1668, %v1670
          %v1679 = vadd.f32 %v1641, %v1671
          %v1680 = vadd.f32 %v1642, %v1672
          %v1681 = vadd.f32 %v1643, %v1673
          %v1682 = vadd.f32 %v1644, %v1674
          %s1683 = sld [smem:[#allocation3 + $0x404]]
          %v1684 = vstv %s1683
          %v1685 = vmul.f32 %v607, %v1684
          %v1686 = vmul.f32 %v608, %v1684
          %v1687 = vmul.f32 %v609, %v1684
          %v1688 = vmul.f32 %v610, %v1684
          %v1689 = vadd.f32 %v1679, %v1685
          %v1690 = vadd.f32 %v1680, %v1686
          %v1691 = vadd.f32 %v1681, %v1687
          %v1692 = vadd.f32 %v1682, %v1688
          %1693 = vset.pattern.permute.xlu0 4
          %1694 = vperm.xlu0 %1693, %v443
          %v1695 = vpop.permute.xlu0 %1694
          %1697 = vset.pattern.permute.xlu0 4
          %1698 = vperm.xlu0 %1697, %v444
          %v1699 = vpop.permute.xlu0 %1698
          %v1701 = vadd.f32 %v1689, %v1695
          %v1702 = vadd.f32 %v1690, %v1695
          %v1703 = vadd.f32 %v1691, %v1699
          %v1704 = vadd.f32 %v1692, %v1699
          %v1705 = vmul.f32 %v1701, %v1701
          %v1706 = vmul.f32 %v1702, %v1702
          %v1707 = vmul.f32 %v1703, %v1703
          %v1708 = vmul.f32 %v1704, %v1704
          %v1709 = vmul.f32 %v1701, %v1705
          %v1710 = vmul.f32 %v1702, %v1706
          %v1711 = vmul.f32 %v1703, %v1707
          %v1712 = vmul.f32 %v1704, %v1708
          %v1713 = vmul.f32 %v1709, 0.044715
          %v1714 = vmul.f32 %v1710, 0.044715
          %v1715 = vmul.f32 %v1711, 0.044715
          %v1716 = vmul.f32 %v1712, 0.044715
          %v1717 = vadd.f32 %v1701, %v1713
          %v1718 = vadd.f32 %v1702, %v1714
          %v1719 = vadd.f32 %v1703, %v1715
          %v1720 = vadd.f32 %v1704, %v1716
          %v1721 = vmul.f32 %v1717, 0.7978846
          %v1722 = vmul.f32 %v1718, 0.7978846
          %v1723 = vmul.f32 %v1719, 0.7978846
          %v1724 = vmul.f32 %v1720, 0.7978846
          %v1725 = vtanh.pop %v1721
          %v1726 = vtanh.pop %v1722
          %v1727 = vtanh.pop %v1723
          %v1728 = vtanh.pop %v1724
          %v1729 = vadd.f32 %v1725, 1.0
          %v1730 = vadd.f32 %v1726, 1.0
          %v1731 = vadd.f32 %v1727, 1.0
          %v1732 = vadd.f32 %v1728, 1.0
          %v1733 = vmul.f32 %v1729, 0.5
          %v1734 = vmul.f32 %v1730, 0.5
          %v1735 = vmul.f32 %v1731, 0.5
          %v1736 = vmul.f32 %v1732, 0.5
          %v1737 = vmul.f32 %v1701, %v1733
          %v1738 = vmul.f32 %v1702, %v1734
          %v1739 = vmul.f32 %v1703, %v1735
          %v1740 = vmul.f32 %v1704, %v1736
          %s1741 = scalar_lea.vmem %s415, 128
          %1742 = vst [vmem:[%s1741] sm:$0xff] %v1737
          %1743 = vst [vmem:[%s1741 + $0x8] sm:$0xff] %v1738
          %1744 = vst [vmem:[%s1741 + $0x10] sm:$0xff] %v1739
          %1745 = vst [vmem:[%s1741 + $0x18] sm:$0xff] %v1740
          %v1746 = vpack.c.bf16 %v1738, %v1737
          %v1747 = vpack.c.bf16 %v1740, %v1739
          %1748 = vst [vmem:[#allocation2 + $0x20] sm:$0xff] %v1746
          %1749 = vst [vmem:[#allocation2 + $0xa0] sm:$0xff] %v1747
          %s1750 = sld [smem:[#allocation3 + $0x5]]
          %v1751 = vstv %s1750
          %v1752 = vmul.f32 %v476, %v1751
          %v1753 = vmul.f32 %v477, %v1751
          %v1754 = vmul.f32 %v478, %v1751
          %v1755 = vmul.f32 %v479, %v1751
          %s1756 = sld [smem:[#allocation3 + $0x85]]
          %v1757 = vstv %s1756
          %v1758 = vmul.f32 %v437, %v1757
          %v1759 = vmul.f32 %v438, %v1757
          %v1760 = vmul.f32 %v439, %v1757
          %v1761 = vmul.f32 %v440, %v1757
          %v1762 = vmul.f32 %v441, %v1757
          %v1763 = vmul.f32 %v442, %v1757
          %1770 = vrot.lane.b32.xlu0 %v1758, 127
          %v1771 = vpop.permute.xlu0 %1770
          %1772 = vrot.lane.b32.xlu0 %v1759, 127
          %v1773 = vpop.permute.xlu0 %1772
          %1774 = vrot.lane.b32.xlu0 %v1760, 127
          %v1775 = vpop.permute.xlu0 %1774
          %1776 = vrot.lane.b32.xlu0 %v1761, 127
          %v1777 = vpop.permute.xlu0 %1776
          %1778 = vrot.lane.b32.xlu0 %v1762, 127
          %v1779 = vpop.permute.xlu0 %1778
          %1780 = vrot.lane.b32.xlu0 %v1763, 127
          %v1781 = vpop.permute.xlu0 %1780
          %v1782 = vsel %vm643, %v1771, %v1773
          %v1783 = vsel %vm643, %v1773, %v1775
          %v1784 = vsel %vm643, %v1777, %v1779
          %v1785 = vsel %vm643, %v1779, %v1781
          %v1790 = vadd.f32 %v1752, %v1782
          %v1791 = vadd.f32 %v1753, %v1783
          %v1792 = vadd.f32 %v1754, %v1784
          %v1793 = vadd.f32 %v1755, %v1785
          %s1794 = sld [smem:[#allocation3 + $0x105]]
          %v1795 = vstv %s1794
          %v1796 = vmul.f32 %v507, %v1795
          %v1797 = vmul.f32 %v508, %v1795
          %v1798 = vmul.f32 %v509, %v1795
          %v1799 = vmul.f32 %v510, %v1795
          %v1800 = vadd.f32 %v1790, %v1796
          %v1801 = vadd.f32 %v1791, %v1797
          %v1802 = vadd.f32 %v1792, %v1798
          %v1803 = vadd.f32 %v1793, %v1799
          %s1804 = sld [smem:[#allocation3 + $0x185]]
          %v1805 = vstv %s1804
          %v1806 = vmul.f32 %v532, %v1805
          %v1807 = vmul.f32 %v533, %v1805
          %v1808 = vmul.f32 %v534, %v1805
          %v1809 = vmul.f32 %v535, %v1805
          %v1810 = vadd.f32 %v1800, %v1806
          %v1811 = vadd.f32 %v1801, %v1807
          %v1812 = vadd.f32 %v1802, %v1808
          %v1813 = vadd.f32 %v1803, %v1809
          %s1814 = sld [smem:[#allocation3 + $0x205]]
          %v1815 = vstv %s1814
          %v1816 = vmul.f32 %v437, %v1815
          %v1817 = vmul.f32 %v438, %v1815
          %v1818 = vmul.f32 %v439, %v1815
          %v1819 = vmul.f32 %v440, %v1815
          %v1820 = vmul.f32 %v441, %v1815
          %v1821 = vmul.f32 %v442, %v1815
          %1828 = vrot.lane.b32.xlu0 %v1816, 111
          %v1829 = vpop.permute.xlu0 %1828
          %1830 = vrot.lane.b32.xlu0 %v1817, 111
          %v1831 = vpop.permute.xlu0 %1830
          %1832 = vrot.lane.b32.xlu0 %v1818, 111
          %v1833 = vpop.permute.xlu0 %1832
          %1834 = vrot.lane.b32.xlu0 %v1819, 111
          %v1835 = vpop.permute.xlu0 %1834
          %1836 = vrot.lane.b32.xlu0 %v1820, 111
          %v1837 = vpop.permute.xlu0 %1836
          %1838 = vrot.lane.b32.xlu0 %v1821, 111
          %v1839 = vpop.permute.xlu0 %1838
          %v1840 = vsel %vm702, %v1829, %v1831
          %v1841 = vsel %vm702, %v1831, %v1833
          %v1842 = vsel %vm702, %v1835, %v1837
          %v1843 = vsel %vm702, %v1837, %v1839
          %v1848 = vadd.f32 %v1810, %v1840
          %v1849 = vadd.f32 %v1811, %v1841
          %v1850 = vadd.f32 %v1812, %v1842
          %v1851 = vadd.f32 %v1813, %v1843
          %s1852 = sld [smem:[#allocation3 + $0x285]]
          %v1853 = vstv %s1852
          %v1854 = vmul.f32 %v557, %v1853
          %v1855 = vmul.f32 %v558, %v1853
          %v1856 = vmul.f32 %v559, %v1853
          %v1857 = vmul.f32 %v560, %v1853
          %v1858 = vadd.f32 %v1848, %v1854
          %v1859 = vadd.f32 %v1849, %v1855
          %v1860 = vadd.f32 %v1850, %v1856
          %v1861 = vadd.f32 %v1851, %v1857
          %s1862 = sld [smem:[#allocation3 + $0x305]]
          %v1863 = vstv %s1862
          %v1864 = vmul.f32 %v582, %v1863
          %v1865 = vmul.f32 %v583, %v1863
          %v1866 = vmul.f32 %v584, %v1863
          %v1867 = vmul.f32 %v585, %v1863
          %v1868 = vadd.f32 %v1858, %v1864
          %v1869 = vadd.f32 %v1859, %v1865
          %v1870 = vadd.f32 %v1860, %v1866
          %v1871 = vadd.f32 %v1861, %v1867
          %s1872 = sld [smem:[#allocation3 + $0x385]]
          %v1873 = vstv %s1872
          %v1874 = vmul.f32 %v437, %v1873
          %v1875 = vmul.f32 %v438, %v1873
          %v1876 = vmul.f32 %v439, %v1873
          %v1877 = vmul.f32 %v440, %v1873
          %v1878 = vmul.f32 %v441, %v1873
          %v1879 = vmul.f32 %v442, %v1873
          %1886 = vrot.lane.b32.xlu0 %v1874, 95
          %v1887 = vpop.permute.xlu0 %1886
          %1888 = vrot.lane.b32.xlu0 %v1875, 95
          %v1889 = vpop.permute.xlu0 %1888
          %1890 = vrot.lane.b32.xlu0 %v1876, 95
          %v1891 = vpop.permute.xlu0 %1890
          %1892 = vrot.lane.b32.xlu0 %v1877, 95
          %v1893 = vpop.permute.xlu0 %1892
          %1894 = vrot.lane.b32.xlu0 %v1878, 95
          %v1895 = vpop.permute.xlu0 %1894
          %1896 = vrot.lane.b32.xlu0 %v1879, 95
          %v1897 = vpop.permute.xlu0 %1896
          %v1898 = vsel %vm761, %v1887, %v1889
          %v1899 = vsel %vm761, %v1889, %v1891
          %v1900 = vsel %vm761, %v1893, %v1895
          %v1901 = vsel %vm761, %v1895, %v1897
          %v1906 = vadd.f32 %v1868, %v1898
          %v1907 = vadd.f32 %v1869, %v1899
          %v1908 = vadd.f32 %v1870, %v1900
          %v1909 = vadd.f32 %v1871, %v1901
          %s1910 = sld [smem:[#allocation3 + $0x405]]
          %v1911 = vstv %s1910
          %v1912 = vmul.f32 %v607, %v1911
          %v1913 = vmul.f32 %v608, %v1911
          %v1914 = vmul.f32 %v609, %v1911
          %v1915 = vmul.f32 %v610, %v1911
          %v1916 = vadd.f32 %v1906, %v1912
          %v1917 = vadd.f32 %v1907, %v1913
          %v1918 = vadd.f32 %v1908, %v1914
          %v1919 = vadd.f32 %v1909, %v1915
          %1920 = vset.pattern.permute.xlu0 5
          %1921 = vperm.xlu0 %1920, %v443
          %v1922 = vpop.permute.xlu0 %1921
          %1924 = vset.pattern.permute.xlu0 5
          %1925 = vperm.xlu0 %1924, %v444
          %v1926 = vpop.permute.xlu0 %1925
          %v1928 = vadd.f32 %v1916, %v1922
          %v1929 = vadd.f32 %v1917, %v1922
          %v1930 = vadd.f32 %v1918, %v1926
          %v1931 = vadd.f32 %v1919, %v1926
          %v1932 = vmul.f32 %v1928, %v1928
          %v1933 = vmul.f32 %v1929, %v1929
          %v1934 = vmul.f32 %v1930, %v1930
          %v1935 = vmul.f32 %v1931, %v1931
          %v1936 = vmul.f32 %v1928, %v1932
          %v1937 = vmul.f32 %v1929, %v1933
          %v1938 = vmul.f32 %v1930, %v1934
          %v1939 = vmul.f32 %v1931, %v1935
          %v1940 = vmul.f32 %v1936, 0.044715
          %v1941 = vmul.f32 %v1937, 0.044715
          %v1942 = vmul.f32 %v1938, 0.044715
          %v1943 = vmul.f32 %v1939, 0.044715
          %v1944 = vadd.f32 %v1928, %v1940
          %v1945 = vadd.f32 %v1929, %v1941
          %v1946 = vadd.f32 %v1930, %v1942
          %v1947 = vadd.f32 %v1931, %v1943
          %v1948 = vmul.f32 %v1944, 0.7978846
          %v1949 = vmul.f32 %v1945, 0.7978846
          %v1950 = vmul.f32 %v1946, 0.7978846
          %v1951 = vmul.f32 %v1947, 0.7978846
          %v1952 = vtanh.pop %v1948
          %v1953 = vtanh.pop %v1949
          %v1954 = vtanh.pop %v1950
          %v1955 = vtanh.pop %v1951
          %v1956 = vadd.f32 %v1952, 1.0
          %v1957 = vadd.f32 %v1953, 1.0
          %v1958 = vadd.f32 %v1954, 1.0
          %v1959 = vadd.f32 %v1955, 1.0
          %v1960 = vmul.f32 %v1956, 0.5
          %v1961 = vmul.f32 %v1957, 0.5
          %v1962 = vmul.f32 %v1958, 0.5
          %v1963 = vmul.f32 %v1959, 0.5
          %v1964 = vmul.f32 %v1928, %v1960
          %v1965 = vmul.f32 %v1929, %v1961
          %v1966 = vmul.f32 %v1930, %v1962
          %v1967 = vmul.f32 %v1931, %v1963
          %s1968 = scalar_lea.vmem %s415, 160
          %1969 = vst [vmem:[%s1968] sm:$0xff] %v1964
          %1970 = vst [vmem:[%s1968 + $0x8] sm:$0xff] %v1965
          %1971 = vst [vmem:[%s1968 + $0x10] sm:$0xff] %v1966
          %1972 = vst [vmem:[%s1968 + $0x18] sm:$0xff] %v1967
          %v1973 = vpack.c.bf16 %v1965, %v1964
          %v1974 = vpack.c.bf16 %v1967, %v1966
          %1975 = vst [vmem:[#allocation2 + $0x28] sm:$0xff] %v1973
          %1976 = vst [vmem:[#allocation2 + $0xa8] sm:$0xff] %v1974
          %s1977 = sld [smem:[#allocation3 + $0x6]]
          %v1978 = vstv %s1977
          %v1979 = vmul.f32 %v476, %v1978
          %v1980 = vmul.f32 %v477, %v1978
          %v1981 = vmul.f32 %v478, %v1978
          %v1982 = vmul.f32 %v479, %v1978
          %s1983 = sld [smem:[#allocation3 + $0x86]]
          %v1984 = vstv %s1983
          %v1985 = vmul.f32 %v437, %v1984
          %v1986 = vmul.f32 %v438, %v1984
          %v1987 = vmul.f32 %v439, %v1984
          %v1988 = vmul.f32 %v440, %v1984
          %v1989 = vmul.f32 %v441, %v1984
          %v1990 = vmul.f32 %v442, %v1984
          %1997 = vrot.lane.b32.xlu0 %v1985, 127
          %v1998 = vpop.permute.xlu0 %1997
          %1999 = vrot.lane.b32.xlu0 %v1986, 127
          %v2000 = vpop.permute.xlu0 %1999
          %2001 = vrot.lane.b32.xlu0 %v1987, 127
          %v2002 = vpop.permute.xlu0 %2001
          %2003 = vrot.lane.b32.xlu0 %v1988, 127
          %v2004 = vpop.permute.xlu0 %2003
          %2005 = vrot.lane.b32.xlu0 %v1989, 127
          %v2006 = vpop.permute.xlu0 %2005
          %2007 = vrot.lane.b32.xlu0 %v1990, 127
          %v2008 = vpop.permute.xlu0 %2007
          %v2009 = vsel %vm643, %v1998, %v2000
          %v2010 = vsel %vm643, %v2000, %v2002
          %v2011 = vsel %vm643, %v2004, %v2006
          %v2012 = vsel %vm643, %v2006, %v2008
          %v2017 = vadd.f32 %v1979, %v2009
          %v2018 = vadd.f32 %v1980, %v2010
          %v2019 = vadd.f32 %v1981, %v2011
          %v2020 = vadd.f32 %v1982, %v2012
          %s2021 = sld [smem:[#allocation3 + $0x106]]
          %v2022 = vstv %s2021
          %v2023 = vmul.f32 %v507, %v2022
          %v2024 = vmul.f32 %v508, %v2022
          %v2025 = vmul.f32 %v509, %v2022
          %v2026 = vmul.f32 %v510, %v2022
          %v2027 = vadd.f32 %v2017, %v2023
          %v2028 = vadd.f32 %v2018, %v2024
          %v2029 = vadd.f32 %v2019, %v2025
          %v2030 = vadd.f32 %v2020, %v2026
          %s2031 = sld [smem:[#allocation3 + $0x186]]
          %v2032 = vstv %s2031
          %v2033 = vmul.f32 %v532, %v2032
          %v2034 = vmul.f32 %v533, %v2032
          %v2035 = vmul.f32 %v534, %v2032
          %v2036 = vmul.f32 %v535, %v2032
          %v2037 = vadd.f32 %v2027, %v2033
          %v2038 = vadd.f32 %v2028, %v2034
          %v2039 = vadd.f32 %v2029, %v2035
          %v2040 = vadd.f32 %v2030, %v2036
          %s2041 = sld [smem:[#allocation3 + $0x206]]
          %v2042 = vstv %s2041
          %v2043 = vmul.f32 %v437, %v2042
          %v2044 = vmul.f32 %v438, %v2042
          %v2045 = vmul.f32 %v439, %v2042
          %v2046 = vmul.f32 %v440, %v2042
          %v2047 = vmul.f32 %v441, %v2042
          %v2048 = vmul.f32 %v442, %v2042
          %2055 = vrot.lane.b32.xlu0 %v2043, 111
          %v2056 = vpop.permute.xlu0 %2055
          %2057 = vrot.lane.b32.xlu0 %v2044, 111
          %v2058 = vpop.permute.xlu0 %2057
          %2059 = vrot.lane.b32.xlu0 %v2045, 111
          %v2060 = vpop.permute.xlu0 %2059
          %2061 = vrot.lane.b32.xlu0 %v2046, 111
          %v2062 = vpop.permute.xlu0 %2061
          %2063 = vrot.lane.b32.xlu0 %v2047, 111
          %v2064 = vpop.permute.xlu0 %2063
          %2065 = vrot.lane.b32.xlu0 %v2048, 111
          %v2066 = vpop.permute.xlu0 %2065
          %v2067 = vsel %vm702, %v2056, %v2058
          %v2068 = vsel %vm702, %v2058, %v2060
          %v2069 = vsel %vm702, %v2062, %v2064
          %v2070 = vsel %vm702, %v2064, %v2066
          %v2075 = vadd.f32 %v2037, %v2067
          %v2076 = vadd.f32 %v2038, %v2068
          %v2077 = vadd.f32 %v2039, %v2069
          %v2078 = vadd.f32 %v2040, %v2070
          %s2079 = sld [smem:[#allocation3 + $0x286]]
          %v2080 = vstv %s2079
          %v2081 = vmul.f32 %v557, %v2080
          %v2082 = vmul.f32 %v558, %v2080
          %v2083 = vmul.f32 %v559, %v2080
          %v2084 = vmul.f32 %v560, %v2080
          %v2085 = vadd.f32 %v2075, %v2081
          %v2086 = vadd.f32 %v2076, %v2082
          %v2087 = vadd.f32 %v2077, %v2083
          %v2088 = vadd.f32 %v2078, %v2084
          %s2089 = sld [smem:[#allocation3 + $0x306]]
          %v2090 = vstv %s2089
          %v2091 = vmul.f32 %v582, %v2090
          %v2092 = vmul.f32 %v583, %v2090
          %v2093 = vmul.f32 %v584, %v2090
          %v2094 = vmul.f32 %v585, %v2090
          %v2095 = vadd.f32 %v2085, %v2091
          %v2096 = vadd.f32 %v2086, %v2092
          %v2097 = vadd.f32 %v2087, %v2093
          %v2098 = vadd.f32 %v2088, %v2094
          %s2099 = sld [smem:[#allocation3 + $0x386]]
          %v2100 = vstv %s2099
          %v2101 = vmul.f32 %v437, %v2100
          %v2102 = vmul.f32 %v438, %v2100
          %v2103 = vmul.f32 %v439, %v2100
          %v2104 = vmul.f32 %v440, %v2100
          %v2105 = vmul.f32 %v441, %v2100
          %v2106 = vmul.f32 %v442, %v2100
          %2113 = vrot.lane.b32.xlu0 %v2101, 95
          %v2114 = vpop.permute.xlu0 %2113
          %2115 = vrot.lane.b32.xlu0 %v2102, 95
          %v2116 = vpop.permute.xlu0 %2115
          %2117 = vrot.lane.b32.xlu0 %v2103, 95
          %v2118 = vpop.permute.xlu0 %2117
          %2119 = vrot.lane.b32.xlu0 %v2104, 95
          %v2120 = vpop.permute.xlu0 %2119
          %2121 = vrot.lane.b32.xlu0 %v2105, 95
          %v2122 = vpop.permute.xlu0 %2121
          %2123 = vrot.lane.b32.xlu0 %v2106, 95
          %v2124 = vpop.permute.xlu0 %2123
          %v2125 = vsel %vm761, %v2114, %v2116
          %v2126 = vsel %vm761, %v2116, %v2118
          %v2127 = vsel %vm761, %v2120, %v2122
          %v2128 = vsel %vm761, %v2122, %v2124
          %v2133 = vadd.f32 %v2095, %v2125
          %v2134 = vadd.f32 %v2096, %v2126
          %v2135 = vadd.f32 %v2097, %v2127
          %v2136 = vadd.f32 %v2098, %v2128
          %s2137 = sld [smem:[#allocation3 + $0x406]]
          %v2138 = vstv %s2137
          %v2139 = vmul.f32 %v607, %v2138
          %v2140 = vmul.f32 %v608, %v2138
          %v2141 = vmul.f32 %v609, %v2138
          %v2142 = vmul.f32 %v610, %v2138
          %v2143 = vadd.f32 %v2133, %v2139
          %v2144 = vadd.f32 %v2134, %v2140
          %v2145 = vadd.f32 %v2135, %v2141
          %v2146 = vadd.f32 %v2136, %v2142
          %2147 = vset.pattern.permute.xlu0 6
          %2148 = vperm.xlu0 %2147, %v443
          %v2149 = vpop.permute.xlu0 %2148
          %2151 = vset.pattern.permute.xlu0 6
          %2152 = vperm.xlu0 %2151, %v444
          %v2153 = vpop.permute.xlu0 %2152
          %v2155 = vadd.f32 %v2143, %v2149
          %v2156 = vadd.f32 %v2144, %v2149
          %v2157 = vadd.f32 %v2145, %v2153
          %v2158 = vadd.f32 %v2146, %v2153
          %v2159 = vmul.f32 %v2155, %v2155
          %v2160 = vmul.f32 %v2156, %v2156
          %v2161 = vmul.f32 %v2157, %v2157
          %v2162 = vmul.f32 %v2158, %v2158
          %v2163 = vmul.f32 %v2155, %v2159
          %v2164 = vmul.f32 %v2156, %v2160
          %v2165 = vmul.f32 %v2157, %v2161
          %v2166 = vmul.f32 %v2158, %v2162
          %v2167 = vmul.f32 %v2163, 0.044715
          %v2168 = vmul.f32 %v2164, 0.044715
          %v2169 = vmul.f32 %v2165, 0.044715
          %v2170 = vmul.f32 %v2166, 0.044715
          %v2171 = vadd.f32 %v2155, %v2167
          %v2172 = vadd.f32 %v2156, %v2168
          %v2173 = vadd.f32 %v2157, %v2169
          %v2174 = vadd.f32 %v2158, %v2170
          %v2175 = vmul.f32 %v2171, 0.7978846
          %v2176 = vmul.f32 %v2172, 0.7978846
          %v2177 = vmul.f32 %v2173, 0.7978846
          %v2178 = vmul.f32 %v2174, 0.7978846
          %v2179 = vtanh.pop %v2175
          %v2180 = vtanh.pop %v2176
          %v2181 = vtanh.pop %v2177
          %v2182 = vtanh.pop %v2178
          %v2183 = vadd.f32 %v2179, 1.0
          %v2184 = vadd.f32 %v2180, 1.0
          %v2185 = vadd.f32 %v2181, 1.0
          %v2186 = vadd.f32 %v2182, 1.0
          %v2187 = vmul.f32 %v2183, 0.5
          %v2188 = vmul.f32 %v2184, 0.5
          %v2189 = vmul.f32 %v2185, 0.5
          %v2190 = vmul.f32 %v2186, 0.5
          %v2191 = vmul.f32 %v2155, %v2187
          %v2192 = vmul.f32 %v2156, %v2188
          %v2193 = vmul.f32 %v2157, %v2189
          %v2194 = vmul.f32 %v2158, %v2190
          %s2195 = scalar_lea.vmem %s415, 192
          %2196 = vst [vmem:[%s2195] sm:$0xff] %v2191
          %2197 = vst [vmem:[%s2195 + $0x8] sm:$0xff] %v2192
          %2198 = vst [vmem:[%s2195 + $0x10] sm:$0xff] %v2193
          %2199 = vst [vmem:[%s2195 + $0x18] sm:$0xff] %v2194
          %v2200 = vpack.c.bf16 %v2192, %v2191
          %v2201 = vpack.c.bf16 %v2194, %v2193
          %2202 = vst [vmem:[#allocation2 + $0x30] sm:$0xff] %v2200
          %2203 = vst [vmem:[#allocation2 + $0xb0] sm:$0xff] %v2201
          %s2204 = sld [smem:[#allocation3 + $0x7]]
          %v2205 = vstv %s2204
          %v2206 = vmul.f32 %v476, %v2205
          %v2207 = vmul.f32 %v477, %v2205
          %v2208 = vmul.f32 %v478, %v2205
          %v2209 = vmul.f32 %v479, %v2205
          %s2210 = sld [smem:[#allocation3 + $0x87]]
          %v2211 = vstv %s2210
          %v2212 = vmul.f32 %v437, %v2211
          %v2213 = vmul.f32 %v438, %v2211
          %v2214 = vmul.f32 %v439, %v2211
          %v2215 = vmul.f32 %v440, %v2211
          %v2216 = vmul.f32 %v441, %v2211
          %v2217 = vmul.f32 %v442, %v2211
          %2224 = vrot.lane.b32.xlu0 %v2212, 127
          %v2225 = vpop.permute.xlu0 %2224
          %2226 = vrot.lane.b32.xlu0 %v2213, 127
          %v2227 = vpop.permute.xlu0 %2226
          %2228 = vrot.lane.b32.xlu0 %v2214, 127
          %v2229 = vpop.permute.xlu0 %2228
          %2230 = vrot.lane.b32.xlu0 %v2215, 127
          %v2231 = vpop.permute.xlu0 %2230
          %2232 = vrot.lane.b32.xlu0 %v2216, 127
          %v2233 = vpop.permute.xlu0 %2232
          %2234 = vrot.lane.b32.xlu0 %v2217, 127
          %v2235 = vpop.permute.xlu0 %2234
          %v2236 = vsel %vm643, %v2225, %v2227
          %v2237 = vsel %vm643, %v2227, %v2229
          %v2238 = vsel %vm643, %v2231, %v2233
          %v2239 = vsel %vm643, %v2233, %v2235
          %v2244 = vadd.f32 %v2206, %v2236
          %v2245 = vadd.f32 %v2207, %v2237
          %v2246 = vadd.f32 %v2208, %v2238
          %v2247 = vadd.f32 %v2209, %v2239
          %s2248 = sld [smem:[#allocation3 + $0x107]]
          %v2249 = vstv %s2248
          %v2250 = vmul.f32 %v507, %v2249
          %v2251 = vmul.f32 %v508, %v2249
          %v2252 = vmul.f32 %v509, %v2249
          %v2253 = vmul.f32 %v510, %v2249
          %v2254 = vadd.f32 %v2244, %v2250
          %v2255 = vadd.f32 %v2245, %v2251
          %v2256 = vadd.f32 %v2246, %v2252
          %v2257 = vadd.f32 %v2247, %v2253
          %s2258 = sld [smem:[#allocation3 + $0x187]]
          %v2259 = vstv %s2258
          %v2260 = vmul.f32 %v532, %v2259
          %v2261 = vmul.f32 %v533, %v2259
          %v2262 = vmul.f32 %v534, %v2259
          %v2263 = vmul.f32 %v535, %v2259
          %v2264 = vadd.f32 %v2254, %v2260
          %v2265 = vadd.f32 %v2255, %v2261
          %v2266 = vadd.f32 %v2256, %v2262
          %v2267 = vadd.f32 %v2257, %v2263
          %s2268 = sld [smem:[#allocation3 + $0x207]]
          %v2269 = vstv %s2268
          %v2270 = vmul.f32 %v437, %v2269
          %v2271 = vmul.f32 %v438, %v2269
          %v2272 = vmul.f32 %v439, %v2269
          %v2273 = vmul.f32 %v440, %v2269
          %v2274 = vmul.f32 %v441, %v2269
          %v2275 = vmul.f32 %v442, %v2269
          %2282 = vrot.lane.b32.xlu0 %v2270, 111
          %v2283 = vpop.permute.xlu0 %2282
          %2284 = vrot.lane.b32.xlu0 %v2271, 111
          %v2285 = vpop.permute.xlu0 %2284
          %2286 = vrot.lane.b32.xlu0 %v2272, 111
          %v2287 = vpop.permute.xlu0 %2286
          %2288 = vrot.lane.b32.xlu0 %v2273, 111
          %v2289 = vpop.permute.xlu0 %2288
          %2290 = vrot.lane.b32.xlu0 %v2274, 111
          %v2291 = vpop.permute.xlu0 %2290
          %2292 = vrot.lane.b32.xlu0 %v2275, 111
          %v2293 = vpop.permute.xlu0 %2292
          %v2294 = vsel %vm702, %v2283, %v2285
          %v2295 = vsel %vm702, %v2285, %v2287
          %v2296 = vsel %vm702, %v2289, %v2291
          %v2297 = vsel %vm702, %v2291, %v2293
          %v2302 = vadd.f32 %v2264, %v2294
          %v2303 = vadd.f32 %v2265, %v2295
          %v2304 = vadd.f32 %v2266, %v2296
          %v2305 = vadd.f32 %v2267, %v2297
          %s2306 = sld [smem:[#allocation3 + $0x287]]
          %v2307 = vstv %s2306
          %v2308 = vmul.f32 %v557, %v2307
          %v2309 = vmul.f32 %v558, %v2307
          %v2310 = vmul.f32 %v559, %v2307
          %v2311 = vmul.f32 %v560, %v2307
          %v2312 = vadd.f32 %v2302, %v2308
          %v2313 = vadd.f32 %v2303, %v2309
          %v2314 = vadd.f32 %v2304, %v2310
          %v2315 = vadd.f32 %v2305, %v2311
          %s2316 = sld [smem:[#allocation3 + $0x307]]
          %v2317 = vstv %s2316
          %v2318 = vmul.f32 %v582, %v2317
          %v2319 = vmul.f32 %v583, %v2317
          %v2320 = vmul.f32 %v584, %v2317
          %v2321 = vmul.f32 %v585, %v2317
          %v2322 = vadd.f32 %v2312, %v2318
          %v2323 = vadd.f32 %v2313, %v2319
          %v2324 = vadd.f32 %v2314, %v2320
          %v2325 = vadd.f32 %v2315, %v2321
          %s2326 = sld [smem:[#allocation3 + $0x387]]
          %v2327 = vstv %s2326
          %v2328 = vmul.f32 %v437, %v2327
          %v2329 = vmul.f32 %v438, %v2327
          %v2330 = vmul.f32 %v439, %v2327
          %v2331 = vmul.f32 %v440, %v2327
          %v2332 = vmul.f32 %v441, %v2327
          %v2333 = vmul.f32 %v442, %v2327
          %2340 = vrot.lane.b32.xlu0 %v2328, 95
          %v2341 = vpop.permute.xlu0 %2340
          %2342 = vrot.lane.b32.xlu0 %v2329, 95
          %v2343 = vpop.permute.xlu0 %2342
          %2344 = vrot.lane.b32.xlu0 %v2330, 95
          %v2345 = vpop.permute.xlu0 %2344
          %2346 = vrot.lane.b32.xlu0 %v2331, 95
          %v2347 = vpop.permute.xlu0 %2346
          %2348 = vrot.lane.b32.xlu0 %v2332, 95
          %v2349 = vpop.permute.xlu0 %2348
          %2350 = vrot.lane.b32.xlu0 %v2333, 95
          %v2351 = vpop.permute.xlu0 %2350
          %v2352 = vsel %vm761, %v2341, %v2343
          %v2353 = vsel %vm761, %v2343, %v2345
          %v2354 = vsel %vm761, %v2347, %v2349
          %v2355 = vsel %vm761, %v2349, %v2351
          %v2360 = vadd.f32 %v2322, %v2352
          %v2361 = vadd.f32 %v2323, %v2353
          %v2362 = vadd.f32 %v2324, %v2354
          %v2363 = vadd.f32 %v2325, %v2355
          %s2364 = sld [smem:[#allocation3 + $0x407]]
          %v2365 = vstv %s2364
          %v2366 = vmul.f32 %v607, %v2365
          %v2367 = vmul.f32 %v608, %v2365
          %v2368 = vmul.f32 %v609, %v2365
          %v2369 = vmul.f32 %v610, %v2365
          %v2370 = vadd.f32 %v2360, %v2366
          %v2371 = vadd.f32 %v2361, %v2367
          %v2372 = vadd.f32 %v2362, %v2368
          %v2373 = vadd.f32 %v2363, %v2369
          %2374 = vset.pattern.permute.xlu0 7
          %2375 = vperm.xlu0 %2374, %v443
          %v2376 = vpop.permute.xlu0 %2375
          %2378 = vset.pattern.permute.xlu0 7
          %2379 = vperm.xlu0 %2378, %v444
          %v2380 = vpop.permute.xlu0 %2379
          %v2382 = vadd.f32 %v2370, %v2376
          %v2383 = vadd.f32 %v2371, %v2376
          %v2384 = vadd.f32 %v2372, %v2380
          %v2385 = vadd.f32 %v2373, %v2380
          %v2386 = vmul.f32 %v2382, %v2382
          %v2387 = vmul.f32 %v2383, %v2383
          %v2388 = vmul.f32 %v2384, %v2384
          %v2389 = vmul.f32 %v2385, %v2385
          %v2390 = vmul.f32 %v2382, %v2386
          %v2391 = vmul.f32 %v2383, %v2387
          %v2392 = vmul.f32 %v2384, %v2388
          %v2393 = vmul.f32 %v2385, %v2389
          %v2394 = vmul.f32 %v2390, 0.044715
          %v2395 = vmul.f32 %v2391, 0.044715
          %v2396 = vmul.f32 %v2392, 0.044715
          %v2397 = vmul.f32 %v2393, 0.044715
          %v2398 = vadd.f32 %v2382, %v2394
          %v2399 = vadd.f32 %v2383, %v2395
          %v2400 = vadd.f32 %v2384, %v2396
          %v2401 = vadd.f32 %v2385, %v2397
          %v2402 = vmul.f32 %v2398, 0.7978846
          %v2403 = vmul.f32 %v2399, 0.7978846
          %v2404 = vmul.f32 %v2400, 0.7978846
          %v2405 = vmul.f32 %v2401, 0.7978846
          %v2406 = vtanh.pop %v2402
          %v2407 = vtanh.pop %v2403
          %v2408 = vtanh.pop %v2404
          %v2409 = vtanh.pop %v2405
          %v2410 = vadd.f32 %v2406, 1.0
          %v2411 = vadd.f32 %v2407, 1.0
          %v2412 = vadd.f32 %v2408, 1.0
          %v2413 = vadd.f32 %v2409, 1.0
          %v2414 = vmul.f32 %v2410, 0.5
          %v2415 = vmul.f32 %v2411, 0.5
          %v2416 = vmul.f32 %v2412, 0.5
          %v2417 = vmul.f32 %v2413, 0.5
          %v2418 = vmul.f32 %v2382, %v2414
          %v2419 = vmul.f32 %v2383, %v2415
          %v2420 = vmul.f32 %v2384, %v2416
          %v2421 = vmul.f32 %v2385, %v2417
          %s2422 = scalar_lea.vmem %s415, 224
          %2423 = vst [vmem:[%s2422] sm:$0xff] %v2418
          %2424 = vst [vmem:[%s2422 + $0x8] sm:$0xff] %v2419
          %2425 = vst [vmem:[%s2422 + $0x10] sm:$0xff] %v2420
          %2426 = vst [vmem:[%s2422 + $0x18] sm:$0xff] %v2421
          %v2427 = vpack.c.bf16 %v2419, %v2418
          %v2428 = vpack.c.bf16 %v2421, %v2420
          %2429 = vst [vmem:[#allocation2 + $0x38] sm:$0xff] %v2427
          %2430 = vst [vmem:[#allocation2 + $0xb8] sm:$0xff] %v2428
          %s2431 = sld [smem:[#allocation3 + $0x8]]
          %v2432 = vstv %s2431
          %v2433 = vmul.f32 %v476, %v2432
          %v2434 = vmul.f32 %v477, %v2432
          %v2435 = vmul.f32 %v478, %v2432
          %v2436 = vmul.f32 %v479, %v2432
          %s2437 = sld [smem:[#allocation3 + $0x88]]
          %v2438 = vstv %s2437
          %v2439 = vmul.f32 %v437, %v2438
          %v2440 = vmul.f32 %v438, %v2438
          %v2441 = vmul.f32 %v439, %v2438
          %v2442 = vmul.f32 %v440, %v2438
          %v2443 = vmul.f32 %v441, %v2438
          %v2444 = vmul.f32 %v442, %v2438
          %2451 = vrot.lane.b32.xlu0 %v2439, 127
          %v2452 = vpop.permute.xlu0 %2451
          %2453 = vrot.lane.b32.xlu0 %v2440, 127
          %v2454 = vpop.permute.xlu0 %2453
          %2455 = vrot.lane.b32.xlu0 %v2441, 127
          %v2456 = vpop.permute.xlu0 %2455
          %2457 = vrot.lane.b32.xlu0 %v2442, 127
          %v2458 = vpop.permute.xlu0 %2457
          %2459 = vrot.lane.b32.xlu0 %v2443, 127
          %v2460 = vpop.permute.xlu0 %2459
          %2461 = vrot.lane.b32.xlu0 %v2444, 127
          %v2462 = vpop.permute.xlu0 %2461
          %v2463 = vsel %vm643, %v2452, %v2454
          %v2464 = vsel %vm643, %v2454, %v2456
          %v2465 = vsel %vm643, %v2458, %v2460
          %v2466 = vsel %vm643, %v2460, %v2462
          %v2471 = vadd.f32 %v2433, %v2463
          %v2472 = vadd.f32 %v2434, %v2464
          %v2473 = vadd.f32 %v2435, %v2465
          %v2474 = vadd.f32 %v2436, %v2466
          %s2475 = sld [smem:[#allocation3 + $0x108]]
          %v2476 = vstv %s2475
          %v2477 = vmul.f32 %v507, %v2476
          %v2478 = vmul.f32 %v508, %v2476
          %v2479 = vmul.f32 %v509, %v2476
          %v2480 = vmul.f32 %v510, %v2476
          %v2481 = vadd.f32 %v2471, %v2477
          %v2482 = vadd.f32 %v2472, %v2478
          %v2483 = vadd.f32 %v2473, %v2479
          %v2484 = vadd.f32 %v2474, %v2480
          %s2485 = sld [smem:[#allocation3 + $0x188]]
          %v2486 = vstv %s2485
          %v2487 = vmul.f32 %v532, %v2486
          %v2488 = vmul.f32 %v533, %v2486
          %v2489 = vmul.f32 %v534, %v2486
          %v2490 = vmul.f32 %v535, %v2486
          %v2491 = vadd.f32 %v2481, %v2487
          %v2492 = vadd.f32 %v2482, %v2488
          %v2493 = vadd.f32 %v2483, %v2489
          %v2494 = vadd.f32 %v2484, %v2490
          %s2495 = sld [smem:[#allocation3 + $0x208]]
          %v2496 = vstv %s2495
          %v2497 = vmul.f32 %v437, %v2496
          %v2498 = vmul.f32 %v438, %v2496
          %v2499 = vmul.f32 %v439, %v2496
          %v2500 = vmul.f32 %v440, %v2496
          %v2501 = vmul.f32 %v441, %v2496
          %v2502 = vmul.f32 %v442, %v2496
          %2509 = vrot.lane.b32.xlu0 %v2497, 111
          %v2510 = vpop.permute.xlu0 %2509
          %2511 = vrot.lane.b32.xlu0 %v2498, 111
          %v2512 = vpop.permute.xlu0 %2511
          %2513 = vrot.lane.b32.xlu0 %v2499, 111
          %v2514 = vpop.permute.xlu0 %2513
          %2515 = vrot.lane.b32.xlu0 %v2500, 111
          %v2516 = vpop.permute.xlu0 %2515
          %2517 = vrot.lane.b32.xlu0 %v2501, 111
          %v2518 = vpop.permute.xlu0 %2517
          %2519 = vrot.lane.b32.xlu0 %v2502, 111
          %v2520 = vpop.permute.xlu0 %2519
          %v2521 = vsel %vm702, %v2510, %v2512
          %v2522 = vsel %vm702, %v2512, %v2514
          %v2523 = vsel %vm702, %v2516, %v2518
          %v2524 = vsel %vm702, %v2518, %v2520
          %v2529 = vadd.f32 %v2491, %v2521
          %v2530 = vadd.f32 %v2492, %v2522
          %v2531 = vadd.f32 %v2493, %v2523
          %v2532 = vadd.f32 %v2494, %v2524
          %s2533 = sld [smem:[#allocation3 + $0x288]]
          %v2534 = vstv %s2533
          %v2535 = vmul.f32 %v557, %v2534
          %v2536 = vmul.f32 %v558, %v2534
          %v2537 = vmul.f32 %v559, %v2534
          %v2538 = vmul.f32 %v560, %v2534
          %v2539 = vadd.f32 %v2529, %v2535
          %v2540 = vadd.f32 %v2530, %v2536
          %v2541 = vadd.f32 %v2531, %v2537
          %v2542 = vadd.f32 %v2532, %v2538
          %s2543 = sld [smem:[#allocation3 + $0x308]]
          %v2544 = vstv %s2543
          %v2545 = vmul.f32 %v582, %v2544
          %v2546 = vmul.f32 %v583, %v2544
          %v2547 = vmul.f32 %v584, %v2544
          %v2548 = vmul.f32 %v585, %v2544
          %v2549 = vadd.f32 %v2539, %v2545
          %v2550 = vadd.f32 %v2540, %v2546
          %v2551 = vadd.f32 %v2541, %v2547
          %v2552 = vadd.f32 %v2542, %v2548
          %s2553 = sld [smem:[#allocation3 + $0x388]]
          %v2554 = vstv %s2553
          %v2555 = vmul.f32 %v437, %v2554
          %v2556 = vmul.f32 %v438, %v2554
          %v2557 = vmul.f32 %v439, %v2554
          %v2558 = vmul.f32 %v440, %v2554
          %v2559 = vmul.f32 %v441, %v2554
          %v2560 = vmul.f32 %v442, %v2554
          %2567 = vrot.lane.b32.xlu0 %v2555, 95
          %v2568 = vpop.permute.xlu0 %2567
          %2569 = vrot.lane.b32.xlu0 %v2556, 95
          %v2570 = vpop.permute.xlu0 %2569
          %2571 = vrot.lane.b32.xlu0 %v2557, 95
          %v2572 = vpop.permute.xlu0 %2571
          %2573 = vrot.lane.b32.xlu0 %v2558, 95
          %v2574 = vpop.permute.xlu0 %2573
          %2575 = vrot.lane.b32.xlu0 %v2559, 95
          %v2576 = vpop.permute.xlu0 %2575
          %2577 = vrot.lane.b32.xlu0 %v2560, 95
          %v2578 = vpop.permute.xlu0 %2577
          %v2579 = vsel %vm761, %v2568, %v2570
          %v2580 = vsel %vm761, %v2570, %v2572
          %v2581 = vsel %vm761, %v2574, %v2576
          %v2582 = vsel %vm761, %v2576, %v2578
          %v2587 = vadd.f32 %v2549, %v2579
          %v2588 = vadd.f32 %v2550, %v2580
          %v2589 = vadd.f32 %v2551, %v2581
          %v2590 = vadd.f32 %v2552, %v2582
          %s2591 = sld [smem:[#allocation3 + $0x408]]
          %v2592 = vstv %s2591
          %v2593 = vmul.f32 %v607, %v2592
          %v2594 = vmul.f32 %v608, %v2592
          %v2595 = vmul.f32 %v609, %v2592
          %v2596 = vmul.f32 %v610, %v2592
          %v2597 = vadd.f32 %v2587, %v2593
          %v2598 = vadd.f32 %v2588, %v2594
          %v2599 = vadd.f32 %v2589, %v2595
          %v2600 = vadd.f32 %v2590, %v2596
          %2601 = vset.pattern.permute.xlu0 8
          %2602 = vperm.xlu0 %2601, %v443
          %v2603 = vpop.permute.xlu0 %2602
          %2605 = vset.pattern.permute.xlu0 8
          %2606 = vperm.xlu0 %2605, %v444
          %v2607 = vpop.permute.xlu0 %2606
          %v2609 = vadd.f32 %v2597, %v2603
          %v2610 = vadd.f32 %v2598, %v2603
          %v2611 = vadd.f32 %v2599, %v2607
          %v2612 = vadd.f32 %v2600, %v2607
          %v2613 = vmul.f32 %v2609, %v2609
          %v2614 = vmul.f32 %v2610, %v2610
          %v2615 = vmul.f32 %v2611, %v2611
          %v2616 = vmul.f32 %v2612, %v2612
          %v2617 = vmul.f32 %v2609, %v2613
          %v2618 = vmul.f32 %v2610, %v2614
          %v2619 = vmul.f32 %v2611, %v2615
          %v2620 = vmul.f32 %v2612, %v2616
          %v2621 = vmul.f32 %v2617, 0.044715
          %v2622 = vmul.f32 %v2618, 0.044715
          %v2623 = vmul.f32 %v2619, 0.044715
          %v2624 = vmul.f32 %v2620, 0.044715
          %v2625 = vadd.f32 %v2609, %v2621
          %v2626 = vadd.f32 %v2610, %v2622
          %v2627 = vadd.f32 %v2611, %v2623
          %v2628 = vadd.f32 %v2612, %v2624
          %v2629 = vmul.f32 %v2625, 0.7978846
          %v2630 = vmul.f32 %v2626, 0.7978846
          %v2631 = vmul.f32 %v2627, 0.7978846
          %v2632 = vmul.f32 %v2628, 0.7978846
          %v2633 = vtanh.pop %v2629
          %v2634 = vtanh.pop %v2630
          %v2635 = vtanh.pop %v2631
          %v2636 = vtanh.pop %v2632
          %v2637 = vadd.f32 %v2633, 1.0
          %v2638 = vadd.f32 %v2634, 1.0
          %v2639 = vadd.f32 %v2635, 1.0
          %v2640 = vadd.f32 %v2636, 1.0
          %v2641 = vmul.f32 %v2637, 0.5
          %v2642 = vmul.f32 %v2638, 0.5
          %v2643 = vmul.f32 %v2639, 0.5
          %v2644 = vmul.f32 %v2640, 0.5
          %v2645 = vmul.f32 %v2609, %v2641
          %v2646 = vmul.f32 %v2610, %v2642
          %v2647 = vmul.f32 %v2611, %v2643
          %v2648 = vmul.f32 %v2612, %v2644
          %s2649 = scalar_lea.vmem %s415, 256
          %2650 = vst [vmem:[%s2649] sm:$0xff] %v2645
          %2651 = vst [vmem:[%s2649 + $0x8] sm:$0xff] %v2646
          %2652 = vst [vmem:[%s2649 + $0x10] sm:$0xff] %v2647
          %2653 = vst [vmem:[%s2649 + $0x18] sm:$0xff] %v2648
          %v2654 = vpack.c.bf16 %v2646, %v2645
          %v2655 = vpack.c.bf16 %v2648, %v2647
          %2656 = vst [vmem:[#allocation2 + $0x40] sm:$0xff] %v2654
          %2657 = vst [vmem:[#allocation2 + $0xc0] sm:$0xff] %v2655
          %s2658 = sld [smem:[#allocation3 + $0x9]]
          %v2659 = vstv %s2658
          %v2660 = vmul.f32 %v476, %v2659
          %v2661 = vmul.f32 %v477, %v2659
          %v2662 = vmul.f32 %v478, %v2659
          %v2663 = vmul.f32 %v479, %v2659
          %s2664 = sld [smem:[#allocation3 + $0x89]]
          %v2665 = vstv %s2664
          %v2666 = vmul.f32 %v437, %v2665
          %v2667 = vmul.f32 %v438, %v2665
          %v2668 = vmul.f32 %v439, %v2665
          %v2669 = vmul.f32 %v440, %v2665
          %v2670 = vmul.f32 %v441, %v2665
          %v2671 = vmul.f32 %v442, %v2665
          %2678 = vrot.lane.b32.xlu0 %v2666, 127
          %v2679 = vpop.permute.xlu0 %2678
          %2680 = vrot.lane.b32.xlu0 %v2667, 127
          %v2681 = vpop.permute.xlu0 %2680
          %2682 = vrot.lane.b32.xlu0 %v2668, 127
          %v2683 = vpop.permute.xlu0 %2682
          %2684 = vrot.lane.b32.xlu0 %v2669, 127
          %v2685 = vpop.permute.xlu0 %2684
          %2686 = vrot.lane.b32.xlu0 %v2670, 127
          %v2687 = vpop.permute.xlu0 %2686
          %2688 = vrot.lane.b32.xlu0 %v2671, 127
          %v2689 = vpop.permute.xlu0 %2688
          %v2690 = vsel %vm643, %v2679, %v2681
          %v2691 = vsel %vm643, %v2681, %v2683
          %v2692 = vsel %vm643, %v2685, %v2687
          %v2693 = vsel %vm643, %v2687, %v2689
          %v2698 = vadd.f32 %v2660, %v2690
          %v2699 = vadd.f32 %v2661, %v2691
          %v2700 = vadd.f32 %v2662, %v2692
          %v2701 = vadd.f32 %v2663, %v2693
          %s2702 = sld [smem:[#allocation3 + $0x109]]
          %v2703 = vstv %s2702
          %v2704 = vmul.f32 %v507, %v2703
          %v2705 = vmul.f32 %v508, %v2703
          %v2706 = vmul.f32 %v509, %v2703
          %v2707 = vmul.f32 %v510, %v2703
          %v2708 = vadd.f32 %v2698, %v2704
          %v2709 = vadd.f32 %v2699, %v2705
          %v2710 = vadd.f32 %v2700, %v2706
          %v2711 = vadd.f32 %v2701, %v2707
          %s2712 = sld [smem:[#allocation3 + $0x189]]
          %v2713 = vstv %s2712
          %v2714 = vmul.f32 %v532, %v2713
          %v2715 = vmul.f32 %v533, %v2713
          %v2716 = vmul.f32 %v534, %v2713
          %v2717 = vmul.f32 %v535, %v2713
          %v2718 = vadd.f32 %v2708, %v2714
          %v2719 = vadd.f32 %v2709, %v2715
          %v2720 = vadd.f32 %v2710, %v2716
          %v2721 = vadd.f32 %v2711, %v2717
          %s2722 = sld [smem:[#allocation3 + $0x209]]
          %v2723 = vstv %s2722
          %v2724 = vmul.f32 %v437, %v2723
          %v2725 = vmul.f32 %v438, %v2723
          %v2726 = vmul.f32 %v439, %v2723
          %v2727 = vmul.f32 %v440, %v2723
          %v2728 = vmul.f32 %v441, %v2723
          %v2729 = vmul.f32 %v442, %v2723
          %2736 = vrot.lane.b32.xlu0 %v2724, 111
          %v2737 = vpop.permute.xlu0 %2736
          %2738 = vrot.lane.b32.xlu0 %v2725, 111
          %v2739 = vpop.permute.xlu0 %2738
          %2740 = vrot.lane.b32.xlu0 %v2726, 111
          %v2741 = vpop.permute.xlu0 %2740
          %2742 = vrot.lane.b32.xlu0 %v2727, 111
          %v2743 = vpop.permute.xlu0 %2742
          %2744 = vrot.lane.b32.xlu0 %v2728, 111
          %v2745 = vpop.permute.xlu0 %2744
          %2746 = vrot.lane.b32.xlu0 %v2729, 111
          %v2747 = vpop.permute.xlu0 %2746
          %v2748 = vsel %vm702, %v2737, %v2739
          %v2749 = vsel %vm702, %v2739, %v2741
          %v2750 = vsel %vm702, %v2743, %v2745
          %v2751 = vsel %vm702, %v2745, %v2747
          %v2756 = vadd.f32 %v2718, %v2748
          %v2757 = vadd.f32 %v2719, %v2749
          %v2758 = vadd.f32 %v2720, %v2750
          %v2759 = vadd.f32 %v2721, %v2751
          %s2760 = sld [smem:[#allocation3 + $0x289]]
          %v2761 = vstv %s2760
          %v2762 = vmul.f32 %v557, %v2761
          %v2763 = vmul.f32 %v558, %v2761
          %v2764 = vmul.f32 %v559, %v2761
          %v2765 = vmul.f32 %v560, %v2761
          %v2766 = vadd.f32 %v2756, %v2762
          %v2767 = vadd.f32 %v2757, %v2763
          %v2768 = vadd.f32 %v2758, %v2764
          %v2769 = vadd.f32 %v2759, %v2765
          %s2770 = sld [smem:[#allocation3 + $0x309]]
          %v2771 = vstv %s2770
          %v2772 = vmul.f32 %v582, %v2771
          %v2773 = vmul.f32 %v583, %v2771
          %v2774 = vmul.f32 %v584, %v2771
          %v2775 = vmul.f32 %v585, %v2771
          %v2776 = vadd.f32 %v2766, %v2772
          %v2777 = vadd.f32 %v2767, %v2773
          %v2778 = vadd.f32 %v2768, %v2774
          %v2779 = vadd.f32 %v2769, %v2775
          %s2780 = sld [smem:[#allocation3 + $0x389]]
          %v2781 = vstv %s2780
          %v2782 = vmul.f32 %v437, %v2781
          %v2783 = vmul.f32 %v438, %v2781
          %v2784 = vmul.f32 %v439, %v2781
          %v2785 = vmul.f32 %v440, %v2781
          %v2786 = vmul.f32 %v441, %v2781
          %v2787 = vmul.f32 %v442, %v2781
          %2794 = vrot.lane.b32.xlu0 %v2782, 95
          %v2795 = vpop.permute.xlu0 %2794
          %2796 = vrot.lane.b32.xlu0 %v2783, 95
          %v2797 = vpop.permute.xlu0 %2796
          %2798 = vrot.lane.b32.xlu0 %v2784, 95
          %v2799 = vpop.permute.xlu0 %2798
          %2800 = vrot.lane.b32.xlu0 %v2785, 95
          %v2801 = vpop.permute.xlu0 %2800
          %2802 = vrot.lane.b32.xlu0 %v2786, 95
          %v2803 = vpop.permute.xlu0 %2802
          %2804 = vrot.lane.b32.xlu0 %v2787, 95
          %v2805 = vpop.permute.xlu0 %2804
          %v2806 = vsel %vm761, %v2795, %v2797
          %v2807 = vsel %vm761, %v2797, %v2799
          %v2808 = vsel %vm761, %v2801, %v2803
          %v2809 = vsel %vm761, %v2803, %v2805
          %v2814 = vadd.f32 %v2776, %v2806
          %v2815 = vadd.f32 %v2777, %v2807
          %v2816 = vadd.f32 %v2778, %v2808
          %v2817 = vadd.f32 %v2779, %v2809
          %s2818 = sld [smem:[#allocation3 + $0x409]]
          %v2819 = vstv %s2818
          %v2820 = vmul.f32 %v607, %v2819
          %v2821 = vmul.f32 %v608, %v2819
          %v2822 = vmul.f32 %v609, %v2819
          %v2823 = vmul.f32 %v610, %v2819
          %v2824 = vadd.f32 %v2814, %v2820
          %v2825 = vadd.f32 %v2815, %v2821
          %v2826 = vadd.f32 %v2816, %v2822
          %v2827 = vadd.f32 %v2817, %v2823
          %2828 = vset.pattern.permute.xlu0 9
          %2829 = vperm.xlu0 %2828, %v443
          %v2830 = vpop.permute.xlu0 %2829
          %2832 = vset.pattern.permute.xlu0 9
          %2833 = vperm.xlu0 %2832, %v444
          %v2834 = vpop.permute.xlu0 %2833
          %v2836 = vadd.f32 %v2824, %v2830
          %v2837 = vadd.f32 %v2825, %v2830
          %v2838 = vadd.f32 %v2826, %v2834
          %v2839 = vadd.f32 %v2827, %v2834
          %v2840 = vmul.f32 %v2836, %v2836
          %v2841 = vmul.f32 %v2837, %v2837
          %v2842 = vmul.f32 %v2838, %v2838
          %v2843 = vmul.f32 %v2839, %v2839
          %v2844 = vmul.f32 %v2836, %v2840
          %v2845 = vmul.f32 %v2837, %v2841
          %v2846 = vmul.f32 %v2838, %v2842
          %v2847 = vmul.f32 %v2839, %v2843
          %v2848 = vmul.f32 %v2844, 0.044715
          %v2849 = vmul.f32 %v2845, 0.044715
          %v2850 = vmul.f32 %v2846, 0.044715
          %v2851 = vmul.f32 %v2847, 0.044715
          %v2852 = vadd.f32 %v2836, %v2848
          %v2853 = vadd.f32 %v2837, %v2849
          %v2854 = vadd.f32 %v2838, %v2850
          %v2855 = vadd.f32 %v2839, %v2851
          %v2856 = vmul.f32 %v2852, 0.7978846
          %v2857 = vmul.f32 %v2853, 0.7978846
          %v2858 = vmul.f32 %v2854, 0.7978846
          %v2859 = vmul.f32 %v2855, 0.7978846
          %v2860 = vtanh.pop %v2856
          %v2861 = vtanh.pop %v2857
          %v2862 = vtanh.pop %v2858
          %v2863 = vtanh.pop %v2859
          %v2864 = vadd.f32 %v2860, 1.0
          %v2865 = vadd.f32 %v2861, 1.0
          %v2866 = vadd.f32 %v2862, 1.0
          %v2867 = vadd.f32 %v2863, 1.0
          %v2868 = vmul.f32 %v2864, 0.5
          %v2869 = vmul.f32 %v2865, 0.5
          %v2870 = vmul.f32 %v2866, 0.5
          %v2871 = vmul.f32 %v2867, 0.5
          %v2872 = vmul.f32 %v2836, %v2868
          %v2873 = vmul.f32 %v2837, %v2869
          %v2874 = vmul.f32 %v2838, %v2870
          %v2875 = vmul.f32 %v2839, %v2871
          %s2876 = scalar_lea.vmem %s415, 288
          %2877 = vst [vmem:[%s2876] sm:$0xff] %v2872
          %2878 = vst [vmem:[%s2876 + $0x8] sm:$0xff] %v2873
          %2879 = vst [vmem:[%s2876 + $0x10] sm:$0xff] %v2874
          %2880 = vst [vmem:[%s2876 + $0x18] sm:$0xff] %v2875
          %v2881 = vpack.c.bf16 %v2873, %v2872
          %v2882 = vpack.c.bf16 %v2875, %v2874
          %2883 = vst [vmem:[#allocation2 + $0x48] sm:$0xff] %v2881
          %2884 = vst [vmem:[#allocation2 + $0xc8] sm:$0xff] %v2882
          %s2885 = sld [smem:[#allocation3 + $0xa]]
          %v2886 = vstv %s2885
          %v2887 = vmul.f32 %v476, %v2886
          %v2888 = vmul.f32 %v477, %v2886
          %v2889 = vmul.f32 %v478, %v2886
          %v2890 = vmul.f32 %v479, %v2886
          %s2891 = sld [smem:[#allocation3 + $0x8a]]
          %v2892 = vstv %s2891
          %v2893 = vmul.f32 %v437, %v2892
          %v2894 = vmul.f32 %v438, %v2892
          %v2895 = vmul.f32 %v439, %v2892
          %v2896 = vmul.f32 %v440, %v2892
          %v2897 = vmul.f32 %v441, %v2892
          %v2898 = vmul.f32 %v442, %v2892
          %2905 = vrot.lane.b32.xlu0 %v2893, 127
          %v2906 = vpop.permute.xlu0 %2905
          %2907 = vrot.lane.b32.xlu0 %v2894, 127
          %v2908 = vpop.permute.xlu0 %2907
          %2909 = vrot.lane.b32.xlu0 %v2895, 127
          %v2910 = vpop.permute.xlu0 %2909
          %2911 = vrot.lane.b32.xlu0 %v2896, 127
          %v2912 = vpop.permute.xlu0 %2911
          %2913 = vrot.lane.b32.xlu0 %v2897, 127
          %v2914 = vpop.permute.xlu0 %2913
          %2915 = vrot.lane.b32.xlu0 %v2898, 127
          %v2916 = vpop.permute.xlu0 %2915
          %v2917 = vsel %vm643, %v2906, %v2908
          %v2918 = vsel %vm643, %v2908, %v2910
          %v2919 = vsel %vm643, %v2912, %v2914
          %v2920 = vsel %vm643, %v2914, %v2916
          %v2925 = vadd.f32 %v2887, %v2917
          %v2926 = vadd.f32 %v2888, %v2918
          %v2927 = vadd.f32 %v2889, %v2919
          %v2928 = vadd.f32 %v2890, %v2920
          %s2929 = sld [smem:[#allocation3 + $0x10a]]
          %v2930 = vstv %s2929
          %v2931 = vmul.f32 %v507, %v2930
          %v2932 = vmul.f32 %v508, %v2930
          %v2933 = vmul.f32 %v509, %v2930
          %v2934 = vmul.f32 %v510, %v2930
          %v2935 = vadd.f32 %v2925, %v2931
          %v2936 = vadd.f32 %v2926, %v2932
          %v2937 = vadd.f32 %v2927, %v2933
          %v2938 = vadd.f32 %v2928, %v2934
          %s2939 = sld [smem:[#allocation3 + $0x18a]]
          %v2940 = vstv %s2939
          %v2941 = vmul.f32 %v532, %v2940
          %v2942 = vmul.f32 %v533, %v2940
          %v2943 = vmul.f32 %v534, %v2940
          %v2944 = vmul.f32 %v535, %v2940
          %v2945 = vadd.f32 %v2935, %v2941
          %v2946 = vadd.f32 %v2936, %v2942
          %v2947 = vadd.f32 %v2937, %v2943
          %v2948 = vadd.f32 %v2938, %v2944
          %s2949 = sld [smem:[#allocation3 + $0x20a]]
          %v2950 = vstv %s2949
          %v2951 = vmul.f32 %v437, %v2950
          %v2952 = vmul.f32 %v438, %v2950
          %v2953 = vmul.f32 %v439, %v2950
          %v2954 = vmul.f32 %v440, %v2950
          %v2955 = vmul.f32 %v441, %v2950
          %v2956 = vmul.f32 %v442, %v2950
          %2963 = vrot.lane.b32.xlu0 %v2951, 111
          %v2964 = vpop.permute.xlu0 %2963
          %2965 = vrot.lane.b32.xlu0 %v2952, 111
          %v2966 = vpop.permute.xlu0 %2965
          %2967 = vrot.lane.b32.xlu0 %v2953, 111
          %v2968 = vpop.permute.xlu0 %2967
          %2969 = vrot.lane.b32.xlu0 %v2954, 111
          %v2970 = vpop.permute.xlu0 %2969
          %2971 = vrot.lane.b32.xlu0 %v2955, 111
          %v2972 = vpop.permute.xlu0 %2971
          %2973 = vrot.lane.b32.xlu0 %v2956, 111
          %v2974 = vpop.permute.xlu0 %2973
          %v2975 = vsel %vm702, %v2964, %v2966
          %v2976 = vsel %vm702, %v2966, %v2968
          %v2977 = vsel %vm702, %v2970, %v2972
          %v2978 = vsel %vm702, %v2972, %v2974
          %v2983 = vadd.f32 %v2945, %v2975
          %v2984 = vadd.f32 %v2946, %v2976
          %v2985 = vadd.f32 %v2947, %v2977
          %v2986 = vadd.f32 %v2948, %v2978
          %s2987 = sld [smem:[#allocation3 + $0x28a]]
          %v2988 = vstv %s2987
          %v2989 = vmul.f32 %v557, %v2988
          %v2990 = vmul.f32 %v558, %v2988
          %v2991 = vmul.f32 %v559, %v2988
          %v2992 = vmul.f32 %v560, %v2988
          %v2993 = vadd.f32 %v2983, %v2989
          %v2994 = vadd.f32 %v2984, %v2990
          %v2995 = vadd.f32 %v2985, %v2991
          %v2996 = vadd.f32 %v2986, %v2992
          %s2997 = sld [smem:[#allocation3 + $0x30a]]
          %v2998 = vstv %s2997
          %v2999 = vmul.f32 %v582, %v2998
          %v3000 = vmul.f32 %v583, %v2998
          %v3001 = vmul.f32 %v584, %v2998
          %v3002 = vmul.f32 %v585, %v2998
          %v3003 = vadd.f32 %v2993, %v2999
          %v3004 = vadd.f32 %v2994, %v3000
          %v3005 = vadd.f32 %v2995, %v3001
          %v3006 = vadd.f32 %v2996, %v3002
          %s3007 = sld [smem:[#allocation3 + $0x38a]]
          %v3008 = vstv %s3007
          %v3009 = vmul.f32 %v437, %v3008
          %v3010 = vmul.f32 %v438, %v3008
          %v3011 = vmul.f32 %v439, %v3008
          %v3012 = vmul.f32 %v440, %v3008
          %v3013 = vmul.f32 %v441, %v3008
          %v3014 = vmul.f32 %v442, %v3008
          %3021 = vrot.lane.b32.xlu0 %v3009, 95
          %v3022 = vpop.permute.xlu0 %3021
          %3023 = vrot.lane.b32.xlu0 %v3010, 95
          %v3024 = vpop.permute.xlu0 %3023
          %3025 = vrot.lane.b32.xlu0 %v3011, 95
          %v3026 = vpop.permute.xlu0 %3025
          %3027 = vrot.lane.b32.xlu0 %v3012, 95
          %v3028 = vpop.permute.xlu0 %3027
          %3029 = vrot.lane.b32.xlu0 %v3013, 95
          %v3030 = vpop.permute.xlu0 %3029
          %3031 = vrot.lane.b32.xlu0 %v3014, 95
          %v3032 = vpop.permute.xlu0 %3031
          %v3033 = vsel %vm761, %v3022, %v3024
          %v3034 = vsel %vm761, %v3024, %v3026
          %v3035 = vsel %vm761, %v3028, %v3030
          %v3036 = vsel %vm761, %v3030, %v3032
          %v3041 = vadd.f32 %v3003, %v3033
          %v3042 = vadd.f32 %v3004, %v3034
          %v3043 = vadd.f32 %v3005, %v3035
          %v3044 = vadd.f32 %v3006, %v3036
          %s3045 = sld [smem:[#allocation3 + $0x40a]]
          %v3046 = vstv %s3045
          %v3047 = vmul.f32 %v607, %v3046
          %v3048 = vmul.f32 %v608, %v3046
          %v3049 = vmul.f32 %v609, %v3046
          %v3050 = vmul.f32 %v610, %v3046
          %v3051 = vadd.f32 %v3041, %v3047
          %v3052 = vadd.f32 %v3042, %v3048
          %v3053 = vadd.f32 %v3043, %v3049
          %v3054 = vadd.f32 %v3044, %v3050
          %3055 = vset.pattern.permute.xlu0 10
          %3056 = vperm.xlu0 %3055, %v443
          %v3057 = vpop.permute.xlu0 %3056
          %3059 = vset.pattern.permute.xlu0 10
          %3060 = vperm.xlu0 %3059, %v444
          %v3061 = vpop.permute.xlu0 %3060
          %v3063 = vadd.f32 %v3051, %v3057
          %v3064 = vadd.f32 %v3052, %v3057
          %v3065 = vadd.f32 %v3053, %v3061
          %v3066 = vadd.f32 %v3054, %v3061
          %v3067 = vmul.f32 %v3063, %v3063
          %v3068 = vmul.f32 %v3064, %v3064
          %v3069 = vmul.f32 %v3065, %v3065
          %v3070 = vmul.f32 %v3066, %v3066
          %v3071 = vmul.f32 %v3063, %v3067
          %v3072 = vmul.f32 %v3064, %v3068
          %v3073 = vmul.f32 %v3065, %v3069
          %v3074 = vmul.f32 %v3066, %v3070
          %v3075 = vmul.f32 %v3071, 0.044715
          %v3076 = vmul.f32 %v3072, 0.044715
          %v3077 = vmul.f32 %v3073, 0.044715
          %v3078 = vmul.f32 %v3074, 0.044715
          %v3079 = vadd.f32 %v3063, %v3075
          %v3080 = vadd.f32 %v3064, %v3076
          %v3081 = vadd.f32 %v3065, %v3077
          %v3082 = vadd.f32 %v3066, %v3078
          %v3083 = vmul.f32 %v3079, 0.7978846
          %v3084 = vmul.f32 %v3080, 0.7978846
          %v3085 = vmul.f32 %v3081, 0.7978846
          %v3086 = vmul.f32 %v3082, 0.7978846
          %v3087 = vtanh.pop %v3083
          %v3088 = vtanh.pop %v3084
          %v3089 = vtanh.pop %v3085
          %v3090 = vtanh.pop %v3086
          %v3091 = vadd.f32 %v3087, 1.0
          %v3092 = vadd.f32 %v3088, 1.0
          %v3093 = vadd.f32 %v3089, 1.0
          %v3094 = vadd.f32 %v3090, 1.0
          %v3095 = vmul.f32 %v3091, 0.5
          %v3096 = vmul.f32 %v3092, 0.5
          %v3097 = vmul.f32 %v3093, 0.5
          %v3098 = vmul.f32 %v3094, 0.5
          %v3099 = vmul.f32 %v3063, %v3095
          %v3100 = vmul.f32 %v3064, %v3096
          %v3101 = vmul.f32 %v3065, %v3097
          %v3102 = vmul.f32 %v3066, %v3098
          %s3103 = scalar_lea.vmem %s415, 320
          %3104 = vst [vmem:[%s3103] sm:$0xff] %v3099
          %3105 = vst [vmem:[%s3103 + $0x8] sm:$0xff] %v3100
          %3106 = vst [vmem:[%s3103 + $0x10] sm:$0xff] %v3101
          %3107 = vst [vmem:[%s3103 + $0x18] sm:$0xff] %v3102
          %v3108 = vpack.c.bf16 %v3100, %v3099
          %v3109 = vpack.c.bf16 %v3102, %v3101
          %3110 = vst [vmem:[#allocation2 + $0x50] sm:$0xff] %v3108
          %3111 = vst [vmem:[#allocation2 + $0xd0] sm:$0xff] %v3109
          %s3112 = sld [smem:[#allocation3 + $0xb]]
          %v3113 = vstv %s3112
          %v3114 = vmul.f32 %v476, %v3113
          %v3115 = vmul.f32 %v477, %v3113
          %v3116 = vmul.f32 %v478, %v3113
          %v3117 = vmul.f32 %v479, %v3113
          %s3118 = sld [smem:[#allocation3 + $0x8b]]
          %v3119 = vstv %s3118
          %v3120 = vmul.f32 %v437, %v3119
          %v3121 = vmul.f32 %v438, %v3119
          %v3122 = vmul.f32 %v439, %v3119
          %v3123 = vmul.f32 %v440, %v3119
          %v3124 = vmul.f32 %v441, %v3119
          %v3125 = vmul.f32 %v442, %v3119
          %3132 = vrot.lane.b32.xlu0 %v3120, 127
          %v3133 = vpop.permute.xlu0 %3132
          %3134 = vrot.lane.b32.xlu0 %v3121, 127
          %v3135 = vpop.permute.xlu0 %3134
          %3136 = vrot.lane.b32.xlu0 %v3122, 127
          %v3137 = vpop.permute.xlu0 %3136
          %3138 = vrot.lane.b32.xlu0 %v3123, 127
          %v3139 = vpop.permute.xlu0 %3138
          %3140 = vrot.lane.b32.xlu0 %v3124, 127
          %v3141 = vpop.permute.xlu0 %3140
          %3142 = vrot.lane.b32.xlu0 %v3125, 127
          %v3143 = vpop.permute.xlu0 %3142
          %v3144 = vsel %vm643, %v3133, %v3135
          %v3145 = vsel %vm643, %v3135, %v3137
          %v3146 = vsel %vm643, %v3139, %v3141
          %v3147 = vsel %vm643, %v3141, %v3143
          %v3152 = vadd.f32 %v3114, %v3144
          %v3153 = vadd.f32 %v3115, %v3145
          %v3154 = vadd.f32 %v3116, %v3146
          %v3155 = vadd.f32 %v3117, %v3147
          %s3156 = sld [smem:[#allocation3 + $0x10b]]
          %v3157 = vstv %s3156
          %v3158 = vmul.f32 %v507, %v3157
          %v3159 = vmul.f32 %v508, %v3157
          %v3160 = vmul.f32 %v509, %v3157
          %v3161 = vmul.f32 %v510, %v3157
          %v3162 = vadd.f32 %v3152, %v3158
          %v3163 = vadd.f32 %v3153, %v3159
          %v3164 = vadd.f32 %v3154, %v3160
          %v3165 = vadd.f32 %v3155, %v3161
          %s3166 = sld [smem:[#allocation3 + $0x18b]]
          %v3167 = vstv %s3166
          %v3168 = vmul.f32 %v532, %v3167
          %v3169 = vmul.f32 %v533, %v3167
          %v3170 = vmul.f32 %v534, %v3167
          %v3171 = vmul.f32 %v535, %v3167
          %v3172 = vadd.f32 %v3162, %v3168
          %v3173 = vadd.f32 %v3163, %v3169
          %v3174 = vadd.f32 %v3164, %v3170
          %v3175 = vadd.f32 %v3165, %v3171
          %s3176 = sld [smem:[#allocation3 + $0x20b]]
          %v3177 = vstv %s3176
          %v3178 = vmul.f32 %v437, %v3177
          %v3179 = vmul.f32 %v438, %v3177
          %v3180 = vmul.f32 %v439, %v3177
          %v3181 = vmul.f32 %v440, %v3177
          %v3182 = vmul.f32 %v441, %v3177
          %v3183 = vmul.f32 %v442, %v3177
          %3190 = vrot.lane.b32.xlu0 %v3178, 111
          %v3191 = vpop.permute.xlu0 %3190
          %3192 = vrot.lane.b32.xlu0 %v3179, 111
          %v3193 = vpop.permute.xlu0 %3192
          %3194 = vrot.lane.b32.xlu0 %v3180, 111
          %v3195 = vpop.permute.xlu0 %3194
          %3196 = vrot.lane.b32.xlu0 %v3181, 111
          %v3197 = vpop.permute.xlu0 %3196
          %3198 = vrot.lane.b32.xlu0 %v3182, 111
          %v3199 = vpop.permute.xlu0 %3198
          %3200 = vrot.lane.b32.xlu0 %v3183, 111
          %v3201 = vpop.permute.xlu0 %3200
          %v3202 = vsel %vm702, %v3191, %v3193
          %v3203 = vsel %vm702, %v3193, %v3195
          %v3204 = vsel %vm702, %v3197, %v3199
          %v3205 = vsel %vm702, %v3199, %v3201
          %v3210 = vadd.f32 %v3172, %v3202
          %v3211 = vadd.f32 %v3173, %v3203
          %v3212 = vadd.f32 %v3174, %v3204
          %v3213 = vadd.f32 %v3175, %v3205
          %s3214 = sld [smem:[#allocation3 + $0x28b]]
          %v3215 = vstv %s3214
          %v3216 = vmul.f32 %v557, %v3215
          %v3217 = vmul.f32 %v558, %v3215
          %v3218 = vmul.f32 %v559, %v3215
          %v3219 = vmul.f32 %v560, %v3215
          %v3220 = vadd.f32 %v3210, %v3216
          %v3221 = vadd.f32 %v3211, %v3217
          %v3222 = vadd.f32 %v3212, %v3218
          %v3223 = vadd.f32 %v3213, %v3219
          %s3224 = sld [smem:[#allocation3 + $0x30b]]
          %v3225 = vstv %s3224
          %v3226 = vmul.f32 %v582, %v3225
          %v3227 = vmul.f32 %v583, %v3225
          %v3228 = vmul.f32 %v584, %v3225
          %v3229 = vmul.f32 %v585, %v3225
          %v3230 = vadd.f32 %v3220, %v3226
          %v3231 = vadd.f32 %v3221, %v3227
          %v3232 = vadd.f32 %v3222, %v3228
          %v3233 = vadd.f32 %v3223, %v3229
          %s3234 = sld [smem:[#allocation3 + $0x38b]]
          %v3235 = vstv %s3234
          %v3236 = vmul.f32 %v437, %v3235
          %v3237 = vmul.f32 %v438, %v3235
          %v3238 = vmul.f32 %v439, %v3235
          %v3239 = vmul.f32 %v440, %v3235
          %v3240 = vmul.f32 %v441, %v3235
          %v3241 = vmul.f32 %v442, %v3235
          %3248 = vrot.lane.b32.xlu0 %v3236, 95
          %v3249 = vpop.permute.xlu0 %3248
          %3250 = vrot.lane.b32.xlu0 %v3237, 95
          %v3251 = vpop.permute.xlu0 %3250
          %3252 = vrot.lane.b32.xlu0 %v3238, 95
          %v3253 = vpop.permute.xlu0 %3252
          %3254 = vrot.lane.b32.xlu0 %v3239, 95
          %v3255 = vpop.permute.xlu0 %3254
          %3256 = vrot.lane.b32.xlu0 %v3240, 95
          %v3257 = vpop.permute.xlu0 %3256
          %3258 = vrot.lane.b32.xlu0 %v3241, 95
          %v3259 = vpop.permute.xlu0 %3258
          %v3260 = vsel %vm761, %v3249, %v3251
          %v3261 = vsel %vm761, %v3251, %v3253
          %v3262 = vsel %vm761, %v3255, %v3257
          %v3263 = vsel %vm761, %v3257, %v3259
          %v3268 = vadd.f32 %v3230, %v3260
          %v3269 = vadd.f32 %v3231, %v3261
          %v3270 = vadd.f32 %v3232, %v3262
          %v3271 = vadd.f32 %v3233, %v3263
          %s3272 = sld [smem:[#allocation3 + $0x40b]]
          %v3273 = vstv %s3272
          %v3274 = vmul.f32 %v607, %v3273
          %v3275 = vmul.f32 %v608, %v3273
          %v3276 = vmul.f32 %v609, %v3273
          %v3277 = vmul.f32 %v610, %v3273
          %v3278 = vadd.f32 %v3268, %v3274
          %v3279 = vadd.f32 %v3269, %v3275
          %v3280 = vadd.f32 %v3270, %v3276
          %v3281 = vadd.f32 %v3271, %v3277
          %3282 = vset.pattern.permute.xlu0 11
          %3283 = vperm.xlu0 %3282, %v443
          %v3284 = vpop.permute.xlu0 %3283
          %3286 = vset.pattern.permute.xlu0 11
          %3287 = vperm.xlu0 %3286, %v444
          %v3288 = vpop.permute.xlu0 %3287
          %v3290 = vadd.f32 %v3278, %v3284
          %v3291 = vadd.f32 %v3279, %v3284
          %v3292 = vadd.f32 %v3280, %v3288
          %v3293 = vadd.f32 %v3281, %v3288
          %v3294 = vmul.f32 %v3290, %v3290
          %v3295 = vmul.f32 %v3291, %v3291
          %v3296 = vmul.f32 %v3292, %v3292
          %v3297 = vmul.f32 %v3293, %v3293
          %v3298 = vmul.f32 %v3290, %v3294
          %v3299 = vmul.f32 %v3291, %v3295
          %v3300 = vmul.f32 %v3292, %v3296
          %v3301 = vmul.f32 %v3293, %v3297
          %v3302 = vmul.f32 %v3298, 0.044715
          %v3303 = vmul.f32 %v3299, 0.044715
          %v3304 = vmul.f32 %v3300, 0.044715
          %v3305 = vmul.f32 %v3301, 0.044715
          %v3306 = vadd.f32 %v3290, %v3302
          %v3307 = vadd.f32 %v3291, %v3303
          %v3308 = vadd.f32 %v3292, %v3304
          %v3309 = vadd.f32 %v3293, %v3305
          %v3310 = vmul.f32 %v3306, 0.7978846
          %v3311 = vmul.f32 %v3307, 0.7978846
          %v3312 = vmul.f32 %v3308, 0.7978846
          %v3313 = vmul.f32 %v3309, 0.7978846
          %v3314 = vtanh.pop %v3310
          %v3315 = vtanh.pop %v3311
          %v3316 = vtanh.pop %v3312
          %v3317 = vtanh.pop %v3313
          %v3318 = vadd.f32 %v3314, 1.0
          %v3319 = vadd.f32 %v3315, 1.0
          %v3320 = vadd.f32 %v3316, 1.0
          %v3321 = vadd.f32 %v3317, 1.0
          %v3322 = vmul.f32 %v3318, 0.5
          %v3323 = vmul.f32 %v3319, 0.5
          %v3324 = vmul.f32 %v3320, 0.5
          %v3325 = vmul.f32 %v3321, 0.5
          %v3326 = vmul.f32 %v3290, %v3322
          %v3327 = vmul.f32 %v3291, %v3323
          %v3328 = vmul.f32 %v3292, %v3324
          %v3329 = vmul.f32 %v3293, %v3325
          %s3330 = scalar_lea.vmem %s415, 352
          %3331 = vst [vmem:[%s3330] sm:$0xff] %v3326
          %3332 = vst [vmem:[%s3330 + $0x8] sm:$0xff] %v3327
          %3333 = vst [vmem:[%s3330 + $0x10] sm:$0xff] %v3328
          %3334 = vst [vmem:[%s3330 + $0x18] sm:$0xff] %v3329
          %v3335 = vpack.c.bf16 %v3327, %v3326
          %v3336 = vpack.c.bf16 %v3329, %v3328
          %3337 = vst [vmem:[#allocation2 + $0x58] sm:$0xff] %v3335
          %3338 = vst [vmem:[#allocation2 + $0xd8] sm:$0xff] %v3336
          %s3339 = sld [smem:[#allocation3 + $0xc]]
          %v3340 = vstv %s3339
          %v3341 = vmul.f32 %v476, %v3340
          %v3342 = vmul.f32 %v477, %v3340
          %v3343 = vmul.f32 %v478, %v3340
          %v3344 = vmul.f32 %v479, %v3340
          %s3345 = sld [smem:[#allocation3 + $0x8c]]
          %v3346 = vstv %s3345
          %v3347 = vmul.f32 %v437, %v3346
          %v3348 = vmul.f32 %v438, %v3346
          %v3349 = vmul.f32 %v439, %v3346
          %v3350 = vmul.f32 %v440, %v3346
          %v3351 = vmul.f32 %v441, %v3346
          %v3352 = vmul.f32 %v442, %v3346
          %3359 = vrot.lane.b32.xlu0 %v3347, 127
          %v3360 = vpop.permute.xlu0 %3359
          %3361 = vrot.lane.b32.xlu0 %v3348, 127
          %v3362 = vpop.permute.xlu0 %3361
          %3363 = vrot.lane.b32.xlu0 %v3349, 127
          %v3364 = vpop.permute.xlu0 %3363
          %3365 = vrot.lane.b32.xlu0 %v3350, 127
          %v3366 = vpop.permute.xlu0 %3365
          %3367 = vrot.lane.b32.xlu0 %v3351, 127
          %v3368 = vpop.permute.xlu0 %3367
          %3369 = vrot.lane.b32.xlu0 %v3352, 127
          %v3370 = vpop.permute.xlu0 %3369
          %v3371 = vsel %vm643, %v3360, %v3362
          %v3372 = vsel %vm643, %v3362, %v3364
          %v3373 = vsel %vm643, %v3366, %v3368
          %v3374 = vsel %vm643, %v3368, %v3370
          %v3379 = vadd.f32 %v3341, %v3371
          %v3380 = vadd.f32 %v3342, %v3372
          %v3381 = vadd.f32 %v3343, %v3373
          %v3382 = vadd.f32 %v3344, %v3374
          %s3383 = sld [smem:[#allocation3 + $0x10c]]
          %v3384 = vstv %s3383
          %v3385 = vmul.f32 %v507, %v3384
          %v3386 = vmul.f32 %v508, %v3384
          %v3387 = vmul.f32 %v509, %v3384
          %v3388 = vmul.f32 %v510, %v3384
          %v3389 = vadd.f32 %v3379, %v3385
          %v3390 = vadd.f32 %v3380, %v3386
          %v3391 = vadd.f32 %v3381, %v3387
          %v3392 = vadd.f32 %v3382, %v3388
          %s3393 = sld [smem:[#allocation3 + $0x18c]]
          %v3394 = vstv %s3393
          %v3395 = vmul.f32 %v532, %v3394
          %v3396 = vmul.f32 %v533, %v3394
          %v3397 = vmul.f32 %v534, %v3394
          %v3398 = vmul.f32 %v535, %v3394
          %v3399 = vadd.f32 %v3389, %v3395
          %v3400 = vadd.f32 %v3390, %v3396
          %v3401 = vadd.f32 %v3391, %v3397
          %v3402 = vadd.f32 %v3392, %v3398
          %s3403 = sld [smem:[#allocation3 + $0x20c]]
          %v3404 = vstv %s3403
          %v3405 = vmul.f32 %v437, %v3404
          %v3406 = vmul.f32 %v438, %v3404
          %v3407 = vmul.f32 %v439, %v3404
          %v3408 = vmul.f32 %v440, %v3404
          %v3409 = vmul.f32 %v441, %v3404
          %v3410 = vmul.f32 %v442, %v3404
          %3417 = vrot.lane.b32.xlu0 %v3405, 111
          %v3418 = vpop.permute.xlu0 %3417
          %3419 = vrot.lane.b32.xlu0 %v3406, 111
          %v3420 = vpop.permute.xlu0 %3419
          %3421 = vrot.lane.b32.xlu0 %v3407, 111
          %v3422 = vpop.permute.xlu0 %3421
          %3423 = vrot.lane.b32.xlu0 %v3408, 111
          %v3424 = vpop.permute.xlu0 %3423
          %3425 = vrot.lane.b32.xlu0 %v3409, 111
          %v3426 = vpop.permute.xlu0 %3425
          %3427 = vrot.lane.b32.xlu0 %v3410, 111
          %v3428 = vpop.permute.xlu0 %3427
          %v3429 = vsel %vm702, %v3418, %v3420
          %v3430 = vsel %vm702, %v3420, %v3422
          %v3431 = vsel %vm702, %v3424, %v3426
          %v3432 = vsel %vm702, %v3426, %v3428
          %v3437 = vadd.f32 %v3399, %v3429
          %v3438 = vadd.f32 %v3400, %v3430
          %v3439 = vadd.f32 %v3401, %v3431
          %v3440 = vadd.f32 %v3402, %v3432
          %s3441 = sld [smem:[#allocation3 + $0x28c]]
          %v3442 = vstv %s3441
          %v3443 = vmul.f32 %v557, %v3442
          %v3444 = vmul.f32 %v558, %v3442
          %v3445 = vmul.f32 %v559, %v3442
          %v3446 = vmul.f32 %v560, %v3442
          %v3447 = vadd.f32 %v3437, %v3443
          %v3448 = vadd.f32 %v3438, %v3444
          %v3449 = vadd.f32 %v3439, %v3445
          %v3450 = vadd.f32 %v3440, %v3446
          %s3451 = sld [smem:[#allocation3 + $0x30c]]
          %v3452 = vstv %s3451
          %v3453 = vmul.f32 %v582, %v3452
          %v3454 = vmul.f32 %v583, %v3452
          %v3455 = vmul.f32 %v584, %v3452
          %v3456 = vmul.f32 %v585, %v3452
          %v3457 = vadd.f32 %v3447, %v3453
          %v3458 = vadd.f32 %v3448, %v3454
          %v3459 = vadd.f32 %v3449, %v3455
          %v3460 = vadd.f32 %v3450, %v3456
          %s3461 = sld [smem:[#allocation3 + $0x38c]]
          %v3462 = vstv %s3461
          %v3463 = vmul.f32 %v437, %v3462
          %v3464 = vmul.f32 %v438, %v3462
          %v3465 = vmul.f32 %v439, %v3462
          %v3466 = vmul.f32 %v440, %v3462
          %v3467 = vmul.f32 %v441, %v3462
          %v3468 = vmul.f32 %v442, %v3462
          %3475 = vrot.lane.b32.xlu0 %v3463, 95
          %v3476 = vpop.permute.xlu0 %3475
          %3477 = vrot.lane.b32.xlu0 %v3464, 95
          %v3478 = vpop.permute.xlu0 %3477
          %3479 = vrot.lane.b32.xlu0 %v3465, 95
          %v3480 = vpop.permute.xlu0 %3479
          %3481 = vrot.lane.b32.xlu0 %v3466, 95
          %v3482 = vpop.permute.xlu0 %3481
          %3483 = vrot.lane.b32.xlu0 %v3467, 95
          %v3484 = vpop.permute.xlu0 %3483
          %3485 = vrot.lane.b32.xlu0 %v3468, 95
          %v3486 = vpop.permute.xlu0 %3485
          %v3487 = vsel %vm761, %v3476, %v3478
          %v3488 = vsel %vm761, %v3478, %v3480
          %v3489 = vsel %vm761, %v3482, %v3484
          %v3490 = vsel %vm761, %v3484, %v3486
          %v3495 = vadd.f32 %v3457, %v3487
          %v3496 = vadd.f32 %v3458, %v3488
          %v3497 = vadd.f32 %v3459, %v3489
          %v3498 = vadd.f32 %v3460, %v3490
          %s3499 = sld [smem:[#allocation3 + $0x40c]]
          %v3500 = vstv %s3499
          %v3501 = vmul.f32 %v607, %v3500
          %v3502 = vmul.f32 %v608, %v3500
          %v3503 = vmul.f32 %v609, %v3500
          %v3504 = vmul.f32 %v610, %v3500
          %v3505 = vadd.f32 %v3495, %v3501
          %v3506 = vadd.f32 %v3496, %v3502
          %v3507 = vadd.f32 %v3497, %v3503
          %v3508 = vadd.f32 %v3498, %v3504
          %3509 = vset.pattern.permute.xlu0 12
          %3510 = vperm.xlu0 %3509, %v443
          %v3511 = vpop.permute.xlu0 %3510
          %3513 = vset.pattern.permute.xlu0 12
          %3514 = vperm.xlu0 %3513, %v444
          %v3515 = vpop.permute.xlu0 %3514
          %v3517 = vadd.f32 %v3505, %v3511
          %v3518 = vadd.f32 %v3506, %v3511
          %v3519 = vadd.f32 %v3507, %v3515
          %v3520 = vadd.f32 %v3508, %v3515
          %v3521 = vmul.f32 %v3517, %v3517
          %v3522 = vmul.f32 %v3518, %v3518
          %v3523 = vmul.f32 %v3519, %v3519
          %v3524 = vmul.f32 %v3520, %v3520
          %v3525 = vmul.f32 %v3517, %v3521
          %v3526 = vmul.f32 %v3518, %v3522
          %v3527 = vmul.f32 %v3519, %v3523
          %v3528 = vmul.f32 %v3520, %v3524
          %v3529 = vmul.f32 %v3525, 0.044715
          %v3530 = vmul.f32 %v3526, 0.044715
          %v3531 = vmul.f32 %v3527, 0.044715
          %v3532 = vmul.f32 %v3528, 0.044715
          %v3533 = vadd.f32 %v3517, %v3529
          %v3534 = vadd.f32 %v3518, %v3530
          %v3535 = vadd.f32 %v3519, %v3531
          %v3536 = vadd.f32 %v3520, %v3532
          %v3537 = vmul.f32 %v3533, 0.7978846
          %v3538 = vmul.f32 %v3534, 0.7978846
          %v3539 = vmul.f32 %v3535, 0.7978846
          %v3540 = vmul.f32 %v3536, 0.7978846
          %v3541 = vtanh.pop %v3537
          %v3542 = vtanh.pop %v3538
          %v3543 = vtanh.pop %v3539
          %v3544 = vtanh.pop %v3540
          %v3545 = vadd.f32 %v3541, 1.0
          %v3546 = vadd.f32 %v3542, 1.0
          %v3547 = vadd.f32 %v3543, 1.0
          %v3548 = vadd.f32 %v3544, 1.0
          %v3549 = vmul.f32 %v3545, 0.5
          %v3550 = vmul.f32 %v3546, 0.5
          %v3551 = vmul.f32 %v3547, 0.5
          %v3552 = vmul.f32 %v3548, 0.5
          %v3553 = vmul.f32 %v3517, %v3549
          %v3554 = vmul.f32 %v3518, %v3550
          %v3555 = vmul.f32 %v3519, %v3551
          %v3556 = vmul.f32 %v3520, %v3552
          %s3557 = scalar_lea.vmem %s415, 384
          %3558 = vst [vmem:[%s3557] sm:$0xff] %v3553
          %3559 = vst [vmem:[%s3557 + $0x8] sm:$0xff] %v3554
          %3560 = vst [vmem:[%s3557 + $0x10] sm:$0xff] %v3555
          %3561 = vst [vmem:[%s3557 + $0x18] sm:$0xff] %v3556
          %v3562 = vpack.c.bf16 %v3554, %v3553
          %v3563 = vpack.c.bf16 %v3556, %v3555
          %3564 = vst [vmem:[#allocation2 + $0x60] sm:$0xff] %v3562
          %3565 = vst [vmem:[#allocation2 + $0xe0] sm:$0xff] %v3563
          %s3566 = sld [smem:[#allocation3 + $0xd]]
          %v3567 = vstv %s3566
          %v3568 = vmul.f32 %v476, %v3567
          %v3569 = vmul.f32 %v477, %v3567
          %v3570 = vmul.f32 %v478, %v3567
          %v3571 = vmul.f32 %v479, %v3567
          %s3572 = sld [smem:[#allocation3 + $0x8d]]
          %v3573 = vstv %s3572
          %v3574 = vmul.f32 %v437, %v3573
          %v3575 = vmul.f32 %v438, %v3573
          %v3576 = vmul.f32 %v439, %v3573
          %v3577 = vmul.f32 %v440, %v3573
          %v3578 = vmul.f32 %v441, %v3573
          %v3579 = vmul.f32 %v442, %v3573
          %3586 = vrot.lane.b32.xlu0 %v3574, 127
          %v3587 = vpop.permute.xlu0 %3586
          %3588 = vrot.lane.b32.xlu0 %v3575, 127
          %v3589 = vpop.permute.xlu0 %3588
          %3590 = vrot.lane.b32.xlu0 %v3576, 127
          %v3591 = vpop.permute.xlu0 %3590
          %3592 = vrot.lane.b32.xlu0 %v3577, 127
          %v3593 = vpop.permute.xlu0 %3592
          %3594 = vrot.lane.b32.xlu0 %v3578, 127
          %v3595 = vpop.permute.xlu0 %3594
          %3596 = vrot.lane.b32.xlu0 %v3579, 127
          %v3597 = vpop.permute.xlu0 %3596
          %v3598 = vsel %vm643, %v3587, %v3589
          %v3599 = vsel %vm643, %v3589, %v3591
          %v3600 = vsel %vm643, %v3593, %v3595
          %v3601 = vsel %vm643, %v3595, %v3597
          %v3606 = vadd.f32 %v3568, %v3598
          %v3607 = vadd.f32 %v3569, %v3599
          %v3608 = vadd.f32 %v3570, %v3600
          %v3609 = vadd.f32 %v3571, %v3601
          %s3610 = sld [smem:[#allocation3 + $0x10d]]
          %v3611 = vstv %s3610
          %v3612 = vmul.f32 %v507, %v3611
          %v3613 = vmul.f32 %v508, %v3611
          %v3614 = vmul.f32 %v509, %v3611
          %v3615 = vmul.f32 %v510, %v3611
          %v3616 = vadd.f32 %v3606, %v3612
          %v3617 = vadd.f32 %v3607, %v3613
          %v3618 = vadd.f32 %v3608, %v3614
          %v3619 = vadd.f32 %v3609, %v3615
          %s3620 = sld [smem:[#allocation3 + $0x18d]]
          %v3621 = vstv %s3620
          %v3622 = vmul.f32 %v532, %v3621
          %v3623 = vmul.f32 %v533, %v3621
          %v3624 = vmul.f32 %v534, %v3621
          %v3625 = vmul.f32 %v535, %v3621
          %v3626 = vadd.f32 %v3616, %v3622
          %v3627 = vadd.f32 %v3617, %v3623
          %v3628 = vadd.f32 %v3618, %v3624
          %v3629 = vadd.f32 %v3619, %v3625
          %s3630 = sld [smem:[#allocation3 + $0x20d]]
          %v3631 = vstv %s3630
          %v3632 = vmul.f32 %v437, %v3631
          %v3633 = vmul.f32 %v438, %v3631
          %v3634 = vmul.f32 %v439, %v3631
          %v3635 = vmul.f32 %v440, %v3631
          %v3636 = vmul.f32 %v441, %v3631
          %v3637 = vmul.f32 %v442, %v3631
          %3644 = vrot.lane.b32.xlu0 %v3632, 111
          %v3645 = vpop.permute.xlu0 %3644
          %3646 = vrot.lane.b32.xlu0 %v3633, 111
          %v3647 = vpop.permute.xlu0 %3646
          %3648 = vrot.lane.b32.xlu0 %v3634, 111
          %v3649 = vpop.permute.xlu0 %3648
          %3650 = vrot.lane.b32.xlu0 %v3635, 111
          %v3651 = vpop.permute.xlu0 %3650
          %3652 = vrot.lane.b32.xlu0 %v3636, 111
          %v3653 = vpop.permute.xlu0 %3652
          %3654 = vrot.lane.b32.xlu0 %v3637, 111
          %v3655 = vpop.permute.xlu0 %3654
          %v3656 = vsel %vm702, %v3645, %v3647
          %v3657 = vsel %vm702, %v3647, %v3649
          %v3658 = vsel %vm702, %v3651, %v3653
          %v3659 = vsel %vm702, %v3653, %v3655
          %v3664 = vadd.f32 %v3626, %v3656
          %v3665 = vadd.f32 %v3627, %v3657
          %v3666 = vadd.f32 %v3628, %v3658
          %v3667 = vadd.f32 %v3629, %v3659
          %s3668 = sld [smem:[#allocation3 + $0x28d]]
          %v3669 = vstv %s3668
          %v3670 = vmul.f32 %v557, %v3669
          %v3671 = vmul.f32 %v558, %v3669
          %v3672 = vmul.f32 %v559, %v3669
          %v3673 = vmul.f32 %v560, %v3669
          %v3674 = vadd.f32 %v3664, %v3670
          %v3675 = vadd.f32 %v3665, %v3671
          %v3676 = vadd.f32 %v3666, %v3672
          %v3677 = vadd.f32 %v3667, %v3673
          %s3678 = sld [smem:[#allocation3 + $0x30d]]
          %v3679 = vstv %s3678
          %v3680 = vmul.f32 %v582, %v3679
          %v3681 = vmul.f32 %v583, %v3679
          %v3682 = vmul.f32 %v584, %v3679
          %v3683 = vmul.f32 %v585, %v3679
          %v3684 = vadd.f32 %v3674, %v3680
          %v3685 = vadd.f32 %v3675, %v3681
          %v3686 = vadd.f32 %v3676, %v3682
          %v3687 = vadd.f32 %v3677, %v3683
          %s3688 = sld [smem:[#allocation3 + $0x38d]]
          %v3689 = vstv %s3688
          %v3690 = vmul.f32 %v437, %v3689
          %v3691 = vmul.f32 %v438, %v3689
          %v3692 = vmul.f32 %v439, %v3689
          %v3693 = vmul.f32 %v440, %v3689
          %v3694 = vmul.f32 %v441, %v3689
          %v3695 = vmul.f32 %v442, %v3689
          %3702 = vrot.lane.b32.xlu0 %v3690, 95
          %v3703 = vpop.permute.xlu0 %3702
          %3704 = vrot.lane.b32.xlu0 %v3691, 95
          %v3705 = vpop.permute.xlu0 %3704
          %3706 = vrot.lane.b32.xlu0 %v3692, 95
          %v3707 = vpop.permute.xlu0 %3706
          %3708 = vrot.lane.b32.xlu0 %v3693, 95
          %v3709 = vpop.permute.xlu0 %3708
          %3710 = vrot.lane.b32.xlu0 %v3694, 95
          %v3711 = vpop.permute.xlu0 %3710
          %3712 = vrot.lane.b32.xlu0 %v3695, 95
          %v3713 = vpop.permute.xlu0 %3712
          %v3714 = vsel %vm761, %v3703, %v3705
          %v3715 = vsel %vm761, %v3705, %v3707
          %v3716 = vsel %vm761, %v3709, %v3711
          %v3717 = vsel %vm761, %v3711, %v3713
          %v3722 = vadd.f32 %v3684, %v3714
          %v3723 = vadd.f32 %v3685, %v3715
          %v3724 = vadd.f32 %v3686, %v3716
          %v3725 = vadd.f32 %v3687, %v3717
          %s3726 = sld [smem:[#allocation3 + $0x40d]]
          %v3727 = vstv %s3726
          %v3728 = vmul.f32 %v607, %v3727
          %v3729 = vmul.f32 %v608, %v3727
          %v3730 = vmul.f32 %v609, %v3727
          %v3731 = vmul.f32 %v610, %v3727
          %v3732 = vadd.f32 %v3722, %v3728
          %v3733 = vadd.f32 %v3723, %v3729
          %v3734 = vadd.f32 %v3724, %v3730
          %v3735 = vadd.f32 %v3725, %v3731
          %3736 = vset.pattern.permute.xlu0 13
          %3737 = vperm.xlu0 %3736, %v443
          %v3738 = vpop.permute.xlu0 %3737
          %3740 = vset.pattern.permute.xlu0 13
          %3741 = vperm.xlu0 %3740, %v444
          %v3742 = vpop.permute.xlu0 %3741
          %v3744 = vadd.f32 %v3732, %v3738
          %v3745 = vadd.f32 %v3733, %v3738
          %v3746 = vadd.f32 %v3734, %v3742
          %v3747 = vadd.f32 %v3735, %v3742
          %v3748 = vmul.f32 %v3744, %v3744
          %v3749 = vmul.f32 %v3745, %v3745
          %v3750 = vmul.f32 %v3746, %v3746
          %v3751 = vmul.f32 %v3747, %v3747
          %v3752 = vmul.f32 %v3744, %v3748
          %v3753 = vmul.f32 %v3745, %v3749
          %v3754 = vmul.f32 %v3746, %v3750
          %v3755 = vmul.f32 %v3747, %v3751
          %v3756 = vmul.f32 %v3752, 0.044715
          %v3757 = vmul.f32 %v3753, 0.044715
          %v3758 = vmul.f32 %v3754, 0.044715
          %v3759 = vmul.f32 %v3755, 0.044715
          %v3760 = vadd.f32 %v3744, %v3756
          %v3761 = vadd.f32 %v3745, %v3757
          %v3762 = vadd.f32 %v3746, %v3758
          %v3763 = vadd.f32 %v3747, %v3759
          %v3764 = vmul.f32 %v3760, 0.7978846
          %v3765 = vmul.f32 %v3761, 0.7978846
          %v3766 = vmul.f32 %v3762, 0.7978846
          %v3767 = vmul.f32 %v3763, 0.7978846
          %v3768 = vtanh.pop %v3764
          %v3769 = vtanh.pop %v3765
          %v3770 = vtanh.pop %v3766
          %v3771 = vtanh.pop %v3767
          %v3772 = vadd.f32 %v3768, 1.0
          %v3773 = vadd.f32 %v3769, 1.0
          %v3774 = vadd.f32 %v3770, 1.0
          %v3775 = vadd.f32 %v3771, 1.0
          %v3776 = vmul.f32 %v3772, 0.5
          %v3777 = vmul.f32 %v3773, 0.5
          %v3778 = vmul.f32 %v3774, 0.5
          %v3779 = vmul.f32 %v3775, 0.5
          %v3780 = vmul.f32 %v3744, %v3776
          %v3781 = vmul.f32 %v3745, %v3777
          %v3782 = vmul.f32 %v3746, %v3778
          %v3783 = vmul.f32 %v3747, %v3779
          %s3784 = scalar_lea.vmem %s415, 416
          %3785 = vst [vmem:[%s3784] sm:$0xff] %v3780
          %3786 = vst [vmem:[%s3784 + $0x8] sm:$0xff] %v3781
          %3787 = vst [vmem:[%s3784 + $0x10] sm:$0xff] %v3782
          %3788 = vst [vmem:[%s3784 + $0x18] sm:$0xff] %v3783
          %v3789 = vpack.c.bf16 %v3781, %v3780
          %v3790 = vpack.c.bf16 %v3783, %v3782
          %3791 = vst [vmem:[#allocation2 + $0x68] sm:$0xff] %v3789
          %3792 = vst [vmem:[#allocation2 + $0xe8] sm:$0xff] %v3790
          %s3793 = sld [smem:[#allocation3 + $0xe]]
          %v3794 = vstv %s3793
          %v3795 = vmul.f32 %v476, %v3794
          %v3796 = vmul.f32 %v477, %v3794
          %v3797 = vmul.f32 %v478, %v3794
          %v3798 = vmul.f32 %v479, %v3794
          %s3799 = sld [smem:[#allocation3 + $0x8e]]
          %v3800 = vstv %s3799
          %v3801 = vmul.f32 %v437, %v3800
          %v3802 = vmul.f32 %v438, %v3800
          %v3803 = vmul.f32 %v439, %v3800
          %v3804 = vmul.f32 %v440, %v3800
          %v3805 = vmul.f32 %v441, %v3800
          %v3806 = vmul.f32 %v442, %v3800
          %3813 = vrot.lane.b32.xlu0 %v3801, 127
          %v3814 = vpop.permute.xlu0 %3813
          %3815 = vrot.lane.b32.xlu0 %v3802, 127
          %v3816 = vpop.permute.xlu0 %3815
          %3817 = vrot.lane.b32.xlu0 %v3803, 127
          %v3818 = vpop.permute.xlu0 %3817
          %3819 = vrot.lane.b32.xlu0 %v3804, 127
          %v3820 = vpop.permute.xlu0 %3819
          %3821 = vrot.lane.b32.xlu0 %v3805, 127
          %v3822 = vpop.permute.xlu0 %3821
          %3823 = vrot.lane.b32.xlu0 %v3806, 127
          %v3824 = vpop.permute.xlu0 %3823
          %v3825 = vsel %vm643, %v3814, %v3816
          %v3826 = vsel %vm643, %v3816, %v3818
          %v3827 = vsel %vm643, %v3820, %v3822
          %v3828 = vsel %vm643, %v3822, %v3824
          %v3833 = vadd.f32 %v3795, %v3825
          %v3834 = vadd.f32 %v3796, %v3826
          %v3835 = vadd.f32 %v3797, %v3827
          %v3836 = vadd.f32 %v3798, %v3828
          %s3837 = sld [smem:[#allocation3 + $0x10e]]
          %v3838 = vstv %s3837
          %v3839 = vmul.f32 %v507, %v3838
          %v3840 = vmul.f32 %v508, %v3838
          %v3841 = vmul.f32 %v509, %v3838
          %v3842 = vmul.f32 %v510, %v3838
          %v3843 = vadd.f32 %v3833, %v3839
          %v3844 = vadd.f32 %v3834, %v3840
          %v3845 = vadd.f32 %v3835, %v3841
          %v3846 = vadd.f32 %v3836, %v3842
          %s3847 = sld [smem:[#allocation3 + $0x18e]]
          %v3848 = vstv %s3847
          %v3849 = vmul.f32 %v532, %v3848
          %v3850 = vmul.f32 %v533, %v3848
          %v3851 = vmul.f32 %v534, %v3848
          %v3852 = vmul.f32 %v535, %v3848
          %v3853 = vadd.f32 %v3843, %v3849
          %v3854 = vadd.f32 %v3844, %v3850
          %v3855 = vadd.f32 %v3845, %v3851
          %v3856 = vadd.f32 %v3846, %v3852
          %s3857 = sld [smem:[#allocation3 + $0x20e]]
          %v3858 = vstv %s3857
          %v3859 = vmul.f32 %v437, %v3858
          %v3860 = vmul.f32 %v438, %v3858
          %v3861 = vmul.f32 %v439, %v3858
          %v3862 = vmul.f32 %v440, %v3858
          %v3863 = vmul.f32 %v441, %v3858
          %v3864 = vmul.f32 %v442, %v3858
          %3871 = vrot.lane.b32.xlu0 %v3859, 111
          %v3872 = vpop.permute.xlu0 %3871
          %3873 = vrot.lane.b32.xlu0 %v3860, 111
          %v3874 = vpop.permute.xlu0 %3873
          %3875 = vrot.lane.b32.xlu0 %v3861, 111
          %v3876 = vpop.permute.xlu0 %3875
          %3877 = vrot.lane.b32.xlu0 %v3862, 111
          %v3878 = vpop.permute.xlu0 %3877
          %3879 = vrot.lane.b32.xlu0 %v3863, 111
          %v3880 = vpop.permute.xlu0 %3879
          %3881 = vrot.lane.b32.xlu0 %v3864, 111
          %v3882 = vpop.permute.xlu0 %3881
          %v3883 = vsel %vm702, %v3872, %v3874
          %v3884 = vsel %vm702, %v3874, %v3876
          %v3885 = vsel %vm702, %v3878, %v3880
          %v3886 = vsel %vm702, %v3880, %v3882
          %v3891 = vadd.f32 %v3853, %v3883
          %v3892 = vadd.f32 %v3854, %v3884
          %v3893 = vadd.f32 %v3855, %v3885
          %v3894 = vadd.f32 %v3856, %v3886
          %s3895 = sld [smem:[#allocation3 + $0x28e]]
          %v3896 = vstv %s3895
          %v3897 = vmul.f32 %v557, %v3896
          %v3898 = vmul.f32 %v558, %v3896
          %v3899 = vmul.f32 %v559, %v3896
          %v3900 = vmul.f32 %v560, %v3896
          %v3901 = vadd.f32 %v3891, %v3897
          %v3902 = vadd.f32 %v3892, %v3898
          %v3903 = vadd.f32 %v3893, %v3899
          %v3904 = vadd.f32 %v3894, %v3900
          %s3905 = sld [smem:[#allocation3 + $0x30e]]
          %v3906 = vstv %s3905
          %v3907 = vmul.f32 %v582, %v3906
          %v3908 = vmul.f32 %v583, %v3906
          %v3909 = vmul.f32 %v584, %v3906
          %v3910 = vmul.f32 %v585, %v3906
          %v3911 = vadd.f32 %v3901, %v3907
          %v3912 = vadd.f32 %v3902, %v3908
          %v3913 = vadd.f32 %v3903, %v3909
          %v3914 = vadd.f32 %v3904, %v3910
          %s3915 = sld [smem:[#allocation3 + $0x38e]]
          %v3916 = vstv %s3915
          %v3917 = vmul.f32 %v437, %v3916
          %v3918 = vmul.f32 %v438, %v3916
          %v3919 = vmul.f32 %v439, %v3916
          %v3920 = vmul.f32 %v440, %v3916
          %v3921 = vmul.f32 %v441, %v3916
          %v3922 = vmul.f32 %v442, %v3916
          %3929 = vrot.lane.b32.xlu0 %v3917, 95
          %v3930 = vpop.permute.xlu0 %3929
          %3931 = vrot.lane.b32.xlu0 %v3918, 95
          %v3932 = vpop.permute.xlu0 %3931
          %3933 = vrot.lane.b32.xlu0 %v3919, 95
          %v3934 = vpop.permute.xlu0 %3933
          %3935 = vrot.lane.b32.xlu0 %v3920, 95
          %v3936 = vpop.permute.xlu0 %3935
          %3937 = vrot.lane.b32.xlu0 %v3921, 95
          %v3938 = vpop.permute.xlu0 %3937
          %3939 = vrot.lane.b32.xlu0 %v3922, 95
          %v3940 = vpop.permute.xlu0 %3939
          %v3941 = vsel %vm761, %v3930, %v3932
          %v3942 = vsel %vm761, %v3932, %v3934
          %v3943 = vsel %vm761, %v3936, %v3938
          %v3944 = vsel %vm761, %v3938, %v3940
          %v3949 = vadd.f32 %v3911, %v3941
          %v3950 = vadd.f32 %v3912, %v3942
          %v3951 = vadd.f32 %v3913, %v3943
          %v3952 = vadd.f32 %v3914, %v3944
          %s3953 = sld [smem:[#allocation3 + $0x40e]]
          %v3954 = vstv %s3953
          %v3955 = vmul.f32 %v607, %v3954
          %v3956 = vmul.f32 %v608, %v3954
          %v3957 = vmul.f32 %v609, %v3954
          %v3958 = vmul.f32 %v610, %v3954
          %v3959 = vadd.f32 %v3949, %v3955
          %v3960 = vadd.f32 %v3950, %v3956
          %v3961 = vadd.f32 %v3951, %v3957
          %v3962 = vadd.f32 %v3952, %v3958
          %3963 = vset.pattern.permute.xlu0 14
          %3964 = vperm.xlu0 %3963, %v443
          %v3965 = vpop.permute.xlu0 %3964
          %3967 = vset.pattern.permute.xlu0 14
          %3968 = vperm.xlu0 %3967, %v444
          %v3969 = vpop.permute.xlu0 %3968
          %v3971 = vadd.f32 %v3959, %v3965
          %v3972 = vadd.f32 %v3960, %v3965
          %v3973 = vadd.f32 %v3961, %v3969
          %v3974 = vadd.f32 %v3962, %v3969
          %v3975 = vmul.f32 %v3971, %v3971
          %v3976 = vmul.f32 %v3972, %v3972
          %v3977 = vmul.f32 %v3973, %v3973
          %v3978 = vmul.f32 %v3974, %v3974
          %v3979 = vmul.f32 %v3971, %v3975
          %v3980 = vmul.f32 %v3972, %v3976
          %v3981 = vmul.f32 %v3973, %v3977
          %v3982 = vmul.f32 %v3974, %v3978
          %v3983 = vmul.f32 %v3979, 0.044715
          %v3984 = vmul.f32 %v3980, 0.044715
          %v3985 = vmul.f32 %v3981, 0.044715
          %v3986 = vmul.f32 %v3982, 0.044715
          %v3987 = vadd.f32 %v3971, %v3983
          %v3988 = vadd.f32 %v3972, %v3984
          %v3989 = vadd.f32 %v3973, %v3985
          %v3990 = vadd.f32 %v3974, %v3986
          %v3991 = vmul.f32 %v3987, 0.7978846
          %v3992 = vmul.f32 %v3988, 0.7978846
          %v3993 = vmul.f32 %v3989, 0.7978846
          %v3994 = vmul.f32 %v3990, 0.7978846
          %v3995 = vtanh.pop %v3991
          %v3996 = vtanh.pop %v3992
          %v3997 = vtanh.pop %v3993
          %v3998 = vtanh.pop %v3994
          %v3999 = vadd.f32 %v3995, 1.0
          %v4000 = vadd.f32 %v3996, 1.0
          %v4001 = vadd.f32 %v3997, 1.0
          %v4002 = vadd.f32 %v3998, 1.0
          %v4003 = vmul.f32 %v3999, 0.5
          %v4004 = vmul.f32 %v4000, 0.5
          %v4005 = vmul.f32 %v4001, 0.5
          %v4006 = vmul.f32 %v4002, 0.5
          %v4007 = vmul.f32 %v3971, %v4003
          %v4008 = vmul.f32 %v3972, %v4004
          %v4009 = vmul.f32 %v3973, %v4005
          %v4010 = vmul.f32 %v3974, %v4006
          %s4011 = scalar_lea.vmem %s415, 448
          %4012 = vst [vmem:[%s4011] sm:$0xff] %v4007
          %4013 = vst [vmem:[%s4011 + $0x8] sm:$0xff] %v4008
          %4014 = vst [vmem:[%s4011 + $0x10] sm:$0xff] %v4009
          %4015 = vst [vmem:[%s4011 + $0x18] sm:$0xff] %v4010
          %v4016 = vpack.c.bf16 %v4008, %v4007
          %v4017 = vpack.c.bf16 %v4010, %v4009
          %4018 = vst [vmem:[#allocation2 + $0x70] sm:$0xff] %v4016
          %4019 = vst [vmem:[#allocation2 + $0xf0] sm:$0xff] %v4017
          %s4020 = sld [smem:[#allocation3 + $0xf]]
          %v4021 = vstv %s4020
          %v4022 = vmul.f32 %v476, %v4021
          %v4023 = vmul.f32 %v477, %v4021
          %v4024 = vmul.f32 %v478, %v4021
          %v4025 = vmul.f32 %v479, %v4021
          %s4026 = sld [smem:[#allocation3 + $0x8f]]
          %v4027 = vstv %s4026
          %v4028 = vmul.f32 %v437, %v4027
          %v4029 = vmul.f32 %v438, %v4027
          %v4030 = vmul.f32 %v439, %v4027
          %v4031 = vmul.f32 %v440, %v4027
          %v4032 = vmul.f32 %v441, %v4027
          %v4033 = vmul.f32 %v442, %v4027
          %4040 = vrot.lane.b32.xlu0 %v4028, 127
          %v4041 = vpop.permute.xlu0 %4040
          %4042 = vrot.lane.b32.xlu0 %v4029, 127
          %v4043 = vpop.permute.xlu0 %4042
          %4044 = vrot.lane.b32.xlu0 %v4030, 127
          %v4045 = vpop.permute.xlu0 %4044
          %4046 = vrot.lane.b32.xlu0 %v4031, 127
          %v4047 = vpop.permute.xlu0 %4046
          %4048 = vrot.lane.b32.xlu0 %v4032, 127
          %v4049 = vpop.permute.xlu0 %4048
          %4050 = vrot.lane.b32.xlu0 %v4033, 127
          %v4051 = vpop.permute.xlu0 %4050
          %v4052 = vsel %vm643, %v4041, %v4043
          %v4053 = vsel %vm643, %v4043, %v4045
          %v4054 = vsel %vm643, %v4047, %v4049
          %v4055 = vsel %vm643, %v4049, %v4051
          %v4060 = vadd.f32 %v4022, %v4052
          %v4061 = vadd.f32 %v4023, %v4053
          %v4062 = vadd.f32 %v4024, %v4054
          %v4063 = vadd.f32 %v4025, %v4055
          %s4064 = sld [smem:[#allocation3 + $0x10f]]
          %v4065 = vstv %s4064
          %v4066 = vmul.f32 %v507, %v4065
          %v4067 = vmul.f32 %v508, %v4065
          %v4068 = vmul.f32 %v509, %v4065
          %v4069 = vmul.f32 %v510, %v4065
          %v4070 = vadd.f32 %v4060, %v4066
          %v4071 = vadd.f32 %v4061, %v4067
          %v4072 = vadd.f32 %v4062, %v4068
          %v4073 = vadd.f32 %v4063, %v4069
          %s4074 = sld [smem:[#allocation3 + $0x18f]]
          %v4075 = vstv %s4074
          %v4076 = vmul.f32 %v532, %v4075
          %v4077 = vmul.f32 %v533, %v4075
          %v4078 = vmul.f32 %v534, %v4075
          %v4079 = vmul.f32 %v535, %v4075
          %v4080 = vadd.f32 %v4070, %v4076
          %v4081 = vadd.f32 %v4071, %v4077
          %v4082 = vadd.f32 %v4072, %v4078
          %v4083 = vadd.f32 %v4073, %v4079
          %s4084 = sld [smem:[#allocation3 + $0x20f]]
          %v4085 = vstv %s4084
          %v4086 = vmul.f32 %v437, %v4085
          %v4087 = vmul.f32 %v438, %v4085
          %v4088 = vmul.f32 %v439, %v4085
          %v4089 = vmul.f32 %v440, %v4085
          %v4090 = vmul.f32 %v441, %v4085
          %v4091 = vmul.f32 %v442, %v4085
          %4098 = vrot.lane.b32.xlu0 %v4086, 111
          %v4099 = vpop.permute.xlu0 %4098
          %4100 = vrot.lane.b32.xlu0 %v4087, 111
          %v4101 = vpop.permute.xlu0 %4100
          %4102 = vrot.lane.b32.xlu0 %v4088, 111
          %v4103 = vpop.permute.xlu0 %4102
          %4104 = vrot.lane.b32.xlu0 %v4089, 111
          %v4105 = vpop.permute.xlu0 %4104
          %4106 = vrot.lane.b32.xlu0 %v4090, 111
          %v4107 = vpop.permute.xlu0 %4106
          %4108 = vrot.lane.b32.xlu0 %v4091, 111
          %v4109 = vpop.permute.xlu0 %4108
          %v4110 = vsel %vm702, %v4099, %v4101
          %v4111 = vsel %vm702, %v4101, %v4103
          %v4112 = vsel %vm702, %v4105, %v4107
          %v4113 = vsel %vm702, %v4107, %v4109
          %v4118 = vadd.f32 %v4080, %v4110
          %v4119 = vadd.f32 %v4081, %v4111
          %v4120 = vadd.f32 %v4082, %v4112
          %v4121 = vadd.f32 %v4083, %v4113
          %s4122 = sld [smem:[#allocation3 + $0x28f]]
          %v4123 = vstv %s4122
          %v4124 = vmul.f32 %v557, %v4123
          %v4125 = vmul.f32 %v558, %v4123
          %v4126 = vmul.f32 %v559, %v4123
          %v4127 = vmul.f32 %v560, %v4123
          %v4128 = vadd.f32 %v4118, %v4124
          %v4129 = vadd.f32 %v4119, %v4125
          %v4130 = vadd.f32 %v4120, %v4126
          %v4131 = vadd.f32 %v4121, %v4127
          %s4132 = sld [smem:[#allocation3 + $0x30f]]
          %v4133 = vstv %s4132
          %v4134 = vmul.f32 %v582, %v4133
          %v4135 = vmul.f32 %v583, %v4133
          %v4136 = vmul.f32 %v584, %v4133
          %v4137 = vmul.f32 %v585, %v4133
          %v4138 = vadd.f32 %v4128, %v4134
          %v4139 = vadd.f32 %v4129, %v4135
          %v4140 = vadd.f32 %v4130, %v4136
          %v4141 = vadd.f32 %v4131, %v4137
          %s4142 = sld [smem:[#allocation3 + $0x38f]]
          %v4143 = vstv %s4142
          %v4144 = vmul.f32 %v437, %v4143
          %v4145 = vmul.f32 %v438, %v4143
          %v4146 = vmul.f32 %v439, %v4143
          %v4147 = vmul.f32 %v440, %v4143
          %v4148 = vmul.f32 %v441, %v4143
          %v4149 = vmul.f32 %v442, %v4143
          %4156 = vrot.lane.b32.xlu0 %v4144, 95
          %v4157 = vpop.permute.xlu0 %4156
          %4158 = vrot.lane.b32.xlu0 %v4145, 95
          %v4159 = vpop.permute.xlu0 %4158
          %4160 = vrot.lane.b32.xlu0 %v4146, 95
          %v4161 = vpop.permute.xlu0 %4160
          %4162 = vrot.lane.b32.xlu0 %v4147, 95
          %v4163 = vpop.permute.xlu0 %4162
          %4164 = vrot.lane.b32.xlu0 %v4148, 95
          %v4165 = vpop.permute.xlu0 %4164
          %4166 = vrot.lane.b32.xlu0 %v4149, 95
          %v4167 = vpop.permute.xlu0 %4166
          %v4168 = vsel %vm761, %v4157, %v4159
          %v4169 = vsel %vm761, %v4159, %v4161
          %v4170 = vsel %vm761, %v4163, %v4165
          %v4171 = vsel %vm761, %v4165, %v4167
          %v4176 = vadd.f32 %v4138, %v4168
          %v4177 = vadd.f32 %v4139, %v4169
          %v4178 = vadd.f32 %v4140, %v4170
          %v4179 = vadd.f32 %v4141, %v4171
          %s4180 = sld [smem:[#allocation3 + $0x40f]]
          %v4181 = vstv %s4180
          %v4182 = vmul.f32 %v607, %v4181
          %v4183 = vmul.f32 %v608, %v4181
          %v4184 = vmul.f32 %v609, %v4181
          %v4185 = vmul.f32 %v610, %v4181
          %v4186 = vadd.f32 %v4176, %v4182
          %v4187 = vadd.f32 %v4177, %v4183
          %v4188 = vadd.f32 %v4178, %v4184
          %v4189 = vadd.f32 %v4179, %v4185
          %4190 = vset.pattern.permute.xlu0 15
          %4191 = vperm.xlu0 %4190, %v443
          %v4192 = vpop.permute.xlu0 %4191
          %4194 = vset.pattern.permute.xlu0 15
          %4195 = vperm.xlu0 %4194, %v444
          %v4196 = vpop.permute.xlu0 %4195
          %v4198 = vadd.f32 %v4186, %v4192
          %v4199 = vadd.f32 %v4187, %v4192
          %v4200 = vadd.f32 %v4188, %v4196
          %v4201 = vadd.f32 %v4189, %v4196
          %v4202 = vmul.f32 %v4198, %v4198
          %v4203 = vmul.f32 %v4199, %v4199
          %v4204 = vmul.f32 %v4200, %v4200
          %v4205 = vmul.f32 %v4201, %v4201
          %v4206 = vmul.f32 %v4198, %v4202
          %v4207 = vmul.f32 %v4199, %v4203
          %v4208 = vmul.f32 %v4200, %v4204
          %v4209 = vmul.f32 %v4201, %v4205
          %v4210 = vmul.f32 %v4206, 0.044715
          %v4211 = vmul.f32 %v4207, 0.044715
          %v4212 = vmul.f32 %v4208, 0.044715
          %v4213 = vmul.f32 %v4209, 0.044715
          %v4214 = vadd.f32 %v4198, %v4210
          %v4215 = vadd.f32 %v4199, %v4211
          %v4216 = vadd.f32 %v4200, %v4212
          %v4217 = vadd.f32 %v4201, %v4213
          %v4218 = vmul.f32 %v4214, 0.7978846
          %v4219 = vmul.f32 %v4215, 0.7978846
          %v4220 = vmul.f32 %v4216, 0.7978846
          %v4221 = vmul.f32 %v4217, 0.7978846
          %v4222 = vtanh.pop %v4218
          %v4223 = vtanh.pop %v4219
          %v4224 = vtanh.pop %v4220
          %v4225 = vtanh.pop %v4221
          %v4226 = vadd.f32 %v4222, 1.0
          %v4227 = vadd.f32 %v4223, 1.0
          %v4228 = vadd.f32 %v4224, 1.0
          %v4229 = vadd.f32 %v4225, 1.0
          %v4230 = vmul.f32 %v4226, 0.5
          %v4231 = vmul.f32 %v4227, 0.5
          %v4232 = vmul.f32 %v4228, 0.5
          %v4233 = vmul.f32 %v4229, 0.5
          %v4234 = vmul.f32 %v4198, %v4230
          %v4235 = vmul.f32 %v4199, %v4231
          %v4236 = vmul.f32 %v4200, %v4232
          %v4237 = vmul.f32 %v4201, %v4233
          %s4238 = scalar_lea.vmem %s415, 480
          %4239 = vst [vmem:[%s4238] sm:$0xff] %v4234
          %4240 = vst [vmem:[%s4238 + $0x8] sm:$0xff] %v4235
          %4241 = vst [vmem:[%s4238 + $0x10] sm:$0xff] %v4236
          %4242 = vst [vmem:[%s4238 + $0x18] sm:$0xff] %v4237
          %v4243 = vpack.c.bf16 %v4235, %v4234
          %v4244 = vpack.c.bf16 %v4237, %v4236
          %4245 = vst [vmem:[#allocation2 + $0x78] sm:$0xff] %v4243
          %4246 = vst [vmem:[#allocation2 + $0xf8] sm:$0xff] %v4244
        $region48: #{model_forward.1} parent=39 // pred_fallthru
          _
        %v4247 = vld [vmem:[#allocation2] sm:$0xff]
        %v4248 = vld [vmem:[#allocation2 + $0x8] sm:$0xff]
        %v4249 = vld [vmem:[#allocation2 + $0x10] sm:$0xff]
        %v4250 = vld [vmem:[#allocation2 + $0x18] sm:$0xff]
        %v4251 = vld [vmem:[#allocation2 + $0x20] sm:$0xff]
        %v4252 = vld [vmem:[#allocation2 + $0x28] sm:$0xff]
        %v4253 = vld [vmem:[#allocation2 + $0x30] sm:$0xff]
        %v4254 = vld [vmem:[#allocation2 + $0x38] sm:$0xff]
        %v4255 = vld [vmem:[#allocation2 + $0x40] sm:$0xff]
        %v4256 = vld [vmem:[#allocation2 + $0x48] sm:$0xff]
        %v4257 = vld [vmem:[#allocation2 + $0x50] sm:$0xff]
        %v4258 = vld [vmem:[#allocation2 + $0x58] sm:$0xff]
        %v4259 = vld [vmem:[#allocation2 + $0x60] sm:$0xff]
        %v4260 = vld [vmem:[#allocation2 + $0x68] sm:$0xff]
        %v4261 = vld [vmem:[#allocation2 + $0x70] sm:$0xff]
        %v4262 = vld [vmem:[#allocation2 + $0x78] sm:$0xff]
        %v4263 = vld [vmem:[#allocation2 + $0x80] sm:$0xff]
        %v4264 = vld [vmem:[#allocation2 + $0x88] sm:$0xff]
        %v4265 = vld [vmem:[#allocation2 + $0x90] sm:$0xff]
        %v4266 = vld [vmem:[#allocation2 + $0x98] sm:$0xff]
        %v4267 = vld [vmem:[#allocation2 + $0xa0] sm:$0xff]
        %v4268 = vld [vmem:[#allocation2 + $0xa8] sm:$0xff]
        %v4269 = vld [vmem:[#allocation2 + $0xb0] sm:$0xff]
        %v4270 = vld [vmem:[#allocation2 + $0xb8] sm:$0xff]
        %v4271 = vld [vmem:[#allocation2 + $0xc0] sm:$0xff]
        %v4272 = vld [vmem:[#allocation2 + $0xc8] sm:$0xff]
        %v4273 = vld [vmem:[#allocation2 + $0xd0] sm:$0xff]
        %v4274 = vld [vmem:[#allocation2 + $0xd8] sm:$0xff]
        %v4275 = vld [vmem:[#allocation2 + $0xe0] sm:$0xff]
        %v4276 = vld [vmem:[#allocation2 + $0xe8] sm:$0xff]
        %v4277 = vld [vmem:[#allocation2 + $0xf0] sm:$0xff]
        %v4278 = vld [vmem:[#allocation2 + $0xf8] sm:$0xff]
        %v4279 = vld [vmem:[%s399] sm:$0xff]
        %v4280 = vld [vmem:[%s399 + $0x8] sm:$0xff]
        %v4281 = vld [vmem:[%s399 + $0x10] sm:$0xff]
        %v4282 = vld [vmem:[%s399 + $0x18] sm:$0xff]
        %v4283 = vld [vmem:[%s399 + $0x20] sm:$0xff]
        %v4284 = vld [vmem:[%s399 + $0x28] sm:$0xff]
        %v4285 = vld [vmem:[%s399 + $0x30] sm:$0xff]
        %v4286 = vld [vmem:[%s399 + $0x38] sm:$0xff]
        %v4287 = vld [vmem:[%s399 + $0x40] sm:$0xff]
        %v4288 = vld [vmem:[%s399 + $0x48] sm:$0xff]
        %v4289 = vld [vmem:[%s399 + $0x50] sm:$0xff]
        %v4290 = vld [vmem:[%s399 + $0x58] sm:$0xff]
        %v4291 = vld [vmem:[%s399 + $0x60] sm:$0xff]
        %v4292 = vld [vmem:[%s399 + $0x68] sm:$0xff]
        %v4293 = vld [vmem:[%s399 + $0x70] sm:$0xff]
        %v4294 = vld [vmem:[%s399 + $0x78] sm:$0xff]
        %v4295 = vld [vmem:[%s399 + $0x80] sm:$0xff]
        %v4296 = vld [vmem:[%s399 + $0x88] sm:$0xff]
        %v4297 = vld [vmem:[%s399 + $0x90] sm:$0xff]
        %v4298 = vld [vmem:[%s399 + $0x98] sm:$0xff]
        %v4299 = vld [vmem:[%s399 + $0xa0] sm:$0xff]
        %v4300 = vld [vmem:[%s399 + $0xa8] sm:$0xff]
        %v4301 = vld [vmem:[%s399 + $0xb0] sm:$0xff]
        %v4302 = vld [vmem:[%s399 + $0xb8] sm:$0xff]
        %v4303 = vld [vmem:[%s399 + $0xc0] sm:$0xff]
        %v4304 = vld [vmem:[%s399 + $0xc8] sm:$0xff]
        %v4305 = vld [vmem:[%s399 + $0xd0] sm:$0xff]
        %v4306 = vld [vmem:[%s399 + $0xd8] sm:$0xff]
        %v4307 = vld [vmem:[%s399 + $0xe0] sm:$0xff]
        %v4308 = vld [vmem:[%s399 + $0xe8] sm:$0xff]
        %v4309 = vld [vmem:[%s399 + $0xf0] sm:$0xff]
        %v4310 = vld [vmem:[%s399 + $0xf8] sm:$0xff]
        %v4311 = vld [vmem:[%s399 + $0x100] sm:$0xff]
        %v4312 = vld [vmem:[%s399 + $0x108] sm:$0xff]
        %v4313 = vld [vmem:[%s399 + $0x110] sm:$0xff]
        %v4314 = vld [vmem:[%s399 + $0x118] sm:$0xff]
        %v4315 = vld [vmem:[%s399 + $0x120] sm:$0xff]
        %v4316 = vld [vmem:[%s399 + $0x128] sm:$0xff]
        %v4317 = vld [vmem:[%s399 + $0x130] sm:$0xff]
        %v4318 = vld [vmem:[%s399 + $0x138] sm:$0xff]
        %v4319 = vld [vmem:[%s399 + $0x140] sm:$0xff]
        %v4320 = vld [vmem:[%s399 + $0x148] sm:$0xff]
        %v4321 = vld [vmem:[%s399 + $0x150] sm:$0xff]
        %v4322 = vld [vmem:[%s399 + $0x158] sm:$0xff]
        %v4323 = vld [vmem:[%s399 + $0x160] sm:$0xff]
        %v4324 = vld [vmem:[%s399 + $0x168] sm:$0xff]
        %v4325 = vld [vmem:[%s399 + $0x170] sm:$0xff]
        %v4326 = vld [vmem:[%s399 + $0x178] sm:$0xff]
        %v4327 = vld [vmem:[%s399 + $0x180] sm:$0xff]
        %v4328 = vld [vmem:[%s399 + $0x188] sm:$0xff]
        %v4329 = vld [vmem:[%s399 + $0x190] sm:$0xff]
        %v4330 = vld [vmem:[%s399 + $0x198] sm:$0xff]
        %v4331 = vld [vmem:[%s399 + $0x1a0] sm:$0xff]
        %v4332 = vld [vmem:[%s399 + $0x1a8] sm:$0xff]
        %v4333 = vld [vmem:[%s399 + $0x1b0] sm:$0xff]
        %v4334 = vld [vmem:[%s399 + $0x1b8] sm:$0xff]
        %v4335 = vld [vmem:[%s399 + $0x1c0] sm:$0xff]
        %v4336 = vld [vmem:[%s399 + $0x1c8] sm:$0xff]
        %v4337 = vld [vmem:[%s399 + $0x1d0] sm:$0xff]
        %v4338 = vld [vmem:[%s399 + $0x1d8] sm:$0xff]
        %v4339 = vld [vmem:[%s399 + $0x1e0] sm:$0xff]
        %v4340 = vld [vmem:[%s399 + $0x1e8] sm:$0xff]
        %v4341 = vld [vmem:[%s399 + $0x1f0] sm:$0xff]
        %v4342 = vld [vmem:[%s399 + $0x1f8] sm:$0xff]
        %v4343 = vld [vmem:[%s399 + $0x200] sm:$0xff]
        %v4344 = vld [vmem:[%s399 + $0x208] sm:$0xff]
        %v4345 = vld [vmem:[%s399 + $0x210] sm:$0xff]
        %v4346 = vld [vmem:[%s399 + $0x218] sm:$0xff]
        %v4347 = vld [vmem:[%s399 + $0x220] sm:$0xff]
        %v4348 = vld [vmem:[%s399 + $0x228] sm:$0xff]
        %v4349 = vld [vmem:[%s399 + $0x230] sm:$0xff]
        %v4350 = vld [vmem:[%s399 + $0x238] sm:$0xff]
        %v4351 = vld [vmem:[%s399 + $0x240] sm:$0xff]
        %v4352 = vld [vmem:[%s399 + $0x248] sm:$0xff]
        %v4353 = vld [vmem:[%s399 + $0x250] sm:$0xff]
        %v4354 = vld [vmem:[%s399 + $0x258] sm:$0xff]
        %v4355 = vld [vmem:[%s399 + $0x260] sm:$0xff]
        %v4356 = vld [vmem:[%s399 + $0x268] sm:$0xff]
        %v4357 = vld [vmem:[%s399 + $0x270] sm:$0xff]
        %v4358 = vld [vmem:[%s399 + $0x278] sm:$0xff]
        %v4359 = vld [vmem:[%s399 + $0x280] sm:$0xff]
        %v4360 = vld [vmem:[%s399 + $0x288] sm:$0xff]
        %v4361 = vld [vmem:[%s399 + $0x290] sm:$0xff]
        %v4362 = vld [vmem:[%s399 + $0x298] sm:$0xff]
        %v4363 = vld [vmem:[%s399 + $0x2a0] sm:$0xff]
        %v4364 = vld [vmem:[%s399 + $0x2a8] sm:$0xff]
        %v4365 = vld [vmem:[%s399 + $0x2b0] sm:$0xff]
        %v4366 = vld [vmem:[%s399 + $0x2b8] sm:$0xff]
        %v4367 = vld [vmem:[%s399 + $0x2c0] sm:$0xff]
        %v4368 = vld [vmem:[%s399 + $0x2c8] sm:$0xff]
        %v4369 = vld [vmem:[%s399 + $0x2d0] sm:$0xff]
        %v4370 = vld [vmem:[%s399 + $0x2d8] sm:$0xff]
        %v4371 = vld [vmem:[%s399 + $0x2e0] sm:$0xff]
        %v4372 = vld [vmem:[%s399 + $0x2e8] sm:$0xff]
        %v4373 = vld [vmem:[%s399 + $0x2f0] sm:$0xff]
        %v4374 = vld [vmem:[%s399 + $0x2f8] sm:$0xff]
        %v4375 = vld [vmem:[%s399 + $0x300] sm:$0xff]
        %v4376 = vld [vmem:[%s399 + $0x308] sm:$0xff]
        %v4377 = vld [vmem:[%s399 + $0x310] sm:$0xff]
        %v4378 = vld [vmem:[%s399 + $0x318] sm:$0xff]
        %v4379 = vld [vmem:[%s399 + $0x320] sm:$0xff]
        %v4380 = vld [vmem:[%s399 + $0x328] sm:$0xff]
        %v4381 = vld [vmem:[%s399 + $0x330] sm:$0xff]
        %v4382 = vld [vmem:[%s399 + $0x338] sm:$0xff]
        %v4383 = vld [vmem:[%s399 + $0x340] sm:$0xff]
        %v4384 = vld [vmem:[%s399 + $0x348] sm:$0xff]
        %v4385 = vld [vmem:[%s399 + $0x350] sm:$0xff]
        %v4386 = vld [vmem:[%s399 + $0x358] sm:$0xff]
        %v4387 = vld [vmem:[%s399 + $0x360] sm:$0xff]
        %v4388 = vld [vmem:[%s399 + $0x368] sm:$0xff]
        %v4389 = vld [vmem:[%s399 + $0x370] sm:$0xff]
        %v4390 = vld [vmem:[%s399 + $0x378] sm:$0xff]
        %v4391 = vld [vmem:[%s399 + $0x380] sm:$0xff]
        %v4392 = vld [vmem:[%s399 + $0x388] sm:$0xff]
        %v4393 = vld [vmem:[%s399 + $0x390] sm:$0xff]
        %v4394 = vld [vmem:[%s399 + $0x398] sm:$0xff]
        %v4395 = vld [vmem:[%s399 + $0x3a0] sm:$0xff]
        %v4396 = vld [vmem:[%s399 + $0x3a8] sm:$0xff]
        %v4397 = vld [vmem:[%s399 + $0x3b0] sm:$0xff]
        %v4398 = vld [vmem:[%s399 + $0x3b8] sm:$0xff]
        %v4399 = vld [vmem:[%s399 + $0x3c0] sm:$0xff]
        %v4400 = vld [vmem:[%s399 + $0x3c8] sm:$0xff]
        %v4401 = vld [vmem:[%s399 + $0x3d0] sm:$0xff]
        %v4402 = vld [vmem:[%s399 + $0x3d8] sm:$0xff]
        %v4403 = vld [vmem:[%s399 + $0x3e0] sm:$0xff]
        %v4404 = vld [vmem:[%s399 + $0x3e8] sm:$0xff]
        %v4405 = vld [vmem:[%s399 + $0x3f0] sm:$0xff]
        %v4406 = vld [vmem:[%s399 + $0x3f8] sm:$0xff]
        %v4407 = vld [vmem:[%s399 + $0x400] sm:$0xff]
        %v4408 = vld [vmem:[%s399 + $0x408] sm:$0xff]
        %v4409 = vld [vmem:[%s399 + $0x410] sm:$0xff]
        %v4410 = vld [vmem:[%s399 + $0x418] sm:$0xff]
        %v4411 = vld [vmem:[%s399 + $0x420] sm:$0xff]
        %v4412 = vld [vmem:[%s399 + $0x428] sm:$0xff]
        %v4413 = vld [vmem:[%s399 + $0x430] sm:$0xff]
        %v4414 = vld [vmem:[%s399 + $0x438] sm:$0xff]
        %v4415 = vld [vmem:[%s399 + $0x440] sm:$0xff]
        %v4416 = vld [vmem:[%s399 + $0x448] sm:$0xff]
        %v4417 = vld [vmem:[%s399 + $0x450] sm:$0xff]
        %v4418 = vld [vmem:[%s399 + $0x458] sm:$0xff]
        %v4419 = vld [vmem:[%s399 + $0x460] sm:$0xff]
        %v4420 = vld [vmem:[%s399 + $0x468] sm:$0xff]
        %v4421 = vld [vmem:[%s399 + $0x470] sm:$0xff]
        %v4422 = vld [vmem:[%s399 + $0x478] sm:$0xff]
        %v4423 = vld [vmem:[%s399 + $0x480] sm:$0xff]
        %v4424 = vld [vmem:[%s399 + $0x488] sm:$0xff]
        %v4425 = vld [vmem:[%s399 + $0x490] sm:$0xff]
        %v4426 = vld [vmem:[%s399 + $0x498] sm:$0xff]
        %v4427 = vld [vmem:[%s399 + $0x4a0] sm:$0xff]
        %v4428 = vld [vmem:[%s399 + $0x4a8] sm:$0xff]
        %v4429 = vld [vmem:[%s399 + $0x4b0] sm:$0xff]
        %v4430 = vld [vmem:[%s399 + $0x4b8] sm:$0xff]
        %v4431 = vld [vmem:[%s399 + $0x4c0] sm:$0xff]
        %v4432 = vld [vmem:[%s399 + $0x4c8] sm:$0xff]
        %v4433 = vld [vmem:[%s399 + $0x4d0] sm:$0xff]
        %v4434 = vld [vmem:[%s399 + $0x4d8] sm:$0xff]
        %v4435 = vld [vmem:[%s399 + $0x4e0] sm:$0xff]
        %v4436 = vld [vmem:[%s399 + $0x4e8] sm:$0xff]
        %v4437 = vld [vmem:[%s399 + $0x4f0] sm:$0xff]
        %v4438 = vld [vmem:[%s399 + $0x4f8] sm:$0xff]
        %v4439 = vld [vmem:[%s399 + $0x500] sm:$0xff]
        %v4440 = vld [vmem:[%s399 + $0x508] sm:$0xff]
        %v4441 = vld [vmem:[%s399 + $0x510] sm:$0xff]
        %v4442 = vld [vmem:[%s399 + $0x518] sm:$0xff]
        %v4443 = vld [vmem:[%s399 + $0x520] sm:$0xff]
        %v4444 = vld [vmem:[%s399 + $0x528] sm:$0xff]
        %v4445 = vld [vmem:[%s399 + $0x530] sm:$0xff]
        %v4446 = vld [vmem:[%s399 + $0x538] sm:$0xff]
        %v4447 = vld [vmem:[%s399 + $0x540] sm:$0xff]
        %v4448 = vld [vmem:[%s399 + $0x548] sm:$0xff]
        %v4449 = vld [vmem:[%s399 + $0x550] sm:$0xff]
        %v4450 = vld [vmem:[%s399 + $0x558] sm:$0xff]
        %v4451 = vld [vmem:[%s399 + $0x560] sm:$0xff]
        %v4452 = vld [vmem:[%s399 + $0x568] sm:$0xff]
        %v4453 = vld [vmem:[%s399 + $0x570] sm:$0xff]
        %v4454 = vld [vmem:[%s399 + $0x578] sm:$0xff]
        %v4455 = vld [vmem:[%s399 + $0x580] sm:$0xff]
        %v4456 = vld [vmem:[%s399 + $0x588] sm:$0xff]
        %v4457 = vld [vmem:[%s399 + $0x590] sm:$0xff]
        %v4458 = vld [vmem:[%s399 + $0x598] sm:$0xff]
        %v4459 = vld [vmem:[%s399 + $0x5a0] sm:$0xff]
        %v4460 = vld [vmem:[%s399 + $0x5a8] sm:$0xff]
        %v4461 = vld [vmem:[%s399 + $0x5b0] sm:$0xff]
        %v4462 = vld [vmem:[%s399 + $0x5b8] sm:$0xff]
        %v4463 = vld [vmem:[%s399 + $0x5c0] sm:$0xff]
        %v4464 = vld [vmem:[%s399 + $0x5c8] sm:$0xff]
        %v4465 = vld [vmem:[%s399 + $0x5d0] sm:$0xff]
        %v4466 = vld [vmem:[%s399 + $0x5d8] sm:$0xff]
        %v4467 = vld [vmem:[%s399 + $0x5e0] sm:$0xff]
        %v4468 = vld [vmem:[%s399 + $0x5e8] sm:$0xff]
        %v4469 = vld [vmem:[%s399 + $0x5f0] sm:$0xff]
        %v4470 = vld [vmem:[%s399 + $0x5f8] sm:$0xff]
        %v4471 = vld [vmem:[%s399 + $0x600] sm:$0xff]
        %v4472 = vld [vmem:[%s399 + $0x608] sm:$0xff]
        %v4473 = vld [vmem:[%s399 + $0x610] sm:$0xff]
        %v4474 = vld [vmem:[%s399 + $0x618] sm:$0xff]
        %v4475 = vld [vmem:[%s399 + $0x620] sm:$0xff]
        %v4476 = vld [vmem:[%s399 + $0x628] sm:$0xff]
        %v4477 = vld [vmem:[%s399 + $0x630] sm:$0xff]
        %v4478 = vld [vmem:[%s399 + $0x638] sm:$0xff]
        %v4479 = vld [vmem:[%s399 + $0x640] sm:$0xff]
        %v4480 = vld [vmem:[%s399 + $0x648] sm:$0xff]
        %v4481 = vld [vmem:[%s399 + $0x650] sm:$0xff]
        %v4482 = vld [vmem:[%s399 + $0x658] sm:$0xff]
        %v4483 = vld [vmem:[%s399 + $0x660] sm:$0xff]
        %v4484 = vld [vmem:[%s399 + $0x668] sm:$0xff]
        %v4485 = vld [vmem:[%s399 + $0x670] sm:$0xff]
        %v4486 = vld [vmem:[%s399 + $0x678] sm:$0xff]
        %v4487 = vld [vmem:[%s399 + $0x680] sm:$0xff]
        %v4488 = vld [vmem:[%s399 + $0x688] sm:$0xff]
        %v4489 = vld [vmem:[%s399 + $0x690] sm:$0xff]
        %v4490 = vld [vmem:[%s399 + $0x698] sm:$0xff]
        %v4491 = vld [vmem:[%s399 + $0x6a0] sm:$0xff]
        %v4492 = vld [vmem:[%s399 + $0x6a8] sm:$0xff]
        %v4493 = vld [vmem:[%s399 + $0x6b0] sm:$0xff]
        %v4494 = vld [vmem:[%s399 + $0x6b8] sm:$0xff]
        %v4495 = vld [vmem:[%s399 + $0x6c0] sm:$0xff]
        %v4496 = vld [vmem:[%s399 + $0x6c8] sm:$0xff]
        %v4497 = vld [vmem:[%s399 + $0x6d0] sm:$0xff]
        %v4498 = vld [vmem:[%s399 + $0x6d8] sm:$0xff]
        %v4499 = vld [vmem:[%s399 + $0x6e0] sm:$0xff]
        %v4500 = vld [vmem:[%s399 + $0x6e8] sm:$0xff]
        %v4501 = vld [vmem:[%s399 + $0x6f0] sm:$0xff]
        %v4502 = vld [vmem:[%s399 + $0x6f8] sm:$0xff]
        %v4503 = vld [vmem:[%s399 + $0x700] sm:$0xff]
        %v4504 = vld [vmem:[%s399 + $0x708] sm:$0xff]
        %v4505 = vld [vmem:[%s399 + $0x710] sm:$0xff]
        %v4506 = vld [vmem:[%s399 + $0x718] sm:$0xff]
        %v4507 = vld [vmem:[%s399 + $0x720] sm:$0xff]
        %v4508 = vld [vmem:[%s399 + $0x728] sm:$0xff]
        %v4509 = vld [vmem:[%s399 + $0x730] sm:$0xff]
        %v4510 = vld [vmem:[%s399 + $0x738] sm:$0xff]
        %v4511 = vld [vmem:[%s399 + $0x740] sm:$0xff]
        %v4512 = vld [vmem:[%s399 + $0x748] sm:$0xff]
        %v4513 = vld [vmem:[%s399 + $0x750] sm:$0xff]
        %v4514 = vld [vmem:[%s399 + $0x758] sm:$0xff]
        %v4515 = vld [vmem:[%s399 + $0x760] sm:$0xff]
        %v4516 = vld [vmem:[%s399 + $0x768] sm:$0xff]
        %v4517 = vld [vmem:[%s399 + $0x770] sm:$0xff]
        %v4518 = vld [vmem:[%s399 + $0x778] sm:$0xff]
        %v4519 = vld [vmem:[%s399 + $0x780] sm:$0xff]
        %v4520 = vld [vmem:[%s399 + $0x788] sm:$0xff]
        %v4521 = vld [vmem:[%s399 + $0x790] sm:$0xff]
        %v4522 = vld [vmem:[%s399 + $0x798] sm:$0xff]
        %v4523 = vld [vmem:[%s399 + $0x7a0] sm:$0xff]
        %v4524 = vld [vmem:[%s399 + $0x7a8] sm:$0xff]
        %v4525 = vld [vmem:[%s399 + $0x7b0] sm:$0xff]
        %v4526 = vld [vmem:[%s399 + $0x7b8] sm:$0xff]
        %v4527 = vld [vmem:[%s399 + $0x7c0] sm:$0xff]
        %v4528 = vld [vmem:[%s399 + $0x7c8] sm:$0xff]
        %v4529 = vld [vmem:[%s399 + $0x7d0] sm:$0xff]
        %v4530 = vld [vmem:[%s399 + $0x7d8] sm:$0xff]
        %v4531 = vld [vmem:[%s399 + $0x7e0] sm:$0xff]
        %v4532 = vld [vmem:[%s399 + $0x7e8] sm:$0xff]
        %v4533 = vld [vmem:[%s399 + $0x7f0] sm:$0xff]
        %v4534 = vld [vmem:[%s399 + $0x7f8] sm:$0xff]
        %v4535 = vld [vmem:[%s399 + $0x800] sm:$0xff]
        %v4536 = vld [vmem:[%s399 + $0x808] sm:$0xff]
        %v4537 = vld [vmem:[%s399 + $0x810] sm:$0xff]
        %v4538 = vld [vmem:[%s399 + $0x818] sm:$0xff]
        %v4539 = vld [vmem:[%s399 + $0x820] sm:$0xff]
        %v4540 = vld [vmem:[%s399 + $0x828] sm:$0xff]
        %v4541 = vld [vmem:[%s399 + $0x830] sm:$0xff]
        %v4542 = vld [vmem:[%s399 + $0x838] sm:$0xff]
        %v4543 = vld [vmem:[%s399 + $0x840] sm:$0xff]
        %v4544 = vld [vmem:[%s399 + $0x848] sm:$0xff]
        %v4545 = vld [vmem:[%s399 + $0x850] sm:$0xff]
        %v4546 = vld [vmem:[%s399 + $0x858] sm:$0xff]
        %v4547 = vld [vmem:[%s399 + $0x860] sm:$0xff]
        %v4548 = vld [vmem:[%s399 + $0x868] sm:$0xff]
        %v4549 = vld [vmem:[%s399 + $0x870] sm:$0xff]
        %v4550 = vld [vmem:[%s399 + $0x878] sm:$0xff]
        %v4551 = vld [vmem:[%s399 + $0x880] sm:$0xff]
        %v4552 = vld [vmem:[%s399 + $0x888] sm:$0xff]
        %v4553 = vld [vmem:[%s399 + $0x890] sm:$0xff]
        %v4554 = vld [vmem:[%s399 + $0x898] sm:$0xff]
        %v4555 = vld [vmem:[%s399 + $0x8a0] sm:$0xff]
        %v4556 = vld [vmem:[%s399 + $0x8a8] sm:$0xff]
        %v4557 = vld [vmem:[%s399 + $0x8b0] sm:$0xff]
        %v4558 = vld [vmem:[%s399 + $0x8b8] sm:$0xff]
        %v4559 = vld [vmem:[%s399 + $0x8c0] sm:$0xff]
        %v4560 = vld [vmem:[%s399 + $0x8c8] sm:$0xff]
        %v4561 = vld [vmem:[%s399 + $0x8d0] sm:$0xff]
        %v4562 = vld [vmem:[%s399 + $0x8d8] sm:$0xff]
        %v4563 = vld [vmem:[%s399 + $0x8e0] sm:$0xff]
        %v4564 = vld [vmem:[%s399 + $0x8e8] sm:$0xff]
        %v4565 = vld [vmem:[%s399 + $0x8f0] sm:$0xff]
        %v4566 = vld [vmem:[%s399 + $0x8f8] sm:$0xff]
        %v4567 = vld [vmem:[%s399 + $0x900] sm:$0xff]
        %v4568 = vld [vmem:[%s399 + $0x908] sm:$0xff]
        %v4569 = vld [vmem:[%s399 + $0x910] sm:$0xff]
        %v4570 = vld [vmem:[%s399 + $0x918] sm:$0xff]
        %v4571 = vld [vmem:[%s399 + $0x920] sm:$0xff]
        %v4572 = vld [vmem:[%s399 + $0x928] sm:$0xff]
        %v4573 = vld [vmem:[%s399 + $0x930] sm:$0xff]
        %v4574 = vld [vmem:[%s399 + $0x938] sm:$0xff]
        %v4575 = vld [vmem:[%s399 + $0x940] sm:$0xff]
        %v4576 = vld [vmem:[%s399 + $0x948] sm:$0xff]
        %v4577 = vld [vmem:[%s399 + $0x950] sm:$0xff]
        %v4578 = vld [vmem:[%s399 + $0x958] sm:$0xff]
        %v4579 = vld [vmem:[%s399 + $0x960] sm:$0xff]
        %v4580 = vld [vmem:[%s399 + $0x968] sm:$0xff]
        %v4581 = vld [vmem:[%s399 + $0x970] sm:$0xff]
        %v4582 = vld [vmem:[%s399 + $0x978] sm:$0xff]
        %v4583 = vld [vmem:[%s399 + $0x980] sm:$0xff]
        %v4584 = vld [vmem:[%s399 + $0x988] sm:$0xff]
        %v4585 = vld [vmem:[%s399 + $0x990] sm:$0xff]
        %v4586 = vld [vmem:[%s399 + $0x998] sm:$0xff]
        %v4587 = vld [vmem:[%s399 + $0x9a0] sm:$0xff]
        %v4588 = vld [vmem:[%s399 + $0x9a8] sm:$0xff]
        %v4589 = vld [vmem:[%s399 + $0x9b0] sm:$0xff]
        %v4590 = vld [vmem:[%s399 + $0x9b8] sm:$0xff]
        %v4591 = vld [vmem:[%s399 + $0x9c0] sm:$0xff]
        %v4592 = vld [vmem:[%s399 + $0x9c8] sm:$0xff]
        %v4593 = vld [vmem:[%s399 + $0x9d0] sm:$0xff]
        %v4594 = vld [vmem:[%s399 + $0x9d8] sm:$0xff]
        %v4595 = vld [vmem:[%s399 + $0x9e0] sm:$0xff]
        %v4596 = vld [vmem:[%s399 + $0x9e8] sm:$0xff]
        %v4597 = vld [vmem:[%s399 + $0x9f0] sm:$0xff]
        %v4598 = vld [vmem:[%s399 + $0x9f8] sm:$0xff]
        %v4599 = vld [vmem:[%s399 + $0xa00] sm:$0xff]
        %v4600 = vld [vmem:[%s399 + $0xa08] sm:$0xff]
        %v4601 = vld [vmem:[%s399 + $0xa10] sm:$0xff]
        %v4602 = vld [vmem:[%s399 + $0xa18] sm:$0xff]
        %v4603 = vld [vmem:[%s399 + $0xa20] sm:$0xff]
        %v4604 = vld [vmem:[%s399 + $0xa28] sm:$0xff]
        %v4605 = vld [vmem:[%s399 + $0xa30] sm:$0xff]
        %v4606 = vld [vmem:[%s399 + $0xa38] sm:$0xff]
        %v4607 = vld [vmem:[%s399 + $0xa40] sm:$0xff]
        %v4608 = vld [vmem:[%s399 + $0xa48] sm:$0xff]
        %v4609 = vld [vmem:[%s399 + $0xa50] sm:$0xff]
        %v4610 = vld [vmem:[%s399 + $0xa58] sm:$0xff]
        %v4611 = vld [vmem:[%s399 + $0xa60] sm:$0xff]
        %v4612 = vld [vmem:[%s399 + $0xa68] sm:$0xff]
        %v4613 = vld [vmem:[%s399 + $0xa70] sm:$0xff]
        %v4614 = vld [vmem:[%s399 + $0xa78] sm:$0xff]
        %v4615 = vld [vmem:[%s399 + $0xa80] sm:$0xff]
        %v4616 = vld [vmem:[%s399 + $0xa88] sm:$0xff]
        %v4617 = vld [vmem:[%s399 + $0xa90] sm:$0xff]
        %v4618 = vld [vmem:[%s399 + $0xa98] sm:$0xff]
        %v4619 = vld [vmem:[%s399 + $0xaa0] sm:$0xff]
        %v4620 = vld [vmem:[%s399 + $0xaa8] sm:$0xff]
        %v4621 = vld [vmem:[%s399 + $0xab0] sm:$0xff]
        %v4622 = vld [vmem:[%s399 + $0xab8] sm:$0xff]
        %v4623 = vld [vmem:[%s399 + $0xac0] sm:$0xff]
        %v4624 = vld [vmem:[%s399 + $0xac8] sm:$0xff]
        %v4625 = vld [vmem:[%s399 + $0xad0] sm:$0xff]
        %v4626 = vld [vmem:[%s399 + $0xad8] sm:$0xff]
        %v4627 = vld [vmem:[%s399 + $0xae0] sm:$0xff]
        %v4628 = vld [vmem:[%s399 + $0xae8] sm:$0xff]
        %v4629 = vld [vmem:[%s399 + $0xaf0] sm:$0xff]
        %v4630 = vld [vmem:[%s399 + $0xaf8] sm:$0xff]
        %v4631 = vld [vmem:[%s399 + $0xb00] sm:$0xff]
        %v4632 = vld [vmem:[%s399 + $0xb08] sm:$0xff]
        %v4633 = vld [vmem:[%s399 + $0xb10] sm:$0xff]
        %v4634 = vld [vmem:[%s399 + $0xb18] sm:$0xff]
        %v4635 = vld [vmem:[%s399 + $0xb20] sm:$0xff]
        %v4636 = vld [vmem:[%s399 + $0xb28] sm:$0xff]
        %v4637 = vld [vmem:[%s399 + $0xb30] sm:$0xff]
        %v4638 = vld [vmem:[%s399 + $0xb38] sm:$0xff]
        %v4639 = vld [vmem:[%s399 + $0xb40] sm:$0xff]
        %v4640 = vld [vmem:[%s399 + $0xb48] sm:$0xff]
        %v4641 = vld [vmem:[%s399 + $0xb50] sm:$0xff]
        %v4642 = vld [vmem:[%s399 + $0xb58] sm:$0xff]
        %v4643 = vld [vmem:[%s399 + $0xb60] sm:$0xff]
        %v4644 = vld [vmem:[%s399 + $0xb68] sm:$0xff]
        %v4645 = vld [vmem:[%s399 + $0xb70] sm:$0xff]
        %v4646 = vld [vmem:[%s399 + $0xb78] sm:$0xff]
        %v4647 = vld [vmem:[%s399 + $0xb80] sm:$0xff]
        %v4648 = vld [vmem:[%s399 + $0xb88] sm:$0xff]
        %v4649 = vld [vmem:[%s399 + $0xb90] sm:$0xff]
        %v4650 = vld [vmem:[%s399 + $0xb98] sm:$0xff]
        %v4651 = vld [vmem:[%s399 + $0xba0] sm:$0xff]
        %v4652 = vld [vmem:[%s399 + $0xba8] sm:$0xff]
        %v4653 = vld [vmem:[%s399 + $0xbb0] sm:$0xff]
        %v4654 = vld [vmem:[%s399 + $0xbb8] sm:$0xff]
        %v4655 = vld [vmem:[%s399 + $0xbc0] sm:$0xff]
        %v4656 = vld [vmem:[%s399 + $0xbc8] sm:$0xff]
        %v4657 = vld [vmem:[%s399 + $0xbd0] sm:$0xff]
        %v4658 = vld [vmem:[%s399 + $0xbd8] sm:$0xff]
        %v4659 = vld [vmem:[%s399 + $0xbe0] sm:$0xff]
        %v4660 = vld [vmem:[%s399 + $0xbe8] sm:$0xff]
        %v4661 = vld [vmem:[%s399 + $0xbf0] sm:$0xff]
        %v4662 = vld [vmem:[%s399 + $0xbf8] sm:$0xff]
        %v4663 = vld [vmem:[%s399 + $0xc00] sm:$0xff]
        %v4664 = vld [vmem:[%s399 + $0xc08] sm:$0xff]
        %v4665 = vld [vmem:[%s399 + $0xc10] sm:$0xff]
        %v4666 = vld [vmem:[%s399 + $0xc18] sm:$0xff]
        %v4667 = vld [vmem:[%s399 + $0xc20] sm:$0xff]
        %v4668 = vld [vmem:[%s399 + $0xc28] sm:$0xff]
        %v4669 = vld [vmem:[%s399 + $0xc30] sm:$0xff]
        %v4670 = vld [vmem:[%s399 + $0xc38] sm:$0xff]
        %v4671 = vld [vmem:[%s399 + $0xc40] sm:$0xff]
        %v4672 = vld [vmem:[%s399 + $0xc48] sm:$0xff]
        %v4673 = vld [vmem:[%s399 + $0xc50] sm:$0xff]
        %v4674 = vld [vmem:[%s399 + $0xc58] sm:$0xff]
        %v4675 = vld [vmem:[%s399 + $0xc60] sm:$0xff]
        %v4676 = vld [vmem:[%s399 + $0xc68] sm:$0xff]
        %v4677 = vld [vmem:[%s399 + $0xc70] sm:$0xff]
        %v4678 = vld [vmem:[%s399 + $0xc78] sm:$0xff]
        %v4679 = vld [vmem:[%s399 + $0xc80] sm:$0xff]
        %v4680 = vld [vmem:[%s399 + $0xc88] sm:$0xff]
        %v4681 = vld [vmem:[%s399 + $0xc90] sm:$0xff]
        %v4682 = vld [vmem:[%s399 + $0xc98] sm:$0xff]
        %v4683 = vld [vmem:[%s399 + $0xca0] sm:$0xff]
        %v4684 = vld [vmem:[%s399 + $0xca8] sm:$0xff]
        %v4685 = vld [vmem:[%s399 + $0xcb0] sm:$0xff]
        %v4686 = vld [vmem:[%s399 + $0xcb8] sm:$0xff]
        %v4687 = vld [vmem:[%s399 + $0xcc0] sm:$0xff]
        %v4688 = vld [vmem:[%s399 + $0xcc8] sm:$0xff]
        %v4689 = vld [vmem:[%s399 + $0xcd0] sm:$0xff]
        %v4690 = vld [vmem:[%s399 + $0xcd8] sm:$0xff]
        %v4691 = vld [vmem:[%s399 + $0xce0] sm:$0xff]
        %v4692 = vld [vmem:[%s399 + $0xce8] sm:$0xff]
        %v4693 = vld [vmem:[%s399 + $0xcf0] sm:$0xff]
        %v4694 = vld [vmem:[%s399 + $0xcf8] sm:$0xff]
        %v4695 = vld [vmem:[%s399 + $0xd00] sm:$0xff]
        %v4696 = vld [vmem:[%s399 + $0xd08] sm:$0xff]
        %v4697 = vld [vmem:[%s399 + $0xd10] sm:$0xff]
        %v4698 = vld [vmem:[%s399 + $0xd18] sm:$0xff]
        %v4699 = vld [vmem:[%s399 + $0xd20] sm:$0xff]
        %v4700 = vld [vmem:[%s399 + $0xd28] sm:$0xff]
        %v4701 = vld [vmem:[%s399 + $0xd30] sm:$0xff]
        %v4702 = vld [vmem:[%s399 + $0xd38] sm:$0xff]
        %v4703 = vld [vmem:[%s399 + $0xd40] sm:$0xff]
        %v4704 = vld [vmem:[%s399 + $0xd48] sm:$0xff]
        %v4705 = vld [vmem:[%s399 + $0xd50] sm:$0xff]
        %v4706 = vld [vmem:[%s399 + $0xd58] sm:$0xff]
        %v4707 = vld [vmem:[%s399 + $0xd60] sm:$0xff]
        %v4708 = vld [vmem:[%s399 + $0xd68] sm:$0xff]
        %v4709 = vld [vmem:[%s399 + $0xd70] sm:$0xff]
        %v4710 = vld [vmem:[%s399 + $0xd78] sm:$0xff]
        %v4711 = vld [vmem:[%s399 + $0xd80] sm:$0xff]
        %v4712 = vld [vmem:[%s399 + $0xd88] sm:$0xff]
        %v4713 = vld [vmem:[%s399 + $0xd90] sm:$0xff]
        %v4714 = vld [vmem:[%s399 + $0xd98] sm:$0xff]
        %v4715 = vld [vmem:[%s399 + $0xda0] sm:$0xff]
        %v4716 = vld [vmem:[%s399 + $0xda8] sm:$0xff]
        %v4717 = vld [vmem:[%s399 + $0xdb0] sm:$0xff]
        %v4718 = vld [vmem:[%s399 + $0xdb8] sm:$0xff]
        %v4719 = vld [vmem:[%s399 + $0xdc0] sm:$0xff]
        %v4720 = vld [vmem:[%s399 + $0xdc8] sm:$0xff]
        %v4721 = vld [vmem:[%s399 + $0xdd0] sm:$0xff]
        %v4722 = vld [vmem:[%s399 + $0xdd8] sm:$0xff]
        %v4723 = vld [vmem:[%s399 + $0xde0] sm:$0xff]
        %v4724 = vld [vmem:[%s399 + $0xde8] sm:$0xff]
        %v4725 = vld [vmem:[%s399 + $0xdf0] sm:$0xff]
        %v4726 = vld [vmem:[%s399 + $0xdf8] sm:$0xff]
        %v4727 = vld [vmem:[%s399 + $0xe00] sm:$0xff]
        %v4728 = vld [vmem:[%s399 + $0xe08] sm:$0xff]
        %v4729 = vld [vmem:[%s399 + $0xe10] sm:$0xff]
        %v4730 = vld [vmem:[%s399 + $0xe18] sm:$0xff]
        %v4731 = vld [vmem:[%s399 + $0xe20] sm:$0xff]
        %v4732 = vld [vmem:[%s399 + $0xe28] sm:$0xff]
        %v4733 = vld [vmem:[%s399 + $0xe30] sm:$0xff]
        %v4734 = vld [vmem:[%s399 + $0xe38] sm:$0xff]
        %v4735 = vld [vmem:[%s399 + $0xe40] sm:$0xff]
        %v4736 = vld [vmem:[%s399 + $0xe48] sm:$0xff]
        %v4737 = vld [vmem:[%s399 + $0xe50] sm:$0xff]
        %v4738 = vld [vmem:[%s399 + $0xe58] sm:$0xff]
        %v4739 = vld [vmem:[%s399 + $0xe60] sm:$0xff]
        %v4740 = vld [vmem:[%s399 + $0xe68] sm:$0xff]
        %v4741 = vld [vmem:[%s399 + $0xe70] sm:$0xff]
        %v4742 = vld [vmem:[%s399 + $0xe78] sm:$0xff]
        %v4743 = vld [vmem:[%s399 + $0xe80] sm:$0xff]
        %v4744 = vld [vmem:[%s399 + $0xe88] sm:$0xff]
        %v4745 = vld [vmem:[%s399 + $0xe90] sm:$0xff]
        %v4746 = vld [vmem:[%s399 + $0xe98] sm:$0xff]
        %v4747 = vld [vmem:[%s399 + $0xea0] sm:$0xff]
        %v4748 = vld [vmem:[%s399 + $0xea8] sm:$0xff]
        %v4749 = vld [vmem:[%s399 + $0xeb0] sm:$0xff]
        %v4750 = vld [vmem:[%s399 + $0xeb8] sm:$0xff]
        %v4751 = vld [vmem:[%s399 + $0xec0] sm:$0xff]
        %v4752 = vld [vmem:[%s399 + $0xec8] sm:$0xff]
        %v4753 = vld [vmem:[%s399 + $0xed0] sm:$0xff]
        %v4754 = vld [vmem:[%s399 + $0xed8] sm:$0xff]
        %v4755 = vld [vmem:[%s399 + $0xee0] sm:$0xff]
        %v4756 = vld [vmem:[%s399 + $0xee8] sm:$0xff]
        %v4757 = vld [vmem:[%s399 + $0xef0] sm:$0xff]
        %v4758 = vld [vmem:[%s399 + $0xef8] sm:$0xff]
        %v4759 = vld [vmem:[%s399 + $0xf00] sm:$0xff]
        %v4760 = vld [vmem:[%s399 + $0xf08] sm:$0xff]
        %v4761 = vld [vmem:[%s399 + $0xf10] sm:$0xff]
        %v4762 = vld [vmem:[%s399 + $0xf18] sm:$0xff]
        %v4763 = vld [vmem:[%s399 + $0xf20] sm:$0xff]
        %v4764 = vld [vmem:[%s399 + $0xf28] sm:$0xff]
        %v4765 = vld [vmem:[%s399 + $0xf30] sm:$0xff]
        %v4766 = vld [vmem:[%s399 + $0xf38] sm:$0xff]
        %v4767 = vld [vmem:[%s399 + $0xf40] sm:$0xff]
        %v4768 = vld [vmem:[%s399 + $0xf48] sm:$0xff]
        %v4769 = vld [vmem:[%s399 + $0xf50] sm:$0xff]
        %v4770 = vld [vmem:[%s399 + $0xf58] sm:$0xff]
        %v4771 = vld [vmem:[%s399 + $0xf60] sm:$0xff]
        %v4772 = vld [vmem:[%s399 + $0xf68] sm:$0xff]
        %v4773 = vld [vmem:[%s399 + $0xf70] sm:$0xff]
        %v4774 = vld [vmem:[%s399 + $0xf78] sm:$0xff]
        %v4775 = vld [vmem:[%s399 + $0xf80] sm:$0xff]
        %v4776 = vld [vmem:[%s399 + $0xf88] sm:$0xff]
        %v4777 = vld [vmem:[%s399 + $0xf90] sm:$0xff]
        %v4778 = vld [vmem:[%s399 + $0xf98] sm:$0xff]
        %v4779 = vld [vmem:[%s399 + $0xfa0] sm:$0xff]
        %v4780 = vld [vmem:[%s399 + $0xfa8] sm:$0xff]
        %v4781 = vld [vmem:[%s399 + $0xfb0] sm:$0xff]
        %v4782 = vld [vmem:[%s399 + $0xfb8] sm:$0xff]
        %v4783 = vld [vmem:[%s399 + $0xfc0] sm:$0xff]
        %v4784 = vld [vmem:[%s399 + $0xfc8] sm:$0xff]
        %v4785 = vld [vmem:[%s399 + $0xfd0] sm:$0xff]
        %v4786 = vld [vmem:[%s399 + $0xfd8] sm:$0xff]
        %v4787 = vld [vmem:[%s399 + $0xfe0] sm:$0xff]
        %v4788 = vld [vmem:[%s399 + $0xfe8] sm:$0xff]
        %v4789 = vld [vmem:[%s399 + $0xff0] sm:$0xff]
        %v4790 = vld [vmem:[%s399 + $0xff8] sm:$0xff]
        %v4791 = vld [vmem:[%s404] sm:$0x3]
        %v4793 = vperm.slane %v4791, 0
        %v4794 = vperm.slane %v4791, 1
        %v4829 = vunpack.c.l.b16 %v4247
        %v4830 = vunpack.c.h.b16 %v4247
        %v4831 = vunpack.c.l.b16 %v4248
        %v4832 = vunpack.c.h.b16 %v4248
        %v4833 = vunpack.c.l.b16 %v4249
        %v4834 = vunpack.c.h.b16 %v4249
        %v4835 = vunpack.c.l.b16 %v4250
        %v4836 = vunpack.c.h.b16 %v4250
        %v4837 = vunpack.c.l.b16 %v4251
        %v4838 = vunpack.c.h.b16 %v4251
        %v4839 = vunpack.c.l.b16 %v4252
        %v4840 = vunpack.c.h.b16 %v4252
        %v4841 = vunpack.c.l.b16 %v4253
        %v4842 = vunpack.c.h.b16 %v4253
        %v4843 = vunpack.c.l.b16 %v4254
        %v4844 = vunpack.c.h.b16 %v4254
        %v4845 = vunpack.c.l.b16 %v4255
        %v4846 = vunpack.c.h.b16 %v4255
        %v4847 = vunpack.c.l.b16 %v4256
        %v4848 = vunpack.c.h.b16 %v4256
        %v4849 = vunpack.c.l.b16 %v4257
        %v4850 = vunpack.c.h.b16 %v4257
        %v4851 = vunpack.c.l.b16 %v4258
        %v4852 = vunpack.c.h.b16 %v4258
        %v4853 = vunpack.c.l.b16 %v4259
        %v4854 = vunpack.c.h.b16 %v4259
        %v4855 = vunpack.c.l.b16 %v4260
        %v4856 = vunpack.c.h.b16 %v4260
        %v4857 = vunpack.c.l.b16 %v4261
        %v4858 = vunpack.c.h.b16 %v4261
        %v4859 = vunpack.c.l.b16 %v4262
        %v4860 = vunpack.c.h.b16 %v4262
        %v4861 = vunpack.c.l.b16 %v4263
        %v4862 = vunpack.c.h.b16 %v4263
        %v4863 = vunpack.c.l.b16 %v4264
        %v4864 = vunpack.c.h.b16 %v4264
        %v4865 = vunpack.c.l.b16 %v4265
        %v4866 = vunpack.c.h.b16 %v4265
        %v4867 = vunpack.c.l.b16 %v4266
        %v4868 = vunpack.c.h.b16 %v4266
        %v4869 = vunpack.c.l.b16 %v4267
        %v4870 = vunpack.c.h.b16 %v4267
        %v4871 = vunpack.c.l.b16 %v4268
        %v4872 = vunpack.c.h.b16 %v4268
        %v4873 = vunpack.c.l.b16 %v4269
        %v4874 = vunpack.c.h.b16 %v4269
        %v4875 = vunpack.c.l.b16 %v4270
        %v4876 = vunpack.c.h.b16 %v4270
        %v4877 = vunpack.c.l.b16 %v4271
        %v4878 = vunpack.c.h.b16 %v4271
        %v4879 = vunpack.c.l.b16 %v4272
        %v4880 = vunpack.c.h.b16 %v4272
        %v4881 = vunpack.c.l.b16 %v4273
        %v4882 = vunpack.c.h.b16 %v4273
        %v4883 = vunpack.c.l.b16 %v4274
        %v4884 = vunpack.c.h.b16 %v4274
        %v4885 = vunpack.c.l.b16 %v4275
        %v4886 = vunpack.c.h.b16 %v4275
        %v4887 = vunpack.c.l.b16 %v4276
        %v4888 = vunpack.c.h.b16 %v4276
        %v4889 = vunpack.c.l.b16 %v4277
        %v4890 = vunpack.c.h.b16 %v4277
        %v4891 = vunpack.c.l.b16 %v4278
        %v4892 = vunpack.c.h.b16 %v4278
        %v4893 = vpack.c.b16 %v4861, %v4829
        %v4894 = vpack.c.b16 %v4862, %v4830
        %v4895 = vpack.c.b16 %v4863, %v4831
        %v4896 = vpack.c.b16 %v4864, %v4832
        %v4897 = vpack.c.b16 %v4865, %v4833
        %v4898 = vpack.c.b16 %v4866, %v4834
        %v4899 = vpack.c.b16 %v4867, %v4835
        %v4900 = vpack.c.b16 %v4868, %v4836
        %v4901 = vpack.c.b16 %v4869, %v4837
        %v4902 = vpack.c.b16 %v4870, %v4838
        %v4903 = vpack.c.b16 %v4871, %v4839
        %v4904 = vpack.c.b16 %v4872, %v4840
        %v4905 = vpack.c.b16 %v4873, %v4841
        %v4906 = vpack.c.b16 %v4874, %v4842
        %v4907 = vpack.c.b16 %v4875, %v4843
        %v4908 = vpack.c.b16 %v4876, %v4844
        %v4909 = vpack.c.b16 %v4877, %v4845
        %v4910 = vpack.c.b16 %v4878, %v4846
        %v4911 = vpack.c.b16 %v4879, %v4847
        %v4912 = vpack.c.b16 %v4880, %v4848
        %v4913 = vpack.c.b16 %v4881, %v4849
        %v4914 = vpack.c.b16 %v4882, %v4850
        %v4915 = vpack.c.b16 %v4883, %v4851
        %v4916 = vpack.c.b16 %v4884, %v4852
        %v4917 = vpack.c.b16 %v4885, %v4853
        %v4918 = vpack.c.b16 %v4886, %v4854
        %v4919 = vpack.c.b16 %v4887, %v4855
        %v4920 = vpack.c.b16 %v4888, %v4856
        %v4921 = vpack.c.b16 %v4889, %v4857
        %v4922 = vpack.c.b16 %v4890, %v4858
        %v4923 = vpack.c.b16 %v4891, %v4859
        %v4924 = vpack.c.b16 %v4892, %v4860
        %v5469 = vunpack.c.l.b16 %v4279
        %v5470 = vunpack.c.h.b16 %v4279
        %v5471 = vunpack.c.l.b16 %v4280
        %v5472 = vunpack.c.h.b16 %v4280
        %v5473 = vunpack.c.l.b16 %v4281
        %v5474 = vunpack.c.h.b16 %v4281
        %v5475 = vunpack.c.l.b16 %v4282
        %v5476 = vunpack.c.h.b16 %v4282
        %v5477 = vunpack.c.l.b16 %v4283
        %v5478 = vunpack.c.h.b16 %v4283
        %v5479 = vunpack.c.l.b16 %v4284
        %v5480 = vunpack.c.h.b16 %v4284
        %v5481 = vunpack.c.l.b16 %v4285
        %v5482 = vunpack.c.h.b16 %v4285
        %v5483 = vunpack.c.l.b16 %v4286
        %v5484 = vunpack.c.h.b16 %v4286
        %v5485 = vunpack.c.l.b16 %v4287
        %v5486 = vunpack.c.h.b16 %v4287
        %v5487 = vunpack.c.l.b16 %v4288
        %v5488 = vunpack.c.h.b16 %v4288
        %v5489 = vunpack.c.l.b16 %v4289
        %v5490 = vunpack.c.h.b16 %v4289
        %v5491 = vunpack.c.l.b16 %v4290
        %v5492 = vunpack.c.h.b16 %v4290
        %v5493 = vunpack.c.l.b16 %v4291
        %v5494 = vunpack.c.h.b16 %v4291
        %v5495 = vunpack.c.l.b16 %v4292
        %v5496 = vunpack.c.h.b16 %v4292
        %v5497 = vunpack.c.l.b16 %v4293
        %v5498 = vunpack.c.h.b16 %v4293
        %v5499 = vunpack.c.l.b16 %v4294
        %v5500 = vunpack.c.h.b16 %v4294
        %v5501 = vunpack.c.l.b16 %v4295
        %v5502 = vunpack.c.h.b16 %v4295
        %v5503 = vunpack.c.l.b16 %v4296
        %v5504 = vunpack.c.h.b16 %v4296
        %v5505 = vunpack.c.l.b16 %v4297
        %v5506 = vunpack.c.h.b16 %v4297
        %v5507 = vunpack.c.l.b16 %v4298
        %v5508 = vunpack.c.h.b16 %v4298
        %v5509 = vunpack.c.l.b16 %v4299
        %v5510 = vunpack.c.h.b16 %v4299
        %v5511 = vunpack.c.l.b16 %v4300
        %v5512 = vunpack.c.h.b16 %v4300
        %v5513 = vunpack.c.l.b16 %v4301
        %v5514 = vunpack.c.h.b16 %v4301
        %v5515 = vunpack.c.l.b16 %v4302
        %v5516 = vunpack.c.h.b16 %v4302
        %v5517 = vunpack.c.l.b16 %v4303
        %v5518 = vunpack.c.h.b16 %v4303
        %v5519 = vunpack.c.l.b16 %v4304
        %v5520 = vunpack.c.h.b16 %v4304
        %v5521 = vunpack.c.l.b16 %v4305
        %v5522 = vunpack.c.h.b16 %v4305
        %v5523 = vunpack.c.l.b16 %v4306
        %v5524 = vunpack.c.h.b16 %v4306
        %v5525 = vunpack.c.l.b16 %v4307
        %v5526 = vunpack.c.h.b16 %v4307
        %v5527 = vunpack.c.l.b16 %v4308
        %v5528 = vunpack.c.h.b16 %v4308
        %v5529 = vunpack.c.l.b16 %v4309
        %v5530 = vunpack.c.h.b16 %v4309
        %v5531 = vunpack.c.l.b16 %v4310
        %v5532 = vunpack.c.h.b16 %v4310
        %v5533 = vunpack.c.l.b16 %v4311
        %v5534 = vunpack.c.h.b16 %v4311
        %v5535 = vunpack.c.l.b16 %v4312
        %v5536 = vunpack.c.h.b16 %v4312
        %v5537 = vunpack.c.l.b16 %v4313
        %v5538 = vunpack.c.h.b16 %v4313
        %v5539 = vunpack.c.l.b16 %v4314
        %v5540 = vunpack.c.h.b16 %v4314
        %v5541 = vunpack.c.l.b16 %v4315
        %v5542 = vunpack.c.h.b16 %v4315
        %v5543 = vunpack.c.l.b16 %v4316
        %v5544 = vunpack.c.h.b16 %v4316
        %v5545 = vunpack.c.l.b16 %v4317
        %v5546 = vunpack.c.h.b16 %v4317
        %v5547 = vunpack.c.l.b16 %v4318
        %v5548 = vunpack.c.h.b16 %v4318
        %v5549 = vunpack.c.l.b16 %v4319
        %v5550 = vunpack.c.h.b16 %v4319
        %v5551 = vunpack.c.l.b16 %v4320
        %v5552 = vunpack.c.h.b16 %v4320
        %v5553 = vunpack.c.l.b16 %v4321
        %v5554 = vunpack.c.h.b16 %v4321
        %v5555 = vunpack.c.l.b16 %v4322
        %v5556 = vunpack.c.h.b16 %v4322
        %v5557 = vunpack.c.l.b16 %v4323
        %v5558 = vunpack.c.h.b16 %v4323
        %v5559 = vunpack.c.l.b16 %v4324
        %v5560 = vunpack.c.h.b16 %v4324
        %v5561 = vunpack.c.l.b16 %v4325
        %v5562 = vunpack.c.h.b16 %v4325
        %v5563 = vunpack.c.l.b16 %v4326
        %v5564 = vunpack.c.h.b16 %v4326
        %v5565 = vunpack.c.l.b16 %v4327
        %v5566 = vunpack.c.h.b16 %v4327
        %v5567 = vunpack.c.l.b16 %v4328
        %v5568 = vunpack.c.h.b16 %v4328
        %v5569 = vunpack.c.l.b16 %v4329
        %v5570 = vunpack.c.h.b16 %v4329
        %v5571 = vunpack.c.l.b16 %v4330
        %v5572 = vunpack.c.h.b16 %v4330
        %v5573 = vunpack.c.l.b16 %v4331
        %v5574 = vunpack.c.h.b16 %v4331
        %v5575 = vunpack.c.l.b16 %v4332
        %v5576 = vunpack.c.h.b16 %v4332
        %v5577 = vunpack.c.l.b16 %v4333
        %v5578 = vunpack.c.h.b16 %v4333
        %v5579 = vunpack.c.l.b16 %v4334
        %v5580 = vunpack.c.h.b16 %v4334
        %v5581 = vunpack.c.l.b16 %v4335
        %v5582 = vunpack.c.h.b16 %v4335
        %v5583 = vunpack.c.l.b16 %v4336
        %v5584 = vunpack.c.h.b16 %v4336
        %v5585 = vunpack.c.l.b16 %v4337
        %v5586 = vunpack.c.h.b16 %v4337
        %v5587 = vunpack.c.l.b16 %v4338
        %v5588 = vunpack.c.h.b16 %v4338
        %v5589 = vunpack.c.l.b16 %v4339
        %v5590 = vunpack.c.h.b16 %v4339
        %v5591 = vunpack.c.l.b16 %v4340
        %v5592 = vunpack.c.h.b16 %v4340
        %v5593 = vunpack.c.l.b16 %v4341
        %v5594 = vunpack.c.h.b16 %v4341
        %v5595 = vunpack.c.l.b16 %v4342
        %v5596 = vunpack.c.h.b16 %v4342
        %v5597 = vunpack.c.l.b16 %v4343
        %v5598 = vunpack.c.h.b16 %v4343
        %v5599 = vunpack.c.l.b16 %v4344
        %v5600 = vunpack.c.h.b16 %v4344
        %v5601 = vunpack.c.l.b16 %v4345
        %v5602 = vunpack.c.h.b16 %v4345
        %v5603 = vunpack.c.l.b16 %v4346
        %v5604 = vunpack.c.h.b16 %v4346
        %v5605 = vunpack.c.l.b16 %v4347
        %v5606 = vunpack.c.h.b16 %v4347
        %v5607 = vunpack.c.l.b16 %v4348
        %v5608 = vunpack.c.h.b16 %v4348
        %v5609 = vunpack.c.l.b16 %v4349
        %v5610 = vunpack.c.h.b16 %v4349
        %v5611 = vunpack.c.l.b16 %v4350
        %v5612 = vunpack.c.h.b16 %v4350
        %v5613 = vunpack.c.l.b16 %v4351
        %v5614 = vunpack.c.h.b16 %v4351
        %v5615 = vunpack.c.l.b16 %v4352
        %v5616 = vunpack.c.h.b16 %v4352
        %v5617 = vunpack.c.l.b16 %v4353
        %v5618 = vunpack.c.h.b16 %v4353
        %v5619 = vunpack.c.l.b16 %v4354
        %v5620 = vunpack.c.h.b16 %v4354
        %v5621 = vunpack.c.l.b16 %v4355
        %v5622 = vunpack.c.h.b16 %v4355
        %v5623 = vunpack.c.l.b16 %v4356
        %v5624 = vunpack.c.h.b16 %v4356
        %v5625 = vunpack.c.l.b16 %v4357
        %v5626 = vunpack.c.h.b16 %v4357
        %v5627 = vunpack.c.l.b16 %v4358
        %v5628 = vunpack.c.h.b16 %v4358
        %v5629 = vunpack.c.l.b16 %v4359
        %v5630 = vunpack.c.h.b16 %v4359
        %v5631 = vunpack.c.l.b16 %v4360
        %v5632 = vunpack.c.h.b16 %v4360
        %v5633 = vunpack.c.l.b16 %v4361
        %v5634 = vunpack.c.h.b16 %v4361
        %v5635 = vunpack.c.l.b16 %v4362
        %v5636 = vunpack.c.h.b16 %v4362
        %v5637 = vunpack.c.l.b16 %v4363
        %v5638 = vunpack.c.h.b16 %v4363
        %v5639 = vunpack.c.l.b16 %v4364
        %v5640 = vunpack.c.h.b16 %v4364
        %v5641 = vunpack.c.l.b16 %v4365
        %v5642 = vunpack.c.h.b16 %v4365
        %v5643 = vunpack.c.l.b16 %v4366
        %v5644 = vunpack.c.h.b16 %v4366
        %v5645 = vunpack.c.l.b16 %v4367
        %v5646 = vunpack.c.h.b16 %v4367
        %v5647 = vunpack.c.l.b16 %v4368
        %v5648 = vunpack.c.h.b16 %v4368
        %v5649 = vunpack.c.l.b16 %v4369
        %v5650 = vunpack.c.h.b16 %v4369
        %v5651 = vunpack.c.l.b16 %v4370
        %v5652 = vunpack.c.h.b16 %v4370
        %v5653 = vunpack.c.l.b16 %v4371
        %v5654 = vunpack.c.h.b16 %v4371
        %v5655 = vunpack.c.l.b16 %v4372
        %v5656 = vunpack.c.h.b16 %v4372
        %v5657 = vunpack.c.l.b16 %v4373
        %v5658 = vunpack.c.h.b16 %v4373
        %v5659 = vunpack.c.l.b16 %v4374
        %v5660 = vunpack.c.h.b16 %v4374
        %v5661 = vunpack.c.l.b16 %v4375
        %v5662 = vunpack.c.h.b16 %v4375
        %v5663 = vunpack.c.l.b16 %v4376
        %v5664 = vunpack.c.h.b16 %v4376
        %v5665 = vunpack.c.l.b16 %v4377
        %v5666 = vunpack.c.h.b16 %v4377
        %v5667 = vunpack.c.l.b16 %v4378
        %v5668 = vunpack.c.h.b16 %v4378
        %v5669 = vunpack.c.l.b16 %v4379
        %v5670 = vunpack.c.h.b16 %v4379
        %v5671 = vunpack.c.l.b16 %v4380
        %v5672 = vunpack.c.h.b16 %v4380
        %v5673 = vunpack.c.l.b16 %v4381
        %v5674 = vunpack.c.h.b16 %v4381
        %v5675 = vunpack.c.l.b16 %v4382
        %v5676 = vunpack.c.h.b16 %v4382
        %v5677 = vunpack.c.l.b16 %v4383
        %v5678 = vunpack.c.h.b16 %v4383
        %v5679 = vunpack.c.l.b16 %v4384
        %v5680 = vunpack.c.h.b16 %v4384
        %v5681 = vunpack.c.l.b16 %v4385
        %v5682 = vunpack.c.h.b16 %v4385
        %v5683 = vunpack.c.l.b16 %v4386
        %v5684 = vunpack.c.h.b16 %v4386
        %v5685 = vunpack.c.l.b16 %v4387
        %v5686 = vunpack.c.h.b16 %v4387
        %v5687 = vunpack.c.l.b16 %v4388
        %v5688 = vunpack.c.h.b16 %v4388
        %v5689 = vunpack.c.l.b16 %v4389
        %v5690 = vunpack.c.h.b16 %v4389
        %v5691 = vunpack.c.l.b16 %v4390
        %v5692 = vunpack.c.h.b16 %v4390
        %v5693 = vunpack.c.l.b16 %v4391
        %v5694 = vunpack.c.h.b16 %v4391
        %v5695 = vunpack.c.l.b16 %v4392
        %v5696 = vunpack.c.h.b16 %v4392
        %v5697 = vunpack.c.l.b16 %v4393
        %v5698 = vunpack.c.h.b16 %v4393
        %v5699 = vunpack.c.l.b16 %v4394
        %v5700 = vunpack.c.h.b16 %v4394
        %v5701 = vunpack.c.l.b16 %v4395
        %v5702 = vunpack.c.h.b16 %v4395
        %v5703 = vunpack.c.l.b16 %v4396
        %v5704 = vunpack.c.h.b16 %v4396
        %v5705 = vunpack.c.l.b16 %v4397
        %v5706 = vunpack.c.h.b16 %v4397
        %v5707 = vunpack.c.l.b16 %v4398
        %v5708 = vunpack.c.h.b16 %v4398
        %v5709 = vunpack.c.l.b16 %v4399
        %v5710 = vunpack.c.h.b16 %v4399
        %v5711 = vunpack.c.l.b16 %v4400
        %v5712 = vunpack.c.h.b16 %v4400
        %v5713 = vunpack.c.l.b16 %v4401
        %v5714 = vunpack.c.h.b16 %v4401
        %v5715 = vunpack.c.l.b16 %v4402
        %v5716 = vunpack.c.h.b16 %v4402
        %v5717 = vunpack.c.l.b16 %v4403
        %v5718 = vunpack.c.h.b16 %v4403
        %v5719 = vunpack.c.l.b16 %v4404
        %v5720 = vunpack.c.h.b16 %v4404
        %v5721 = vunpack.c.l.b16 %v4405
        %v5722 = vunpack.c.h.b16 %v4405
        %v5723 = vunpack.c.l.b16 %v4406
        %v5724 = vunpack.c.h.b16 %v4406
        %v5725 = vunpack.c.l.b16 %v4407
        %v5726 = vunpack.c.h.b16 %v4407
        %v5727 = vunpack.c.l.b16 %v4408
        %v5728 = vunpack.c.h.b16 %v4408
        %v5729 = vunpack.c.l.b16 %v4409
        %v5730 = vunpack.c.h.b16 %v4409
        %v5731 = vunpack.c.l.b16 %v4410
        %v5732 = vunpack.c.h.b16 %v4410
        %v5733 = vunpack.c.l.b16 %v4411
        %v5734 = vunpack.c.h.b16 %v4411
        %v5735 = vunpack.c.l.b16 %v4412
        %v5736 = vunpack.c.h.b16 %v4412
        %v5737 = vunpack.c.l.b16 %v4413
        %v5738 = vunpack.c.h.b16 %v4413
        %v5739 = vunpack.c.l.b16 %v4414
        %v5740 = vunpack.c.h.b16 %v4414
        %v5741 = vunpack.c.l.b16 %v4415
        %v5742 = vunpack.c.h.b16 %v4415
        %v5743 = vunpack.c.l.b16 %v4416
        %v5744 = vunpack.c.h.b16 %v4416
        %v5745 = vunpack.c.l.b16 %v4417
        %v5746 = vunpack.c.h.b16 %v4417
        %v5747 = vunpack.c.l.b16 %v4418
        %v5748 = vunpack.c.h.b16 %v4418
        %v5749 = vunpack.c.l.b16 %v4419
        %v5750 = vunpack.c.h.b16 %v4419
        %v5751 = vunpack.c.l.b16 %v4420
        %v5752 = vunpack.c.h.b16 %v4420
        %v5753 = vunpack.c.l.b16 %v4421
        %v5754 = vunpack.c.h.b16 %v4421
        %v5755 = vunpack.c.l.b16 %v4422
        %v5756 = vunpack.c.h.b16 %v4422
        %v5757 = vunpack.c.l.b16 %v4423
        %v5758 = vunpack.c.h.b16 %v4423
        %v5759 = vunpack.c.l.b16 %v4424
        %v5760 = vunpack.c.h.b16 %v4424
        %v5761 = vunpack.c.l.b16 %v4425
        %v5762 = vunpack.c.h.b16 %v4425
        %v5763 = vunpack.c.l.b16 %v4426
        %v5764 = vunpack.c.h.b16 %v4426
        %v5765 = vunpack.c.l.b16 %v4427
        %v5766 = vunpack.c.h.b16 %v4427
        %v5767 = vunpack.c.l.b16 %v4428
        %v5768 = vunpack.c.h.b16 %v4428
        %v5769 = vunpack.c.l.b16 %v4429
        %v5770 = vunpack.c.h.b16 %v4429
        %v5771 = vunpack.c.l.b16 %v4430
        %v5772 = vunpack.c.h.b16 %v4430
        %v5773 = vunpack.c.l.b16 %v4431
        %v5774 = vunpack.c.h.b16 %v4431
        %v5775 = vunpack.c.l.b16 %v4432
        %v5776 = vunpack.c.h.b16 %v4432
        %v5777 = vunpack.c.l.b16 %v4433
        %v5778 = vunpack.c.h.b16 %v4433
        %v5779 = vunpack.c.l.b16 %v4434
        %v5780 = vunpack.c.h.b16 %v4434
        %v5781 = vunpack.c.l.b16 %v4435
        %v5782 = vunpack.c.h.b16 %v4435
        %v5783 = vunpack.c.l.b16 %v4436
        %v5784 = vunpack.c.h.b16 %v4436
        %v5785 = vunpack.c.l.b16 %v4437
        %v5786 = vunpack.c.h.b16 %v4437
        %v5787 = vunpack.c.l.b16 %v4438
        %v5788 = vunpack.c.h.b16 %v4438
        %v5789 = vunpack.c.l.b16 %v4439
        %v5790 = vunpack.c.h.b16 %v4439
        %v5791 = vunpack.c.l.b16 %v4440
        %v5792 = vunpack.c.h.b16 %v4440
        %v5793 = vunpack.c.l.b16 %v4441
        %v5794 = vunpack.c.h.b16 %v4441
        %v5795 = vunpack.c.l.b16 %v4442
        %v5796 = vunpack.c.h.b16 %v4442
        %v5797 = vunpack.c.l.b16 %v4443
        %v5798 = vunpack.c.h.b16 %v4443
        %v5799 = vunpack.c.l.b16 %v4444
        %v5800 = vunpack.c.h.b16 %v4444
        %v5801 = vunpack.c.l.b16 %v4445
        %v5802 = vunpack.c.h.b16 %v4445
        %v5803 = vunpack.c.l.b16 %v4446
        %v5804 = vunpack.c.h.b16 %v4446
        %v5805 = vunpack.c.l.b16 %v4447
        %v5806 = vunpack.c.h.b16 %v4447
        %v5807 = vunpack.c.l.b16 %v4448
        %v5808 = vunpack.c.h.b16 %v4448
        %v5809 = vunpack.c.l.b16 %v4449
        %v5810 = vunpack.c.h.b16 %v4449
        %v5811 = vunpack.c.l.b16 %v4450
        %v5812 = vunpack.c.h.b16 %v4450
        %v5813 = vunpack.c.l.b16 %v4451
        %v5814 = vunpack.c.h.b16 %v4451
        %v5815 = vunpack.c.l.b16 %v4452
        %v5816 = vunpack.c.h.b16 %v4452
        %v5817 = vunpack.c.l.b16 %v4453
        %v5818 = vunpack.c.h.b16 %v4453
        %v5819 = vunpack.c.l.b16 %v4454
        %v5820 = vunpack.c.h.b16 %v4454
        %v5821 = vunpack.c.l.b16 %v4455
        %v5822 = vunpack.c.h.b16 %v4455
        %v5823 = vunpack.c.l.b16 %v4456
        %v5824 = vunpack.c.h.b16 %v4456
        %v5825 = vunpack.c.l.b16 %v4457
        %v5826 = vunpack.c.h.b16 %v4457
        %v5827 = vunpack.c.l.b16 %v4458
        %v5828 = vunpack.c.h.b16 %v4458
        %v5829 = vunpack.c.l.b16 %v4459
        %v5830 = vunpack.c.h.b16 %v4459
        %v5831 = vunpack.c.l.b16 %v4460
        %v5832 = vunpack.c.h.b16 %v4460
        %v5833 = vunpack.c.l.b16 %v4461
        %v5834 = vunpack.c.h.b16 %v4461
        %v5835 = vunpack.c.l.b16 %v4462
        %v5836 = vunpack.c.h.b16 %v4462
        %v5837 = vunpack.c.l.b16 %v4463
        %v5838 = vunpack.c.h.b16 %v4463
        %v5839 = vunpack.c.l.b16 %v4464
        %v5840 = vunpack.c.h.b16 %v4464
        %v5841 = vunpack.c.l.b16 %v4465
        %v5842 = vunpack.c.h.b16 %v4465
        %v5843 = vunpack.c.l.b16 %v4466
        %v5844 = vunpack.c.h.b16 %v4466
        %v5845 = vunpack.c.l.b16 %v4467
        %v5846 = vunpack.c.h.b16 %v4467
        %v5847 = vunpack.c.l.b16 %v4468
        %v5848 = vunpack.c.h.b16 %v4468
        %v5849 = vunpack.c.l.b16 %v4469
        %v5850 = vunpack.c.h.b16 %v4469
        %v5851 = vunpack.c.l.b16 %v4470
        %v5852 = vunpack.c.h.b16 %v4470
        %v5853 = vunpack.c.l.b16 %v4471
        %v5854 = vunpack.c.h.b16 %v4471
        %v5855 = vunpack.c.l.b16 %v4472
        %v5856 = vunpack.c.h.b16 %v4472
        %v5857 = vunpack.c.l.b16 %v4473
        %v5858 = vunpack.c.h.b16 %v4473
        %v5859 = vunpack.c.l.b16 %v4474
        %v5860 = vunpack.c.h.b16 %v4474
        %v5861 = vunpack.c.l.b16 %v4475
        %v5862 = vunpack.c.h.b16 %v4475
        %v5863 = vunpack.c.l.b16 %v4476
        %v5864 = vunpack.c.h.b16 %v4476
        %v5865 = vunpack.c.l.b16 %v4477
        %v5866 = vunpack.c.h.b16 %v4477
        %v5867 = vunpack.c.l.b16 %v4478
        %v5868 = vunpack.c.h.b16 %v4478
        %v5869 = vunpack.c.l.b16 %v4479
        %v5870 = vunpack.c.h.b16 %v4479
        %v5871 = vunpack.c.l.b16 %v4480
        %v5872 = vunpack.c.h.b16 %v4480
        %v5873 = vunpack.c.l.b16 %v4481
        %v5874 = vunpack.c.h.b16 %v4481
        %v5875 = vunpack.c.l.b16 %v4482
        %v5876 = vunpack.c.h.b16 %v4482
        %v5877 = vunpack.c.l.b16 %v4483
        %v5878 = vunpack.c.h.b16 %v4483
        %v5879 = vunpack.c.l.b16 %v4484
        %v5880 = vunpack.c.h.b16 %v4484
        %v5881 = vunpack.c.l.b16 %v4485
        %v5882 = vunpack.c.h.b16 %v4485
        %v5883 = vunpack.c.l.b16 %v4486
        %v5884 = vunpack.c.h.b16 %v4486
        %v5885 = vunpack.c.l.b16 %v4487
        %v5886 = vunpack.c.h.b16 %v4487
        %v5887 = vunpack.c.l.b16 %v4488
        %v5888 = vunpack.c.h.b16 %v4488
        %v5889 = vunpack.c.l.b16 %v4489
        %v5890 = vunpack.c.h.b16 %v4489
        %v5891 = vunpack.c.l.b16 %v4490
        %v5892 = vunpack.c.h.b16 %v4490
        %v5893 = vunpack.c.l.b16 %v4491
        %v5894 = vunpack.c.h.b16 %v4491
        %v5895 = vunpack.c.l.b16 %v4492
        %v5896 = vunpack.c.h.b16 %v4492
        %v5897 = vunpack.c.l.b16 %v4493
        %v5898 = vunpack.c.h.b16 %v4493
        %v5899 = vunpack.c.l.b16 %v4494
        %v5900 = vunpack.c.h.b16 %v4494
        %v5901 = vunpack.c.l.b16 %v4495
        %v5902 = vunpack.c.h.b16 %v4495
        %v5903 = vunpack.c.l.b16 %v4496
        %v5904 = vunpack.c.h.b16 %v4496
        %v5905 = vunpack.c.l.b16 %v4497
        %v5906 = vunpack.c.h.b16 %v4497
        %v5907 = vunpack.c.l.b16 %v4498
        %v5908 = vunpack.c.h.b16 %v4498
        %v5909 = vunpack.c.l.b16 %v4499
        %v5910 = vunpack.c.h.b16 %v4499
        %v5911 = vunpack.c.l.b16 %v4500
        %v5912 = vunpack.c.h.b16 %v4500
        %v5913 = vunpack.c.l.b16 %v4501
        %v5914 = vunpack.c.h.b16 %v4501
        %v5915 = vunpack.c.l.b16 %v4502
        %v5916 = vunpack.c.h.b16 %v4502
        %v5917 = vunpack.c.l.b16 %v4503
        %v5918 = vunpack.c.h.b16 %v4503
        %v5919 = vunpack.c.l.b16 %v4504
        %v5920 = vunpack.c.h.b16 %v4504
        %v5921 = vunpack.c.l.b16 %v4505
        %v5922 = vunpack.c.h.b16 %v4505
        %v5923 = vunpack.c.l.b16 %v4506
        %v5924 = vunpack.c.h.b16 %v4506
        %v5925 = vunpack.c.l.b16 %v4507
        %v5926 = vunpack.c.h.b16 %v4507
        %v5927 = vunpack.c.l.b16 %v4508
        %v5928 = vunpack.c.h.b16 %v4508
        %v5929 = vunpack.c.l.b16 %v4509
        %v5930 = vunpack.c.h.b16 %v4509
        %v5931 = vunpack.c.l.b16 %v4510
        %v5932 = vunpack.c.h.b16 %v4510
        %v5933 = vunpack.c.l.b16 %v4511
        %v5934 = vunpack.c.h.b16 %v4511
        %v5935 = vunpack.c.l.b16 %v4512
        %v5936 = vunpack.c.h.b16 %v4512
        %v5937 = vunpack.c.l.b16 %v4513
        %v5938 = vunpack.c.h.b16 %v4513
        %v5939 = vunpack.c.l.b16 %v4514
        %v5940 = vunpack.c.h.b16 %v4514
        %v5941 = vunpack.c.l.b16 %v4515
        %v5942 = vunpack.c.h.b16 %v4515
        %v5943 = vunpack.c.l.b16 %v4516
        %v5944 = vunpack.c.h.b16 %v4516
        %v5945 = vunpack.c.l.b16 %v4517
        %v5946 = vunpack.c.h.b16 %v4517
        %v5947 = vunpack.c.l.b16 %v4518
        %v5948 = vunpack.c.h.b16 %v4518
        %v5949 = vunpack.c.l.b16 %v4519
        %v5950 = vunpack.c.h.b16 %v4519
        %v5951 = vunpack.c.l.b16 %v4520
        %v5952 = vunpack.c.h.b16 %v4520
        %v5953 = vunpack.c.l.b16 %v4521
        %v5954 = vunpack.c.h.b16 %v4521
        %v5955 = vunpack.c.l.b16 %v4522
        %v5956 = vunpack.c.h.b16 %v4522
        %v5957 = vunpack.c.l.b16 %v4523
        %v5958 = vunpack.c.h.b16 %v4523
        %v5959 = vunpack.c.l.b16 %v4524
        %v5960 = vunpack.c.h.b16 %v4524
        %v5961 = vunpack.c.l.b16 %v4525
        %v5962 = vunpack.c.h.b16 %v4525
        %v5963 = vunpack.c.l.b16 %v4526
        %v5964 = vunpack.c.h.b16 %v4526
        %v5965 = vunpack.c.l.b16 %v4527
        %v5966 = vunpack.c.h.b16 %v4527
        %v5967 = vunpack.c.l.b16 %v4528
        %v5968 = vunpack.c.h.b16 %v4528
        %v5969 = vunpack.c.l.b16 %v4529
        %v5970 = vunpack.c.h.b16 %v4529
        %v5971 = vunpack.c.l.b16 %v4530
        %v5972 = vunpack.c.h.b16 %v4530
        %v5973 = vunpack.c.l.b16 %v4531
        %v5974 = vunpack.c.h.b16 %v4531
        %v5975 = vunpack.c.l.b16 %v4532
        %v5976 = vunpack.c.h.b16 %v4532
        %v5977 = vunpack.c.l.b16 %v4533
        %v5978 = vunpack.c.h.b16 %v4533
        %v5979 = vunpack.c.l.b16 %v4534
        %v5980 = vunpack.c.h.b16 %v4534
        %v5981 = vunpack.c.l.b16 %v4535
        %v5982 = vunpack.c.h.b16 %v4535
        %v5983 = vunpack.c.l.b16 %v4536
        %v5984 = vunpack.c.h.b16 %v4536
        %v5985 = vunpack.c.l.b16 %v4537
        %v5986 = vunpack.c.h.b16 %v4537
        %v5987 = vunpack.c.l.b16 %v4538
        %v5988 = vunpack.c.h.b16 %v4538
        %v5989 = vunpack.c.l.b16 %v4539
        %v5990 = vunpack.c.h.b16 %v4539
        %v5991 = vunpack.c.l.b16 %v4540
        %v5992 = vunpack.c.h.b16 %v4540
        %v5993 = vunpack.c.l.b16 %v4541
        %v5994 = vunpack.c.h.b16 %v4541
        %v5995 = vunpack.c.l.b16 %v4542
        %v5996 = vunpack.c.h.b16 %v4542
        %v5997 = vunpack.c.l.b16 %v4543
        %v5998 = vunpack.c.h.b16 %v4543
        %v5999 = vunpack.c.l.b16 %v4544
        %v6000 = vunpack.c.h.b16 %v4544
        %v6001 = vunpack.c.l.b16 %v4545
        %v6002 = vunpack.c.h.b16 %v4545
        %v6003 = vunpack.c.l.b16 %v4546
        %v6004 = vunpack.c.h.b16 %v4546
        %v6005 = vunpack.c.l.b16 %v4547
        %v6006 = vunpack.c.h.b16 %v4547
        %v6007 = vunpack.c.l.b16 %v4548
        %v6008 = vunpack.c.h.b16 %v4548
        %v6009 = vunpack.c.l.b16 %v4549
        %v6010 = vunpack.c.h.b16 %v4549
        %v6011 = vunpack.c.l.b16 %v4550
        %v6012 = vunpack.c.h.b16 %v4550
        %v6013 = vunpack.c.l.b16 %v4551
        %v6014 = vunpack.c.h.b16 %v4551
        %v6015 = vunpack.c.l.b16 %v4552
        %v6016 = vunpack.c.h.b16 %v4552
        %v6017 = vunpack.c.l.b16 %v4553
        %v6018 = vunpack.c.h.b16 %v4553
        %v6019 = vunpack.c.l.b16 %v4554
        %v6020 = vunpack.c.h.b16 %v4554
        %v6021 = vunpack.c.l.b16 %v4555
        %v6022 = vunpack.c.h.b16 %v4555
        %v6023 = vunpack.c.l.b16 %v4556
        %v6024 = vunpack.c.h.b16 %v4556
        %v6025 = vunpack.c.l.b16 %v4557
        %v6026 = vunpack.c.h.b16 %v4557
        %v6027 = vunpack.c.l.b16 %v4558
        %v6028 = vunpack.c.h.b16 %v4558
        %v6029 = vunpack.c.l.b16 %v4559
        %v6030 = vunpack.c.h.b16 %v4559
        %v6031 = vunpack.c.l.b16 %v4560
        %v6032 = vunpack.c.h.b16 %v4560
        %v6033 = vunpack.c.l.b16 %v4561
        %v6034 = vunpack.c.h.b16 %v4561
        %v6035 = vunpack.c.l.b16 %v4562
        %v6036 = vunpack.c.h.b16 %v4562
        %v6037 = vunpack.c.l.b16 %v4563
        %v6038 = vunpack.c.h.b16 %v4563
        %v6039 = vunpack.c.l.b16 %v4564
        %v6040 = vunpack.c.h.b16 %v4564
        %v6041 = vunpack.c.l.b16 %v4565
        %v6042 = vunpack.c.h.b16 %v4565
        %v6043 = vunpack.c.l.b16 %v4566
        %v6044 = vunpack.c.h.b16 %v4566
        %v6045 = vunpack.c.l.b16 %v4567
        %v6046 = vunpack.c.h.b16 %v4567
        %v6047 = vunpack.c.l.b16 %v4568
        %v6048 = vunpack.c.h.b16 %v4568
        %v6049 = vunpack.c.l.b16 %v4569
        %v6050 = vunpack.c.h.b16 %v4569
        %v6051 = vunpack.c.l.b16 %v4570
        %v6052 = vunpack.c.h.b16 %v4570
        %v6053 = vunpack.c.l.b16 %v4571
        %v6054 = vunpack.c.h.b16 %v4571
        %v6055 = vunpack.c.l.b16 %v4572
        %v6056 = vunpack.c.h.b16 %v4572
        %v6057 = vunpack.c.l.b16 %v4573
        %v6058 = vunpack.c.h.b16 %v4573
        %v6059 = vunpack.c.l.b16 %v4574
        %v6060 = vunpack.c.h.b16 %v4574
        %v6061 = vunpack.c.l.b16 %v4575
        %v6062 = vunpack.c.h.b16 %v4575
        %v6063 = vunpack.c.l.b16 %v4576
        %v6064 = vunpack.c.h.b16 %v4576
        %v6065 = vunpack.c.l.b16 %v4577
        %v6066 = vunpack.c.h.b16 %v4577
        %v6067 = vunpack.c.l.b16 %v4578
        %v6068 = vunpack.c.h.b16 %v4578
        %v6069 = vunpack.c.l.b16 %v4579
        %v6070 = vunpack.c.h.b16 %v4579
        %v6071 = vunpack.c.l.b16 %v4580
        %v6072 = vunpack.c.h.b16 %v4580
        %v6073 = vunpack.c.l.b16 %v4581
        %v6074 = vunpack.c.h.b16 %v4581
        %v6075 = vunpack.c.l.b16 %v4582
        %v6076 = vunpack.c.h.b16 %v4582
        %v6077 = vunpack.c.l.b16 %v4583
        %v6078 = vunpack.c.h.b16 %v4583
        %v6079 = vunpack.c.l.b16 %v4584
        %v6080 = vunpack.c.h.b16 %v4584
        %v6081 = vunpack.c.l.b16 %v4585
        %v6082 = vunpack.c.h.b16 %v4585
        %v6083 = vunpack.c.l.b16 %v4586
        %v6084 = vunpack.c.h.b16 %v4586
        %v6085 = vunpack.c.l.b16 %v4587
        %v6086 = vunpack.c.h.b16 %v4587
        %v6087 = vunpack.c.l.b16 %v4588
        %v6088 = vunpack.c.h.b16 %v4588
        %v6089 = vunpack.c.l.b16 %v4589
        %v6090 = vunpack.c.h.b16 %v4589
        %v6091 = vunpack.c.l.b16 %v4590
        %v6092 = vunpack.c.h.b16 %v4590
        %v6093 = vunpack.c.l.b16 %v4591
        %v6094 = vunpack.c.h.b16 %v4591
        %v6095 = vunpack.c.l.b16 %v4592
        %v6096 = vunpack.c.h.b16 %v4592
        %v6097 = vunpack.c.l.b16 %v4593
        %v6098 = vunpack.c.h.b16 %v4593
        %v6099 = vunpack.c.l.b16 %v4594
        %v6100 = vunpack.c.h.b16 %v4594
        %v6101 = vunpack.c.l.b16 %v4595
        %v6102 = vunpack.c.h.b16 %v4595
        %v6103 = vunpack.c.l.b16 %v4596
        %v6104 = vunpack.c.h.b16 %v4596
        %v6105 = vunpack.c.l.b16 %v4597
        %v6106 = vunpack.c.h.b16 %v4597
        %v6107 = vunpack.c.l.b16 %v4598
        %v6108 = vunpack.c.h.b16 %v4598
        %v6109 = vunpack.c.l.b16 %v4599
        %v6110 = vunpack.c.h.b16 %v4599
        %v6111 = vunpack.c.l.b16 %v4600
        %v6112 = vunpack.c.h.b16 %v4600
        %v6113 = vunpack.c.l.b16 %v4601
        %v6114 = vunpack.c.h.b16 %v4601
        %v6115 = vunpack.c.l.b16 %v4602
        %v6116 = vunpack.c.h.b16 %v4602
        %v6117 = vunpack.c.l.b16 %v4603
        %v6118 = vunpack.c.h.b16 %v4603
        %v6119 = vunpack.c.l.b16 %v4604
        %v6120 = vunpack.c.h.b16 %v4604
        %v6121 = vunpack.c.l.b16 %v4605
        %v6122 = vunpack.c.h.b16 %v4605
        %v6123 = vunpack.c.l.b16 %v4606
        %v6124 = vunpack.c.h.b16 %v4606
        %v6125 = vunpack.c.l.b16 %v4607
        %v6126 = vunpack.c.h.b16 %v4607
        %v6127 = vunpack.c.l.b16 %v4608
        %v6128 = vunpack.c.h.b16 %v4608
        %v6129 = vunpack.c.l.b16 %v4609
        %v6130 = vunpack.c.h.b16 %v4609
        %v6131 = vunpack.c.l.b16 %v4610
        %v6132 = vunpack.c.h.b16 %v4610
        %v6133 = vunpack.c.l.b16 %v4611
        %v6134 = vunpack.c.h.b16 %v4611
        %v6135 = vunpack.c.l.b16 %v4612
        %v6136 = vunpack.c.h.b16 %v4612
        %v6137 = vunpack.c.l.b16 %v4613
        %v6138 = vunpack.c.h.b16 %v4613
        %v6139 = vunpack.c.l.b16 %v4614
        %v6140 = vunpack.c.h.b16 %v4614
        %v6141 = vunpack.c.l.b16 %v4615
        %v6142 = vunpack.c.h.b16 %v4615
        %v6143 = vunpack.c.l.b16 %v4616
        %v6144 = vunpack.c.h.b16 %v4616
        %v6145 = vunpack.c.l.b16 %v4617
        %v6146 = vunpack.c.h.b16 %v4617
        %v6147 = vunpack.c.l.b16 %v4618
        %v6148 = vunpack.c.h.b16 %v4618
        %v6149 = vunpack.c.l.b16 %v4619
        %v6150 = vunpack.c.h.b16 %v4619
        %v6151 = vunpack.c.l.b16 %v4620
        %v6152 = vunpack.c.h.b16 %v4620
        %v6153 = vunpack.c.l.b16 %v4621
        %v6154 = vunpack.c.h.b16 %v4621
        %v6155 = vunpack.c.l.b16 %v4622
        %v6156 = vunpack.c.h.b16 %v4622
        %v6157 = vunpack.c.l.b16 %v4623
        %v6158 = vunpack.c.h.b16 %v4623
        %v6159 = vunpack.c.l.b16 %v4624
        %v6160 = vunpack.c.h.b16 %v4624
        %v6161 = vunpack.c.l.b16 %v4625
        %v6162 = vunpack.c.h.b16 %v4625
        %v6163 = vunpack.c.l.b16 %v4626
        %v6164 = vunpack.c.h.b16 %v4626
        %v6165 = vunpack.c.l.b16 %v4627
        %v6166 = vunpack.c.h.b16 %v4627
        %v6167 = vunpack.c.l.b16 %v4628
        %v6168 = vunpack.c.h.b16 %v4628
        %v6169 = vunpack.c.l.b16 %v4629
        %v6170 = vunpack.c.h.b16 %v4629
        %v6171 = vunpack.c.l.b16 %v4630
        %v6172 = vunpack.c.h.b16 %v4630
        %v6173 = vunpack.c.l.b16 %v4631
        %v6174 = vunpack.c.h.b16 %v4631
        %v6175 = vunpack.c.l.b16 %v4632
        %v6176 = vunpack.c.h.b16 %v4632
        %v6177 = vunpack.c.l.b16 %v4633
        %v6178 = vunpack.c.h.b16 %v4633
        %v6179 = vunpack.c.l.b16 %v4634
        %v6180 = vunpack.c.h.b16 %v4634
        %v6181 = vunpack.c.l.b16 %v4635
        %v6182 = vunpack.c.h.b16 %v4635
        %v6183 = vunpack.c.l.b16 %v4636
        %v6184 = vunpack.c.h.b16 %v4636
        %v6185 = vunpack.c.l.b16 %v4637
        %v6186 = vunpack.c.h.b16 %v4637
        %v6187 = vunpack.c.l.b16 %v4638
        %v6188 = vunpack.c.h.b16 %v4638
        %v6189 = vunpack.c.l.b16 %v4639
        %v6190 = vunpack.c.h.b16 %v4639
        %v6191 = vunpack.c.l.b16 %v4640
        %v6192 = vunpack.c.h.b16 %v4640
        %v6193 = vunpack.c.l.b16 %v4641
        %v6194 = vunpack.c.h.b16 %v4641
        %v6195 = vunpack.c.l.b16 %v4642
        %v6196 = vunpack.c.h.b16 %v4642
        %v6197 = vunpack.c.l.b16 %v4643
        %v6198 = vunpack.c.h.b16 %v4643
        %v6199 = vunpack.c.l.b16 %v4644
        %v6200 = vunpack.c.h.b16 %v4644
        %v6201 = vunpack.c.l.b16 %v4645
        %v6202 = vunpack.c.h.b16 %v4645
        %v6203 = vunpack.c.l.b16 %v4646
        %v6204 = vunpack.c.h.b16 %v4646
        %v6205 = vunpack.c.l.b16 %v4647
        %v6206 = vunpack.c.h.b16 %v4647
        %v6207 = vunpack.c.l.b16 %v4648
        %v6208 = vunpack.c.h.b16 %v4648
        %v6209 = vunpack.c.l.b16 %v4649
        %v6210 = vunpack.c.h.b16 %v4649
        %v6211 = vunpack.c.l.b16 %v4650
        %v6212 = vunpack.c.h.b16 %v4650
        %v6213 = vunpack.c.l.b16 %v4651
        %v6214 = vunpack.c.h.b16 %v4651
        %v6215 = vunpack.c.l.b16 %v4652
        %v6216 = vunpack.c.h.b16 %v4652
        %v6217 = vunpack.c.l.b16 %v4653
        %v6218 = vunpack.c.h.b16 %v4653
        %v6219 = vunpack.c.l.b16 %v4654
        %v6220 = vunpack.c.h.b16 %v4654
        %v6221 = vunpack.c.l.b16 %v4655
        %v6222 = vunpack.c.h.b16 %v4655
        %v6223 = vunpack.c.l.b16 %v4656
        %v6224 = vunpack.c.h.b16 %v4656
        %v6225 = vunpack.c.l.b16 %v4657
        %v6226 = vunpack.c.h.b16 %v4657
        %v6227 = vunpack.c.l.b16 %v4658
        %v6228 = vunpack.c.h.b16 %v4658
        %v6229 = vunpack.c.l.b16 %v4659
        %v6230 = vunpack.c.h.b16 %v4659
        %v6231 = vunpack.c.l.b16 %v4660
        %v6232 = vunpack.c.h.b16 %v4660
        %v6233 = vunpack.c.l.b16 %v4661
        %v6234 = vunpack.c.h.b16 %v4661
        %v6235 = vunpack.c.l.b16 %v4662
        %v6236 = vunpack.c.h.b16 %v4662
        %v6237 = vunpack.c.l.b16 %v4663
        %v6238 = vunpack.c.h.b16 %v4663
        %v6239 = vunpack.c.l.b16 %v4664
        %v6240 = vunpack.c.h.b16 %v4664
        %v6241 = vunpack.c.l.b16 %v4665
        %v6242 = vunpack.c.h.b16 %v4665
        %v6243 = vunpack.c.l.b16 %v4666
        %v6244 = vunpack.c.h.b16 %v4666
        %v6245 = vunpack.c.l.b16 %v4667
        %v6246 = vunpack.c.h.b16 %v4667
        %v6247 = vunpack.c.l.b16 %v4668
        %v6248 = vunpack.c.h.b16 %v4668
        %v6249 = vunpack.c.l.b16 %v4669
        %v6250 = vunpack.c.h.b16 %v4669
        %v6251 = vunpack.c.l.b16 %v4670
        %v6252 = vunpack.c.h.b16 %v4670
        %v6253 = vunpack.c.l.b16 %v4671
        %v6254 = vunpack.c.h.b16 %v4671
        %v6255 = vunpack.c.l.b16 %v4672
        %v6256 = vunpack.c.h.b16 %v4672
        %v6257 = vunpack.c.l.b16 %v4673
        %v6258 = vunpack.c.h.b16 %v4673
        %v6259 = vunpack.c.l.b16 %v4674
        %v6260 = vunpack.c.h.b16 %v4674
        %v6261 = vunpack.c.l.b16 %v4675
        %v6262 = vunpack.c.h.b16 %v4675
        %v6263 = vunpack.c.l.b16 %v4676
        %v6264 = vunpack.c.h.b16 %v4676
        %v6265 = vunpack.c.l.b16 %v4677
        %v6266 = vunpack.c.h.b16 %v4677
        %v6267 = vunpack.c.l.b16 %v4678
        %v6268 = vunpack.c.h.b16 %v4678
        %v6269 = vunpack.c.l.b16 %v4679
        %v6270 = vunpack.c.h.b16 %v4679
        %v6271 = vunpack.c.l.b16 %v4680
        %v6272 = vunpack.c.h.b16 %v4680
        %v6273 = vunpack.c.l.b16 %v4681
        %v6274 = vunpack.c.h.b16 %v4681
        %v6275 = vunpack.c.l.b16 %v4682
        %v6276 = vunpack.c.h.b16 %v4682
        %v6277 = vunpack.c.l.b16 %v4683
        %v6278 = vunpack.c.h.b16 %v4683
        %v6279 = vunpack.c.l.b16 %v4684
        %v6280 = vunpack.c.h.b16 %v4684
        %v6281 = vunpack.c.l.b16 %v4685
        %v6282 = vunpack.c.h.b16 %v4685
        %v6283 = vunpack.c.l.b16 %v4686
        %v6284 = vunpack.c.h.b16 %v4686
        %v6285 = vunpack.c.l.b16 %v4687
        %v6286 = vunpack.c.h.b16 %v4687
        %v6287 = vunpack.c.l.b16 %v4688
        %v6288 = vunpack.c.h.b16 %v4688
        %v6289 = vunpack.c.l.b16 %v4689
        %v6290 = vunpack.c.h.b16 %v4689
        %v6291 = vunpack.c.l.b16 %v4690
        %v6292 = vunpack.c.h.b16 %v4690
        %v6293 = vunpack.c.l.b16 %v4691
        %v6294 = vunpack.c.h.b16 %v4691
        %v6295 = vunpack.c.l.b16 %v4692
        %v6296 = vunpack.c.h.b16 %v4692
        %v6297 = vunpack.c.l.b16 %v4693
        %v6298 = vunpack.c.h.b16 %v4693
        %v6299 = vunpack.c.l.b16 %v4694
        %v6300 = vunpack.c.h.b16 %v4694
        %v6301 = vunpack.c.l.b16 %v4695
        %v6302 = vunpack.c.h.b16 %v4695
        %v6303 = vunpack.c.l.b16 %v4696
        %v6304 = vunpack.c.h.b16 %v4696
        %v6305 = vunpack.c.l.b16 %v4697
        %v6306 = vunpack.c.h.b16 %v4697
        %v6307 = vunpack.c.l.b16 %v4698
        %v6308 = vunpack.c.h.b16 %v4698
        %v6309 = vunpack.c.l.b16 %v4699
        %v6310 = vunpack.c.h.b16 %v4699
        %v6311 = vunpack.c.l.b16 %v4700
        %v6312 = vunpack.c.h.b16 %v4700
        %v6313 = vunpack.c.l.b16 %v4701
        %v6314 = vunpack.c.h.b16 %v4701
        %v6315 = vunpack.c.l.b16 %v4702
        %v6316 = vunpack.c.h.b16 %v4702
        %v6317 = vunpack.c.l.b16 %v4703
        %v6318 = vunpack.c.h.b16 %v4703
        %v6319 = vunpack.c.l.b16 %v4704
        %v6320 = vunpack.c.h.b16 %v4704
        %v6321 = vunpack.c.l.b16 %v4705
        %v6322 = vunpack.c.h.b16 %v4705
        %v6323 = vunpack.c.l.b16 %v4706
        %v6324 = vunpack.c.h.b16 %v4706
        %v6325 = vunpack.c.l.b16 %v4707
        %v6326 = vunpack.c.h.b16 %v4707
        %v6327 = vunpack.c.l.b16 %v4708
        %v6328 = vunpack.c.h.b16 %v4708
        %v6329 = vunpack.c.l.b16 %v4709
        %v6330 = vunpack.c.h.b16 %v4709
        %v6331 = vunpack.c.l.b16 %v4710
        %v6332 = vunpack.c.h.b16 %v4710
        %v6333 = vunpack.c.l.b16 %v4711
        %v6334 = vunpack.c.h.b16 %v4711
        %v6335 = vunpack.c.l.b16 %v4712
        %v6336 = vunpack.c.h.b16 %v4712
        %v6337 = vunpack.c.l.b16 %v4713
        %v6338 = vunpack.c.h.b16 %v4713
        %v6339 = vunpack.c.l.b16 %v4714
        %v6340 = vunpack.c.h.b16 %v4714
        %v6341 = vunpack.c.l.b16 %v4715
        %v6342 = vunpack.c.h.b16 %v4715
        %v6343 = vunpack.c.l.b16 %v4716
        %v6344 = vunpack.c.h.b16 %v4716
        %v6345 = vunpack.c.l.b16 %v4717
        %v6346 = vunpack.c.h.b16 %v4717
        %v6347 = vunpack.c.l.b16 %v4718
        %v6348 = vunpack.c.h.b16 %v4718
        %v6349 = vunpack.c.l.b16 %v4719
        %v6350 = vunpack.c.h.b16 %v4719
        %v6351 = vunpack.c.l.b16 %v4720
        %v6352 = vunpack.c.h.b16 %v4720
        %v6353 = vunpack.c.l.b16 %v4721
        %v6354 = vunpack.c.h.b16 %v4721
        %v6355 = vunpack.c.l.b16 %v4722
        %v6356 = vunpack.c.h.b16 %v4722
        %v6357 = vunpack.c.l.b16 %v4723
        %v6358 = vunpack.c.h.b16 %v4723
        %v6359 = vunpack.c.l.b16 %v4724
        %v6360 = vunpack.c.h.b16 %v4724
        %v6361 = vunpack.c.l.b16 %v4725
        %v6362 = vunpack.c.h.b16 %v4725
        %v6363 = vunpack.c.l.b16 %v4726
        %v6364 = vunpack.c.h.b16 %v4726
        %v6365 = vunpack.c.l.b16 %v4727
        %v6366 = vunpack.c.h.b16 %v4727
        %v6367 = vunpack.c.l.b16 %v4728
        %v6368 = vunpack.c.h.b16 %v4728
        %v6369 = vunpack.c.l.b16 %v4729
        %v6370 = vunpack.c.h.b16 %v4729
        %v6371 = vunpack.c.l.b16 %v4730
        %v6372 = vunpack.c.h.b16 %v4730
        %v6373 = vunpack.c.l.b16 %v4731
        %v6374 = vunpack.c.h.b16 %v4731
        %v6375 = vunpack.c.l.b16 %v4732
        %v6376 = vunpack.c.h.b16 %v4732
        %v6377 = vunpack.c.l.b16 %v4733
        %v6378 = vunpack.c.h.b16 %v4733
        %v6379 = vunpack.c.l.b16 %v4734
        %v6380 = vunpack.c.h.b16 %v4734
        %v6381 = vunpack.c.l.b16 %v4735
        %v6382 = vunpack.c.h.b16 %v4735
        %v6383 = vunpack.c.l.b16 %v4736
        %v6384 = vunpack.c.h.b16 %v4736
        %v6385 = vunpack.c.l.b16 %v4737
        %v6386 = vunpack.c.h.b16 %v4737
        %v6387 = vunpack.c.l.b16 %v4738
        %v6388 = vunpack.c.h.b16 %v4738
        %v6389 = vunpack.c.l.b16 %v4739
        %v6390 = vunpack.c.h.b16 %v4739
        %v6391 = vunpack.c.l.b16 %v4740
        %v6392 = vunpack.c.h.b16 %v4740
        %v6393 = vunpack.c.l.b16 %v4741
        %v6394 = vunpack.c.h.b16 %v4741
        %v6395 = vunpack.c.l.b16 %v4742
        %v6396 = vunpack.c.h.b16 %v4742
        %v6397 = vunpack.c.l.b16 %v4743
        %v6398 = vunpack.c.h.b16 %v4743
        %v6399 = vunpack.c.l.b16 %v4744
        %v6400 = vunpack.c.h.b16 %v4744
        %v6401 = vunpack.c.l.b16 %v4745
        %v6402 = vunpack.c.h.b16 %v4745
        %v6403 = vunpack.c.l.b16 %v4746
        %v6404 = vunpack.c.h.b16 %v4746
        %v6405 = vunpack.c.l.b16 %v4747
        %v6406 = vunpack.c.h.b16 %v4747
        %v6407 = vunpack.c.l.b16 %v4748
        %v6408 = vunpack.c.h.b16 %v4748
        %v6409 = vunpack.c.l.b16 %v4749
        %v6410 = vunpack.c.h.b16 %v4749
        %v6411 = vunpack.c.l.b16 %v4750
        %v6412 = vunpack.c.h.b16 %v4750
        %v6413 = vunpack.c.l.b16 %v4751
        %v6414 = vunpack.c.h.b16 %v4751
        %v6415 = vunpack.c.l.b16 %v4752
        %v6416 = vunpack.c.h.b16 %v4752
        %v6417 = vunpack.c.l.b16 %v4753
        %v6418 = vunpack.c.h.b16 %v4753
        %v6419 = vunpack.c.l.b16 %v4754
        %v6420 = vunpack.c.h.b16 %v4754
        %v6421 = vunpack.c.l.b16 %v4755
        %v6422 = vunpack.c.h.b16 %v4755
        %v6423 = vunpack.c.l.b16 %v4756
        %v6424 = vunpack.c.h.b16 %v4756
        %v6425 = vunpack.c.l.b16 %v4757
        %v6426 = vunpack.c.h.b16 %v4757
        %v6427 = vunpack.c.l.b16 %v4758
        %v6428 = vunpack.c.h.b16 %v4758
        %v6429 = vunpack.c.l.b16 %v4759
        %v6430 = vunpack.c.h.b16 %v4759
        %v6431 = vunpack.c.l.b16 %v4760
        %v6432 = vunpack.c.h.b16 %v4760
        %v6433 = vunpack.c.l.b16 %v4761
        %v6434 = vunpack.c.h.b16 %v4761
        %v6435 = vunpack.c.l.b16 %v4762
        %v6436 = vunpack.c.h.b16 %v4762
        %v6437 = vunpack.c.l.b16 %v4763
        %v6438 = vunpack.c.h.b16 %v4763
        %v6439 = vunpack.c.l.b16 %v4764
        %v6440 = vunpack.c.h.b16 %v4764
        %v6441 = vunpack.c.l.b16 %v4765
        %v6442 = vunpack.c.h.b16 %v4765
        %v6443 = vunpack.c.l.b16 %v4766
        %v6444 = vunpack.c.h.b16 %v4766
        %v6445 = vunpack.c.l.b16 %v4767
        %v6446 = vunpack.c.h.b16 %v4767
        %v6447 = vunpack.c.l.b16 %v4768
        %v6448 = vunpack.c.h.b16 %v4768
        %v6449 = vunpack.c.l.b16 %v4769
        %v6450 = vunpack.c.h.b16 %v4769
        %v6451 = vunpack.c.l.b16 %v4770
        %v6452 = vunpack.c.h.b16 %v4770
        %v6453 = vunpack.c.l.b16 %v4771
        %v6454 = vunpack.c.h.b16 %v4771
        %v6455 = vunpack.c.l.b16 %v4772
        %v6456 = vunpack.c.h.b16 %v4772
        %v6457 = vunpack.c.l.b16 %v4773
        %v6458 = vunpack.c.h.b16 %v4773
        %v6459 = vunpack.c.l.b16 %v4774
        %v6460 = vunpack.c.h.b16 %v4774
        %v6461 = vunpack.c.l.b16 %v4775
        %v6462 = vunpack.c.h.b16 %v4775
        %v6463 = vunpack.c.l.b16 %v4776
        %v6464 = vunpack.c.h.b16 %v4776
        %v6465 = vunpack.c.l.b16 %v4777
        %v6466 = vunpack.c.h.b16 %v4777
        %v6467 = vunpack.c.l.b16 %v4778
        %v6468 = vunpack.c.h.b16 %v4778
        %v6469 = vunpack.c.l.b16 %v4779
        %v6470 = vunpack.c.h.b16 %v4779
        %v6471 = vunpack.c.l.b16 %v4780
        %v6472 = vunpack.c.h.b16 %v4780
        %v6473 = vunpack.c.l.b16 %v4781
        %v6474 = vunpack.c.h.b16 %v4781
        %v6475 = vunpack.c.l.b16 %v4782
        %v6476 = vunpack.c.h.b16 %v4782
        %v6477 = vunpack.c.l.b16 %v4783
        %v6478 = vunpack.c.h.b16 %v4783
        %v6479 = vunpack.c.l.b16 %v4784
        %v6480 = vunpack.c.h.b16 %v4784
        %v6481 = vunpack.c.l.b16 %v4785
        %v6482 = vunpack.c.h.b16 %v4785
        %v6483 = vunpack.c.l.b16 %v4786
        %v6484 = vunpack.c.h.b16 %v4786
        %v6485 = vunpack.c.l.b16 %v4787
        %v6486 = vunpack.c.h.b16 %v4787
        %v6487 = vunpack.c.l.b16 %v4788
        %v6488 = vunpack.c.h.b16 %v4788
        %v6489 = vunpack.c.l.b16 %v4789
        %v6490 = vunpack.c.h.b16 %v4789
        %v6491 = vunpack.c.l.b16 %v4790
        %v6492 = vunpack.c.h.b16 %v4790
        %v6493 = vpack.c.b16 %v5471, %v5469
        %v6494 = vpack.c.b16 %v5472, %v5470
        %v6495 = vpack.c.b16 %v5475, %v5473
        %v6496 = vpack.c.b16 %v5476, %v5474
        %v6497 = vpack.c.b16 %v5479, %v5477
        %v6498 = vpack.c.b16 %v5480, %v5478
        %v6499 = vpack.c.b16 %v5483, %v5481
        %v6500 = vpack.c.b16 %v5484, %v5482
        %v6501 = vpack.c.b16 %v5487, %v5485
        %v6502 = vpack.c.b16 %v5488, %v5486
        %v6503 = vpack.c.b16 %v5491, %v5489
        %v6504 = vpack.c.b16 %v5492, %v5490
        %v6505 = vpack.c.b16 %v5495, %v5493
        %v6506 = vpack.c.b16 %v5496, %v5494
        %v6507 = vpack.c.b16 %v5499, %v5497
        %v6508 = vpack.c.b16 %v5500, %v5498
        %v6509 = vpack.c.b16 %v5503, %v5501
        %v6510 = vpack.c.b16 %v5504, %v5502
        %v6511 = vpack.c.b16 %v5507, %v5505
        %v6512 = vpack.c.b16 %v5508, %v5506
        %v6513 = vpack.c.b16 %v5511, %v5509
        %v6514 = vpack.c.b16 %v5512, %v5510
        %v6515 = vpack.c.b16 %v5515, %v5513
        %v6516 = vpack.c.b16 %v5516, %v5514
        %v6517 = vpack.c.b16 %v5519, %v5517
        %v6518 = vpack.c.b16 %v5520, %v5518
        %v6519 = vpack.c.b16 %v5523, %v5521
        %v6520 = vpack.c.b16 %v5524, %v5522
        %v6521 = vpack.c.b16 %v5527, %v5525
        %v6522 = vpack.c.b16 %v5528, %v5526
        %v6523 = vpack.c.b16 %v5531, %v5529
        %v6524 = vpack.c.b16 %v5532, %v5530
        %v6525 = vpack.c.b16 %v5535, %v5533
        %v6526 = vpack.c.b16 %v5536, %v5534
        %v6527 = vpack.c.b16 %v5539, %v5537
        %v6528 = vpack.c.b16 %v5540, %v5538
        %v6529 = vpack.c.b16 %v5543, %v5541
        %v6530 = vpack.c.b16 %v5544, %v5542
        %v6531 = vpack.c.b16 %v5547, %v5545
        %v6532 = vpack.c.b16 %v5548, %v5546
        %v6533 = vpack.c.b16 %v5551, %v5549
        %v6534 = vpack.c.b16 %v5552, %v5550
        %v6535 = vpack.c.b16 %v5555, %v5553
        %v6536 = vpack.c.b16 %v5556, %v5554
        %v6537 = vpack.c.b16 %v5559, %v5557
        %v6538 = vpack.c.b16 %v5560, %v5558
        %v6539 = vpack.c.b16 %v5563, %v5561
        %v6540 = vpack.c.b16 %v5564, %v5562
        %v6541 = vpack.c.b16 %v5567, %v5565
        %v6542 = vpack.c.b16 %v5568, %v5566
        %v6543 = vpack.c.b16 %v5571, %v5569
        %v6544 = vpack.c.b16 %v5572, %v5570
        %v6545 = vpack.c.b16 %v5575, %v5573
        %v6546 = vpack.c.b16 %v5576, %v5574
        %v6547 = vpack.c.b16 %v5579, %v5577
        %v6548 = vpack.c.b16 %v5580, %v5578
        %v6549 = vpack.c.b16 %v5583, %v5581
        %v6550 = vpack.c.b16 %v5584, %v5582
        %v6551 = vpack.c.b16 %v5587, %v5585
        %v6552 = vpack.c.b16 %v5588, %v5586
        %v6553 = vpack.c.b16 %v5591, %v5589
        %v6554 = vpack.c.b16 %v5592, %v5590
        %v6555 = vpack.c.b16 %v5595, %v5593
        %v6556 = vpack.c.b16 %v5596, %v5594
        %v6557 = vpack.c.b16 %v5599, %v5597
        %v6558 = vpack.c.b16 %v5600, %v5598
        %v6559 = vpack.c.b16 %v5603, %v5601
        %v6560 = vpack.c.b16 %v5604, %v5602
        %v6561 = vpack.c.b16 %v5607, %v5605
        %v6562 = vpack.c.b16 %v5608, %v5606
        %v6563 = vpack.c.b16 %v5611, %v5609
        %v6564 = vpack.c.b16 %v5612, %v5610
        %v6565 = vpack.c.b16 %v5615, %v5613
        %v6566 = vpack.c.b16 %v5616, %v5614
        %v6567 = vpack.c.b16 %v5619, %v5617
        %v6568 = vpack.c.b16 %v5620, %v5618
        %v6569 = vpack.c.b16 %v5623, %v5621
        %v6570 = vpack.c.b16 %v5624, %v5622
        %v6571 = vpack.c.b16 %v5627, %v5625
        %v6572 = vpack.c.b16 %v5628, %v5626
        %v6573 = vpack.c.b16 %v5631, %v5629
        %v6574 = vpack.c.b16 %v5632, %v5630
        %v6575 = vpack.c.b16 %v5635, %v5633
        %v6576 = vpack.c.b16 %v5636, %v5634
        %v6577 = vpack.c.b16 %v5639, %v5637
        %v6578 = vpack.c.b16 %v5640, %v5638
        %v6579 = vpack.c.b16 %v5643, %v5641
        %v6580 = vpack.c.b16 %v5644, %v5642
        %v6581 = vpack.c.b16 %v5647, %v5645
        %v6582 = vpack.c.b16 %v5648, %v5646
        %v6583 = vpack.c.b16 %v5651, %v5649
        %v6584 = vpack.c.b16 %v5652, %v5650
        %v6585 = vpack.c.b16 %v5655, %v5653
        %v6586 = vpack.c.b16 %v5656, %v5654
        %v6587 = vpack.c.b16 %v5659, %v5657
        %v6588 = vpack.c.b16 %v5660, %v5658
        %v6589 = vpack.c.b16 %v5663, %v5661
        %v6590 = vpack.c.b16 %v5664, %v5662
        %v6591 = vpack.c.b16 %v5667, %v5665
        %v6592 = vpack.c.b16 %v5668, %v5666
        %v6593 = vpack.c.b16 %v5671, %v5669
        %v6594 = vpack.c.b16 %v5672, %v5670
        %v6595 = vpack.c.b16 %v5675, %v5673
        %v6596 = vpack.c.b16 %v5676, %v5674
        %v6597 = vpack.c.b16 %v5679, %v5677
        %v6598 = vpack.c.b16 %v5680, %v5678
        %v6599 = vpack.c.b16 %v5683, %v5681
        %v6600 = vpack.c.b16 %v5684, %v5682
        %v6601 = vpack.c.b16 %v5687, %v5685
        %v6602 = vpack.c.b16 %v5688, %v5686
        %v6603 = vpack.c.b16 %v5691, %v5689
        %v6604 = vpack.c.b16 %v5692, %v5690
        %v6605 = vpack.c.b16 %v5695, %v5693
        %v6606 = vpack.c.b16 %v5696, %v5694
        %v6607 = vpack.c.b16 %v5699, %v5697
        %v6608 = vpack.c.b16 %v5700, %v5698
        %v6609 = vpack.c.b16 %v5703, %v5701
        %v6610 = vpack.c.b16 %v5704, %v5702
        %v6611 = vpack.c.b16 %v5707, %v5705
        %v6612 = vpack.c.b16 %v5708, %v5706
        %v6613 = vpack.c.b16 %v5711, %v5709
        %v6614 = vpack.c.b16 %v5712, %v5710
        %v6615 = vpack.c.b16 %v5715, %v5713
        %v6616 = vpack.c.b16 %v5716, %v5714
        %v6617 = vpack.c.b16 %v5719, %v5717
        %v6618 = vpack.c.b16 %v5720, %v5718
        %v6619 = vpack.c.b16 %v5723, %v5721
        %v6620 = vpack.c.b16 %v5724, %v5722
        %v6621 = vpack.c.b16 %v5727, %v5725
        %v6622 = vpack.c.b16 %v5728, %v5726
        %v6623 = vpack.c.b16 %v5731, %v5729
        %v6624 = vpack.c.b16 %v5732, %v5730
        %v6625 = vpack.c.b16 %v5735, %v5733
        %v6626 = vpack.c.b16 %v5736, %v5734
        %v6627 = vpack.c.b16 %v5739, %v5737
        %v6628 = vpack.c.b16 %v5740, %v5738
        %v6629 = vpack.c.b16 %v5743, %v5741
        %v6630 = vpack.c.b16 %v5744, %v5742
        %v6631 = vpack.c.b16 %v5747, %v5745
        %v6632 = vpack.c.b16 %v5748, %v5746
        %v6633 = vpack.c.b16 %v5751, %v5749
        %v6634 = vpack.c.b16 %v5752, %v5750
        %v6635 = vpack.c.b16 %v5755, %v5753
        %v6636 = vpack.c.b16 %v5756, %v5754
        %v6637 = vpack.c.b16 %v5759, %v5757
        %v6638 = vpack.c.b16 %v5760, %v5758
        %v6639 = vpack.c.b16 %v5763, %v5761
        %v6640 = vpack.c.b16 %v5764, %v5762
        %v6641 = vpack.c.b16 %v5767, %v5765
        %v6642 = vpack.c.b16 %v5768, %v5766
        %v6643 = vpack.c.b16 %v5771, %v5769
        %v6644 = vpack.c.b16 %v5772, %v5770
        %v6645 = vpack.c.b16 %v5775, %v5773
        %v6646 = vpack.c.b16 %v5776, %v5774
        %v6647 = vpack.c.b16 %v5779, %v5777
        %v6648 = vpack.c.b16 %v5780, %v5778
        %v6649 = vpack.c.b16 %v5783, %v5781
        %v6650 = vpack.c.b16 %v5784, %v5782
        %v6651 = vpack.c.b16 %v5787, %v5785
        %v6652 = vpack.c.b16 %v5788, %v5786
        %v6653 = vpack.c.b16 %v5791, %v5789
        %v6654 = vpack.c.b16 %v5792, %v5790
        %v6655 = vpack.c.b16 %v5795, %v5793
        %v6656 = vpack.c.b16 %v5796, %v5794
        %v6657 = vpack.c.b16 %v5799, %v5797
        %v6658 = vpack.c.b16 %v5800, %v5798
        %v6659 = vpack.c.b16 %v5803, %v5801
        %v6660 = vpack.c.b16 %v5804, %v5802
        %v6661 = vpack.c.b16 %v5807, %v5805
        %v6662 = vpack.c.b16 %v5808, %v5806
        %v6663 = vpack.c.b16 %v5811, %v5809
        %v6664 = vpack.c.b16 %v5812, %v5810
        %v6665 = vpack.c.b16 %v5815, %v5813
        %v6666 = vpack.c.b16 %v5816, %v5814
        %v6667 = vpack.c.b16 %v5819, %v5817
        %v6668 = vpack.c.b16 %v5820, %v5818
        %v6669 = vpack.c.b16 %v5823, %v5821
        %v6670 = vpack.c.b16 %v5824, %v5822
        %v6671 = vpack.c.b16 %v5827, %v5825
        %v6672 = vpack.c.b16 %v5828, %v5826
        %v6673 = vpack.c.b16 %v5831, %v5829
        %v6674 = vpack.c.b16 %v5832, %v5830
        %v6675 = vpack.c.b16 %v5835, %v5833
        %v6676 = vpack.c.b16 %v5836, %v5834
        %v6677 = vpack.c.b16 %v5839, %v5837
        %v6678 = vpack.c.b16 %v5840, %v5838
        %v6679 = vpack.c.b16 %v5843, %v5841
        %v6680 = vpack.c.b16 %v5844, %v5842
        %v6681 = vpack.c.b16 %v5847, %v5845
        %v6682 = vpack.c.b16 %v5848, %v5846
        %v6683 = vpack.c.b16 %v5851, %v5849
        %v6684 = vpack.c.b16 %v5852, %v5850
        %v6685 = vpack.c.b16 %v5855, %v5853
        %v6686 = vpack.c.b16 %v5856, %v5854
        %v6687 = vpack.c.b16 %v5859, %v5857
        %v6688 = vpack.c.b16 %v5860, %v5858
        %v6689 = vpack.c.b16 %v5863, %v5861
        %v6690 = vpack.c.b16 %v5864, %v5862
        %v6691 = vpack.c.b16 %v5867, %v5865
        %v6692 = vpack.c.b16 %v5868, %v5866
        %v6693 = vpack.c.b16 %v5871, %v5869
        %v6694 = vpack.c.b16 %v5872, %v5870
        %v6695 = vpack.c.b16 %v5875, %v5873
        %v6696 = vpack.c.b16 %v5876, %v5874
        %v6697 = vpack.c.b16 %v5879, %v5877
        %v6698 = vpack.c.b16 %v5880, %v5878
        %v6699 = vpack.c.b16 %v5883, %v5881
        %v6700 = vpack.c.b16 %v5884, %v5882
        %v6701 = vpack.c.b16 %v5887, %v5885
        %v6702 = vpack.c.b16 %v5888, %v5886
        %v6703 = vpack.c.b16 %v5891, %v5889
        %v6704 = vpack.c.b16 %v5892, %v5890
        %v6705 = vpack.c.b16 %v5895, %v5893
        %v6706 = vpack.c.b16 %v5896, %v5894
        %v6707 = vpack.c.b16 %v5899, %v5897
        %v6708 = vpack.c.b16 %v5900, %v5898
        %v6709 = vpack.c.b16 %v5903, %v5901
        %v6710 = vpack.c.b16 %v5904, %v5902
        %v6711 = vpack.c.b16 %v5907, %v5905
        %v6712 = vpack.c.b16 %v5908, %v5906
        %v6713 = vpack.c.b16 %v5911, %v5909
        %v6714 = vpack.c.b16 %v5912, %v5910
        %v6715 = vpack.c.b16 %v5915, %v5913
        %v6716 = vpack.c.b16 %v5916, %v5914
        %v6717 = vpack.c.b16 %v5919, %v5917
        %v6718 = vpack.c.b16 %v5920, %v5918
        %v6719 = vpack.c.b16 %v5923, %v5921
        %v6720 = vpack.c.b16 %v5924, %v5922
        %v6721 = vpack.c.b16 %v5927, %v5925
        %v6722 = vpack.c.b16 %v5928, %v5926
        %v6723 = vpack.c.b16 %v5931, %v5929
        %v6724 = vpack.c.b16 %v5932, %v5930
        %v6725 = vpack.c.b16 %v5935, %v5933
        %v6726 = vpack.c.b16 %v5936, %v5934
        %v6727 = vpack.c.b16 %v5939, %v5937
        %v6728 = vpack.c.b16 %v5940, %v5938
        %v6729 = vpack.c.b16 %v5943, %v5941
        %v6730 = vpack.c.b16 %v5944, %v5942
        %v6731 = vpack.c.b16 %v5947, %v5945
        %v6732 = vpack.c.b16 %v5948, %v5946
        %v6733 = vpack.c.b16 %v5951, %v5949
        %v6734 = vpack.c.b16 %v5952, %v5950
        %v6735 = vpack.c.b16 %v5955, %v5953
        %v6736 = vpack.c.b16 %v5956, %v5954
        %v6737 = vpack.c.b16 %v5959, %v5957
        %v6738 = vpack.c.b16 %v5960, %v5958
        %v6739 = vpack.c.b16 %v5963, %v5961
        %v6740 = vpack.c.b16 %v5964, %v5962
        %v6741 = vpack.c.b16 %v5967, %v5965
        %v6742 = vpack.c.b16 %v5968, %v5966
        %v6743 = vpack.c.b16 %v5971, %v5969
        %v6744 = vpack.c.b16 %v5972, %v5970
        %v6745 = vpack.c.b16 %v5975, %v5973
        %v6746 = vpack.c.b16 %v5976, %v5974
        %v6747 = vpack.c.b16 %v5979, %v5977
        %v6748 = vpack.c.b16 %v5980, %v5978
        %v6749 = vpack.c.b16 %v5983, %v5981
        %v6750 = vpack.c.b16 %v5984, %v5982
        %v6751 = vpack.c.b16 %v5987, %v5985
        %v6752 = vpack.c.b16 %v5988, %v5986
        %v6753 = vpack.c.b16 %v5991, %v5989
        %v6754 = vpack.c.b16 %v5992, %v5990
        %v6755 = vpack.c.b16 %v5995, %v5993
        %v6756 = vpack.c.b16 %v5996, %v5994
        %v6757 = vpack.c.b16 %v5999, %v5997
        %v6758 = vpack.c.b16 %v6000, %v5998
        %v6759 = vpack.c.b16 %v6003, %v6001
        %v6760 = vpack.c.b16 %v6004, %v6002
        %v6761 = vpack.c.b16 %v6007, %v6005
        %v6762 = vpack.c.b16 %v6008, %v6006
        %v6763 = vpack.c.b16 %v6011, %v6009
        %v6764 = vpack.c.b16 %v6012, %v6010
        %v6765 = vpack.c.b16 %v6015, %v6013
        %v6766 = vpack.c.b16 %v6016, %v6014
        %v6767 = vpack.c.b16 %v6019, %v6017
        %v6768 = vpack.c.b16 %v6020, %v6018
        %v6769 = vpack.c.b16 %v6023, %v6021
        %v6770 = vpack.c.b16 %v6024, %v6022
        %v6771 = vpack.c.b16 %v6027, %v6025
        %v6772 = vpack.c.b16 %v6028, %v6026
        %v6773 = vpack.c.b16 %v6031, %v6029
        %v6774 = vpack.c.b16 %v6032, %v6030
        %v6775 = vpack.c.b16 %v6035, %v6033
        %v6776 = vpack.c.b16 %v6036, %v6034
        %v6777 = vpack.c.b16 %v6039, %v6037
        %v6778 = vpack.c.b16 %v6040, %v6038
        %v6779 = vpack.c.b16 %v6043, %v6041
        %v6780 = vpack.c.b16 %v6044, %v6042
        %v6781 = vpack.c.b16 %v6047, %v6045
        %v6782 = vpack.c.b16 %v6048, %v6046
        %v6783 = vpack.c.b16 %v6051, %v6049
        %v6784 = vpack.c.b16 %v6052, %v6050
        %v6785 = vpack.c.b16 %v6055, %v6053
        %v6786 = vpack.c.b16 %v6056, %v6054
        %v6787 = vpack.c.b16 %v6059, %v6057
        %v6788 = vpack.c.b16 %v6060, %v6058
        %v6789 = vpack.c.b16 %v6063, %v6061
        %v6790 = vpack.c.b16 %v6064, %v6062
        %v6791 = vpack.c.b16 %v6067, %v6065
        %v6792 = vpack.c.b16 %v6068, %v6066
        %v6793 = vpack.c.b16 %v6071, %v6069
        %v6794 = vpack.c.b16 %v6072, %v6070
        %v6795 = vpack.c.b16 %v6075, %v6073
        %v6796 = vpack.c.b16 %v6076, %v6074
        %v6797 = vpack.c.b16 %v6079, %v6077
        %v6798 = vpack.c.b16 %v6080, %v6078
        %v6799 = vpack.c.b16 %v6083, %v6081
        %v6800 = vpack.c.b16 %v6084, %v6082
        %v6801 = vpack.c.b16 %v6087, %v6085
        %v6802 = vpack.c.b16 %v6088, %v6086
        %v6803 = vpack.c.b16 %v6091, %v6089
        %v6804 = vpack.c.b16 %v6092, %v6090
        %v6805 = vpack.c.b16 %v6095, %v6093
        %v6806 = vpack.c.b16 %v6096, %v6094
        %v6807 = vpack.c.b16 %v6099, %v6097
        %v6808 = vpack.c.b16 %v6100, %v6098
        %v6809 = vpack.c.b16 %v6103, %v6101
        %v6810 = vpack.c.b16 %v6104, %v6102
        %v6811 = vpack.c.b16 %v6107, %v6105
        %v6812 = vpack.c.b16 %v6108, %v6106
        %v6813 = vpack.c.b16 %v6111, %v6109
        %v6814 = vpack.c.b16 %v6112, %v6110
        %v6815 = vpack.c.b16 %v6115, %v6113
        %v6816 = vpack.c.b16 %v6116, %v6114
        %v6817 = vpack.c.b16 %v6119, %v6117
        %v6818 = vpack.c.b16 %v6120, %v6118
        %v6819 = vpack.c.b16 %v6123, %v6121
        %v6820 = vpack.c.b16 %v6124, %v6122
        %v6821 = vpack.c.b16 %v6127, %v6125
        %v6822 = vpack.c.b16 %v6128, %v6126
        %v6823 = vpack.c.b16 %v6131, %v6129
        %v6824 = vpack.c.b16 %v6132, %v6130
        %v6825 = vpack.c.b16 %v6135, %v6133
        %v6826 = vpack.c.b16 %v6136, %v6134
        %v6827 = vpack.c.b16 %v6139, %v6137
        %v6828 = vpack.c.b16 %v6140, %v6138
        %v6829 = vpack.c.b16 %v6143, %v6141
        %v6830 = vpack.c.b16 %v6144, %v6142
        %v6831 = vpack.c.b16 %v6147, %v6145
        %v6832 = vpack.c.b16 %v6148, %v6146
        %v6833 = vpack.c.b16 %v6151, %v6149
        %v6834 = vpack.c.b16 %v6152, %v6150
        %v6835 = vpack.c.b16 %v6155, %v6153
        %v6836 = vpack.c.b16 %v6156, %v6154
        %v6837 = vpack.c.b16 %v6159, %v6157
        %v6838 = vpack.c.b16 %v6160, %v6158
        %v6839 = vpack.c.b16 %v6163, %v6161
        %v6840 = vpack.c.b16 %v6164, %v6162
        %v6841 = vpack.c.b16 %v6167, %v6165
        %v6842 = vpack.c.b16 %v6168, %v6166
        %v6843 = vpack.c.b16 %v6171, %v6169
        %v6844 = vpack.c.b16 %v6172, %v6170
        %v6845 = vpack.c.b16 %v6175, %v6173
        %v6846 = vpack.c.b16 %v6176, %v6174
        %v6847 = vpack.c.b16 %v6179, %v6177
        %v6848 = vpack.c.b16 %v6180, %v6178
        %v6849 = vpack.c.b16 %v6183, %v6181
        %v6850 = vpack.c.b16 %v6184, %v6182
        %v6851 = vpack.c.b16 %v6187, %v6185
        %v6852 = vpack.c.b16 %v6188, %v6186
        %v6853 = vpack.c.b16 %v6191, %v6189
        %v6854 = vpack.c.b16 %v6192, %v6190
        %v6855 = vpack.c.b16 %v6195, %v6193
        %v6856 = vpack.c.b16 %v6196, %v6194
        %v6857 = vpack.c.b16 %v6199, %v6197
        %v6858 = vpack.c.b16 %v6200, %v6198
        %v6859 = vpack.c.b16 %v6203, %v6201
        %v6860 = vpack.c.b16 %v6204, %v6202
        %v6861 = vpack.c.b16 %v6207, %v6205
        %v6862 = vpack.c.b16 %v6208, %v6206
        %v6863 = vpack.c.b16 %v6211, %v6209
        %v6864 = vpack.c.b16 %v6212, %v6210
        %v6865 = vpack.c.b16 %v6215, %v6213
        %v6866 = vpack.c.b16 %v6216, %v6214
        %v6867 = vpack.c.b16 %v6219, %v6217
        %v6868 = vpack.c.b16 %v6220, %v6218
        %v6869 = vpack.c.b16 %v6223, %v6221
        %v6870 = vpack.c.b16 %v6224, %v6222
        %v6871 = vpack.c.b16 %v6227, %v6225
        %v6872 = vpack.c.b16 %v6228, %v6226
        %v6873 = vpack.c.b16 %v6231, %v6229
        %v6874 = vpack.c.b16 %v6232, %v6230
        %v6875 = vpack.c.b16 %v6235, %v6233
        %v6876 = vpack.c.b16 %v6236, %v6234
        %v6877 = vpack.c.b16 %v6239, %v6237
        %v6878 = vpack.c.b16 %v6240, %v6238
        %v6879 = vpack.c.b16 %v6243, %v6241
        %v6880 = vpack.c.b16 %v6244, %v6242
        %v6881 = vpack.c.b16 %v6247, %v6245
        %v6882 = vpack.c.b16 %v6248, %v6246
        %v6883 = vpack.c.b16 %v6251, %v6249
        %v6884 = vpack.c.b16 %v6252, %v6250
        %v6885 = vpack.c.b16 %v6255, %v6253
        %v6886 = vpack.c.b16 %v6256, %v6254
        %v6887 = vpack.c.b16 %v6259, %v6257
        %v6888 = vpack.c.b16 %v6260, %v6258
        %v6889 = vpack.c.b16 %v6263, %v6261
        %v6890 = vpack.c.b16 %v6264, %v6262
        %v6891 = vpack.c.b16 %v6267, %v6265
        %v6892 = vpack.c.b16 %v6268, %v6266
        %v6893 = vpack.c.b16 %v6271, %v6269
        %v6894 = vpack.c.b16 %v6272, %v6270
        %v6895 = vpack.c.b16 %v6275, %v6273
        %v6896 = vpack.c.b16 %v6276, %v6274
        %v6897 = vpack.c.b16 %v6279, %v6277
        %v6898 = vpack.c.b16 %v6280, %v6278
        %v6899 = vpack.c.b16 %v6283, %v6281
        %v6900 = vpack.c.b16 %v6284, %v6282
        %v6901 = vpack.c.b16 %v6287, %v6285
        %v6902 = vpack.c.b16 %v6288, %v6286
        %v6903 = vpack.c.b16 %v6291, %v6289
        %v6904 = vpack.c.b16 %v6292, %v6290
        %v6905 = vpack.c.b16 %v6295, %v6293
        %v6906 = vpack.c.b16 %v6296, %v6294
        %v6907 = vpack.c.b16 %v6299, %v6297
        %v6908 = vpack.c.b16 %v6300, %v6298
        %v6909 = vpack.c.b16 %v6303, %v6301
        %v6910 = vpack.c.b16 %v6304, %v6302
        %v6911 = vpack.c.b16 %v6307, %v6305
        %v6912 = vpack.c.b16 %v6308, %v6306
        %v6913 = vpack.c.b16 %v6311, %v6309
        %v6914 = vpack.c.b16 %v6312, %v6310
        %v6915 = vpack.c.b16 %v6315, %v6313
        %v6916 = vpack.c.b16 %v6316, %v6314
        %v6917 = vpack.c.b16 %v6319, %v6317
        %v6918 = vpack.c.b16 %v6320, %v6318
        %v6919 = vpack.c.b16 %v6323, %v6321
        %v6920 = vpack.c.b16 %v6324, %v6322
        %v6921 = vpack.c.b16 %v6327, %v6325
        %v6922 = vpack.c.b16 %v6328, %v6326
        %v6923 = vpack.c.b16 %v6331, %v6329
        %v6924 = vpack.c.b16 %v6332, %v6330
        %v6925 = vpack.c.b16 %v6335, %v6333
        %v6926 = vpack.c.b16 %v6336, %v6334
        %v6927 = vpack.c.b16 %v6339, %v6337
        %v6928 = vpack.c.b16 %v6340, %v6338
        %v6929 = vpack.c.b16 %v6343, %v6341
        %v6930 = vpack.c.b16 %v6344, %v6342
        %v6931 = vpack.c.b16 %v6347, %v6345
        %v6932 = vpack.c.b16 %v6348, %v6346
        %v6933 = vpack.c.b16 %v6351, %v6349
        %v6934 = vpack.c.b16 %v6352, %v6350
        %v6935 = vpack.c.b16 %v6355, %v6353
        %v6936 = vpack.c.b16 %v6356, %v6354
        %v6937 = vpack.c.b16 %v6359, %v6357
        %v6938 = vpack.c.b16 %v6360, %v6358
        %v6939 = vpack.c.b16 %v6363, %v6361
        %v6940 = vpack.c.b16 %v6364, %v6362
        %v6941 = vpack.c.b16 %v6367, %v6365
        %v6942 = vpack.c.b16 %v6368, %v6366
        %v6943 = vpack.c.b16 %v6371, %v6369
        %v6944 = vpack.c.b16 %v6372, %v6370
        %v6945 = vpack.c.b16 %v6375, %v6373
        %v6946 = vpack.c.b16 %v6376, %v6374
        %v6947 = vpack.c.b16 %v6379, %v6377
        %v6948 = vpack.c.b16 %v6380, %v6378
        %v6949 = vpack.c.b16 %v6383, %v6381
        %v6950 = vpack.c.b16 %v6384, %v6382
        %v6951 = vpack.c.b16 %v6387, %v6385
        %v6952 = vpack.c.b16 %v6388, %v6386
        %v6953 = vpack.c.b16 %v6391, %v6389
        %v6954 = vpack.c.b16 %v6392, %v6390
        %v6955 = vpack.c.b16 %v6395, %v6393
        %v6956 = vpack.c.b16 %v6396, %v6394
        %v6957 = vpack.c.b16 %v6399, %v6397
        %v6958 = vpack.c.b16 %v6400, %v6398
        %v6959 = vpack.c.b16 %v6403, %v6401
        %v6960 = vpack.c.b16 %v6404, %v6402
        %v6961 = vpack.c.b16 %v6407, %v6405
        %v6962 = vpack.c.b16 %v6408, %v6406
        %v6963 = vpack.c.b16 %v6411, %v6409
        %v6964 = vpack.c.b16 %v6412, %v6410
        %v6965 = vpack.c.b16 %v6415, %v6413
        %v6966 = vpack.c.b16 %v6416, %v6414
        %v6967 = vpack.c.b16 %v6419, %v6417
        %v6968 = vpack.c.b16 %v6420, %v6418
        %v6969 = vpack.c.b16 %v6423, %v6421
        %v6970 = vpack.c.b16 %v6424, %v6422
        %v6971 = vpack.c.b16 %v6427, %v6425
        %v6972 = vpack.c.b16 %v6428, %v6426
        %v6973 = vpack.c.b16 %v6431, %v6429
        %v6974 = vpack.c.b16 %v6432, %v6430
        %v6975 = vpack.c.b16 %v6435, %v6433
        %v6976 = vpack.c.b16 %v6436, %v6434
        %v6977 = vpack.c.b16 %v6439, %v6437
        %v6978 = vpack.c.b16 %v6440, %v6438
        %v6979 = vpack.c.b16 %v6443, %v6441
        %v6980 = vpack.c.b16 %v6444, %v6442
        %v6981 = vpack.c.b16 %v6447, %v6445
        %v6982 = vpack.c.b16 %v6448, %v6446
        %v6983 = vpack.c.b16 %v6451, %v6449
        %v6984 = vpack.c.b16 %v6452, %v6450
        %v6985 = vpack.c.b16 %v6455, %v6453
        %v6986 = vpack.c.b16 %v6456, %v6454
        %v6987 = vpack.c.b16 %v6459, %v6457
        %v6988 = vpack.c.b16 %v6460, %v6458
        %v6989 = vpack.c.b16 %v6463, %v6461
        %v6990 = vpack.c.b16 %v6464, %v6462
        %v6991 = vpack.c.b16 %v6467, %v6465
        %v6992 = vpack.c.b16 %v6468, %v6466
        %v6993 = vpack.c.b16 %v6471, %v6469
        %v6994 = vpack.c.b16 %v6472, %v6470
        %v6995 = vpack.c.b16 %v6475, %v6473
        %v6996 = vpack.c.b16 %v6476, %v6474
        %v6997 = vpack.c.b16 %v6479, %v6477
        %v6998 = vpack.c.b16 %v6480, %v6478
        %v6999 = vpack.c.b16 %v6483, %v6481
        %v7000 = vpack.c.b16 %v6484, %v6482
        %v7001 = vpack.c.b16 %v6487, %v6485
        %v7002 = vpack.c.b16 %v6488, %v6486
        %v7003 = vpack.c.b16 %v6491, %v6489
        %v7004 = vpack.c.b16 %v6492, %v6490
        %7517 = vmatpush.bf16.msra.mxu0 %v6507
        %7518 = vmatpush.bf16.msra.mxu0 %v6505
        %7519 = vmatpush.bf16.msra.mxu0 %v6503
        %7520 = vmatpush.bf16.msra.mxu0 %v6501
        %7521 = vmatpush.bf16.msra.mxu0 %v6499
        %7522 = vmatpush.bf16.msra.mxu0 %v6497
        %7523 = vmatpush.bf16.msra.mxu0 %v6495
        %7524 = vmatpush.bf16.msra.mxu0 %v6493
        %7525 = vmatmul.bf16.gmra.mxu0 %v4893
        %v7526 = vpop.f32.mrf.mxu0
        %v7527 = vadd.f32 %v4793, %v7526
        %v7528 = vpop.f32.mrf.mxu0
        %v7529 = vadd.f32 %v4793, %v7528
        %7530 = vdwg.mxu0
        %7531 = vmatpush.bf16.msra.mxu0 %v6523
        %7532 = vmatpush.bf16.msra.mxu0 %v6521
        %7533 = vmatpush.bf16.msra.mxu0 %v6519
        %7534 = vmatpush.bf16.msra.mxu0 %v6517
        %7535 = vmatpush.bf16.msra.mxu0 %v6515
        %7536 = vmatpush.bf16.msra.mxu0 %v6513
        %7537 = vmatpush.bf16.msra.mxu0 %v6511
        %7538 = vmatpush.bf16.msra.mxu0 %v6509
        %7539 = vmatmul.bf16.gmra.mxu0 %v4894
        %v7540 = vpop.f32.mrf.mxu0
        %v7541 = vadd.f32 %v7527, %v7540
        %v7542 = vpop.f32.mrf.mxu0
        %v7543 = vadd.f32 %v7529, %v7542
        %7544 = vdwg.mxu0
        %7545 = vmatpush.bf16.msra.mxu0 %v6539
        %7546 = vmatpush.bf16.msra.mxu0 %v6537
        %7547 = vmatpush.bf16.msra.mxu0 %v6535
        %7548 = vmatpush.bf16.msra.mxu0 %v6533
        %7549 = vmatpush.bf16.msra.mxu0 %v6531
        %7550 = vmatpush.bf16.msra.mxu0 %v6529
        %7551 = vmatpush.bf16.msra.mxu0 %v6527
        %7552 = vmatpush.bf16.msra.mxu0 %v6525
        %7553 = vmatmul.bf16.gmra.mxu0 %v4895
        %v7554 = vpop.f32.mrf.mxu0
        %v7555 = vadd.f32 %v7541, %v7554
        %v7556 = vpop.f32.mrf.mxu0
        %v7557 = vadd.f32 %v7543, %v7556
        %7558 = vdwg.mxu0
        %7559 = vmatpush.bf16.msra.mxu0 %v6555
        %7560 = vmatpush.bf16.msra.mxu0 %v6553
        %7561 = vmatpush.bf16.msra.mxu0 %v6551
        %7562 = vmatpush.bf16.msra.mxu0 %v6549
        %7563 = vmatpush.bf16.msra.mxu0 %v6547
        %7564 = vmatpush.bf16.msra.mxu0 %v6545
        %7565 = vmatpush.bf16.msra.mxu0 %v6543
        %7566 = vmatpush.bf16.msra.mxu0 %v6541
        %7567 = vmatmul.bf16.gmra.mxu0 %v4896
        %v7568 = vpop.f32.mrf.mxu0
        %v7569 = vadd.f32 %v7555, %v7568
        %v7570 = vpop.f32.mrf.mxu0
        %v7571 = vadd.f32 %v7557, %v7570
        %7572 = vdwg.mxu0
        %7573 = vmatpush.bf16.msra.mxu0 %v6571
        %7574 = vmatpush.bf16.msra.mxu0 %v6569
        %7575 = vmatpush.bf16.msra.mxu0 %v6567
        %7576 = vmatpush.bf16.msra.mxu0 %v6565
        %7577 = vmatpush.bf16.msra.mxu0 %v6563
        %7578 = vmatpush.bf16.msra.mxu0 %v6561
        %7579 = vmatpush.bf16.msra.mxu0 %v6559
        %7580 = vmatpush.bf16.msra.mxu0 %v6557
        %7581 = vmatmul.bf16.gmra.mxu0 %v4897
        %v7582 = vpop.f32.mrf.mxu0
        %v7583 = vadd.f32 %v7569, %v7582
        %v7584 = vpop.f32.mrf.mxu0
        %v7585 = vadd.f32 %v7571, %v7584
        %7586 = vdwg.mxu0
        %7587 = vmatpush.bf16.msra.mxu0 %v6587
        %7588 = vmatpush.bf16.msra.mxu0 %v6585
        %7589 = vmatpush.bf16.msra.mxu0 %v6583
        %7590 = vmatpush.bf16.msra.mxu0 %v6581
        %7591 = vmatpush.bf16.msra.mxu0 %v6579
        %7592 = vmatpush.bf16.msra.mxu0 %v6577
        %7593 = vmatpush.bf16.msra.mxu0 %v6575
        %7594 = vmatpush.bf16.msra.mxu0 %v6573
        %7595 = vmatmul.bf16.gmra.mxu0 %v4898
        %v7596 = vpop.f32.mrf.mxu0
        %v7597 = vadd.f32 %v7583, %v7596
        %v7598 = vpop.f32.mrf.mxu0
        %v7599 = vadd.f32 %v7585, %v7598
        %7600 = vdwg.mxu0
        %7601 = vmatpush.bf16.msra.mxu0 %v6603
        %7602 = vmatpush.bf16.msra.mxu0 %v6601
        %7603 = vmatpush.bf16.msra.mxu0 %v6599
        %7604 = vmatpush.bf16.msra.mxu0 %v6597
        %7605 = vmatpush.bf16.msra.mxu0 %v6595
        %7606 = vmatpush.bf16.msra.mxu0 %v6593
        %7607 = vmatpush.bf16.msra.mxu0 %v6591
        %7608 = vmatpush.bf16.msra.mxu0 %v6589
        %7609 = vmatmul.bf16.gmra.mxu0 %v4899
        %v7610 = vpop.f32.mrf.mxu0
        %v7611 = vadd.f32 %v7597, %v7610
        %v7612 = vpop.f32.mrf.mxu0
        %v7613 = vadd.f32 %v7599, %v7612
        %7614 = vdwg.mxu0
        %7615 = vmatpush.bf16.msra.mxu0 %v6619
        %7616 = vmatpush.bf16.msra.mxu0 %v6617
        %7617 = vmatpush.bf16.msra.mxu0 %v6615
        %7618 = vmatpush.bf16.msra.mxu0 %v6613
        %7619 = vmatpush.bf16.msra.mxu0 %v6611
        %7620 = vmatpush.bf16.msra.mxu0 %v6609
        %7621 = vmatpush.bf16.msra.mxu0 %v6607
        %7622 = vmatpush.bf16.msra.mxu0 %v6605
        %7623 = vmatmul.bf16.gmra.mxu0 %v4900
        %v7624 = vpop.f32.mrf.mxu0
        %v7625 = vadd.f32 %v7611, %v7624
        %v7626 = vpop.f32.mrf.mxu0
        %v7627 = vadd.f32 %v7613, %v7626
        %7628 = vdwg.mxu0
        %7629 = vmatpush.bf16.msra.mxu0 %v6635
        %7630 = vmatpush.bf16.msra.mxu0 %v6633
        %7631 = vmatpush.bf16.msra.mxu0 %v6631
        %7632 = vmatpush.bf16.msra.mxu0 %v6629
        %7633 = vmatpush.bf16.msra.mxu0 %v6627
        %7634 = vmatpush.bf16.msra.mxu0 %v6625
        %7635 = vmatpush.bf16.msra.mxu0 %v6623
        %7636 = vmatpush.bf16.msra.mxu0 %v6621
        %7637 = vmatmul.bf16.gmra.mxu0 %v4901
        %v7638 = vpop.f32.mrf.mxu0
        %v7639 = vadd.f32 %v7625, %v7638
        %v7640 = vpop.f32.mrf.mxu0
        %v7641 = vadd.f32 %v7627, %v7640
        %7642 = vdwg.mxu0
        %7643 = vmatpush.bf16.msra.mxu0 %v6651
        %7644 = vmatpush.bf16.msra.mxu0 %v6649
        %7645 = vmatpush.bf16.msra.mxu0 %v6647
        %7646 = vmatpush.bf16.msra.mxu0 %v6645
        %7647 = vmatpush.bf16.msra.mxu0 %v6643
        %7648 = vmatpush.bf16.msra.mxu0 %v6641
        %7649 = vmatpush.bf16.msra.mxu0 %v6639
        %7650 = vmatpush.bf16.msra.mxu0 %v6637
        %7651 = vmatmul.bf16.gmra.mxu0 %v4902
        %v7652 = vpop.f32.mrf.mxu0
        %v7653 = vadd.f32 %v7639, %v7652
        %v7654 = vpop.f32.mrf.mxu0
        %v7655 = vadd.f32 %v7641, %v7654
        %7656 = vdwg.mxu0
        %7657 = vmatpush.bf16.msra.mxu0 %v6667
        %7658 = vmatpush.bf16.msra.mxu0 %v6665
        %7659 = vmatpush.bf16.msra.mxu0 %v6663
        %7660 = vmatpush.bf16.msra.mxu0 %v6661
        %7661 = vmatpush.bf16.msra.mxu0 %v6659
        %7662 = vmatpush.bf16.msra.mxu0 %v6657
        %7663 = vmatpush.bf16.msra.mxu0 %v6655
        %7664 = vmatpush.bf16.msra.mxu0 %v6653
        %7665 = vmatmul.bf16.gmra.mxu0 %v4903
        %v7666 = vpop.f32.mrf.mxu0
        %v7667 = vadd.f32 %v7653, %v7666
        %v7668 = vpop.f32.mrf.mxu0
        %v7669 = vadd.f32 %v7655, %v7668
        %7670 = vdwg.mxu0
        %7671 = vmatpush.bf16.msra.mxu0 %v6683
        %7672 = vmatpush.bf16.msra.mxu0 %v6681
        %7673 = vmatpush.bf16.msra.mxu0 %v6679
        %7674 = vmatpush.bf16.msra.mxu0 %v6677
        %7675 = vmatpush.bf16.msra.mxu0 %v6675
        %7676 = vmatpush.bf16.msra.mxu0 %v6673
        %7677 = vmatpush.bf16.msra.mxu0 %v6671
        %7678 = vmatpush.bf16.msra.mxu0 %v6669
        %7679 = vmatmul.bf16.gmra.mxu0 %v4904
        %v7680 = vpop.f32.mrf.mxu0
        %v7681 = vadd.f32 %v7667, %v7680
        %v7682 = vpop.f32.mrf.mxu0
        %v7683 = vadd.f32 %v7669, %v7682
        %7684 = vdwg.mxu0
        %7685 = vmatpush.bf16.msra.mxu0 %v6699
        %7686 = vmatpush.bf16.msra.mxu0 %v6697
        %7687 = vmatpush.bf16.msra.mxu0 %v6695
        %7688 = vmatpush.bf16.msra.mxu0 %v6693
        %7689 = vmatpush.bf16.msra.mxu0 %v6691
        %7690 = vmatpush.bf16.msra.mxu0 %v6689
        %7691 = vmatpush.bf16.msra.mxu0 %v6687
        %7692 = vmatpush.bf16.msra.mxu0 %v6685
        %7693 = vmatmul.bf16.gmra.mxu0 %v4905
        %v7694 = vpop.f32.mrf.mxu0
        %v7695 = vadd.f32 %v7681, %v7694
        %v7696 = vpop.f32.mrf.mxu0
        %v7697 = vadd.f32 %v7683, %v7696
        %7698 = vdwg.mxu0
        %7699 = vmatpush.bf16.msra.mxu0 %v6715
        %7700 = vmatpush.bf16.msra.mxu0 %v6713
        %7701 = vmatpush.bf16.msra.mxu0 %v6711
        %7702 = vmatpush.bf16.msra.mxu0 %v6709
        %7703 = vmatpush.bf16.msra.mxu0 %v6707
        %7704 = vmatpush.bf16.msra.mxu0 %v6705
        %7705 = vmatpush.bf16.msra.mxu0 %v6703
        %7706 = vmatpush.bf16.msra.mxu0 %v6701
        %7707 = vmatmul.bf16.gmra.mxu0 %v4906
        %v7708 = vpop.f32.mrf.mxu0
        %v7709 = vadd.f32 %v7695, %v7708
        %v7710 = vpop.f32.mrf.mxu0
        %v7711 = vadd.f32 %v7697, %v7710
        %7712 = vdwg.mxu0
        %7713 = vmatpush.bf16.msra.mxu0 %v6731
        %7714 = vmatpush.bf16.msra.mxu0 %v6729
        %7715 = vmatpush.bf16.msra.mxu0 %v6727
        %7716 = vmatpush.bf16.msra.mxu0 %v6725
        %7717 = vmatpush.bf16.msra.mxu0 %v6723
        %7718 = vmatpush.bf16.msra.mxu0 %v6721
        %7719 = vmatpush.bf16.msra.mxu0 %v6719
        %7720 = vmatpush.bf16.msra.mxu0 %v6717
        %7721 = vmatmul.bf16.gmra.mxu0 %v4907
        %v7722 = vpop.f32.mrf.mxu0
        %v7723 = vadd.f32 %v7709, %v7722
        %v7724 = vpop.f32.mrf.mxu0
        %v7725 = vadd.f32 %v7711, %v7724
        %7726 = vdwg.mxu0
        %7727 = vmatpush.bf16.msra.mxu0 %v6747
        %7728 = vmatpush.bf16.msra.mxu0 %v6745
        %7729 = vmatpush.bf16.msra.mxu0 %v6743
        %7730 = vmatpush.bf16.msra.mxu0 %v6741
        %7731 = vmatpush.bf16.msra.mxu0 %v6739
        %7732 = vmatpush.bf16.msra.mxu0 %v6737
        %7733 = vmatpush.bf16.msra.mxu0 %v6735
        %7734 = vmatpush.bf16.msra.mxu0 %v6733
        %7735 = vmatmul.bf16.gmra.mxu0 %v4908
        %v7736 = vpop.f32.mrf.mxu0
        %v7737 = vadd.f32 %v7723, %v7736
        %v7738 = vpop.f32.mrf.mxu0
        %v7739 = vadd.f32 %v7725, %v7738
        %7740 = vdwg.mxu0
        %7741 = vmatpush.bf16.msra.mxu0 %v6763
        %7742 = vmatpush.bf16.msra.mxu0 %v6761
        %7743 = vmatpush.bf16.msra.mxu0 %v6759
        %7744 = vmatpush.bf16.msra.mxu0 %v6757
        %7745 = vmatpush.bf16.msra.mxu0 %v6755
        %7746 = vmatpush.bf16.msra.mxu0 %v6753
        %7747 = vmatpush.bf16.msra.mxu0 %v6751
        %7748 = vmatpush.bf16.msra.mxu0 %v6749
        %7749 = vmatmul.bf16.gmra.mxu0 %v4909
        %v7750 = vpop.f32.mrf.mxu0
        %v7751 = vadd.f32 %v7737, %v7750
        %v7752 = vpop.f32.mrf.mxu0
        %v7753 = vadd.f32 %v7739, %v7752
        %7754 = vdwg.mxu0
        %7755 = vmatpush.bf16.msra.mxu0 %v6779
        %7756 = vmatpush.bf16.msra.mxu0 %v6777
        %7757 = vmatpush.bf16.msra.mxu0 %v6775
        %7758 = vmatpush.bf16.msra.mxu0 %v6773
        %7759 = vmatpush.bf16.msra.mxu0 %v6771
        %7760 = vmatpush.bf16.msra.mxu0 %v6769
        %7761 = vmatpush.bf16.msra.mxu0 %v6767
        %7762 = vmatpush.bf16.msra.mxu0 %v6765
        %7763 = vmatmul.bf16.gmra.mxu0 %v4910
        %v7764 = vpop.f32.mrf.mxu0
        %v7765 = vadd.f32 %v7751, %v7764
        %v7766 = vpop.f32.mrf.mxu0
        %v7767 = vadd.f32 %v7753, %v7766
        %7768 = vdwg.mxu0
        %7769 = vmatpush.bf16.msra.mxu0 %v6795
        %7770 = vmatpush.bf16.msra.mxu0 %v6793
        %7771 = vmatpush.bf16.msra.mxu0 %v6791
        %7772 = vmatpush.bf16.msra.mxu0 %v6789
        %7773 = vmatpush.bf16.msra.mxu0 %v6787
        %7774 = vmatpush.bf16.msra.mxu0 %v6785
        %7775 = vmatpush.bf16.msra.mxu0 %v6783
        %7776 = vmatpush.bf16.msra.mxu0 %v6781
        %7777 = vmatmul.bf16.gmra.mxu0 %v4911
        %v7778 = vpop.f32.mrf.mxu0
        %v7779 = vadd.f32 %v7765, %v7778
        %v7780 = vpop.f32.mrf.mxu0
        %v7781 = vadd.f32 %v7767, %v7780
        %7782 = vdwg.mxu0
        %7783 = vmatpush.bf16.msra.mxu0 %v6811
        %7784 = vmatpush.bf16.msra.mxu0 %v6809
        %7785 = vmatpush.bf16.msra.mxu0 %v6807
        %7786 = vmatpush.bf16.msra.mxu0 %v6805
        %7787 = vmatpush.bf16.msra.mxu0 %v6803
        %7788 = vmatpush.bf16.msra.mxu0 %v6801
        %7789 = vmatpush.bf16.msra.mxu0 %v6799
        %7790 = vmatpush.bf16.msra.mxu0 %v6797
        %7791 = vmatmul.bf16.gmra.mxu0 %v4912
        %v7792 = vpop.f32.mrf.mxu0
        %v7793 = vadd.f32 %v7779, %v7792
        %v7794 = vpop.f32.mrf.mxu0
        %v7795 = vadd.f32 %v7781, %v7794
        %7796 = vdwg.mxu0
        %7797 = vmatpush.bf16.msra.mxu0 %v6827
        %7798 = vmatpush.bf16.msra.mxu0 %v6825
        %7799 = vmatpush.bf16.msra.mxu0 %v6823
        %7800 = vmatpush.bf16.msra.mxu0 %v6821
        %7801 = vmatpush.bf16.msra.mxu0 %v6819
        %7802 = vmatpush.bf16.msra.mxu0 %v6817
        %7803 = vmatpush.bf16.msra.mxu0 %v6815
        %7804 = vmatpush.bf16.msra.mxu0 %v6813
        %7805 = vmatmul.bf16.gmra.mxu0 %v4913
        %v7806 = vpop.f32.mrf.mxu0
        %v7807 = vadd.f32 %v7793, %v7806
        %v7808 = vpop.f32.mrf.mxu0
        %v7809 = vadd.f32 %v7795, %v7808
        %7810 = vdwg.mxu0
        %7811 = vmatpush.bf16.msra.mxu0 %v6843
        %7812 = vmatpush.bf16.msra.mxu0 %v6841
        %7813 = vmatpush.bf16.msra.mxu0 %v6839
        %7814 = vmatpush.bf16.msra.mxu0 %v6837
        %7815 = vmatpush.bf16.msra.mxu0 %v6835
        %7816 = vmatpush.bf16.msra.mxu0 %v6833
        %7817 = vmatpush.bf16.msra.mxu0 %v6831
        %7818 = vmatpush.bf16.msra.mxu0 %v6829
        %7819 = vmatmul.bf16.gmra.mxu0 %v4914
        %v7820 = vpop.f32.mrf.mxu0
        %v7821 = vadd.f32 %v7807, %v7820
        %v7822 = vpop.f32.mrf.mxu0
        %v7823 = vadd.f32 %v7809, %v7822
        %7824 = vdwg.mxu0
        %7825 = vmatpush.bf16.msra.mxu0 %v6859
        %7826 = vmatpush.bf16.msra.mxu0 %v6857
        %7827 = vmatpush.bf16.msra.mxu0 %v6855
        %7828 = vmatpush.bf16.msra.mxu0 %v6853
        %7829 = vmatpush.bf16.msra.mxu0 %v6851
        %7830 = vmatpush.bf16.msra.mxu0 %v6849
        %7831 = vmatpush.bf16.msra.mxu0 %v6847
        %7832 = vmatpush.bf16.msra.mxu0 %v6845
        %7833 = vmatmul.bf16.gmra.mxu0 %v4915
        %v7834 = vpop.f32.mrf.mxu0
        %v7835 = vadd.f32 %v7821, %v7834
        %v7836 = vpop.f32.mrf.mxu0
        %v7837 = vadd.f32 %v7823, %v7836
        %7838 = vdwg.mxu0
        %7839 = vmatpush.bf16.msra.mxu0 %v6875
        %7840 = vmatpush.bf16.msra.mxu0 %v6873
        %7841 = vmatpush.bf16.msra.mxu0 %v6871
        %7842 = vmatpush.bf16.msra.mxu0 %v6869
        %7843 = vmatpush.bf16.msra.mxu0 %v6867
        %7844 = vmatpush.bf16.msra.mxu0 %v6865
        %7845 = vmatpush.bf16.msra.mxu0 %v6863
        %7846 = vmatpush.bf16.msra.mxu0 %v6861
        %7847 = vmatmul.bf16.gmra.mxu0 %v4916
        %v7848 = vpop.f32.mrf.mxu0
        %v7849 = vadd.f32 %v7835, %v7848
        %v7850 = vpop.f32.mrf.mxu0
        %v7851 = vadd.f32 %v7837, %v7850
        %7852 = vdwg.mxu0
        %7853 = vmatpush.bf16.msra.mxu0 %v6891
        %7854 = vmatpush.bf16.msra.mxu0 %v6889
        %7855 = vmatpush.bf16.msra.mxu0 %v6887
        %7856 = vmatpush.bf16.msra.mxu0 %v6885
        %7857 = vmatpush.bf16.msra.mxu0 %v6883
        %7858 = vmatpush.bf16.msra.mxu0 %v6881
        %7859 = vmatpush.bf16.msra.mxu0 %v6879
        %7860 = vmatpush.bf16.msra.mxu0 %v6877
        %7861 = vmatmul.bf16.gmra.mxu0 %v4917
        %v7862 = vpop.f32.mrf.mxu0
        %v7863 = vadd.f32 %v7849, %v7862
        %v7864 = vpop.f32.mrf.mxu0
        %v7865 = vadd.f32 %v7851, %v7864
        %7866 = vdwg.mxu0
        %7867 = vmatpush.bf16.msra.mxu0 %v6907
        %7868 = vmatpush.bf16.msra.mxu0 %v6905
        %7869 = vmatpush.bf16.msra.mxu0 %v6903
        %7870 = vmatpush.bf16.msra.mxu0 %v6901
        %7871 = vmatpush.bf16.msra.mxu0 %v6899
        %7872 = vmatpush.bf16.msra.mxu0 %v6897
        %7873 = vmatpush.bf16.msra.mxu0 %v6895
        %7874 = vmatpush.bf16.msra.mxu0 %v6893
        %7875 = vmatmul.bf16.gmra.mxu0 %v4918
        %v7876 = vpop.f32.mrf.mxu0
        %v7877 = vadd.f32 %v7863, %v7876
        %v7878 = vpop.f32.mrf.mxu0
        %v7879 = vadd.f32 %v7865, %v7878
        %7880 = vdwg.mxu0
        %7881 = vmatpush.bf16.msra.mxu0 %v6923
        %7882 = vmatpush.bf16.msra.mxu0 %v6921
        %7883 = vmatpush.bf16.msra.mxu0 %v6919
        %7884 = vmatpush.bf16.msra.mxu0 %v6917
        %7885 = vmatpush.bf16.msra.mxu0 %v6915
        %7886 = vmatpush.bf16.msra.mxu0 %v6913
        %7887 = vmatpush.bf16.msra.mxu0 %v6911
        %7888 = vmatpush.bf16.msra.mxu0 %v6909
        %7889 = vmatmul.bf16.gmra.mxu0 %v4919
        %v7890 = vpop.f32.mrf.mxu0
        %v7891 = vadd.f32 %v7877, %v7890
        %v7892 = vpop.f32.mrf.mxu0
        %v7893 = vadd.f32 %v7879, %v7892
        %7894 = vdwg.mxu0
        %7895 = vmatpush.bf16.msra.mxu0 %v6939
        %7896 = vmatpush.bf16.msra.mxu0 %v6937
        %7897 = vmatpush.bf16.msra.mxu0 %v6935
        %7898 = vmatpush.bf16.msra.mxu0 %v6933
        %7899 = vmatpush.bf16.msra.mxu0 %v6931
        %7900 = vmatpush.bf16.msra.mxu0 %v6929
        %7901 = vmatpush.bf16.msra.mxu0 %v6927
        %7902 = vmatpush.bf16.msra.mxu0 %v6925
        %7903 = vmatmul.bf16.gmra.mxu0 %v4920
        %v7904 = vpop.f32.mrf.mxu0
        %v7905 = vadd.f32 %v7891, %v7904
        %v7906 = vpop.f32.mrf.mxu0
        %v7907 = vadd.f32 %v7893, %v7906
        %7908 = vdwg.mxu0
        %7909 = vmatpush.bf16.msra.mxu0 %v6955
        %7910 = vmatpush.bf16.msra.mxu0 %v6953
        %7911 = vmatpush.bf16.msra.mxu0 %v6951
        %7912 = vmatpush.bf16.msra.mxu0 %v6949
        %7913 = vmatpush.bf16.msra.mxu0 %v6947
        %7914 = vmatpush.bf16.msra.mxu0 %v6945
        %7915 = vmatpush.bf16.msra.mxu0 %v6943
        %7916 = vmatpush.bf16.msra.mxu0 %v6941
        %7917 = vmatmul.bf16.gmra.mxu0 %v4921
        %v7918 = vpop.f32.mrf.mxu0
        %v7919 = vadd.f32 %v7905, %v7918
        %v7920 = vpop.f32.mrf.mxu0
        %v7921 = vadd.f32 %v7907, %v7920
        %7922 = vdwg.mxu0
        %7923 = vmatpush.bf16.msra.mxu0 %v6971
        %7924 = vmatpush.bf16.msra.mxu0 %v6969
        %7925 = vmatpush.bf16.msra.mxu0 %v6967
        %7926 = vmatpush.bf16.msra.mxu0 %v6965
        %7927 = vmatpush.bf16.msra.mxu0 %v6963
        %7928 = vmatpush.bf16.msra.mxu0 %v6961
        %7929 = vmatpush.bf16.msra.mxu0 %v6959
        %7930 = vmatpush.bf16.msra.mxu0 %v6957
        %7931 = vmatmul.bf16.gmra.mxu0 %v4922
        %v7932 = vpop.f32.mrf.mxu0
        %v7933 = vadd.f32 %v7919, %v7932
        %v7934 = vpop.f32.mrf.mxu0
        %v7935 = vadd.f32 %v7921, %v7934
        %7936 = vdwg.mxu0
        %7937 = vmatpush.bf16.msra.mxu0 %v6987
        %7938 = vmatpush.bf16.msra.mxu0 %v6985
        %7939 = vmatpush.bf16.msra.mxu0 %v6983
        %7940 = vmatpush.bf16.msra.mxu0 %v6981
        %7941 = vmatpush.bf16.msra.mxu0 %v6979
        %7942 = vmatpush.bf16.msra.mxu0 %v6977
        %7943 = vmatpush.bf16.msra.mxu0 %v6975
        %7944 = vmatpush.bf16.msra.mxu0 %v6973
        %7945 = vmatmul.bf16.gmra.mxu0 %v4923
        %v7946 = vpop.f32.mrf.mxu0
        %v7947 = vadd.f32 %v7933, %v7946
        %v7948 = vpop.f32.mrf.mxu0
        %v7949 = vadd.f32 %v7935, %v7948
        %7950 = vdwg.mxu0
        %7951 = vmatpush.bf16.msra.mxu0 %v7003
        %7952 = vmatpush.bf16.msra.mxu0 %v7001
        %7953 = vmatpush.bf16.msra.mxu0 %v6999
        %7954 = vmatpush.bf16.msra.mxu0 %v6997
        %7955 = vmatpush.bf16.msra.mxu0 %v6995
        %7956 = vmatpush.bf16.msra.mxu0 %v6993
        %7957 = vmatpush.bf16.msra.mxu0 %v6991
        %7958 = vmatpush.bf16.msra.mxu0 %v6989
        %7959 = vmatmul.bf16.gmra.mxu0 %v4924
        %v7960 = vpop.f32.mrf.mxu0
        %v7961 = vadd.f32 %v7947, %v7960
        %v7962 = vpop.f32.mrf.mxu0
        %v7963 = vadd.f32 %v7949, %v7962
        %7964 = vdwg.mxu0
        %7965 = vmatpush.bf16.msra.mxu0 %v6508
        %7966 = vmatpush.bf16.msra.mxu0 %v6506
        %7967 = vmatpush.bf16.msra.mxu0 %v6504
        %7968 = vmatpush.bf16.msra.mxu0 %v6502
        %7969 = vmatpush.bf16.msra.mxu0 %v6500
        %7970 = vmatpush.bf16.msra.mxu0 %v6498
        %7971 = vmatpush.bf16.msra.mxu0 %v6496
        %7972 = vmatpush.bf16.msra.mxu0 %v6494
        %7973 = vmatmul.bf16.gmra.mxu0 %v4893
        %v7974 = vpop.f32.mrf.mxu0
        %v7975 = vadd.f32 %v4794, %v7974
        %v7976 = vpop.f32.mrf.mxu0
        %v7977 = vadd.f32 %v4794, %v7976
        %7978 = vdwg.mxu0
        %7979 = vmatpush.bf16.msra.mxu0 %v6524
        %7980 = vmatpush.bf16.msra.mxu0 %v6522
        %7981 = vmatpush.bf16.msra.mxu0 %v6520
        %7982 = vmatpush.bf16.msra.mxu0 %v6518
        %7983 = vmatpush.bf16.msra.mxu0 %v6516
        %7984 = vmatpush.bf16.msra.mxu0 %v6514
        %7985 = vmatpush.bf16.msra.mxu0 %v6512
        %7986 = vmatpush.bf16.msra.mxu0 %v6510
        %7987 = vmatmul.bf16.gmra.mxu0 %v4894
        %v7988 = vpop.f32.mrf.mxu0
        %v7989 = vadd.f32 %v7975, %v7988
        %v7990 = vpop.f32.mrf.mxu0
        %v7991 = vadd.f32 %v7977, %v7990
        %7992 = vdwg.mxu0
        %7993 = vmatpush.bf16.msra.mxu0 %v6540
        %7994 = vmatpush.bf16.msra.mxu0 %v6538
        %7995 = vmatpush.bf16.msra.mxu0 %v6536
        %7996 = vmatpush.bf16.msra.mxu0 %v6534
        %7997 = vmatpush.bf16.msra.mxu0 %v6532
        %7998 = vmatpush.bf16.msra.mxu0 %v6530
        %7999 = vmatpush.bf16.msra.mxu0 %v6528
        %8000 = vmatpush.bf16.msra.mxu0 %v6526
        %8001 = vmatmul.bf16.gmra.mxu0 %v4895
        %v8002 = vpop.f32.mrf.mxu0
        %v8003 = vadd.f32 %v7989, %v8002
        %v8004 = vpop.f32.mrf.mxu0
        %v8005 = vadd.f32 %v7991, %v8004
        %8006 = vdwg.mxu0
        %8007 = vmatpush.bf16.msra.mxu0 %v6556
        %8008 = vmatpush.bf16.msra.mxu0 %v6554
        %8009 = vmatpush.bf16.msra.mxu0 %v6552
        %8010 = vmatpush.bf16.msra.mxu0 %v6550
        %8011 = vmatpush.bf16.msra.mxu0 %v6548
        %8012 = vmatpush.bf16.msra.mxu0 %v6546
        %8013 = vmatpush.bf16.msra.mxu0 %v6544
        %8014 = vmatpush.bf16.msra.mxu0 %v6542
        %8015 = vmatmul.bf16.gmra.mxu0 %v4896
        %v8016 = vpop.f32.mrf.mxu0
        %v8017 = vadd.f32 %v8003, %v8016
        %v8018 = vpop.f32.mrf.mxu0
        %v8019 = vadd.f32 %v8005, %v8018
        %8020 = vdwg.mxu0
        %8021 = vmatpush.bf16.msra.mxu0 %v6572
        %8022 = vmatpush.bf16.msra.mxu0 %v6570
        %8023 = vmatpush.bf16.msra.mxu0 %v6568
        %8024 = vmatpush.bf16.msra.mxu0 %v6566
        %8025 = vmatpush.bf16.msra.mxu0 %v6564
        %8026 = vmatpush.bf16.msra.mxu0 %v6562
        %8027 = vmatpush.bf16.msra.mxu0 %v6560
        %8028 = vmatpush.bf16.msra.mxu0 %v6558
        %8029 = vmatmul.bf16.gmra.mxu0 %v4897
        %v8030 = vpop.f32.mrf.mxu0
        %v8031 = vadd.f32 %v8017, %v8030
        %v8032 = vpop.f32.mrf.mxu0
        %v8033 = vadd.f32 %v8019, %v8032
        %8034 = vdwg.mxu0
        %8035 = vmatpush.bf16.msra.mxu0 %v6588
        %8036 = vmatpush.bf16.msra.mxu0 %v6586
        %8037 = vmatpush.bf16.msra.mxu0 %v6584
        %8038 = vmatpush.bf16.msra.mxu0 %v6582
        %8039 = vmatpush.bf16.msra.mxu0 %v6580
        %8040 = vmatpush.bf16.msra.mxu0 %v6578
        %8041 = vmatpush.bf16.msra.mxu0 %v6576
        %8042 = vmatpush.bf16.msra.mxu0 %v6574
        %8043 = vmatmul.bf16.gmra.mxu0 %v4898
        %v8044 = vpop.f32.mrf.mxu0
        %v8045 = vadd.f32 %v8031, %v8044
        %v8046 = vpop.f32.mrf.mxu0
        %v8047 = vadd.f32 %v8033, %v8046
        %8048 = vdwg.mxu0
        %8049 = vmatpush.bf16.msra.mxu0 %v6604
        %8050 = vmatpush.bf16.msra.mxu0 %v6602
        %8051 = vmatpush.bf16.msra.mxu0 %v6600
        %8052 = vmatpush.bf16.msra.mxu0 %v6598
        %8053 = vmatpush.bf16.msra.mxu0 %v6596
        %8054 = vmatpush.bf16.msra.mxu0 %v6594
        %8055 = vmatpush.bf16.msra.mxu0 %v6592
        %8056 = vmatpush.bf16.msra.mxu0 %v6590
        %8057 = vmatmul.bf16.gmra.mxu0 %v4899
        %v8058 = vpop.f32.mrf.mxu0
        %v8059 = vadd.f32 %v8045, %v8058
        %v8060 = vpop.f32.mrf.mxu0
        %v8061 = vadd.f32 %v8047, %v8060
        %8062 = vdwg.mxu0
        %8063 = vmatpush.bf16.msra.mxu0 %v6620
        %8064 = vmatpush.bf16.msra.mxu0 %v6618
        %8065 = vmatpush.bf16.msra.mxu0 %v6616
        %8066 = vmatpush.bf16.msra.mxu0 %v6614
        %8067 = vmatpush.bf16.msra.mxu0 %v6612
        %8068 = vmatpush.bf16.msra.mxu0 %v6610
        %8069 = vmatpush.bf16.msra.mxu0 %v6608
        %8070 = vmatpush.bf16.msra.mxu0 %v6606
        %8071 = vmatmul.bf16.gmra.mxu0 %v4900
        %v8072 = vpop.f32.mrf.mxu0
        %v8073 = vadd.f32 %v8059, %v8072
        %v8074 = vpop.f32.mrf.mxu0
        %v8075 = vadd.f32 %v8061, %v8074
        %8076 = vdwg.mxu0
        %8077 = vmatpush.bf16.msra.mxu0 %v6636
        %8078 = vmatpush.bf16.msra.mxu0 %v6634
        %8079 = vmatpush.bf16.msra.mxu0 %v6632
        %8080 = vmatpush.bf16.msra.mxu0 %v6630
        %8081 = vmatpush.bf16.msra.mxu0 %v6628
        %8082 = vmatpush.bf16.msra.mxu0 %v6626
        %8083 = vmatpush.bf16.msra.mxu0 %v6624
        %8084 = vmatpush.bf16.msra.mxu0 %v6622
        %8085 = vmatmul.bf16.gmra.mxu0 %v4901
        %v8086 = vpop.f32.mrf.mxu0
        %v8087 = vadd.f32 %v8073, %v8086
        %v8088 = vpop.f32.mrf.mxu0
        %v8089 = vadd.f32 %v8075, %v8088
        %8090 = vdwg.mxu0
        %8091 = vmatpush.bf16.msra.mxu0 %v6652
        %8092 = vmatpush.bf16.msra.mxu0 %v6650
        %8093 = vmatpush.bf16.msra.mxu0 %v6648
        %8094 = vmatpush.bf16.msra.mxu0 %v6646
        %8095 = vmatpush.bf16.msra.mxu0 %v6644
        %8096 = vmatpush.bf16.msra.mxu0 %v6642
        %8097 = vmatpush.bf16.msra.mxu0 %v6640
        %8098 = vmatpush.bf16.msra.mxu0 %v6638
        %8099 = vmatmul.bf16.gmra.mxu0 %v4902
        %v8100 = vpop.f32.mrf.mxu0
        %v8101 = vadd.f32 %v8087, %v8100
        %v8102 = vpop.f32.mrf.mxu0
        %v8103 = vadd.f32 %v8089, %v8102
        %8104 = vdwg.mxu0
        %8105 = vmatpush.bf16.msra.mxu0 %v6668
        %8106 = vmatpush.bf16.msra.mxu0 %v6666
        %8107 = vmatpush.bf16.msra.mxu0 %v6664
        %8108 = vmatpush.bf16.msra.mxu0 %v6662
        %8109 = vmatpush.bf16.msra.mxu0 %v6660
        %8110 = vmatpush.bf16.msra.mxu0 %v6658
        %8111 = vmatpush.bf16.msra.mxu0 %v6656
        %8112 = vmatpush.bf16.msra.mxu0 %v6654
        %8113 = vmatmul.bf16.gmra.mxu0 %v4903
        %v8114 = vpop.f32.mrf.mxu0
        %v8115 = vadd.f32 %v8101, %v8114
        %v8116 = vpop.f32.mrf.mxu0
        %v8117 = vadd.f32 %v8103, %v8116
        %8118 = vdwg.mxu0
        %8119 = vmatpush.bf16.msra.mxu0 %v6684
        %8120 = vmatpush.bf16.msra.mxu0 %v6682
        %8121 = vmatpush.bf16.msra.mxu0 %v6680
        %8122 = vmatpush.bf16.msra.mxu0 %v6678
        %8123 = vmatpush.bf16.msra.mxu0 %v6676
        %8124 = vmatpush.bf16.msra.mxu0 %v6674
        %8125 = vmatpush.bf16.msra.mxu0 %v6672
        %8126 = vmatpush.bf16.msra.mxu0 %v6670
        %8127 = vmatmul.bf16.gmra.mxu0 %v4904
        %v8128 = vpop.f32.mrf.mxu0
        %v8129 = vadd.f32 %v8115, %v8128
        %v8130 = vpop.f32.mrf.mxu0
        %v8131 = vadd.f32 %v8117, %v8130
        %8132 = vdwg.mxu0
        %8133 = vmatpush.bf16.msra.mxu0 %v6700
        %8134 = vmatpush.bf16.msra.mxu0 %v6698
        %8135 = vmatpush.bf16.msra.mxu0 %v6696
        %8136 = vmatpush.bf16.msra.mxu0 %v6694
        %8137 = vmatpush.bf16.msra.mxu0 %v6692
        %8138 = vmatpush.bf16.msra.mxu0 %v6690
        %8139 = vmatpush.bf16.msra.mxu0 %v6688
        %8140 = vmatpush.bf16.msra.mxu0 %v6686
        %8141 = vmatmul.bf16.gmra.mxu0 %v4905
        %v8142 = vpop.f32.mrf.mxu0
        %v8143 = vadd.f32 %v8129, %v8142
        %v8144 = vpop.f32.mrf.mxu0
        %v8145 = vadd.f32 %v8131, %v8144
        %8146 = vdwg.mxu0
        %8147 = vmatpush.bf16.msra.mxu0 %v6716
        %8148 = vmatpush.bf16.msra.mxu0 %v6714
        %8149 = vmatpush.bf16.msra.mxu0 %v6712
        %8150 = vmatpush.bf16.msra.mxu0 %v6710
        %8151 = vmatpush.bf16.msra.mxu0 %v6708
        %8152 = vmatpush.bf16.msra.mxu0 %v6706
        %8153 = vmatpush.bf16.msra.mxu0 %v6704
        %8154 = vmatpush.bf16.msra.mxu0 %v6702
        %8155 = vmatmul.bf16.gmra.mxu0 %v4906
        %v8156 = vpop.f32.mrf.mxu0
        %v8157 = vadd.f32 %v8143, %v8156
        %v8158 = vpop.f32.mrf.mxu0
        %v8159 = vadd.f32 %v8145, %v8158
        %8160 = vdwg.mxu0
        %8161 = vmatpush.bf16.msra.mxu0 %v6732
        %8162 = vmatpush.bf16.msra.mxu0 %v6730
        %8163 = vmatpush.bf16.msra.mxu0 %v6728
        %8164 = vmatpush.bf16.msra.mxu0 %v6726
        %8165 = vmatpush.bf16.msra.mxu0 %v6724
        %8166 = vmatpush.bf16.msra.mxu0 %v6722
        %8167 = vmatpush.bf16.msra.mxu0 %v6720
        %8168 = vmatpush.bf16.msra.mxu0 %v6718
        %8169 = vmatmul.bf16.gmra.mxu0 %v4907
        %v8170 = vpop.f32.mrf.mxu0
        %v8171 = vadd.f32 %v8157, %v8170
        %v8172 = vpop.f32.mrf.mxu0
        %v8173 = vadd.f32 %v8159, %v8172
        %8174 = vdwg.mxu0
        %8175 = vmatpush.bf16.msra.mxu0 %v6748
        %8176 = vmatpush.bf16.msra.mxu0 %v6746
        %8177 = vmatpush.bf16.msra.mxu0 %v6744
        %8178 = vmatpush.bf16.msra.mxu0 %v6742
        %8179 = vmatpush.bf16.msra.mxu0 %v6740
        %8180 = vmatpush.bf16.msra.mxu0 %v6738
        %8181 = vmatpush.bf16.msra.mxu0 %v6736
        %8182 = vmatpush.bf16.msra.mxu0 %v6734
        %8183 = vmatmul.bf16.gmra.mxu0 %v4908
        %v8184 = vpop.f32.mrf.mxu0
        %v8185 = vadd.f32 %v8171, %v8184
        %v8186 = vpop.f32.mrf.mxu0
        %v8187 = vadd.f32 %v8173, %v8186
        %8188 = vdwg.mxu0
        %8189 = vmatpush.bf16.msra.mxu0 %v6764
        %8190 = vmatpush.bf16.msra.mxu0 %v6762
        %8191 = vmatpush.bf16.msra.mxu0 %v6760
        %8192 = vmatpush.bf16.msra.mxu0 %v6758
        %8193 = vmatpush.bf16.msra.mxu0 %v6756
        %8194 = vmatpush.bf16.msra.mxu0 %v6754
        %8195 = vmatpush.bf16.msra.mxu0 %v6752
        %8196 = vmatpush.bf16.msra.mxu0 %v6750
        %8197 = vmatmul.bf16.gmra.mxu0 %v4909
        %v8198 = vpop.f32.mrf.mxu0
        %v8199 = vadd.f32 %v8185, %v8198
        %v8200 = vpop.f32.mrf.mxu0
        %v8201 = vadd.f32 %v8187, %v8200
        %8202 = vdwg.mxu0
        %8203 = vmatpush.bf16.msra.mxu0 %v6780
        %8204 = vmatpush.bf16.msra.mxu0 %v6778
        %8205 = vmatpush.bf16.msra.mxu0 %v6776
        %8206 = vmatpush.bf16.msra.mxu0 %v6774
        %8207 = vmatpush.bf16.msra.mxu0 %v6772
        %8208 = vmatpush.bf16.msra.mxu0 %v6770
        %8209 = vmatpush.bf16.msra.mxu0 %v6768
        %8210 = vmatpush.bf16.msra.mxu0 %v6766
        %8211 = vmatmul.bf16.gmra.mxu0 %v4910
        %v8212 = vpop.f32.mrf.mxu0
        %v8213 = vadd.f32 %v8199, %v8212
        %v8214 = vpop.f32.mrf.mxu0
        %v8215 = vadd.f32 %v8201, %v8214
        %8216 = vdwg.mxu0
        %8217 = vmatpush.bf16.msra.mxu0 %v6796
        %8218 = vmatpush.bf16.msra.mxu0 %v6794
        %8219 = vmatpush.bf16.msra.mxu0 %v6792
        %8220 = vmatpush.bf16.msra.mxu0 %v6790
        %8221 = vmatpush.bf16.msra.mxu0 %v6788
        %8222 = vmatpush.bf16.msra.mxu0 %v6786
        %8223 = vmatpush.bf16.msra.mxu0 %v6784
        %8224 = vmatpush.bf16.msra.mxu0 %v6782
        %8225 = vmatmul.bf16.gmra.mxu0 %v4911
        %v8226 = vpop.f32.mrf.mxu0
        %v8227 = vadd.f32 %v8213, %v8226
        %v8228 = vpop.f32.mrf.mxu0
        %v8229 = vadd.f32 %v8215, %v8228
        %8230 = vdwg.mxu0
        %8231 = vmatpush.bf16.msra.mxu0 %v6812
        %8232 = vmatpush.bf16.msra.mxu0 %v6810
        %8233 = vmatpush.bf16.msra.mxu0 %v6808
        %8234 = vmatpush.bf16.msra.mxu0 %v6806
        %8235 = vmatpush.bf16.msra.mxu0 %v6804
        %8236 = vmatpush.bf16.msra.mxu0 %v6802
        %8237 = vmatpush.bf16.msra.mxu0 %v6800
        %8238 = vmatpush.bf16.msra.mxu0 %v6798
        %8239 = vmatmul.bf16.gmra.mxu0 %v4912
        %v8240 = vpop.f32.mrf.mxu0
        %v8241 = vadd.f32 %v8227, %v8240
        %v8242 = vpop.f32.mrf.mxu0
        %v8243 = vadd.f32 %v8229, %v8242
        %8244 = vdwg.mxu0
        %8245 = vmatpush.bf16.msra.mxu0 %v6828
        %8246 = vmatpush.bf16.msra.mxu0 %v6826
        %8247 = vmatpush.bf16.msra.mxu0 %v6824
        %8248 = vmatpush.bf16.msra.mxu0 %v6822
        %8249 = vmatpush.bf16.msra.mxu0 %v6820
        %8250 = vmatpush.bf16.msra.mxu0 %v6818
        %8251 = vmatpush.bf16.msra.mxu0 %v6816
        %8252 = vmatpush.bf16.msra.mxu0 %v6814
        %8253 = vmatmul.bf16.gmra.mxu0 %v4913
        %v8254 = vpop.f32.mrf.mxu0
        %v8255 = vadd.f32 %v8241, %v8254
        %v8256 = vpop.f32.mrf.mxu0
        %v8257 = vadd.f32 %v8243, %v8256
        %8258 = vdwg.mxu0
        %8259 = vmatpush.bf16.msra.mxu0 %v6844
        %8260 = vmatpush.bf16.msra.mxu0 %v6842
        %8261 = vmatpush.bf16.msra.mxu0 %v6840
        %8262 = vmatpush.bf16.msra.mxu0 %v6838
        %8263 = vmatpush.bf16.msra.mxu0 %v6836
        %8264 = vmatpush.bf16.msra.mxu0 %v6834
        %8265 = vmatpush.bf16.msra.mxu0 %v6832
        %8266 = vmatpush.bf16.msra.mxu0 %v6830
        %8267 = vmatmul.bf16.gmra.mxu0 %v4914
        %v8268 = vpop.f32.mrf.mxu0
        %v8269 = vadd.f32 %v8255, %v8268
        %v8270 = vpop.f32.mrf.mxu0
        %v8271 = vadd.f32 %v8257, %v8270
        %8272 = vdwg.mxu0
        %8273 = vmatpush.bf16.msra.mxu0 %v6860
        %8274 = vmatpush.bf16.msra.mxu0 %v6858
        %8275 = vmatpush.bf16.msra.mxu0 %v6856
        %8276 = vmatpush.bf16.msra.mxu0 %v6854
        %8277 = vmatpush.bf16.msra.mxu0 %v6852
        %8278 = vmatpush.bf16.msra.mxu0 %v6850
        %8279 = vmatpush.bf16.msra.mxu0 %v6848
        %8280 = vmatpush.bf16.msra.mxu0 %v6846
        %8281 = vmatmul.bf16.gmra.mxu0 %v4915
        %v8282 = vpop.f32.mrf.mxu0
        %v8283 = vadd.f32 %v8269, %v8282
        %v8284 = vpop.f32.mrf.mxu0
        %v8285 = vadd.f32 %v8271, %v8284
        %8286 = vdwg.mxu0
        %8287 = vmatpush.bf16.msra.mxu0 %v6876
        %8288 = vmatpush.bf16.msra.mxu0 %v6874
        %8289 = vmatpush.bf16.msra.mxu0 %v6872
        %8290 = vmatpush.bf16.msra.mxu0 %v6870
        %8291 = vmatpush.bf16.msra.mxu0 %v6868
        %8292 = vmatpush.bf16.msra.mxu0 %v6866
        %8293 = vmatpush.bf16.msra.mxu0 %v6864
        %8294 = vmatpush.bf16.msra.mxu0 %v6862
        %8295 = vmatmul.bf16.gmra.mxu0 %v4916
        %v8296 = vpop.f32.mrf.mxu0
        %v8297 = vadd.f32 %v8283, %v8296
        %v8298 = vpop.f32.mrf.mxu0
        %v8299 = vadd.f32 %v8285, %v8298
        %8300 = vdwg.mxu0
        %8301 = vmatpush.bf16.msra.mxu0 %v6892
        %8302 = vmatpush.bf16.msra.mxu0 %v6890
        %8303 = vmatpush.bf16.msra.mxu0 %v6888
        %8304 = vmatpush.bf16.msra.mxu0 %v6886
        %8305 = vmatpush.bf16.msra.mxu0 %v6884
        %8306 = vmatpush.bf16.msra.mxu0 %v6882
        %8307 = vmatpush.bf16.msra.mxu0 %v6880
        %8308 = vmatpush.bf16.msra.mxu0 %v6878
        %8309 = vmatmul.bf16.gmra.mxu0 %v4917
        %v8310 = vpop.f32.mrf.mxu0
        %v8311 = vadd.f32 %v8297, %v8310
        %v8312 = vpop.f32.mrf.mxu0
        %v8313 = vadd.f32 %v8299, %v8312
        %8314 = vdwg.mxu0
        %8315 = vmatpush.bf16.msra.mxu0 %v6908
        %8316 = vmatpush.bf16.msra.mxu0 %v6906
        %8317 = vmatpush.bf16.msra.mxu0 %v6904
        %8318 = vmatpush.bf16.msra.mxu0 %v6902
        %8319 = vmatpush.bf16.msra.mxu0 %v6900
        %8320 = vmatpush.bf16.msra.mxu0 %v6898
        %8321 = vmatpush.bf16.msra.mxu0 %v6896
        %8322 = vmatpush.bf16.msra.mxu0 %v6894
        %8323 = vmatmul.bf16.gmra.mxu0 %v4918
        %v8324 = vpop.f32.mrf.mxu0
        %v8325 = vadd.f32 %v8311, %v8324
        %v8326 = vpop.f32.mrf.mxu0
        %v8327 = vadd.f32 %v8313, %v8326
        %8328 = vdwg.mxu0
        %8329 = vmatpush.bf16.msra.mxu0 %v6924
        %8330 = vmatpush.bf16.msra.mxu0 %v6922
        %8331 = vmatpush.bf16.msra.mxu0 %v6920
        %8332 = vmatpush.bf16.msra.mxu0 %v6918
        %8333 = vmatpush.bf16.msra.mxu0 %v6916
        %8334 = vmatpush.bf16.msra.mxu0 %v6914
        %8335 = vmatpush.bf16.msra.mxu0 %v6912
        %8336 = vmatpush.bf16.msra.mxu0 %v6910
        %8337 = vmatmul.bf16.gmra.mxu0 %v4919
        %v8338 = vpop.f32.mrf.mxu0
        %v8339 = vadd.f32 %v8325, %v8338
        %v8340 = vpop.f32.mrf.mxu0
        %v8341 = vadd.f32 %v8327, %v8340
        %8342 = vdwg.mxu0
        %8343 = vmatpush.bf16.msra.mxu0 %v6940
        %8344 = vmatpush.bf16.msra.mxu0 %v6938
        %8345 = vmatpush.bf16.msra.mxu0 %v6936
        %8346 = vmatpush.bf16.msra.mxu0 %v6934
        %8347 = vmatpush.bf16.msra.mxu0 %v6932
        %8348 = vmatpush.bf16.msra.mxu0 %v6930
        %8349 = vmatpush.bf16.msra.mxu0 %v6928
        %8350 = vmatpush.bf16.msra.mxu0 %v6926
        %8351 = vmatmul.bf16.gmra.mxu0 %v4920
        %v8352 = vpop.f32.mrf.mxu0
        %v8353 = vadd.f32 %v8339, %v8352
        %v8354 = vpop.f32.mrf.mxu0
        %v8355 = vadd.f32 %v8341, %v8354
        %8356 = vdwg.mxu0
        %8357 = vmatpush.bf16.msra.mxu0 %v6956
        %8358 = vmatpush.bf16.msra.mxu0 %v6954
        %8359 = vmatpush.bf16.msra.mxu0 %v6952
        %8360 = vmatpush.bf16.msra.mxu0 %v6950
        %8361 = vmatpush.bf16.msra.mxu0 %v6948
        %8362 = vmatpush.bf16.msra.mxu0 %v6946
        %8363 = vmatpush.bf16.msra.mxu0 %v6944
        %8364 = vmatpush.bf16.msra.mxu0 %v6942
        %8365 = vmatmul.bf16.gmra.mxu0 %v4921
        %v8366 = vpop.f32.mrf.mxu0
        %v8367 = vadd.f32 %v8353, %v8366
        %v8368 = vpop.f32.mrf.mxu0
        %v8369 = vadd.f32 %v8355, %v8368
        %8370 = vdwg.mxu0
        %8371 = vmatpush.bf16.msra.mxu0 %v6972
        %8372 = vmatpush.bf16.msra.mxu0 %v6970
        %8373 = vmatpush.bf16.msra.mxu0 %v6968
        %8374 = vmatpush.bf16.msra.mxu0 %v6966
        %8375 = vmatpush.bf16.msra.mxu0 %v6964
        %8376 = vmatpush.bf16.msra.mxu0 %v6962
        %8377 = vmatpush.bf16.msra.mxu0 %v6960
        %8378 = vmatpush.bf16.msra.mxu0 %v6958
        %8379 = vmatmul.bf16.gmra.mxu0 %v4922
        %v8380 = vpop.f32.mrf.mxu0
        %v8381 = vadd.f32 %v8367, %v8380
        %v8382 = vpop.f32.mrf.mxu0
        %v8383 = vadd.f32 %v8369, %v8382
        %8384 = vdwg.mxu0
        %8385 = vmatpush.bf16.msra.mxu0 %v6988
        %8386 = vmatpush.bf16.msra.mxu0 %v6986
        %8387 = vmatpush.bf16.msra.mxu0 %v6984
        %8388 = vmatpush.bf16.msra.mxu0 %v6982
        %8389 = vmatpush.bf16.msra.mxu0 %v6980
        %8390 = vmatpush.bf16.msra.mxu0 %v6978
        %8391 = vmatpush.bf16.msra.mxu0 %v6976
        %8392 = vmatpush.bf16.msra.mxu0 %v6974
        %8393 = vmatmul.bf16.gmra.mxu0 %v4923
        %v8394 = vpop.f32.mrf.mxu0
        %v8395 = vadd.f32 %v8381, %v8394
        %v8396 = vpop.f32.mrf.mxu0
        %v8397 = vadd.f32 %v8383, %v8396
        %8398 = vdwg.mxu0
        %8399 = vmatpush.bf16.msra.mxu0 %v7004
        %8400 = vmatpush.bf16.msra.mxu0 %v7002
        %8401 = vmatpush.bf16.msra.mxu0 %v7000
        %8402 = vmatpush.bf16.msra.mxu0 %v6998
        %8403 = vmatpush.bf16.msra.mxu0 %v6996
        %8404 = vmatpush.bf16.msra.mxu0 %v6994
        %8405 = vmatpush.bf16.msra.mxu0 %v6992
        %8406 = vmatpush.bf16.msra.mxu0 %v6990
        %8407 = vmatmul.bf16.gmra.mxu0 %v4924
        %v8408 = vpop.f32.mrf.mxu0
        %v8409 = vadd.f32 %v8395, %v8408
        %v8410 = vpop.f32.mrf.mxu0
        %v8411 = vadd.f32 %v8397, %v8410
        %8412 = vdwg.mxu0
        %vm8413 = vcmp.gt.f32.partialorder %v7961, 0.0
        %vm8414 = vcmp.gt.f32.partialorder %v8409, 0.0
        %vm8415 = vcmp.gt.f32.partialorder %v7963, 0.0
        %vm8416 = vcmp.gt.f32.partialorder %v8411, 0.0
        %v8417 = vadd.f32 %v7961, 1.0
        %v8418 = vadd.f32 %v8409, 1.0
        %v8419 = vadd.f32 %v7963, 1.0
        %v8420 = vadd.f32 %v8411, 1.0
        %v8421 = vmul.f32 %v7961, 1.442695
        %v8422 = vpow.pop %v8421
        %v8423 = vmul.f32 %v8409, 1.442695
        %v8424 = vpow.pop %v8423
        %v8425 = vmul.f32 %v7963, 1.442695
        %v8426 = vpow.pop %v8425
        %v8427 = vmul.f32 %v8411, 1.442695
        %v8428 = vpow.pop %v8427
        %v8429 = vsel %vm8413, %v8417, %v8422
        %v8430 = vsel %vm8414, %v8418, %v8424
        %v8431 = vsel %vm8415, %v8419, %v8426
        %v8432 = vsel %vm8416, %v8420, %v8428
        %8433 = vst [vmem:[%s430] sm:$0xff] %v8429
        %8434 = vst [vmem:[%s430 + $0x8] sm:$0xff] %v8430
        %8435 = vst [vmem:[%s430 + $0x10] sm:$0xff] %v8431
        %8436 = vst [vmem:[%s430 + $0x18] sm:$0xff] %v8432
        %s8437 = smul.u32 2, %s25
        %p8438 = scmp.lt.s32.totalorder %s24, 1
        %s8439 = scalar_select %p8438, %s24, 1
        %p8440 = scmp.lt.s32.totalorder %s8437, 1
        %s8441 = scalar_select %p8440, %s8437, 1
        %s8442 = smul.addr %s8441, 2
        %s8443 = smul.addr %s8439, 64
        %s8444 = sadd.s32 %s8442, %s8443
        %s8445 = smul.addr %s8444, 8
        %s8446 = scalar_lea.vmem %s5, %s8445
        %s8447 = smul.u32 2, %s25
        %s8448 = smul.u32 2, %s26
        %p8449 = scmp.lt.s32.totalorder %s24, 1
        %s8450 = scalar_select %p8449, %s24, 1
        %p8451 = scmp.lt.s32.totalorder %s8447, 1
        %s8452 = scalar_select %p8451, %s8447, 1
        %p8453 = scmp.lt.s32.totalorder %s8448, 1
        %s8454 = scalar_select %p8453, %s8448, 1
        %s8455 = smul.addr %s8452, 2
        %s8456 = sadd.s32 %s8454, %s8455
        %s8457 = smul.addr %s8450, 4
        %s8458 = sadd.s32 %s8456, %s8457
        %s8459 = smul.addr %s8458, 8
        %s8460 = scalar_lea.vmem %s6, %s8459
        // Predicated region
        $region49: #{model_forward.1} parent=39 // pred_check
          %p8461 = pneg %p187
        $region50: #{model_forward.1} parent=39 // pred_check_branch
          %8463 = sbr.rel (%p8461) target = $region52
        $region51: #{model_forward.1} parent=39 // pred_region
          %s8464 = smul.u32 2, %s25
        $region52: #{model_forward.1} parent=39 // pred_fallthru
          _
        // Predicated region
        $region53: #{model_forward.1} parent=39 // pred_check
          %p8465 = pneg %p217
        $region54: #{model_forward.1} parent=39 // pred_check_branch
          %8467 = sbr.rel (%p8465) target = $region56
        $region55: #{model_forward.1} parent=39 // pred_region
          %s8468 = smul.u32 2, %s25
          %s8469 = smul.u32 2, %s26
        $region56: #{model_forward.1} parent=39 // pred_fallthru
          _
      $region40: #{model_forward.1} parent=5 // pred_fallthru
        _
      %p8470 = scmp.le.s32.totalorder 2, %s14
      // Predicated region
      $region57: #{model_forward.1} parent=5 // pred_check
        %p8471 = pneg %p8470
      $region58: #{model_forward.1} parent=5 // pred_check_branch
        %8473 = sbr.rel (%p8471) target = $region60
      $region59: #{model_forward.1} parent=5 // pred_region
        %s8474 = ssub.s32 %s14, 2
        // Predicated region
        $region61: #{model_forward.1} parent=59 // pred_check
          %p8475 = pneg %p193
        $region62: #{model_forward.1} parent=59 // pred_check_branch
          %8477 = sbr.rel (%p8475) target = $region64
        $region63: #{model_forward.1} parent=59 // pred_region
          %s8478 = smul.u32 2, %s28
          %p8479 = scmp.lt.s32.totalorder %s27, 1
          %s8480 = scalar_select %p8479, %s27, 1
          %p8481 = scmp.lt.s32.totalorder %s8478, 1
          %s8482 = scalar_select %p8481, %s8478, 1
          %s8483 = smul.addr %s8482, 2
          %s8484 = smul.addr %s8480, 64
          %s8485 = sadd.s32 %s8483, %s8484
          %s8486 = smul.addr %s8485, 8
          %s8487 = scalar_lea.vmem %s5, %s8486
        $region64: #{model_forward.1} parent=59 // pred_fallthru
          _
        // Predicated region
        $region65: #{model_forward.1} parent=59 // pred_check
          %p8488 = pneg %p223
        $region66: #{model_forward.1} parent=59 // pred_check_branch
          %8490 = sbr.rel (%p8488) target = $region68
        $region67: #{model_forward.1} parent=59 // pred_region
          %s8491 = smul.u32 2, %s28
          %s8492 = smul.u32 2, %s29
          %p8493 = scmp.lt.s32.totalorder %s27, 1
          %s8494 = scalar_select %p8493, %s27, 1
          %p8495 = scmp.lt.s32.totalorder %s8491, 1
          %s8496 = scalar_select %p8495, %s8491, 1
          %p8497 = scmp.lt.s32.totalorder %s8492, 1
          %s8498 = scalar_select %p8497, %s8492, 1
          %s8499 = smul.addr %s8496, 2
          %s8500 = sadd.s32 %s8498, %s8499
          %s8501 = smul.addr %s8494, 4
          %s8502 = sadd.s32 %s8500, %s8501
          %s8503 = smul.addr %s8502, 8
          %s8504 = scalar_lea.vmem %s6, %s8503
        $region68: #{model_forward.1} parent=59 // pred_fallthru
          _
      $region60: #{model_forward.1} parent=5 // pred_fallthru
        _
    $region6: #{model_forward.1} parent=1 // loop_footer
      %s18 = sadd.s32 1, %s14
    $region7: #{model_forward.1} parent=1 // loop_footer_branch
      %13 = sbr.rel target = $region3
    $region8: #{model_forward.1} parent=1 // loop_exit
      _
    %8505 = vsyncpa [#allocation4], 1
    %s8506 = scalar_lea.sflag [#allocation4], 1
    %8507 = vsyncpa %s8506, 1

</llo_original>
